<compile_context>
chip_gen: v5e
topology: v5e:2x2
jax: 0.10.0
libtpu: 0.0.40
codegen_flags: <defaults>
</compile_context>

<pallas_src>
import functools

import jax
import jax.numpy as jnp
from jax import lax
from jax.experimental import pallas as pl
from jax.experimental.pallas import tpu as pltpu

BN_EPS = 1e-5
BLOCK_N = 2            # samples handled per grid step
_IN_HW = 14            # input spatial size implied by the architecture
_POOL_HW = 5           # spatial size after MaxPool(2,2)


def _row_counts(bn):
    """Row counts of the 2-D (rows, channels) activation matrices."""
    r0 = bn * _IN_HW * _IN_HW        # input rows (stride-14 coordinates)
    r1 = r0 - 30                     # conv1 output rows (same coordinates)
    r2 = r1 - 30                     # conv2 output rows
    ra = (bn - 1) * 196 + 121        # 2x2 pool-anchor rows
    r3 = bn * 25 - 12                # conv3 / conv4 rows (stride-5 coordinates)
    r5 = (bn - 1) * 25 + 1           # conv5 strided output rows
    return r0, r1, r2, ra, r3, r5


# ----------------------------- fused Pallas kernel ---------------------------

def _fused_kernel(x_ref, w1_ref, c1_ref, w2_ref, c2_ref, sp_ref,
                  w3_ref, c3_ref, w4_ref, c4_ref, w5_ref, b5_ref, s5_ref,
                  fc1w_ref, fc1b_ref, fc2w_ref, fc2b_ref,
                  o_ref,
                  a1_ref, a2_ref, p_ref, a3_ref, *, bn):
    r0, r1, r2, ra, r3, r5 = _row_counts(bn)
    f32 = jnp.float32

    # ---- Conv2d(1, 64, 3) + BatchNorm2d(64) + ReLU --------------------------
    acc = jnp.zeros((r1, 64), f32)
    for kh in range(3):
        for kw in range(3):
            off = kh * _IN_HW + kw
            tap = x_ref[pl.ds(off, r1), :]                      # (r1, 1)
            acc = acc + tap * w1_ref[pl.ds(kh * 3 + kw, 1), :]  # broadcast MAC
    a1_ref[...] = jnp.maximum(
        acc * c1_ref[pl.ds(0, 1), :] + c1_ref[pl.ds(1, 1), :], 0.0)

    # ---- Conv2d(64, 128, 3) + BatchNorm2d(128) ------------------------------
    acc = jnp.zeros((r2, 128), f32)
    for kh in range(3):
        for kw in range(3):
            off = kh * _IN_HW + kw
            acc = acc + jnp.dot(a1_ref[pl.ds(off, r2), :], w2_ref[kh * 3 + kw],
                                preferred_element_type=f32)
    a2_ref[...] = acc * c2_ref[pl.ds(0, 1), :] + c2_ref[pl.ds(1, 1), :]

    # ---- MaxPool2d(2, 2) + ReLU ---------------------------------------------
    # max over the 2x2 window anchored at each row, then pick the stride-2
    # anchors with a constant 0/1 selection matmul onto the dense 5x5 grid.
    wmax = jnp.maximum(
        jnp.maximum(a2_ref[pl.ds(0, ra), :], a2_ref[pl.ds(1, ra), :]),
        jnp.maximum(a2_ref[pl.ds(_IN_HW, ra), :],
                    a2_ref[pl.ds(_IN_HW + 1, ra), :]))
    p_ref[...] = jnp.maximum(
        jnp.dot(sp_ref[...], wmax, preferred_element_type=f32), 0.0)

    # ---- Conv2d(128, 128, 3) + BatchNorm2d(128) + ReLU ----------------------
    acc = jnp.zeros((r3, 128), f32)
    for kh in range(3):
        for kw in range(3):
            off = kh * _POOL_HW + kw
            acc = acc + jnp.dot(p_ref[pl.ds(off, r3), :], w3_ref[kh * 3 + kw],
                                preferred_element_type=f32)
    a3_ref[...] = jnp.maximum(
        acc * c3_ref[pl.ds(0, 1), :] + c3_ref[pl.ds(1, 1), :], 0.0)

    # ---- Conv2d(128, 128, 1) + BatchNorm2d(128) + ReLU ----------------------
    a4 = jnp.maximum(
        jnp.dot(a3_ref[...], w4_ref[...], preferred_element_type=f32)
        * c4_ref[pl.ds(0, 1), :] + c4_ref[pl.ds(1, 1), :], 0.0)
    a3_ref[...] = a4                                           # reuse scratch

    # ---- Conv2d(128, 128, 3) (no BN / ReLU) + Flatten -----------------------
    acc = jnp.zeros((r5, 128), f32)
    for kh in range(3):
        for kw in range(3):
            off = kh * _POOL_HW + kw
            acc = acc + jnp.dot(a3_ref[pl.ds(off, r5), :], w5_ref[kh * 3 + kw],
                                preferred_element_type=f32)
    flat = jnp.dot(s5_ref[...], acc + b5_ref[...],
                   preferred_element_type=f32)                 # (bn, 128)

    # ---- Linear(128,64) + ReLU + BatchNorm1d(64) [folded] + Linear(64,10) ---
    h = jnp.maximum(jnp.dot(flat, fc1w_ref[...], preferred_element_type=f32)
                    + fc1b_ref[...], 0.0)
    o_ref[...] = (jnp.dot(h, fc2w_ref[...], preferred_element_type=f32)
                  + fc2b_ref[...])


# ----------------------------- host-side wrapper -----------------------------

def _full_spec(arr):
    nd = arr.ndim
    return pl.BlockSpec(arr.shape, lambda i, _nd=nd: (0,) * _nd)


def _pool_select(bn):
    _, _, _, ra, _, _ = _row_counts(bn)
    n = jnp.arange(bn)[:, None, None]
    py = jnp.arange(_POOL_HW)[None, :, None]
    px = jnp.arange(_POOL_HW)[None, None, :]
    anchors = (n * 196 + (2 * py) * _IN_HW + 2 * px).reshape(-1)
    return jax.nn.one_hot(anchors, ra, dtype=jnp.float32)       # (bn*25, ra)


def _flat_select(bn):
    r5 = (bn - 1) * 25 + 1
    return jax.nn.one_hot(jnp.arange(bn) * 25, r5, dtype=jnp.float32)  # (bn, r5)


def simple_net_forward(x, params, block_n=BLOCK_N):
    assert x.shape[1:] == (1, _IN_HW, _IN_HW), x.shape
    n = x.shape[0]
    pad = (-n) % block_n
    if pad:
        x = jnp.concatenate([x, jnp.zeros((pad,) + x.shape[1:], x.dtype)], 0)
    n_pad = n + pad
    g = n_pad // block_n
    r0, r1, r2, ra, r3, r5 = _row_counts(block_n)

    x_rows = x.reshape(g, block_n * _IN_HW * _IN_HW, 1)
    sp = _pool_select(block_n)
    s5 = _flat_select(block_n)

    ins = (x_rows,
           params["w1"], params["c1"], params["w2"], params["c2"], sp,
           params["w3"], params["c3"], params["w4"], params["c4"],
           params["w5"], params["b5"], s5,
           params["fc1_w"], params["fc1_b"], params["fc2_w"], params["fc2_b"])

    in_specs = ([pl.BlockSpec((None, block_n * 196, 1), lambda i: (i, 0, 0))]
                + [_full_spec(a) for a in ins[1:]])

    out = pl.pallas_call(
        functools.partial(_fused_kernel, bn=block_n),
        out_shape=jax.ShapeDtypeStruct((g, block_n, 10), jnp.float32),
        grid=(g,),
        in_specs=in_specs,
        out_specs=pl.BlockSpec((None, block_n, 10), lambda i: (i, 0, 0)),
        scratch_shapes=[
            pltpu.VMEM((r1, 64), jnp.float32),            # conv1 activations
            pltpu.VMEM((r2, 128), jnp.float32),           # conv2 (pre-pool)
            pltpu.VMEM((block_n * 25, 128), jnp.float32),  # pooled activations
            pltpu.VMEM((r3, 128), jnp.float32),           # conv3 / conv4
        ],
        compiler_params=pltpu.CompilerParams(
            dimension_semantics=("parallel",)),
    )(*ins)
    return out.reshape(n_pad, 10)[:n]


# ----------------------------- parameters ------------------------------------

def init_params(key):
    ks = jax.random.split(key, 16)

    def conv_w(k, co, ci, kk):
        return (jax.random.normal(k, (co, ci, kk, kk), jnp.float32)
                / jnp.sqrt(ci * kk * kk))

    def lin_w(k, o, i):
        return jax.random.normal(k, (o, i), jnp.float32) / jnp.sqrt(i)

    def bn_stats(k, c):
        k1, k2, k3, k4 = jax.random.split(k, 4)
        gamma = 1.0 + 0.1 * jax.random.normal(k1, (c,), jnp.float32)
        beta = 0.1 * jax.random.normal(k2, (c,), jnp.float32)
        mean = 0.1 * jax.random.normal(k3, (c,), jnp.float32)
        var = jax.random.uniform(k4, (c,), jnp.float32, minval=0.5, maxval=1.5)
        return gamma, beta, mean, var

    w1 = conv_w(ks[0], 64, 1, 3);    b1 = 0.05 * jax.random.normal(ks[1], (64,), jnp.float32)
    w2 = conv_w(ks[2], 128, 64, 3);  b2 = 0.05 * jax.random.normal(ks[3], (128,), jnp.float32)
    w3 = conv_w(ks[4], 128, 128, 3); b3 = 0.05 * jax.random.normal(ks[5], (128,), jnp.float32)
    w4 = conv_w(ks[6], 128, 128, 1); b4 = 0.05 * jax.random.normal(ks[7], (128,), jnp.float32)
    w5 = conv_w(ks[8], 128, 128, 3); b5 = 0.05 * jax.random.normal(ks[9], (128,), jnp.float32)
    fc1_w = lin_w(ks[10], 64, 128);  fc1_b = 0.05 * jax.random.normal(ks[11], (64,), jnp.float32)
    fc2_w = lin_w(ks[12], 10, 64);   fc2_b = 0.05 * jax.random.normal(ks[13], (10,), jnp.float32)
    bn1 = bn_stats(ks[14], 64)
    kx = jax.random.split(ks[15], 4)
    bn2, bn3, bn4, bn1d = (bn_stats(kx[0], 128), bn_stats(kx[1], 128),
                           bn_stats(kx[2], 128), bn_stats(kx[3], 64))

    def conv_taps(w):
        co, ci, kh, kw = w.shape
        return jnp.transpose(w, (2, 3, 1, 0)).reshape(kh * kw, ci, co)

    def fold_bn(bias, stats):
        gamma, beta, mean, var = stats
        s = gamma / jnp.sqrt(var + BN_EPS)
        return jnp.stack([s, bias * s + beta - mean * s], axis=0)   # (2, C)

    s1d = bn1d[0] / jnp.sqrt(bn1d[3] + BN_EPS)
    t1d = bn1d[1] - bn1d[2] * s1d

    return dict(
        # kernel-ready (folded / transposed) parameters
        w1=conv_taps(w1).reshape(9, 64), c1=fold_bn(b1, bn1),
        w2=conv_taps(w2),                c2=fold_bn(b2, bn2),
        w3=conv_taps(w3),                c3=fold_bn(b3, bn3),
        w4=w4.reshape(128, 128).T,       c4=fold_bn(b4, bn4),
        w5=conv_taps(w5),                b5=b5.reshape(1, 128),
        fc1_w=fc1_w.T, fc1_b=fc1_b.reshape(1, 64),
        fc2_w=fc2_w.T * s1d[:, None],                       # BN1d folded in
        fc2_b=(fc2_b + fc2_w @ t1d).reshape(1, 10),
        # raw parameters for the pure-JAX reference
        raw=dict(w1=w1, b1=b1, w2=w2, b2=b2, w3=w3, b3=b3, w4=w4, b4=b4,
                 w5=w5, b5_raw=b5, fc1_w=fc1_w, fc1_b=fc1_b, fc2_w=fc2_w,
                 fc2_b=fc2_b, bn1=bn1, bn2=bn2, bn3=bn3, bn4=bn4, bn1d=bn1d),
    )


# ----------------------------- pure-JAX reference ----------------------------

def reference_forward(x, params):
    p = params["raw"]
    hi = lax.Precision.HIGHEST

    def conv(y, w, b):
        y = lax.conv_general_dilated(y, w, (1, 1), "VALID",
                                     dimension_numbers=("NCHW", "OIHW", "NCHW"),
                                     precision=hi)
        return y + b[None, :, None, None]

    def bn2d(y, stats):
        g, b, m, v = stats
        return (g[None, :, None, None] * (y - m[None, :, None, None])
                / jnp.sqrt(v[None, :, None, None] + BN_EPS)
                + b[None, :, None, None])

    y = jnp.maximum(bn2d(conv(x, p["w1"], p["b1"]), p["bn1"]), 0.0)
    y = bn2d(conv(y, p["w2"], p["b2"]), p["bn2"])
    y = lax.reduce_window(y, -jnp.inf, lax.max, (1, 1, 2, 2), (1, 1, 2, 2),
                          "VALID")
    y = jnp.maximum(y, 0.0)
    y = jnp.maximum(bn2d(conv(y, p["w3"], p["b3"]), p["bn3"]), 0.0)
    y = jnp.maximum(bn2d(conv(y, p["w4"], p["b4"]), p["bn4"]), 0.0)
    y = conv(y, p["w5"], p["b5_raw"])
    y = y.reshape(y.shape[0], -1)                            # Flatten
    y = jnp.maximum(jnp.dot(y, p["fc1_w"].T, precision=hi) + p["fc1_b"], 0.0)
    g, b, m, v = p["bn1d"]
    y = g * (y - m) / jnp.sqrt(v + BN_EPS) + b               # BatchNorm1d (eval)
    return jnp.dot(y, p["fc2_w"].T, precision=hi) + p["fc2_b"]


# ----------------------------- main -------------------------------------------

if __name__ == "__main__":
    key = jax.random.PRNGKey(0)
    pkey, xkey = jax.random.split(key)
    params = init_params(pkey)

    # Simple_Net requires (N, 1, 14, 14): Linear(128, 64) after the conv stack
    # implies a 1x1x128 feature map, i.e. 14x14 single-channel input.
    x = jax.random.normal(xkey, (2, 1, 14, 14), jnp.float32)

    fwd = jax.jit(simple_net_forward)
    out = jax.block_until_ready(fwd(x, params))
    ref = jax.block_until_ready(reference_forward(x, params))

    assert out.shape == (2, 10), out.shape
    assert jnp.allclose(out, ref, atol=3e-3, rtol=3e-3), (out, ref)
    print("KERNEL_OK")
</pallas_src>

<mosaic_0001>
module attributes {stable_mosaic.version = 11 : i64} {
  func.func @_fused_kernel(%arg0: i32, %arg1: memref<1x392x1xf32, #tpu.memory_space<vmem>>, %arg2: memref<9x64xf32, #tpu.memory_space<vmem>>, %arg3: memref<2x64xf32, #tpu.memory_space<vmem>>, %arg4: memref<9x64x128xf32, #tpu.memory_space<vmem>>, %arg5: memref<2x128xf32, #tpu.memory_space<vmem>>, %arg6: memref<50x317xf32, #tpu.memory_space<vmem>>, %arg7: memref<9x128x128xf32, #tpu.memory_space<vmem>>, %arg8: memref<2x128xf32, #tpu.memory_space<vmem>>, %arg9: memref<128x128xf32, #tpu.memory_space<vmem>>, %arg10: memref<2x128xf32, #tpu.memory_space<vmem>>, %arg11: memref<9x128x128xf32, #tpu.memory_space<vmem>>, %arg12: memref<1x128xf32, #tpu.memory_space<vmem>>, %arg13: memref<2x26xf32, #tpu.memory_space<vmem>>, %arg14: memref<128x64xf32, #tpu.memory_space<vmem>>, %arg15: memref<1x64xf32, #tpu.memory_space<vmem>>, %arg16: memref<64x10xf32, #tpu.memory_space<vmem>>, %arg17: memref<1x10xf32, #tpu.memory_space<vmem>>, %arg18: memref<1x2x10xf32, #tpu.memory_space<vmem>>, %arg19: memref<362x64xf32, #tpu.memory_space<vmem>>, %arg20: memref<332x128xf32, #tpu.memory_space<vmem>>, %arg21: memref<50x128xf32, #tpu.memory_space<vmem>>, %arg22: memref<38x128xf32, #tpu.memory_space<vmem>>) attributes {dimension_semantics = [#tpu.dimension_semantics<parallel>], iteration_bounds = array<i64: 1>, scalar_prefetch = 0 : i64, scratch_operands = 4 : i64, tpu.core_type = #tpu.core_type<tc>, window_params = [{transform_indices = @transform_0, window_bounds = array<i64: 1, 392, 1>}, {pipeline_mode = #tpu.pipeline_mode<synchronous>, transform_indices = @transform_1, window_bounds = array<i64: 9, 64>}, {pipeline_mode = #tpu.pipeline_mode<synchronous>, transform_indices = @transform_2, window_bounds = array<i64: 2, 64>}, {pipeline_mode = #tpu.pipeline_mode<synchronous>, transform_indices = @transform_3, window_bounds = array<i64: 9, 64, 128>}, {pipeline_mode = #tpu.pipeline_mode<synchronous>, transform_indices = @transform_4, window_bounds = array<i64: 2, 128>}, {pipeline_mode = #tpu.pipeline_mode<synchronous>, transform_indices = @transform_5, window_bounds = array<i64: 50, 317>}, {pipeline_mode = #tpu.pipeline_mode<synchronous>, transform_indices = @transform_6, window_bounds = array<i64: 9, 128, 128>}, {pipeline_mode = #tpu.pipeline_mode<synchronous>, transform_indices = @transform_7, window_bounds = array<i64: 2, 128>}, {pipeline_mode = #tpu.pipeline_mode<synchronous>, transform_indices = @transform_8, window_bounds = array<i64: 128, 128>}, {pipeline_mode = #tpu.pipeline_mode<synchronous>, transform_indices = @transform_9, window_bounds = array<i64: 2, 128>}, {pipeline_mode = #tpu.pipeline_mode<synchronous>, transform_indices = @transform_10, window_bounds = array<i64: 9, 128, 128>}, {pipeline_mode = #tpu.pipeline_mode<synchronous>, transform_indices = @transform_11, window_bounds = array<i64: 1, 128>}, {pipeline_mode = #tpu.pipeline_mode<synchronous>, transform_indices = @transform_12, window_bounds = array<i64: 2, 26>}, {pipeline_mode = #tpu.pipeline_mode<synchronous>, transform_indices = @transform_13, window_bounds = array<i64: 128, 64>}, {pipeline_mode = #tpu.pipeline_mode<synchronous>, transform_indices = @transform_14, window_bounds = array<i64: 1, 64>}, {pipeline_mode = #tpu.pipeline_mode<synchronous>, transform_indices = @transform_15, window_bounds = array<i64: 64, 10>}, {pipeline_mode = #tpu.pipeline_mode<synchronous>, transform_indices = @transform_16, window_bounds = array<i64: 1, 10>}, {transform_indices = @transform_17, window_bounds = array<i64: 1, 2, 10>}]} {
    %cst = arith.constant 0.000000e+00 : f32
    %0 = vector.broadcast %cst : f32 to vector<362x64xf32>
    %c0 = arith.constant 0 : index
    %c0_0 = arith.constant 0 : index
    %c0_1 = arith.constant 0 : index
    %1 = vector.load %arg1[%c0, %c0_0, %c0_1] : memref<1x392x1xf32, #tpu.memory_space<vmem>>, vector<1x362x1xf32>
    %2 = vector.shape_cast %1 : vector<1x362x1xf32> to vector<362x1xf32>
    %c0_2 = arith.constant 0 : index
    %c0_3 = arith.constant 0 : index
    %3 = vector.load %arg2[%c0_2, %c0_3] : memref<9x64xf32, #tpu.memory_space<vmem>>, vector<1x64xf32>
    %4 = vector.broadcast %2 : vector<362x1xf32> to vector<362x64xf32>
    %5 = vector.broadcast %3 : vector<1x64xf32> to vector<362x64xf32>
    %6 = arith.mulf %4, %5 : vector<362x64xf32>
    %7 = arith.addf %0, %6 : vector<362x64xf32>
    %c0_4 = arith.constant 0 : index
    %c1 = arith.constant 1 : index
    %c0_5 = arith.constant 0 : index
    %8 = vector.load %arg1[%c0_4, %c1, %c0_5] : memref<1x392x1xf32, #tpu.memory_space<vmem>>, vector<1x362x1xf32>
    %9 = vector.shape_cast %8 : vector<1x362x1xf32> to vector<362x1xf32>
    %c1_6 = arith.constant 1 : index
    %c0_7 = arith.constant 0 : index
    %10 = vector.load %arg2[%c1_6, %c0_7] : memref<9x64xf32, #tpu.memory_space<vmem>>, vector<1x64xf32>
    %11 = vector.broadcast %9 : vector<362x1xf32> to vector<362x64xf32>
    %12 = vector.broadcast %10 : vector<1x64xf32> to vector<362x64xf32>
    %13 = arith.mulf %11, %12 : vector<362x64xf32>
    %14 = arith.addf %7, %13 : vector<362x64xf32>
    %c0_8 = arith.constant 0 : index
    %c2 = arith.constant 2 : index
    %c0_9 = arith.constant 0 : index
    %15 = vector.load %arg1[%c0_8, %c2, %c0_9] : memref<1x392x1xf32, #tpu.memory_space<vmem>>, vector<1x362x1xf32>
    %16 = vector.shape_cast %15 : vector<1x362x1xf32> to vector<362x1xf32>
    %c2_10 = arith.constant 2 : index
    %c0_11 = arith.constant 0 : index
    %17 = vector.load %arg2[%c2_10, %c0_11] : memref<9x64xf32, #tpu.memory_space<vmem>>, vector<1x64xf32>
    %18 = vector.broadcast %16 : vector<362x1xf32> to vector<362x64xf32>
    %19 = vector.broadcast %17 : vector<1x64xf32> to vector<362x64xf32>
    %20 = arith.mulf %18, %19 : vector<362x64xf32>
    %21 = arith.addf %14, %20 : vector<362x64xf32>
    %c0_12 = arith.constant 0 : index
    %c14 = arith.constant 14 : index
    %c0_13 = arith.constant 0 : index
    %22 = vector.load %arg1[%c0_12, %c14, %c0_13] : memref<1x392x1xf32, #tpu.memory_space<vmem>>, vector<1x362x1xf32>
    %23 = vector.shape_cast %22 : vector<1x362x1xf32> to vector<362x1xf32>
    %c3 = arith.constant 3 : index
    %c0_14 = arith.constant 0 : index
    %24 = vector.load %arg2[%c3, %c0_14] : memref<9x64xf32, #tpu.memory_space<vmem>>, vector<1x64xf32>
    %25 = vector.broadcast %23 : vector<362x1xf32> to vector<362x64xf32>
    %26 = vector.broadcast %24 : vector<1x64xf32> to vector<362x64xf32>
    %27 = arith.mulf %25, %26 : vector<362x64xf32>
    %28 = arith.addf %21, %27 : vector<362x64xf32>
    %c0_15 = arith.constant 0 : index
    %c15 = arith.constant 15 : index
    %c0_16 = arith.constant 0 : index
    %29 = vector.load %arg1[%c0_15, %c15, %c0_16] : memref<1x392x1xf32, #tpu.memory_space<vmem>>, vector<1x362x1xf32>
    %30 = vector.shape_cast %29 : vector<1x362x1xf32> to vector<362x1xf32>
    %c4 = arith.constant 4 : index
    %c0_17 = arith.constant 0 : index
    %31 = vector.load %arg2[%c4, %c0_17] : memref<9x64xf32, #tpu.memory_space<vmem>>, vector<1x64xf32>
    %32 = vector.broadcast %30 : vector<362x1xf32> to vector<362x64xf32>
    %33 = vector.broadcast %31 : vector<1x64xf32> to vector<362x64xf32>
    %34 = arith.mulf %32, %33 : vector<362x64xf32>
    %35 = arith.addf %28, %34 : vector<362x64xf32>
    %c0_18 = arith.constant 0 : index
    %c16 = arith.constant 16 : index
    %c0_19 = arith.constant 0 : index
    %36 = vector.load %arg1[%c0_18, %c16, %c0_19] : memref<1x392x1xf32, #tpu.memory_space<vmem>>, vector<1x362x1xf32>
    %37 = vector.shape_cast %36 : vector<1x362x1xf32> to vector<362x1xf32>
    %c5 = arith.constant 5 : index
    %c0_20 = arith.constant 0 : index
    %38 = vector.load %arg2[%c5, %c0_20] : memref<9x64xf32, #tpu.memory_space<vmem>>, vector<1x64xf32>
    %39 = vector.broadcast %37 : vector<362x1xf32> to vector<362x64xf32>
    %40 = vector.broadcast %38 : vector<1x64xf32> to vector<362x64xf32>
    %41 = arith.mulf %39, %40 : vector<362x64xf32>
    %42 = arith.addf %35, %41 : vector<362x64xf32>
    %c0_21 = arith.constant 0 : index
    %c28 = arith.constant 28 : index
    %c0_22 = arith.constant 0 : index
    %43 = vector.load %arg1[%c0_21, %c28, %c0_22] : memref<1x392x1xf32, #tpu.memory_space<vmem>>, vector<1x362x1xf32>
    %44 = vector.shape_cast %43 : vector<1x362x1xf32> to vector<362x1xf32>
    %c6 = arith.constant 6 : index
    %c0_23 = arith.constant 0 : index
    %45 = vector.load %arg2[%c6, %c0_23] : memref<9x64xf32, #tpu.memory_space<vmem>>, vector<1x64xf32>
    %46 = vector.broadcast %44 : vector<362x1xf32> to vector<362x64xf32>
    %47 = vector.broadcast %45 : vector<1x64xf32> to vector<362x64xf32>
    %48 = arith.mulf %46, %47 : vector<362x64xf32>
    %49 = arith.addf %42, %48 : vector<362x64xf32>
    %c0_24 = arith.constant 0 : index
    %c29 = arith.constant 29 : index
    %c0_25 = arith.constant 0 : index
    %50 = vector.load %arg1[%c0_24, %c29, %c0_25] : memref<1x392x1xf32, #tpu.memory_space<vmem>>, vector<1x362x1xf32>
    %51 = vector.shape_cast %50 : vector<1x362x1xf32> to vector<362x1xf32>
    %c7 = arith.constant 7 : index
    %c0_26 = arith.constant 0 : index
    %52 = vector.load %arg2[%c7, %c0_26] : memref<9x64xf32, #tpu.memory_space<vmem>>, vector<1x64xf32>
    %53 = vector.broadcast %51 : vector<362x1xf32> to vector<362x64xf32>
    %54 = vector.broadcast %52 : vector<1x64xf32> to vector<362x64xf32>
    %55 = arith.mulf %53, %54 : vector<362x64xf32>
    %56 = arith.addf %49, %55 : vector<362x64xf32>
    %c0_27 = arith.constant 0 : index
    %c30 = arith.constant 30 : index
    %c0_28 = arith.constant 0 : index
    %57 = vector.load %arg1[%c0_27, %c30, %c0_28] : memref<1x392x1xf32, #tpu.memory_space<vmem>>, vector<1x362x1xf32>
    %58 = vector.shape_cast %57 : vector<1x362x1xf32> to vector<362x1xf32>
    %c8 = arith.constant 8 : index
    %c0_29 = arith.constant 0 : index
    %59 = vector.load %arg2[%c8, %c0_29] : memref<9x64xf32, #tpu.memory_space<vmem>>, vector<1x64xf32>
    %60 = vector.broadcast %58 : vector<362x1xf32> to vector<362x64xf32>
    %61 = vector.broadcast %59 : vector<1x64xf32> to vector<362x64xf32>
    %62 = arith.mulf %60, %61 : vector<362x64xf32>
    %63 = arith.addf %56, %62 : vector<362x64xf32>
    %c0_30 = arith.constant 0 : index
    %c0_31 = arith.constant 0 : index
    %64 = vector.load %arg3[%c0_30, %c0_31] : memref<2x64xf32, #tpu.memory_space<vmem>>, vector<1x64xf32>
    %65 = vector.broadcast %64 : vector<1x64xf32> to vector<362x64xf32>
    %66 = arith.mulf %63, %65 : vector<362x64xf32>
    %c1_32 = arith.constant 1 : index
    %c0_33 = arith.constant 0 : index
    %67 = vector.load %arg3[%c1_32, %c0_33] : memref<2x64xf32, #tpu.memory_space<vmem>>, vector<1x64xf32>
    %68 = vector.broadcast %67 : vector<1x64xf32> to vector<362x64xf32>
    %69 = arith.addf %66, %68 : vector<362x64xf32>
    %cst_34 = arith.constant 0.000000e+00 : f32
    %70 = vector.broadcast %cst_34 : f32 to vector<362x64xf32>
    %71 = arith.maximumf %69, %70 : vector<362x64xf32>
    %c0_35 = arith.constant 0 : index
    %c0_36 = arith.constant 0 : index
    %72 = vector.load %arg19[%c0_35, %c0_36] : memref<362x64xf32, #tpu.memory_space<vmem>>, vector<362x64xf32>
    tpu.vector_store %arg19[%c0_35, %c0_36], %71 {strides = array<i32>} : memref<362x64xf32, #tpu.memory_space<vmem>>, vector<362x64xf32>,
    %cst_37 = arith.constant 0.000000e+00 : f32
    %73 = vector.broadcast %cst_37 : f32 to vector<332x128xf32>
    %c0_38 = arith.constant 0 : index
    %c0_39 = arith.constant 0 : index
    %74 = vector.load %arg19[%c0_38, %c0_39] : memref<362x64xf32, #tpu.memory_space<vmem>>, vector<332x64xf32>
    %c0_40 = arith.constant 0 : index
    %c0_41 = arith.constant 0 : index
    %c0_42 = arith.constant 0 : index
    %75 = vector.load %arg4[%c0_40, %c0_41, %c0_42] : memref<9x64x128xf32, #tpu.memory_space<vmem>>, vector<1x64x128xf32>
    %76 = vector.shape_cast %75 : vector<1x64x128xf32> to vector<64x128xf32>
    %cst_43 = arith.constant dense<0.000000e+00> : vector<332x128xf32>
    %77 = tpu.matmul %74, %76, %cst_43 {dimension_numbers = #tpu.dot_dimension_numbers<[1], [0], [0], [1], [0, 0, 1, 1], [], []>} : vector<332x64xf32>, vector<64x128xf32>, vector<332x128xf32> -> vector<332x128xf32>
    %78 = arith.addf %73, %77 : vector<332x128xf32>
    %c1_44 = arith.constant 1 : index
    %c0_45 = arith.constant 0 : index
    %79 = vector.load %arg19[%c1_44, %c0_45] : memref<362x64xf32, #tpu.memory_space<vmem>>, vector<332x64xf32>
    %c1_46 = arith.constant 1 : index
    %c0_47 = arith.constant 0 : index
    %c0_48 = arith.constant 0 : index
    %80 = vector.load %arg4[%c1_46, %c0_47, %c0_48] : memref<9x64x128xf32, #tpu.memory_space<vmem>>, vector<1x64x128xf32>
    %81 = vector.shape_cast %80 : vector<1x64x128xf32> to vector<64x128xf32>
    %cst_49 = arith.constant dense<0.000000e+00> : vector<332x128xf32>
    %82 = tpu.matmul %79, %81, %cst_49 {dimension_numbers = #tpu.dot_dimension_numbers<[1], [0], [0], [1], [0, 0, 1, 1], [], []>} : vector<332x64xf32>, vector<64x128xf32>, vector<332x128xf32> -> vector<332x128xf32>
    %83 = arith.addf %78, %82 : vector<332x128xf32>
    %c2_50 = arith.constant 2 : index
    %c0_51 = arith.constant 0 : index
    %84 = vector.load %arg19[%c2_50, %c0_51] : memref<362x64xf32, #tpu.memory_space<vmem>>, vector<332x64xf32>
    %c2_52 = arith.constant 2 : index
    %c0_53 = arith.constant 0 : index
    %c0_54 = arith.constant 0 : index
    %85 = vector.load %arg4[%c2_52, %c0_53, %c0_54] : memref<9x64x128xf32, #tpu.memory_space<vmem>>, vector<1x64x128xf32>
    %86 = vector.shape_cast %85 : vector<1x64x128xf32> to vector<64x128xf32>
    %cst_55 = arith.constant dense<0.000000e+00> : vector<332x128xf32>
    %87 = tpu.matmul %84, %86, %cst_55 {dimension_numbers = #tpu.dot_dimension_numbers<[1], [0], [0], [1], [0, 0, 1, 1], [], []>} : vector<332x64xf32>, vector<64x128xf32>, vector<332x128xf32> -> vector<332x128xf32>
    %88 = arith.addf %83, %87 : vector<332x128xf32>
    %c14_56 = arith.constant 14 : index
    %c0_57 = arith.constant 0 : index
    %89 = vector.load %arg19[%c14_56, %c0_57] : memref<362x64xf32, #tpu.memory_space<vmem>>, vector<332x64xf32>
    %c3_58 = arith.constant 3 : index
    %c0_59 = arith.constant 0 : index
    %c0_60 = arith.constant 0 : index
    %90 = vector.load %arg4[%c3_58, %c0_59, %c0_60] : memref<9x64x128xf32, #tpu.memory_space<vmem>>, vector<1x64x128xf32>
    %91 = vector.shape_cast %90 : vector<1x64x128xf32> to vector<64x128xf32>
    %cst_61 = arith.constant dense<0.000000e+00> : vector<332x128xf32>
    %92 = tpu.matmul %89, %91, %cst_61 {dimension_numbers = #tpu.dot_dimension_numbers<[1], [0], [0], [1], [0, 0, 1, 1], [], []>} : vector<332x64xf32>, vector<64x128xf32>, vector<332x128xf32> -> vector<332x128xf32>
    %93 = arith.addf %88, %92 : vector<332x128xf32>
    %c15_62 = arith.constant 15 : index
    %c0_63 = arith.constant 0 : index
    %94 = vector.load %arg19[%c15_62, %c0_63] : memref<362x64xf32, #tpu.memory_space<vmem>>, vector<332x64xf32>
    %c4_64 = arith.constant 4 : index
    %c0_65 = arith.constant 0 : index
    %c0_66 = arith.constant 0 : index
    %95 = vector.load %arg4[%c4_64, %c0_65, %c0_66] : memref<9x64x128xf32, #tpu.memory_space<vmem>>, vector<1x64x128xf32>
    %96 = vector.shape_cast %95 : vector<1x64x128xf32> to vector<64x128xf32>
    %cst_67 = arith.constant dense<0.000000e+00> : vector<332x128xf32>
    %97 = tpu.matmul %94, %96, %cst_67 {dimension_numbers = #tpu.dot_dimension_numbers<[1], [0], [0], [1], [0, 0, 1, 1], [], []>} : vector<332x64xf32>, vector<64x128xf32>, vector<332x128xf32> -> vector<332x128xf32>
    %98 = arith.addf %93, %97 : vector<332x128xf32>
    %c16_68 = arith.constant 16 : index
    %c0_69 = arith.constant 0 : index
    %99 = vector.load %arg19[%c16_68, %c0_69] : memref<362x64xf32, #tpu.memory_space<vmem>>, vector<332x64xf32>
    %c5_70 = arith.constant 5 : index
    %c0_71 = arith.constant 0 : index
    %c0_72 = arith.constant 0 : index
    %100 = vector.load %arg4[%c5_70, %c0_71, %c0_72] : memref<9x64x128xf32, #tpu.memory_space<vmem>>, vector<1x64x128xf32>
    %101 = vector.shape_cast %100 : vector<1x64x128xf32> to vector<64x128xf32>
    %cst_73 = arith.constant dense<0.000000e+00> : vector<332x128xf32>
    %102 = tpu.matmul %99, %101, %cst_73 {dimension_numbers = #tpu.dot_dimension_numbers<[1], [0], [0], [1], [0, 0, 1, 1], [], []>} : vector<332x64xf32>, vector<64x128xf32>, vector<332x128xf32> -> vector<332x128xf32>
    %103 = arith.addf %98, %102 : vector<332x128xf32>
    %c28_74 = arith.constant 28 : index
    %c0_75 = arith.constant 0 : index
    %104 = vector.load %arg19[%c28_74, %c0_75] : memref<362x64xf32, #tpu.memory_space<vmem>>, vector<332x64xf32>
    %c6_76 = arith.constant 6 : index
    %c0_77 = arith.constant 0 : index
    %c0_78 = arith.constant 0 : index
    %105 = vector.load %arg4[%c6_76, %c0_77, %c0_78] : memref<9x64x128xf32, #tpu.memory_space<vmem>>, vector<1x64x128xf32>
    %106 = vector.shape_cast %105 : vector<1x64x128xf32> to vector<64x128xf32>
    %cst_79 = arith.constant dense<0.000000e+00> : vector<332x128xf32>
    %107 = tpu.matmul %104, %106, %cst_79 {dimension_numbers = #tpu.dot_dimension_numbers<[1], [0], [0], [1], [0, 0, 1, 1], [], []>} : vector<332x64xf32>, vector<64x128xf32>, vector<332x128xf32> -> vector<332x128xf32>
    %108 = arith.addf %103, %107 : vector<332x128xf32>
    %c29_80 = arith.constant 29 : index
    %c0_81 = arith.constant 0 : index
    %109 = vector.load %arg19[%c29_80, %c0_81] : memref<362x64xf32, #tpu.memory_space<vmem>>, vector<332x64xf32>
    %c7_82 = arith.constant 7 : index
    %c0_83 = arith.constant 0 : index
    %c0_84 = arith.constant 0 : index
    %110 = vector.load %arg4[%c7_82, %c0_83, %c0_84] : memref<9x64x128xf32, #tpu.memory_space<vmem>>, vector<1x64x128xf32>
    %111 = vector.shape_cast %110 : vector<1x64x128xf32> to vector<64x128xf32>
    %cst_85 = arith.constant dense<0.000000e+00> : vector<332x128xf32>
    %112 = tpu.matmul %109, %111, %cst_85 {dimension_numbers = #tpu.dot_dimension_numbers<[1], [0], [0], [1], [0, 0, 1, 1], [], []>} : vector<332x64xf32>, vector<64x128xf32>, vector<332x128xf32> -> vector<332x128xf32>
    %113 = arith.addf %108, %112 : vector<332x128xf32>
    %c30_86 = arith.constant 30 : index
    %c0_87 = arith.constant 0 : index
    %114 = vector.load %arg19[%c30_86, %c0_87] : memref<362x64xf32, #tpu.memory_space<vmem>>, vector<332x64xf32>
    %c8_88 = arith.constant 8 : index
    %c0_89 = arith.constant 0 : index
    %c0_90 = arith.constant 0 : index
    %115 = vector.load %arg4[%c8_88, %c0_89, %c0_90] : memref<9x64x128xf32, #tpu.memory_space<vmem>>, vector<1x64x128xf32>
    %116 = vector.shape_cast %115 : vector<1x64x128xf32> to vector<64x128xf32>
    %cst_91 = arith.constant dense<0.000000e+00> : vector<332x128xf32>
    %117 = tpu.matmul %114, %116, %cst_91 {dimension_numbers = #tpu.dot_dimension_numbers<[1], [0], [0], [1], [0, 0, 1, 1], [], []>} : vector<332x64xf32>, vector<64x128xf32>, vector<332x128xf32> -> vector<332x128xf32>
    %118 = arith.addf %113, %117 : vector<332x128xf32>
    %c0_92 = arith.constant 0 : index
    %c0_93 = arith.constant 0 : index
    %119 = vector.load %arg5[%c0_92, %c0_93] : memref<2x128xf32, #tpu.memory_space<vmem>>, vector<1x128xf32>
    %120 = vector.broadcast %119 : vector<1x128xf32> to vector<332x128xf32>
    %121 = arith.mulf %118, %120 : vector<332x128xf32>
    %c1_94 = arith.constant 1 : index
    %c0_95 = arith.constant 0 : index
    %122 = vector.load %arg5[%c1_94, %c0_95] : memref<2x128xf32, #tpu.memory_space<vmem>>, vector<1x128xf32>
    %123 = vector.broadcast %122 : vector<1x128xf32> to vector<332x128xf32>
    %124 = arith.addf %121, %123 : vector<332x128xf32>
    %c0_96 = arith.constant 0 : index
    %c0_97 = arith.constant 0 : index
    %125 = vector.load %arg20[%c0_96, %c0_97] : memref<332x128xf32, #tpu.memory_space<vmem>>, vector<332x128xf32>
    tpu.vector_store %arg20[%c0_96, %c0_97], %124 {strides = array<i32>} : memref<332x128xf32, #tpu.memory_space<vmem>>, vector<332x128xf32>,
    %c0_98 = arith.constant 0 : index
    %c0_99 = arith.constant 0 : index
    %126 = vector.load %arg20[%c0_98, %c0_99] : memref<332x128xf32, #tpu.memory_space<vmem>>, vector<317x128xf32>
    %c1_100 = arith.constant 1 : index
    %c0_101 = arith.constant 0 : index
    %127 = vector.load %arg20[%c1_100, %c0_101] : memref<332x128xf32, #tpu.memory_space<vmem>>, vector<317x128xf32>
    %128 = arith.maximumf %126, %127 : vector<317x128xf32>
    %c14_102 = arith.constant 14 : index
    %c0_103 = arith.constant 0 : index
    %129 = vector.load %arg20[%c14_102, %c0_103] : memref<332x128xf32, #tpu.memory_space<vmem>>, vector<317x128xf32>
    %c15_104 = arith.constant 15 : index
    %c0_105 = arith.constant 0 : index
    %130 = vector.load %arg20[%c15_104, %c0_105] : memref<332x128xf32, #tpu.memory_space<vmem>>, vector<317x128xf32>
    %131 = arith.maximumf %129, %130 : vector<317x128xf32>
    %132 = arith.maximumf %128, %131 : vector<317x128xf32>
    %c0_106 = arith.constant 0 : index
    %c0_107 = arith.constant 0 : index
    %133 = vector.load %arg6[%c0_106, %c0_107] : memref<50x317xf32, #tpu.memory_space<vmem>>, vector<50x317xf32>
    %cst_108 = arith.constant dense<0.000000e+00> : vector<50x128xf32>
    %134 = tpu.matmul %133, %132, %cst_108 {dimension_numbers = #tpu.dot_dimension_numbers<[1], [0], [0], [1], [0, 0, 1, 1], [], []>} : vector<50x317xf32>, vector<317x128xf32>, vector<50x128xf32> -> vector<50x128xf32>
    %cst_109 = arith.constant 0.000000e+00 : f32
    %135 = vector.broadcast %cst_109 : f32 to vector<50x128xf32>
    %136 = arith.maximumf %134, %135 : vector<50x128xf32>
    %c0_110 = arith.constant 0 : index
    %c0_111 = arith.constant 0 : index
    %137 = vector.load %arg21[%c0_110, %c0_111] : memref<50x128xf32, #tpu.memory_space<vmem>>, vector<50x128xf32>
    tpu.vector_store %arg21[%c0_110, %c0_111], %136 {strides = array<i32>} : memref<50x128xf32, #tpu.memory_space<vmem>>, vector<50x128xf32>,
    %cst_112 = arith.constant 0.000000e+00 : f32
    %138 = vector.broadcast %cst_112 : f32 to vector<38x128xf32>
    %c0_113 = arith.constant 0 : index
    %c0_114 = arith.constant 0 : index
    %139 = vector.load %arg21[%c0_113, %c0_114] : memref<50x128xf32, #tpu.memory_space<vmem>>, vector<38x128xf32>
    %c0_115 = arith.constant 0 : index
    %c0_116 = arith.constant 0 : index
    %c0_117 = arith.constant 0 : index
    %140 = vector.load %arg7[%c0_115, %c0_116, %c0_117] : memref<9x128x128xf32, #tpu.memory_space<vmem>>, vector<1x128x128xf32>
    %141 = vector.shape_cast %140 : vector<1x128x128xf32> to vector<128x128xf32>
    %cst_118 = arith.constant dense<0.000000e+00> : vector<38x128xf32>
    %142 = tpu.matmul %139, %141, %cst_118 {dimension_numbers = #tpu.dot_dimension_numbers<[1], [0], [0], [1], [0, 0, 1, 1], [], []>} : vector<38x128xf32>, vector<128x128xf32>, vector<38x128xf32> -> vector<38x128xf32>
    %143 = arith.addf %138, %142 : vector<38x128xf32>
    %c1_119 = arith.constant 1 : index
    %c0_120 = arith.constant 0 : index
    %144 = vector.load %arg21[%c1_119, %c0_120] : memref<50x128xf32, #tpu.memory_space<vmem>>, vector<38x128xf32>
    %c1_121 = arith.constant 1 : index
    %c0_122 = arith.constant 0 : index
    %c0_123 = arith.constant 0 : index
    %145 = vector.load %arg7[%c1_121, %c0_122, %c0_123] : memref<9x128x128xf32, #tpu.memory_space<vmem>>, vector<1x128x128xf32>
    %146 = vector.shape_cast %145 : vector<1x128x128xf32> to vector<128x128xf32>
    %cst_124 = arith.constant dense<0.000000e+00> : vector<38x128xf32>
    %147 = tpu.matmul %144, %146, %cst_124 {dimension_numbers = #tpu.dot_dimension_numbers<[1], [0], [0], [1], [0, 0, 1, 1], [], []>} : vector<38x128xf32>, vector<128x128xf32>, vector<38x128xf32> -> vector<38x128xf32>
    %148 = arith.addf %143, %147 : vector<38x128xf32>
    %c2_125 = arith.constant 2 : index
    %c0_126 = arith.constant 0 : index
    %149 = vector.load %arg21[%c2_125, %c0_126] : memref<50x128xf32, #tpu.memory_space<vmem>>, vector<38x128xf32>
    %c2_127 = arith.constant 2 : index
    %c0_128 = arith.constant 0 : index
    %c0_129 = arith.constant 0 : index
    %150 = vector.load %arg7[%c2_127, %c0_128, %c0_129] : memref<9x128x128xf32, #tpu.memory_space<vmem>>, vector<1x128x128xf32>
    %151 = vector.shape_cast %150 : vector<1x128x128xf32> to vector<128x128xf32>
    %cst_130 = arith.constant dense<0.000000e+00> : vector<38x128xf32>
    %152 = tpu.matmul %149, %151, %cst_130 {dimension_numbers = #tpu.dot_dimension_numbers<[1], [0], [0], [1], [0, 0, 1, 1], [], []>} : vector<38x128xf32>, vector<128x128xf32>, vector<38x128xf32> -> vector<38x128xf32>
    %153 = arith.addf %148, %152 : vector<38x128xf32>
    %c5_131 = arith.constant 5 : index
    %c0_132 = arith.constant 0 : index
    %154 = vector.load %arg21[%c5_131, %c0_132] : memref<50x128xf32, #tpu.memory_space<vmem>>, vector<38x128xf32>
    %c3_133 = arith.constant 3 : index
    %c0_134 = arith.constant 0 : index
    %c0_135 = arith.constant 0 : index
    %155 = vector.load %arg7[%c3_133, %c0_134, %c0_135] : memref<9x128x128xf32, #tpu.memory_space<vmem>>, vector<1x128x128xf32>
    %156 = vector.shape_cast %155 : vector<1x128x128xf32> to vector<128x128xf32>
    %cst_136 = arith.constant dense<0.000000e+00> : vector<38x128xf32>
    %157 = tpu.matmul %154, %156, %cst_136 {dimension_numbers = #tpu.dot_dimension_numbers<[1], [0], [0], [1], [0, 0, 1, 1], [], []>} : vector<38x128xf32>, vector<128x128xf32>, vector<38x128xf32> -> vector<38x128xf32>
    %158 = arith.addf %153, %157 : vector<38x128xf32>
    %c6_137 = arith.constant 6 : index
    %c0_138 = arith.constant 0 : index
    %159 = vector.load %arg21[%c6_137, %c0_138] : memref<50x128xf32, #tpu.memory_space<vmem>>, vector<38x128xf32>
    %c4_139 = arith.constant 4 : index
    %c0_140 = arith.constant 0 : index
    %c0_141 = arith.constant 0 : index
    %160 = vector.load %arg7[%c4_139, %c0_140, %c0_141] : memref<9x128x128xf32, #tpu.memory_space<vmem>>, vector<1x128x128xf32>
    %161 = vector.shape_cast %160 : vector<1x128x128xf32> to vector<128x128xf32>
    %cst_142 = arith.constant dense<0.000000e+00> : vector<38x128xf32>
    %162 = tpu.matmul %159, %161, %cst_142 {dimension_numbers = #tpu.dot_dimension_numbers<[1], [0], [0], [1], [0, 0, 1, 1], [], []>} : vector<38x128xf32>, vector<128x128xf32>, vector<38x128xf32> -> vector<38x128xf32>
    %163 = arith.addf %158, %162 : vector<38x128xf32>
    %c7_143 = arith.constant 7 : index
    %c0_144 = arith.constant 0 : index
    %164 = vector.load %arg21[%c7_143, %c0_144] : memref<50x128xf32, #tpu.memory_space<vmem>>, vector<38x128xf32>
    %c5_145 = arith.constant 5 : index
    %c0_146 = arith.constant 0 : index
    %c0_147 = arith.constant 0 : index
    %165 = vector.load %arg7[%c5_145, %c0_146, %c0_147] : memref<9x128x128xf32, #tpu.memory_space<vmem>>, vector<1x128x128xf32>
    %166 = vector.shape_cast %165 : vector<1x128x128xf32> to vector<128x128xf32>
    %cst_148 = arith.constant dense<0.000000e+00> : vector<38x128xf32>
    %167 = tpu.matmul %164, %166, %cst_148 {dimension_numbers = #tpu.dot_dimension_numbers<[1], [0], [0], [1], [0, 0, 1, 1], [], []>} : vector<38x128xf32>, vector<128x128xf32>, vector<38x128xf32> -> vector<38x128xf32>
    %168 = arith.addf %163, %167 : vector<38x128xf32>
    %c10 = arith.constant 10 : index
    %c0_149 = arith.constant 0 : index
    %169 = vector.load %arg21[%c10, %c0_149] : memref<50x128xf32, #tpu.memory_space<vmem>>, vector<38x128xf32>
    %c6_150 = arith.constant 6 : index
    %c0_151 = arith.constant 0 : index
    %c0_152 = arith.constant 0 : index
    %170 = vector.load %arg7[%c6_150, %c0_151, %c0_152] : memref<9x128x128xf32, #tpu.memory_space<vmem>>, vector<1x128x128xf32>
    %171 = vector.shape_cast %170 : vector<1x128x128xf32> to vector<128x128xf32>
    %cst_153 = arith.constant dense<0.000000e+00> : vector<38x128xf32>
    %172 = tpu.matmul %169, %171, %cst_153 {dimension_numbers = #tpu.dot_dimension_numbers<[1], [0], [0], [1], [0, 0, 1, 1], [], []>} : vector<38x128xf32>, vector<128x128xf32>, vector<38x128xf32> -> vector<38x128xf32>
    %173 = arith.addf %168, %172 : vector<38x128xf32>
    %c11 = arith.constant 11 : index
    %c0_154 = arith.constant 0 : index
    %174 = vector.load %arg21[%c11, %c0_154] : memref<50x128xf32, #tpu.memory_space<vmem>>, vector<38x128xf32>
    %c7_155 = arith.constant 7 : index
    %c0_156 = arith.constant 0 : index
    %c0_157 = arith.constant 0 : index
    %175 = vector.load %arg7[%c7_155, %c0_156, %c0_157] : memref<9x128x128xf32, #tpu.memory_space<vmem>>, vector<1x128x128xf32>
    %176 = vector.shape_cast %175 : vector<1x128x128xf32> to vector<128x128xf32>
    %cst_158 = arith.constant dense<0.000000e+00> : vector<38x128xf32>
    %177 = tpu.matmul %174, %176, %cst_158 {dimension_numbers = #tpu.dot_dimension_numbers<[1], [0], [0], [1], [0, 0, 1, 1], [], []>} : vector<38x128xf32>, vector<128x128xf32>, vector<38x128xf32> -> vector<38x128xf32>
    %178 = arith.addf %173, %177 : vector<38x128xf32>
    %c12 = arith.constant 12 : index
    %c0_159 = arith.constant 0 : index
    %179 = vector.load %arg21[%c12, %c0_159] : memref<50x128xf32, #tpu.memory_space<vmem>>, vector<38x128xf32>
    %c8_160 = arith.constant 8 : index
    %c0_161 = arith.constant 0 : index
    %c0_162 = arith.constant 0 : index
    %180 = vector.load %arg7[%c8_160, %c0_161, %c0_162] : memref<9x128x128xf32, #tpu.memory_space<vmem>>, vector<1x128x128xf32>
    %181 = vector.shape_cast %180 : vector<1x128x128xf32> to vector<128x128xf32>
    %cst_163 = arith.constant dense<0.000000e+00> : vector<38x128xf32>
    %182 = tpu.matmul %179, %181, %cst_163 {dimension_numbers = #tpu.dot_dimension_numbers<[1], [0], [0], [1], [0, 0, 1, 1], [], []>} : vector<38x128xf32>, vector<128x128xf32>, vector<38x128xf32> -> vector<38x128xf32>
    %183 = arith.addf %178, %182 : vector<38x128xf32>
    %c0_164 = arith.constant 0 : index
    %c0_165 = arith.constant 0 : index
    %184 = vector.load %arg8[%c0_164, %c0_165] : memref<2x128xf32, #tpu.memory_space<vmem>>, vector<1x128xf32>
    %185 = vector.broadcast %184 : vector<1x128xf32> to vector<38x128xf32>
    %186 = arith.mulf %183, %185 : vector<38x128xf32>
    %c1_166 = arith.constant 1 : index
    %c0_167 = arith.constant 0 : index
    %187 = vector.load %arg8[%c1_166, %c0_167] : memref<2x128xf32, #tpu.memory_space<vmem>>, vector<1x128xf32>
    %188 = vector.broadcast %187 : vector<1x128xf32> to vector<38x128xf32>
    %189 = arith.addf %186, %188 : vector<38x128xf32>
    %cst_168 = arith.constant 0.000000e+00 : f32
    %190 = vector.broadcast %cst_168 : f32 to vector<38x128xf32>
    %191 = arith.maximumf %189, %190 : vector<38x128xf32>
    %c0_169 = arith.constant 0 : index
    %c0_170 = arith.constant 0 : index
    %192 = vector.load %arg22[%c0_169, %c0_170] : memref<38x128xf32, #tpu.memory_space<vmem>>, vector<38x128xf32>
    tpu.vector_store %arg22[%c0_169, %c0_170], %191 {strides = array<i32>} : memref<38x128xf32, #tpu.memory_space<vmem>>, vector<38x128xf32>,
    %c0_171 = arith.constant 0 : index
    %c0_172 = arith.constant 0 : index
    %193 = vector.load %arg22[%c0_171, %c0_172] : memref<38x128xf32, #tpu.memory_space<vmem>>, vector<38x128xf32>
    %c0_173 = arith.constant 0 : index
    %c0_174 = arith.constant 0 : index
    %194 = vector.load %arg9[%c0_173, %c0_174] : memref<128x128xf32, #tpu.memory_space<vmem>>, vector<128x128xf32>
    %cst_175 = arith.constant dense<0.000000e+00> : vector<38x128xf32>
    %195 = tpu.matmul %193, %194, %cst_175 {dimension_numbers = #tpu.dot_dimension_numbers<[1], [0], [0], [1], [0, 0, 1, 1], [], []>} : vector<38x128xf32>, vector<128x128xf32>, vector<38x128xf32> -> vector<38x128xf32>
    %c0_176 = arith.constant 0 : index
    %c0_177 = arith.constant 0 : index
    %196 = vector.load %arg10[%c0_176, %c0_177] : memref<2x128xf32, #tpu.memory_space<vmem>>, vector<1x128xf32>
    %197 = vector.broadcast %196 : vector<1x128xf32> to vector<38x128xf32>
    %198 = arith.mulf %195, %197 : vector<38x128xf32>
    %c1_178 = arith.constant 1 : index
    %c0_179 = arith.constant 0 : index
    %199 = vector.load %arg10[%c1_178, %c0_179] : memref<2x128xf32, #tpu.memory_space<vmem>>, vector<1x128xf32>
    %200 = vector.broadcast %199 : vector<1x128xf32> to vector<38x128xf32>
    %201 = arith.addf %198, %200 : vector<38x128xf32>
    %cst_180 = arith.constant 0.000000e+00 : f32
    %202 = vector.broadcast %cst_180 : f32 to vector<38x128xf32>
    %203 = arith.maximumf %201, %202 : vector<38x128xf32>
    %c0_181 = arith.constant 0 : index
    %c0_182 = arith.constant 0 : index
    %204 = vector.load %arg22[%c0_181, %c0_182] : memref<38x128xf32, #tpu.memory_space<vmem>>, vector<38x128xf32>
    tpu.vector_store %arg22[%c0_181, %c0_182], %203 {strides = array<i32>} : memref<38x128xf32, #tpu.memory_space<vmem>>, vector<38x128xf32>,
    %cst_183 = arith.constant 0.000000e+00 : f32
    %205 = vector.broadcast %cst_183 : f32 to vector<26x128xf32>
    %c0_184 = arith.constant 0 : index
    %c0_185 = arith.constant 0 : index
    %206 = vector.load %arg22[%c0_184, %c0_185] : memref<38x128xf32, #tpu.memory_space<vmem>>, vector<26x128xf32>
    %c0_186 = arith.constant 0 : index
    %c0_187 = arith.constant 0 : index
    %c0_188 = arith.constant 0 : index
    %207 = vector.load %arg11[%c0_186, %c0_187, %c0_188] : memref<9x128x128xf32, #tpu.memory_space<vmem>>, vector<1x128x128xf32>
    %208 = vector.shape_cast %207 : vector<1x128x128xf32> to vector<128x128xf32>
    %cst_189 = arith.constant dense<0.000000e+00> : vector<26x128xf32>
    %209 = tpu.matmul %206, %208, %cst_189 {dimension_numbers = #tpu.dot_dimension_numbers<[1], [0], [0], [1], [0, 0, 1, 1], [], []>} : vector<26x128xf32>, vector<128x128xf32>, vector<26x128xf32> -> vector<26x128xf32>
    %210 = arith.addf %205, %209 : vector<26x128xf32>
    %c1_190 = arith.constant 1 : index
    %c0_191 = arith.constant 0 : index
    %211 = vector.load %arg22[%c1_190, %c0_191] : memref<38x128xf32, #tpu.memory_space<vmem>>, vector<26x128xf32>
    %c1_192 = arith.constant 1 : index
    %c0_193 = arith.constant 0 : index
    %c0_194 = arith.constant 0 : index
    %212 = vector.load %arg11[%c1_192, %c0_193, %c0_194] : memref<9x128x128xf32, #tpu.memory_space<vmem>>, vector<1x128x128xf32>
    %213 = vector.shape_cast %212 : vector<1x128x128xf32> to vector<128x128xf32>
    %cst_195 = arith.constant dense<0.000000e+00> : vector<26x128xf32>
    %214 = tpu.matmul %211, %213, %cst_195 {dimension_numbers = #tpu.dot_dimension_numbers<[1], [0], [0], [1], [0, 0, 1, 1], [], []>} : vector<26x128xf32>, vector<128x128xf32>, vector<26x128xf32> -> vector<26x128xf32>
    %215 = arith.addf %210, %214 : vector<26x128xf32>
    %c2_196 = arith.constant 2 : index
    %c0_197 = arith.constant 0 : index
    %216 = vector.load %arg22[%c2_196, %c0_197] : memref<38x128xf32, #tpu.memory_space<vmem>>, vector<26x128xf32>
    %c2_198 = arith.constant 2 : index
    %c0_199 = arith.constant 0 : index
    %c0_200 = arith.constant 0 : index
    %217 = vector.load %arg11[%c2_198, %c0_199, %c0_200] : memref<9x128x128xf32, #tpu.memory_space<vmem>>, vector<1x128x128xf32>
    %218 = vector.shape_cast %217 : vector<1x128x128xf32> to vector<128x128xf32>
    %cst_201 = arith.constant dense<0.000000e+00> : vector<26x128xf32>
    %219 = tpu.matmul %216, %218, %cst_201 {dimension_numbers = #tpu.dot_dimension_numbers<[1], [0], [0], [1], [0, 0, 1, 1], [], []>} : vector<26x128xf32>, vector<128x128xf32>, vector<26x128xf32> -> vector<26x128xf32>
    %220 = arith.addf %215, %219 : vector<26x128xf32>
    %c5_202 = arith.constant 5 : index
    %c0_203 = arith.constant 0 : index
    %221 = vector.load %arg22[%c5_202, %c0_203] : memref<38x128xf32, #tpu.memory_space<vmem>>, vector<26x128xf32>
    %c3_204 = arith.constant 3 : index
    %c0_205 = arith.constant 0 : index
    %c0_206 = arith.constant 0 : index
    %222 = vector.load %arg11[%c3_204, %c0_205, %c0_206] : memref<9x128x128xf32, #tpu.memory_space<vmem>>, vector<1x128x128xf32>
    %223 = vector.shape_cast %222 : vector<1x128x128xf32> to vector<128x128xf32>
    %cst_207 = arith.constant dense<0.000000e+00> : vector<26x128xf32>
    %224 = tpu.matmul %221, %223, %cst_207 {dimension_numbers = #tpu.dot_dimension_numbers<[1], [0], [0], [1], [0, 0, 1, 1], [], []>} : vector<26x128xf32>, vector<128x128xf32>, vector<26x128xf32> -> vector<26x128xf32>
    %225 = arith.addf %220, %224 : vector<26x128xf32>
    %c6_208 = arith.constant 6 : index
    %c0_209 = arith.constant 0 : index
    %226 = vector.load %arg22[%c6_208, %c0_209] : memref<38x128xf32, #tpu.memory_space<vmem>>, vector<26x128xf32>
    %c4_210 = arith.constant 4 : index
    %c0_211 = arith.constant 0 : index
    %c0_212 = arith.constant 0 : index
    %227 = vector.load %arg11[%c4_210, %c0_211, %c0_212] : memref<9x128x128xf32, #tpu.memory_space<vmem>>, vector<1x128x128xf32>
    %228 = vector.shape_cast %227 : vector<1x128x128xf32> to vector<128x128xf32>
    %cst_213 = arith.constant dense<0.000000e+00> : vector<26x128xf32>
    %229 = tpu.matmul %226, %228, %cst_213 {dimension_numbers = #tpu.dot_dimension_numbers<[1], [0], [0], [1], [0, 0, 1, 1], [], []>} : vector<26x128xf32>, vector<128x128xf32>, vector<26x128xf32> -> vector<26x128xf32>
    %230 = arith.addf %225, %229 : vector<26x128xf32>
    %c7_214 = arith.constant 7 : index
    %c0_215 = arith.constant 0 : index
    %231 = vector.load %arg22[%c7_214, %c0_215] : memref<38x128xf32, #tpu.memory_space<vmem>>, vector<26x128xf32>
    %c5_216 = arith.constant 5 : index
    %c0_217 = arith.constant 0 : index
    %c0_218 = arith.constant 0 : index
    %232 = vector.load %arg11[%c5_216, %c0_217, %c0_218] : memref<9x128x128xf32, #tpu.memory_space<vmem>>, vector<1x128x128xf32>
    %233 = vector.shape_cast %232 : vector<1x128x128xf32> to vector<128x128xf32>
    %cst_219 = arith.constant dense<0.000000e+00> : vector<26x128xf32>
    %234 = tpu.matmul %231, %233, %cst_219 {dimension_numbers = #tpu.dot_dimension_numbers<[1], [0], [0], [1], [0, 0, 1, 1], [], []>} : vector<26x128xf32>, vector<128x128xf32>, vector<26x128xf32> -> vector<26x128xf32>
    %235 = arith.addf %230, %234 : vector<26x128xf32>
    %c10_220 = arith.constant 10 : index
    %c0_221 = arith.constant 0 : index
    %236 = vector.load %arg22[%c10_220, %c0_221] : memref<38x128xf32, #tpu.memory_space<vmem>>, vector<26x128xf32>
    %c6_222 = arith.constant 6 : index
    %c0_223 = arith.constant 0 : index
    %c0_224 = arith.constant 0 : index
    %237 = vector.load %arg11[%c6_222, %c0_223, %c0_224] : memref<9x128x128xf32, #tpu.memory_space<vmem>>, vector<1x128x128xf32>
    %238 = vector.shape_cast %237 : vector<1x128x128xf32> to vector<128x128xf32>
    %cst_225 = arith.constant dense<0.000000e+00> : vector<26x128xf32>
    %239 = tpu.matmul %236, %238, %cst_225 {dimension_numbers = #tpu.dot_dimension_numbers<[1], [0], [0], [1], [0, 0, 1, 1], [], []>} : vector<26x128xf32>, vector<128x128xf32>, vector<26x128xf32> -> vector<26x128xf32>
    %240 = arith.addf %235, %239 : vector<26x128xf32>
    %c11_226 = arith.constant 11 : index
    %c0_227 = arith.constant 0 : index
    %241 = vector.load %arg22[%c11_226, %c0_227] : memref<38x128xf32, #tpu.memory_space<vmem>>, vector<26x128xf32>
    %c7_228 = arith.constant 7 : index
    %c0_229 = arith.constant 0 : index
    %c0_230 = arith.constant 0 : index
    %242 = vector.load %arg11[%c7_228, %c0_229, %c0_230] : memref<9x128x128xf32, #tpu.memory_space<vmem>>, vector<1x128x128xf32>
    %243 = vector.shape_cast %242 : vector<1x128x128xf32> to vector<128x128xf32>
    %cst_231 = arith.constant dense<0.000000e+00> : vector<26x128xf32>
    %244 = tpu.matmul %241, %243, %cst_231 {dimension_numbers = #tpu.dot_dimension_numbers<[1], [0], [0], [1], [0, 0, 1, 1], [], []>} : vector<26x128xf32>, vector<128x128xf32>, vector<26x128xf32> -> vector<26x128xf32>
    %245 = arith.addf %240, %244 : vector<26x128xf32>
    %c12_232 = arith.constant 12 : index
    %c0_233 = arith.constant 0 : index
    %246 = vector.load %arg22[%c12_232, %c0_233] : memref<38x128xf32, #tpu.memory_space<vmem>>, vector<26x128xf32>
    %c8_234 = arith.constant 8 : index
    %c0_235 = arith.constant 0 : index
    %c0_236 = arith.constant 0 : index
    %247 = vector.load %arg11[%c8_234, %c0_235, %c0_236] : memref<9x128x128xf32, #tpu.memory_space<vmem>>, vector<1x128x128xf32>
    %248 = vector.shape_cast %247 : vector<1x128x128xf32> to vector<128x128xf32>
    %cst_237 = arith.constant dense<0.000000e+00> : vector<26x128xf32>
    %249 = tpu.matmul %246, %248, %cst_237 {dimension_numbers = #tpu.dot_dimension_numbers<[1], [0], [0], [1], [0, 0, 1, 1], [], []>} : vector<26x128xf32>, vector<128x128xf32>, vector<26x128xf32> -> vector<26x128xf32>
    %250 = arith.addf %245, %249 : vector<26x128xf32>
    %c0_238 = arith.constant 0 : index
    %c0_239 = arith.constant 0 : index
    %251 = vector.load %arg13[%c0_238, %c0_239] : memref<2x26xf32, #tpu.memory_space<vmem>>, vector<2x26xf32>
    %c0_240 = arith.constant 0 : index
    %c0_241 = arith.constant 0 : index
    %252 = vector.load %arg12[%c0_240, %c0_241] : memref<1x128xf32, #tpu.memory_space<vmem>>, vector<1x128xf32>
    %253 = vector.broadcast %252 : vector<1x128xf32> to vector<26x128xf32>
    %254 = arith.addf %250, %253 : vector<26x128xf32>
    %cst_242 = arith.constant dense<0.000000e+00> : vector<2x128xf32>
    %255 = tpu.matmul %251, %254, %cst_242 {dimension_numbers = #tpu.dot_dimension_numbers<[1], [0], [0], [1], [0, 0, 1, 1], [], []>} : vector<2x26xf32>, vector<26x128xf32>, vector<2x128xf32> -> vector<2x128xf32>
    %c0_243 = arith.constant 0 : index
    %c0_244 = arith.constant 0 : index
    %256 = vector.load %arg14[%c0_243, %c0_244] : memref<128x64xf32, #tpu.memory_space<vmem>>, vector<128x64xf32>
    %cst_245 = arith.constant dense<0.000000e+00> : vector<2x64xf32>
    %257 = tpu.matmul %255, %256, %cst_245 {dimension_numbers = #tpu.dot_dimension_numbers<[1], [0], [0], [1], [0, 0, 1, 1], [], []>} : vector<2x128xf32>, vector<128x64xf32>, vector<2x64xf32> -> vector<2x64xf32>
    %c0_246 = arith.constant 0 : index
    %c0_247 = arith.constant 0 : index
    %258 = vector.load %arg15[%c0_246, %c0_247] : memref<1x64xf32, #tpu.memory_space<vmem>>, vector<1x64xf32>
    %259 = vector.broadcast %258 : vector<1x64xf32> to vector<2x64xf32>
    %260 = arith.addf %257, %259 : vector<2x64xf32>
    %cst_248 = arith.constant 0.000000e+00 : f32
    %261 = vector.broadcast %cst_248 : f32 to vector<2x64xf32>
    %262 = arith.maximumf %260, %261 : vector<2x64xf32>
    %c0_249 = arith.constant 0 : index
    %c0_250 = arith.constant 0 : index
    %263 = vector.load %arg16[%c0_249, %c0_250] : memref<64x10xf32, #tpu.memory_space<vmem>>, vector<64x10xf32>
    %cst_251 = arith.constant dense<0.000000e+00> : vector<2x10xf32>
    %264 = tpu.matmul %262, %263, %cst_251 {dimension_numbers = #tpu.dot_dimension_numbers<[1], [0], [0], [1], [0, 0, 1, 1], [], []>} : vector<2x64xf32>, vector<64x10xf32>, vector<2x10xf32> -> vector<2x10xf32>
    %c0_252 = arith.constant 0 : index
    %c0_253 = arith.constant 0 : index
    %265 = vector.load %arg17[%c0_252, %c0_253] : memref<1x10xf32, #tpu.memory_space<vmem>>, vector<1x10xf32>
    %266 = vector.broadcast %265 : vector<1x10xf32> to vector<2x10xf32>
    %267 = arith.addf %264, %266 : vector<2x10xf32>
    %c0_254 = arith.constant 0 : index
    %c0_255 = arith.constant 0 : index
    %c0_256 = arith.constant 0 : index
    %268 = vector.load %arg18[%c0_254, %c0_255, %c0_256] : memref<1x2x10xf32, #tpu.memory_space<vmem>>, vector<1x2x10xf32>
    %269 = vector.shape_cast %268 : vector<1x2x10xf32> to vector<2x10xf32>
    %270 = vector.shape_cast %267 : vector<2x10xf32> to vector<1x2x10xf32>
    tpu.vector_store %arg18[%c0_254, %c0_255, %c0_256], %270 {strides = array<i32>} : memref<1x2x10xf32, #tpu.memory_space<vmem>>, vector<1x2x10xf32>,
    return
  }
  func.func @transform_0(%arg0: i32) -> (i32, i32, i32) {
    %c0_i32 = arith.constant 0 : i32
    %c0_i32_0 = arith.constant 0 : i32
    %c0_i32_1 = arith.constant 0 : i32
    return %arg0, %c0_i32, %c0_i32_0 : i32, i32, i32
  }
  func.func @transform_1(%arg0: i32) -> (i32, i32) {
    %c0_i32 = arith.constant 0 : i32
    %c0_i32_0 = arith.constant 0 : i32
    %c0_i32_1 = arith.constant 0 : i32
    return %c0_i32, %c0_i32_0 : i32, i32
  }
  func.func @transform_2(%arg0: i32) -> (i32, i32) {
    %c0_i32 = arith.constant 0 : i32
    %c0_i32_0 = arith.constant 0 : i32
    %c0_i32_1 = arith.constant 0 : i32
    return %c0_i32, %c0_i32_0 : i32, i32
  }
  func.func @transform_3(%arg0: i32) -> (i32, i32, i32) {
    %c0_i32 = arith.constant 0 : i32
    %c0_i32_0 = arith.constant 0 : i32
    %c0_i32_1 = arith.constant 0 : i32
    %c0_i32_2 = arith.constant 0 : i32
    return %c0_i32, %c0_i32_0, %c0_i32_1 : i32, i32, i32
  }
  func.func @transform_4(%arg0: i32) -> (i32, i32) {
    %c0_i32 = arith.constant 0 : i32
    %c0_i32_0 = arith.constant 0 : i32
    %c0_i32_1 = arith.constant 0 : i32
    return %c0_i32, %c0_i32_0 : i32, i32
  }
  func.func @transform_5(%arg0: i32) -> (i32, i32) {
    %c0_i32 = arith.constant 0 : i32
    %c0_i32_0 = arith.constant 0 : i32
    %c0_i32_1 = arith.constant 0 : i32
    return %c0_i32, %c0_i32_0 : i32, i32
  }
  func.func @transform_6(%arg0: i32) -> (i32, i32, i32) {
    %c0_i32 = arith.constant 0 : i32
    %c0_i32_0 = arith.constant 0 : i32
    %c0_i32_1 = arith.constant 0 : i32
    %c0_i32_2 = arith.constant 0 : i32
    return %c0_i32, %c0_i32_0, %c0_i32_1 : i32, i32, i32
  }
  func.func @transform_7(%arg0: i32) -> (i32, i32) {
    %c0_i32 = arith.constant 0 : i32
    %c0_i32_0 = arith.constant 0 : i32
    %c0_i32_1 = arith.constant 0 : i32
    return %c0_i32, %c0_i32_0 : i32, i32
  }
  func.func @transform_8(%arg0: i32) -> (i32, i32) {
    %c0_i32 = arith.constant 0 : i32
    %c0_i32_0 = arith.constant 0 : i32
    %c0_i32_1 = arith.constant 0 : i32
    return %c0_i32, %c0_i32_0 : i32, i32
  }
  func.func @transform_9(%arg0: i32) -> (i32, i32) {
    %c0_i32 = arith.constant 0 : i32
    %c0_i32_0 = arith.constant 0 : i32
    %c0_i32_1 = arith.constant 0 : i32
    return %c0_i32, %c0_i32_0 : i32, i32
  }
  func.func @transform_10(%arg0: i32) -> (i32, i32, i32) {
    %c0_i32 = arith.constant 0 : i32
    %c0_i32_0 = arith.constant 0 : i32
    %c0_i32_1 = arith.constant 0 : i32
    %c0_i32_2 = arith.constant 0 : i32
    return %c0_i32, %c0_i32_0, %c0_i32_1 : i32, i32, i32
  }
  func.func @transform_11(%arg0: i32) -> (i32, i32) {
    %c0_i32 = arith.constant 0 : i32
    %c0_i32_0 = arith.constant 0 : i32
    %c0_i32_1 = arith.constant 0 : i32
    return %c0_i32, %c0_i32_0 : i32, i32
  }
  func.func @transform_12(%arg0: i32) -> (i32, i32) {
    %c0_i32 = arith.constant 0 : i32
    %c0_i32_0 = arith.constant 0 : i32
    %c0_i32_1 = arith.constant 0 : i32
    return %c0_i32, %c0_i32_0 : i32, i32
  }
  func.func @transform_13(%arg0: i32) -> (i32, i32) {
    %c0_i32 = arith.constant 0 : i32
    %c0_i32_0 = arith.constant 0 : i32
    %c0_i32_1 = arith.constant 0 : i32
    return %c0_i32, %c0_i32_0 : i32, i32
  }
  func.func @transform_14(%arg0: i32) -> (i32, i32) {
    %c0_i32 = arith.constant 0 : i32
    %c0_i32_0 = arith.constant 0 : i32
    %c0_i32_1 = arith.constant 0 : i32
    return %c0_i32, %c0_i32_0 : i32, i32
  }
  func.func @transform_15(%arg0: i32) -> (i32, i32) {
    %c0_i32 = arith.constant 0 : i32
    %c0_i32_0 = arith.constant 0 : i32
    %c0_i32_1 = arith.constant 0 : i32
    return %c0_i32, %c0_i32_0 : i32, i32
  }
  func.func @transform_16(%arg0: i32) -> (i32, i32) {
    %c0_i32 = arith.constant 0 : i32
    %c0_i32_0 = arith.constant 0 : i32
    %c0_i32_1 = arith.constant 0 : i32
    return %c0_i32, %c0_i32_0 : i32, i32
  }
  func.func @transform_17(%arg0: i32) -> (i32, i32, i32) {
    %c0_i32 = arith.constant 0 : i32
    %c0_i32_0 = arith.constant 0 : i32
    %c0_i32_1 = arith.constant 0 : i32
    return %arg0, %c0_i32, %c0_i32_0 : i32, i32, i32
  }
}

</mosaic_0001>

<llo_original>
// kernel: simple_net_forward.1
$region0: #{simple_net_forward.1}
  #allocation0 [shape = 'u32[]', space=smem, size = 0x4, offset = 0x4, fixed_abs, tag = 'smem constant byte address 0x4 - core index']
  #allocation1 [shape = 'u32[72,128]{1,0:T(1,128)}', space=vmem, size = 0x9000, scoped, tag = 'internal scratch']
  #allocation2 [shape = 'f32[362,64]{1,0:T(8,128)}', space=vmem, size = 0x2e000, scoped, tag = 'scratch operand']
  #allocation3 [shape = 'f32[332,128]{1,0:T(8,128)}', space=vmem, size = 0x2a000, scoped, tag = 'scratch operand']
  #allocation4 [shape = 'f32[50,128]{1,0:T(8,128)}', space=vmem, size = 0x7000, scoped, tag = 'scratch operand']
  #allocation5 [shape = 'f32[38,128]{1,0:T(8,128)}', space=vmem, size = 0x5000, scoped, tag = 'scratch operand']
  %s0 = inlined_call_operand.vmem [shape: f32[1,392,1], index: 0, kind: input, shape index: {}]
  %s1 = inlined_call_operand.vmem [shape: f32[9,64], index: 1, kind: input, shape index: {}]
  %s2 = inlined_call_operand.vmem [shape: f32[2,64], index: 2, kind: input, shape index: {}]
  %s3 = inlined_call_operand.vmem [shape: f32[9,64,128], index: 3, kind: input, shape index: {}]
  %s4 = inlined_call_operand.vmem [shape: f32[2,128], index: 4, kind: input, shape index: {}]
  %s5 = inlined_call_operand.vmem [shape: f32[50,317], index: 5, kind: input, shape index: {}]
  %s6 = inlined_call_operand.hbm [shape: f32[9,128,128], index: 6, kind: input, shape index: {}]
  %s7 = inlined_call_operand.vmem [shape: f32[2,128], index: 7, kind: input, shape index: {}]
  %s8 = inlined_call_operand.vmem [shape: f32[128,128], index: 8, kind: input, shape index: {}]
  %s9 = inlined_call_operand.vmem [shape: f32[2,128], index: 9, kind: input, shape index: {}]
  %s10 = inlined_call_operand.hbm [shape: f32[9,128,128], index: 10, kind: input, shape index: {}]
  %s11 = inlined_call_operand.vmem [shape: f32[1,128], index: 11, kind: input, shape index: {}]
  %s12 = inlined_call_operand.vmem [shape: f32[2,26], index: 12, kind: input, shape index: {}]
  %s13 = inlined_call_operand.vmem [shape: f32[128,64], index: 13, kind: input, shape index: {}]
  %s14 = inlined_call_operand.vmem [shape: f32[1,64], index: 14, kind: input, shape index: {}]
  %s15 = inlined_call_operand.vmem [shape: f32[64,10], index: 15, kind: input, shape index: {}]
  %s16 = inlined_call_operand.vmem [shape: f32[1,10], index: 16, kind: input, shape index: {}]
  %s17 = inlined_call_operand.hbm [shape: f32[1,2,10], index: 17, kind: output, shape index: {}]
  %s18 = sld [smem:[#allocation0]]
  $region86: #{simple_net_forward.1} parent=0
    _
  %s20 = ssub.s32 1, %s18
  %s21 = scalar_select 0, %s20, %s18
  $region1: #{simple_net_forward.1} parent=0
    #allocation6 [shape = 'u8[589824]{0}', space=vmem, size = 0x90000, scoped, tag = 'input window, operand 6, single buffered']
    #allocation7 [shape = 's32[1]{0}', space=sflag, size = 0x4, scoped, tag = 'scoped memory for simple_net_forward.1']
    #allocation8 [shape = 's32[1]{0}', space=sflag, size = 0x4, scoped, tag = 'scoped memory for simple_net_forward.1']
    #allocation9 [shape = 'u8[589824]{0}', space=vmem, size = 0x90000, scoped, tag = 'input window, operand 10, single buffered']
    #allocation10 [shape = 's32[1]{0}', space=sflag, size = 0x4, scoped, tag = 'scoped memory for simple_net_forward.1']
    #allocation11 [shape = 'u8[1024]{0}', space=vmem, size = 0x400, scoped, tag = 'output window, operand 0, single buffered']
    %22 = vsyncpa [#allocation7], 0
    %23 = vsyncpa [#allocation10], 0
    %24 = vsyncpa [#allocation8], 0
    // Predicated region
    $region2: #{simple_net_forward.1} parent=1 // pred_check
      _
    $region3: #{simple_net_forward.1} parent=1 // pred_check_branch
      %26 = sbr.rel (0) target = $region5
    $region4: #{simple_net_forward.1} parent=1 // pred_region
      _
    $region5: #{simple_net_forward.1} parent=1 // pred_fallthru
      _
    // Predicated region
    $region6: #{simple_net_forward.1} parent=1 // pred_check
      _
    $region7: #{simple_net_forward.1} parent=1 // pred_check_branch
      %28 = sbr.rel (0) target = $region9
    $region8: #{simple_net_forward.1} parent=1 // pred_region
      _
    $region9: #{simple_net_forward.1} parent=1 // pred_fallthru
      _
    // Predicated region
    $region10: #{simple_net_forward.1} parent=1 // pred_check
      _
    $region11: #{simple_net_forward.1} parent=1 // pred_check_branch
      %30 = sbr.rel (0) target = $region13
    $region12: #{simple_net_forward.1} parent=1 // pred_region
      _
    $region13: #{simple_net_forward.1} parent=1 // pred_fallthru
      _
    // Predicated region
    $region14: #{simple_net_forward.1} parent=1 // pred_check
      _
    $region15: #{simple_net_forward.1} parent=1 // pred_check_branch
      %32 = sbr.rel (0) target = $region17
    $region16: #{simple_net_forward.1} parent=1 // pred_region
      _
    $region17: #{simple_net_forward.1} parent=1 // pred_fallthru
      _
    // Predicated region
    $region18: #{simple_net_forward.1} parent=1 // pred_check
      _
    $region19: #{simple_net_forward.1} parent=1 // pred_check_branch
      %34 = sbr.rel (0) target = $region21
    $region20: #{simple_net_forward.1} parent=1 // pred_region
      _
    $region21: #{simple_net_forward.1} parent=1 // pred_fallthru
      _
    // Predicated region
    $region22: #{simple_net_forward.1} parent=1 // pred_check
      _
    $region23: #{simple_net_forward.1} parent=1 // pred_check_branch
      %36 = sbr.rel (0) target = $region25
    $region24: #{simple_net_forward.1} parent=1 // pred_region
      _
    $region25: #{simple_net_forward.1} parent=1 // pred_fallthru
      _
    // Predicated region
    $region26: #{simple_net_forward.1} parent=1 // pred_check
      _
    $region27: #{simple_net_forward.1} parent=1 // pred_check_branch
      %38 = sbr.rel (0) target = $region29
    $region28: #{simple_net_forward.1} parent=1 // pred_region
      %40 = vsyncadd [#allocation7], 0
      %s41 = sshll.u32 %s6, 4
      %s42 = int_to_ptr.hbm [resolvable:$true] %s41
      %s43 = sshll.u32 [#allocation6], 4
      %s44 = int_to_ptr.vmem [resolvable:$true] %s43
      %49 = dma.hbm_to_vmem [thread:$0]  %s42, 18432, %s44, [#allocation7], 128, 128, 8
    $region29: #{simple_net_forward.1} parent=1 // pred_fallthru
      _
    // Predicated region
    $region30: #{simple_net_forward.1} parent=1 // pred_check
      _
    $region31: #{simple_net_forward.1} parent=1 // pred_check_branch
      %51 = sbr.rel (0) target = $region33
    $region32: #{simple_net_forward.1} parent=1 // pred_region
      _
    $region33: #{simple_net_forward.1} parent=1 // pred_fallthru
      _
    // Predicated region
    $region34: #{simple_net_forward.1} parent=1 // pred_check
      _
    $region35: #{simple_net_forward.1} parent=1 // pred_check_branch
      %53 = sbr.rel (0) target = $region37
    $region36: #{simple_net_forward.1} parent=1 // pred_region
      _
    $region37: #{simple_net_forward.1} parent=1 // pred_fallthru
      _
    // Predicated region
    $region38: #{simple_net_forward.1} parent=1 // pred_check
      _
    $region39: #{simple_net_forward.1} parent=1 // pred_check_branch
      %55 = sbr.rel (0) target = $region41
    $region40: #{simple_net_forward.1} parent=1 // pred_region
      _
    $region41: #{simple_net_forward.1} parent=1 // pred_fallthru
      _
    // Predicated region
    $region42: #{simple_net_forward.1} parent=1 // pred_check
      _
    $region43: #{simple_net_forward.1} parent=1 // pred_check_branch
      %57 = sbr.rel (0) target = $region45
    $region44: #{simple_net_forward.1} parent=1 // pred_region
      %59 = vsyncadd [#allocation10], 0
      %s60 = sshll.u32 %s10, 4
      %s61 = int_to_ptr.hbm [resolvable:$true] %s60
      %s62 = sshll.u32 [#allocation9], 4
      %s63 = int_to_ptr.vmem [resolvable:$true] %s62
      %68 = dma.hbm_to_vmem [thread:$0]  %s61, 18432, %s63, [#allocation10], 128, 128, 8
    $region45: #{simple_net_forward.1} parent=1 // pred_fallthru
      _
    // Predicated region
    $region46: #{simple_net_forward.1} parent=1 // pred_check
      _
    $region47: #{simple_net_forward.1} parent=1 // pred_check_branch
      %70 = sbr.rel (0) target = $region49
    $region48: #{simple_net_forward.1} parent=1 // pred_region
      _
    $region49: #{simple_net_forward.1} parent=1 // pred_fallthru
      _
    // Predicated region
    $region50: #{simple_net_forward.1} parent=1 // pred_check
      _
    $region51: #{simple_net_forward.1} parent=1 // pred_check_branch
      %72 = sbr.rel (0) target = $region53
    $region52: #{simple_net_forward.1} parent=1 // pred_region
      _
    $region53: #{simple_net_forward.1} parent=1 // pred_fallthru
      _
    // Predicated region
    $region54: #{simple_net_forward.1} parent=1 // pred_check
      _
    $region55: #{simple_net_forward.1} parent=1 // pred_check_branch
      %74 = sbr.rel (0) target = $region57
    $region56: #{simple_net_forward.1} parent=1 // pred_region
      _
    $region57: #{simple_net_forward.1} parent=1 // pred_fallthru
      _
    // Predicated region
    $region58: #{simple_net_forward.1} parent=1 // pred_check
      _
    $region59: #{simple_net_forward.1} parent=1 // pred_check_branch
      %76 = sbr.rel (0) target = $region61
    $region60: #{simple_net_forward.1} parent=1 // pred_region
      _
    $region61: #{simple_net_forward.1} parent=1 // pred_fallthru
      _
    // Predicated region
    $region62: #{simple_net_forward.1} parent=1 // pred_check
      _
    $region63: #{simple_net_forward.1} parent=1 // pred_check_branch
      %78 = sbr.rel (0) target = $region65
    $region64: #{simple_net_forward.1} parent=1 // pred_region
      _
    $region65: #{simple_net_forward.1} parent=1 // pred_fallthru
      _
    // Predicated region
    $region66: #{simple_net_forward.1} parent=1 // pred_check
      _
    $region67: #{simple_net_forward.1} parent=1 // pred_check_branch
      %80 = sbr.rel (0) target = $region69
    $region68: #{simple_net_forward.1} parent=1 // pred_region
      _
    $region69: #{simple_net_forward.1} parent=1 // pred_fallthru
      _
    // Predicated region
    $region70: #{simple_net_forward.1} parent=1 // pred_check
      _
    $region71: #{simple_net_forward.1} parent=1 // pred_check_branch
      %82 = sbr.rel (0) target = $region73
    $region72: #{simple_net_forward.1} parent=1 // pred_region
      %84 = dma.done [#allocation7], 18432
    $region73: #{simple_net_forward.1} parent=1 // pred_fallthru
      _
    // Predicated region
    $region74: #{simple_net_forward.1} parent=1 // pred_check
      _
    $region75: #{simple_net_forward.1} parent=1 // pred_check_branch
      %86 = sbr.rel (0) target = $region77
    $region76: #{simple_net_forward.1} parent=1 // pred_region
      %88 = dma.done [#allocation10], 18432
    $region77: #{simple_net_forward.1} parent=1 // pred_fallthru
      _
    %v89 = vld [vmem:[%s0] sm:$0xff]
    %v90 = vld [vmem:[%s0 + $0x8] sm:$0xff]
    %v91 = vld [vmem:[%s0 + $0x10] sm:$0xff]
    %v92 = vld [vmem:[%s0 + $0x18] sm:$0xff]
    %v93 = vld [vmem:[%s0 + $0x20] sm:$0xff]
    %v94 = vld [vmem:[%s0 + $0x28] sm:$0xff]
    %v95 = vld [vmem:[%s0 + $0x30] sm:$0xff]
    %v96 = vld [vmem:[%s0 + $0x38] sm:$0xff]
    %v97 = vld [vmem:[%s0 + $0x40] sm:$0xff]
    %v98 = vld [vmem:[%s0 + $0x48] sm:$0xff]
    %v99 = vld [vmem:[%s0 + $0x50] sm:$0xff]
    %v100 = vld [vmem:[%s0 + $0x58] sm:$0xff]
    %v101 = vld [vmem:[%s0 + $0x60] sm:$0xff]
    %v102 = vld [vmem:[%s0 + $0x68] sm:$0xff]
    %v103 = vld [vmem:[%s0 + $0x70] sm:$0xff]
    %v104 = vld [vmem:[%s0 + $0x78] sm:$0xff]
    %v105 = vld [vmem:[%s0 + $0x80] sm:$0xff]
    %v106 = vld [vmem:[%s0 + $0x88] sm:$0xff]
    %v107 = vld [vmem:[%s0 + $0x90] sm:$0xff]
    %v108 = vld [vmem:[%s0 + $0x98] sm:$0xff]
    %v109 = vld [vmem:[%s0 + $0xa0] sm:$0xff]
    %v110 = vld [vmem:[%s0 + $0xa8] sm:$0xff]
    %v111 = vld [vmem:[%s0 + $0xb0] sm:$0xff]
    %v112 = vld [vmem:[%s0 + $0xb8] sm:$0xff]
    %v113 = vld [vmem:[%s0 + $0xc0] sm:$0xff]
    %v114 = vld [vmem:[%s0 + $0xc8] sm:$0xff]
    %v115 = vld [vmem:[%s0 + $0xd0] sm:$0xff]
    %v116 = vld [vmem:[%s0 + $0xd8] sm:$0xff]
    %v117 = vld [vmem:[%s0 + $0xe0] sm:$0xff]
    %v118 = vld [vmem:[%s0 + $0xe8] sm:$0xff]
    %v119 = vld [vmem:[%s0 + $0xf0] sm:$0xff]
    %v120 = vld [vmem:[%s0 + $0xf8] sm:$0xff]
    %v121 = vld [vmem:[%s0 + $0x100] sm:$0xff]
    %v122 = vld [vmem:[%s0 + $0x108] sm:$0xff]
    %v123 = vld [vmem:[%s0 + $0x110] sm:$0xff]
    %v124 = vld [vmem:[%s0 + $0x118] sm:$0xff]
    %v125 = vld [vmem:[%s0 + $0x120] sm:$0xff]
    %v126 = vld [vmem:[%s0 + $0x128] sm:$0xff]
    %v127 = vld [vmem:[%s0 + $0x130] sm:$0xff]
    %v128 = vld [vmem:[%s0 + $0x138] sm:$0xff]
    %v129 = vld [vmem:[%s0 + $0x140] sm:$0xff]
    %v130 = vld [vmem:[%s0 + $0x148] sm:$0xff]
    %v131 = vld [vmem:[%s0 + $0x150] sm:$0xff]
    %v132 = vld [vmem:[%s0 + $0x158] sm:$0xff]
    %v133 = vld [vmem:[%s0 + $0x160] sm:$0xff]
    %v134 = vld [vmem:[%s0 + $0x168] sm:$0x3]
    %v135 = vld [vmem:[%s1] sm:$0x1]
    %137 = vset.pattern.permute.xlu0 0
    %138 = vperm.xlu0 %137, %v89
    %v139 = vpop.permute.xlu0 %138
    %142 = vset.pattern.permute.xlu0 0
    %143 = vperm.xlu0 %142, %v90
    %v144 = vpop.permute.xlu0 %143
    %147 = vset.pattern.permute.xlu0 0
    %148 = vperm.xlu0 %147, %v91
    %v149 = vpop.permute.xlu0 %148
    %152 = vset.pattern.permute.xlu0 0
    %153 = vperm.xlu0 %152, %v92
    %v154 = vpop.permute.xlu0 %153
    %157 = vset.pattern.permute.xlu0 0
    %158 = vperm.xlu0 %157, %v93
    %v159 = vpop.permute.xlu0 %158
    %162 = vset.pattern.permute.xlu0 0
    %163 = vperm.xlu0 %162, %v94
    %v164 = vpop.permute.xlu0 %163
    %167 = vset.pattern.permute.xlu0 0
    %168 = vperm.xlu0 %167, %v95
    %v169 = vpop.permute.xlu0 %168
    %172 = vset.pattern.permute.xlu0 0
    %173 = vperm.xlu0 %172, %v96
    %v174 = vpop.permute.xlu0 %173
    %177 = vset.pattern.permute.xlu0 0
    %178 = vperm.xlu0 %177, %v97
    %v179 = vpop.permute.xlu0 %178
    %182 = vset.pattern.permute.xlu0 0
    %183 = vperm.xlu0 %182, %v98
    %v184 = vpop.permute.xlu0 %183
    %187 = vset.pattern.permute.xlu0 0
    %188 = vperm.xlu0 %187, %v99
    %v189 = vpop.permute.xlu0 %188
    %192 = vset.pattern.permute.xlu0 0
    %193 = vperm.xlu0 %192, %v100
    %v194 = vpop.permute.xlu0 %193
    %197 = vset.pattern.permute.xlu0 0
    %198 = vperm.xlu0 %197, %v101
    %v199 = vpop.permute.xlu0 %198
    %202 = vset.pattern.permute.xlu0 0
    %203 = vperm.xlu0 %202, %v102
    %v204 = vpop.permute.xlu0 %203
    %207 = vset.pattern.permute.xlu0 0
    %208 = vperm.xlu0 %207, %v103
    %v209 = vpop.permute.xlu0 %208
    %212 = vset.pattern.permute.xlu0 0
    %213 = vperm.xlu0 %212, %v104
    %v214 = vpop.permute.xlu0 %213
    %217 = vset.pattern.permute.xlu0 0
    %218 = vperm.xlu0 %217, %v105
    %v219 = vpop.permute.xlu0 %218
    %222 = vset.pattern.permute.xlu0 0
    %223 = vperm.xlu0 %222, %v106
    %v224 = vpop.permute.xlu0 %223
    %227 = vset.pattern.permute.xlu0 0
    %228 = vperm.xlu0 %227, %v107
    %v229 = vpop.permute.xlu0 %228
    %232 = vset.pattern.permute.xlu0 0
    %233 = vperm.xlu0 %232, %v108
    %v234 = vpop.permute.xlu0 %233
    %237 = vset.pattern.permute.xlu0 0
    %238 = vperm.xlu0 %237, %v109
    %v239 = vpop.permute.xlu0 %238
    %242 = vset.pattern.permute.xlu0 0
    %243 = vperm.xlu0 %242, %v110
    %v244 = vpop.permute.xlu0 %243
    %247 = vset.pattern.permute.xlu0 0
    %248 = vperm.xlu0 %247, %v111
    %v249 = vpop.permute.xlu0 %248
    %252 = vset.pattern.permute.xlu0 0
    %253 = vperm.xlu0 %252, %v112
    %v254 = vpop.permute.xlu0 %253
    %257 = vset.pattern.permute.xlu0 0
    %258 = vperm.xlu0 %257, %v113
    %v259 = vpop.permute.xlu0 %258
    %262 = vset.pattern.permute.xlu0 0
    %263 = vperm.xlu0 %262, %v114
    %v264 = vpop.permute.xlu0 %263
    %267 = vset.pattern.permute.xlu0 0
    %268 = vperm.xlu0 %267, %v115
    %v269 = vpop.permute.xlu0 %268
    %272 = vset.pattern.permute.xlu0 0
    %273 = vperm.xlu0 %272, %v116
    %v274 = vpop.permute.xlu0 %273
    %277 = vset.pattern.permute.xlu0 0
    %278 = vperm.xlu0 %277, %v117
    %v279 = vpop.permute.xlu0 %278
    %282 = vset.pattern.permute.xlu0 0
    %283 = vperm.xlu0 %282, %v118
    %v284 = vpop.permute.xlu0 %283
    %287 = vset.pattern.permute.xlu0 0
    %288 = vperm.xlu0 %287, %v119
    %v289 = vpop.permute.xlu0 %288
    %292 = vset.pattern.permute.xlu0 0
    %293 = vperm.xlu0 %292, %v120
    %v294 = vpop.permute.xlu0 %293
    %297 = vset.pattern.permute.xlu0 0
    %298 = vperm.xlu0 %297, %v121
    %v299 = vpop.permute.xlu0 %298
    %302 = vset.pattern.permute.xlu0 0
    %303 = vperm.xlu0 %302, %v122
    %v304 = vpop.permute.xlu0 %303
    %307 = vset.pattern.permute.xlu0 0
    %308 = vperm.xlu0 %307, %v123
    %v309 = vpop.permute.xlu0 %308
    %312 = vset.pattern.permute.xlu0 0
    %313 = vperm.xlu0 %312, %v124
    %v314 = vpop.permute.xlu0 %313
    %317 = vset.pattern.permute.xlu0 0
    %318 = vperm.xlu0 %317, %v125
    %v319 = vpop.permute.xlu0 %318
    %322 = vset.pattern.permute.xlu0 0
    %323 = vperm.xlu0 %322, %v126
    %v324 = vpop.permute.xlu0 %323
    %327 = vset.pattern.permute.xlu0 0
    %328 = vperm.xlu0 %327, %v127
    %v329 = vpop.permute.xlu0 %328
    %332 = vset.pattern.permute.xlu0 0
    %333 = vperm.xlu0 %332, %v128
    %v334 = vpop.permute.xlu0 %333
    %337 = vset.pattern.permute.xlu0 0
    %338 = vperm.xlu0 %337, %v129
    %v339 = vpop.permute.xlu0 %338
    %342 = vset.pattern.permute.xlu0 0
    %343 = vperm.xlu0 %342, %v130
    %v344 = vpop.permute.xlu0 %343
    %347 = vset.pattern.permute.xlu0 0
    %348 = vperm.xlu0 %347, %v131
    %v349 = vpop.permute.xlu0 %348
    %352 = vset.pattern.permute.xlu0 0
    %353 = vperm.xlu0 %352, %v132
    %v354 = vpop.permute.xlu0 %353
    %357 = vset.pattern.permute.xlu0 0
    %358 = vperm.xlu0 %357, %v133
    %v359 = vpop.permute.xlu0 %358
    %362 = vset.pattern.permute.xlu0 0
    %363 = vperm.xlu0 %362, %v134
    %v364 = vpop.permute.xlu0 %363
    %v366 = vperm.slane %v135, 0
    %v367 = vmul.f32 %v139, %v366
    %v368 = vmul.f32 %v144, %v366
    %v369 = vmul.f32 %v149, %v366
    %v370 = vmul.f32 %v154, %v366
    %v371 = vmul.f32 %v159, %v366
    %v372 = vmul.f32 %v164, %v366
    %v373 = vmul.f32 %v169, %v366
    %v374 = vmul.f32 %v174, %v366
    %v375 = vmul.f32 %v179, %v366
    %v376 = vmul.f32 %v184, %v366
    %v377 = vmul.f32 %v189, %v366
    %v378 = vmul.f32 %v194, %v366
    %v379 = vmul.f32 %v199, %v366
    %v380 = vmul.f32 %v204, %v366
    %v381 = vmul.f32 %v209, %v366
    %v382 = vmul.f32 %v214, %v366
    %v383 = vmul.f32 %v219, %v366
    %v384 = vmul.f32 %v224, %v366
    %v385 = vmul.f32 %v229, %v366
    %v386 = vmul.f32 %v234, %v366
    %v387 = vmul.f32 %v239, %v366
    %v388 = vmul.f32 %v244, %v366
    %v389 = vmul.f32 %v249, %v366
    %v390 = vmul.f32 %v254, %v366
    %v391 = vmul.f32 %v259, %v366
    %v392 = vmul.f32 %v264, %v366
    %v393 = vmul.f32 %v269, %v366
    %v394 = vmul.f32 %v274, %v366
    %v395 = vmul.f32 %v279, %v366
    %v396 = vmul.f32 %v284, %v366
    %v397 = vmul.f32 %v289, %v366
    %v398 = vmul.f32 %v294, %v366
    %v399 = vmul.f32 %v299, %v366
    %v400 = vmul.f32 %v304, %v366
    %v401 = vmul.f32 %v309, %v366
    %v402 = vmul.f32 %v314, %v366
    %v403 = vmul.f32 %v319, %v366
    %v404 = vmul.f32 %v324, %v366
    %v405 = vmul.f32 %v329, %v366
    %v406 = vmul.f32 %v334, %v366
    %v407 = vmul.f32 %v339, %v366
    %v408 = vmul.f32 %v344, %v366
    %v409 = vmul.f32 %v349, %v366
    %v410 = vmul.f32 %v354, %v366
    %v411 = vmul.f32 %v359, %v366
    %v412 = vmul.f32 %v364, %v366
    %v413 = vadd.f32 %v367, 0.0
    %v414 = vadd.f32 %v368, 0.0
    %v415 = vadd.f32 %v369, 0.0
    %v416 = vadd.f32 %v370, 0.0
    %v417 = vadd.f32 %v371, 0.0
    %v418 = vadd.f32 %v372, 0.0
    %v419 = vadd.f32 %v373, 0.0
    %v420 = vadd.f32 %v374, 0.0
    %v421 = vadd.f32 %v375, 0.0
    %v422 = vadd.f32 %v376, 0.0
    %v423 = vadd.f32 %v377, 0.0
    %v424 = vadd.f32 %v378, 0.0
    %v425 = vadd.f32 %v379, 0.0
    %v426 = vadd.f32 %v380, 0.0
    %v427 = vadd.f32 %v381, 0.0
    %v428 = vadd.f32 %v382, 0.0
    %v429 = vadd.f32 %v383, 0.0
    %v430 = vadd.f32 %v384, 0.0
    %v431 = vadd.f32 %v385, 0.0
    %v432 = vadd.f32 %v386, 0.0
    %v433 = vadd.f32 %v387, 0.0
    %v434 = vadd.f32 %v388, 0.0
    %v435 = vadd.f32 %v389, 0.0
    %v436 = vadd.f32 %v390, 0.0
    %v437 = vadd.f32 %v391, 0.0
    %v438 = vadd.f32 %v392, 0.0
    %v439 = vadd.f32 %v393, 0.0
    %v440 = vadd.f32 %v394, 0.0
    %v441 = vadd.f32 %v395, 0.0
    %v442 = vadd.f32 %v396, 0.0
    %v443 = vadd.f32 %v397, 0.0
    %v444 = vadd.f32 %v398, 0.0
    %v445 = vadd.f32 %v399, 0.0
    %v446 = vadd.f32 %v400, 0.0
    %v447 = vadd.f32 %v401, 0.0
    %v448 = vadd.f32 %v402, 0.0
    %v449 = vadd.f32 %v403, 0.0
    %v450 = vadd.f32 %v404, 0.0
    %v451 = vadd.f32 %v405, 0.0
    %v452 = vadd.f32 %v406, 0.0
    %v453 = vadd.f32 %v407, 0.0
    %v454 = vadd.f32 %v408, 0.0
    %v455 = vadd.f32 %v409, 0.0
    %v456 = vadd.f32 %v410, 0.0
    %v457 = vadd.f32 %v411, 0.0
    %v458 = vadd.f32 %v412, 0.0
    %v459 = vld [vmem:[%s0 + $0x1] sm:$0xff]
    %v460 = vld [vmem:[%s0 + $0x9] sm:$0xff]
    %v461 = vld [vmem:[%s0 + $0x11] sm:$0xff]
    %v462 = vld [vmem:[%s0 + $0x19] sm:$0xff]
    %v463 = vld [vmem:[%s0 + $0x21] sm:$0xff]
    %v464 = vld [vmem:[%s0 + $0x29] sm:$0xff]
    %v465 = vld [vmem:[%s0 + $0x31] sm:$0xff]
    %v466 = vld [vmem:[%s0 + $0x39] sm:$0xff]
    %v467 = vld [vmem:[%s0 + $0x41] sm:$0xff]
    %v468 = vld [vmem:[%s0 + $0x49] sm:$0xff]
    %v469 = vld [vmem:[%s0 + $0x51] sm:$0xff]
    %v470 = vld [vmem:[%s0 + $0x59] sm:$0xff]
    %v471 = vld [vmem:[%s0 + $0x61] sm:$0xff]
    %v472 = vld [vmem:[%s0 + $0x69] sm:$0xff]
    %v473 = vld [vmem:[%s0 + $0x71] sm:$0xff]
    %v474 = vld [vmem:[%s0 + $0x79] sm:$0xff]
    %v475 = vld [vmem:[%s0 + $0x81] sm:$0xff]
    %v476 = vld [vmem:[%s0 + $0x89] sm:$0xff]
    %v477 = vld [vmem:[%s0 + $0x91] sm:$0xff]
    %v478 = vld [vmem:[%s0 + $0x99] sm:$0xff]
    %v479 = vld [vmem:[%s0 + $0xa1] sm:$0xff]
    %v480 = vld [vmem:[%s0 + $0xa9] sm:$0xff]
    %v481 = vld [vmem:[%s0 + $0xb1] sm:$0xff]
    %v482 = vld [vmem:[%s0 + $0xb9] sm:$0xff]
    %v483 = vld [vmem:[%s0 + $0xc1] sm:$0xff]
    %v484 = vld [vmem:[%s0 + $0xc9] sm:$0xff]
    %v485 = vld [vmem:[%s0 + $0xd1] sm:$0xff]
    %v486 = vld [vmem:[%s0 + $0xd9] sm:$0xff]
    %v487 = vld [vmem:[%s0 + $0xe1] sm:$0xff]
    %v488 = vld [vmem:[%s0 + $0xe9] sm:$0xff]
    %v489 = vld [vmem:[%s0 + $0xf1] sm:$0xff]
    %v490 = vld [vmem:[%s0 + $0xf9] sm:$0xff]
    %v491 = vld [vmem:[%s0 + $0x101] sm:$0xff]
    %v492 = vld [vmem:[%s0 + $0x109] sm:$0xff]
    %v493 = vld [vmem:[%s0 + $0x111] sm:$0xff]
    %v494 = vld [vmem:[%s0 + $0x119] sm:$0xff]
    %v495 = vld [vmem:[%s0 + $0x121] sm:$0xff]
    %v496 = vld [vmem:[%s0 + $0x129] sm:$0xff]
    %v497 = vld [vmem:[%s0 + $0x131] sm:$0xff]
    %v498 = vld [vmem:[%s0 + $0x139] sm:$0xff]
    %v499 = vld [vmem:[%s0 + $0x141] sm:$0xff]
    %v500 = vld [vmem:[%s0 + $0x149] sm:$0xff]
    %v501 = vld [vmem:[%s0 + $0x151] sm:$0xff]
    %v502 = vld [vmem:[%s0 + $0x159] sm:$0xff]
    %v503 = vld [vmem:[%s0 + $0x161] sm:$0xff]
    %v504 = vld [vmem:[%s0 + $0x169] sm:$0x3]
    %v505 = vld [vmem:[%s1 + $0x1] sm:$0x1]
    %507 = vset.pattern.permute.xlu0 0
    %508 = vperm.xlu0 %507, %v459
    %v509 = vpop.permute.xlu0 %508
    %512 = vset.pattern.permute.xlu0 0
    %513 = vperm.xlu0 %512, %v460
    %v514 = vpop.permute.xlu0 %513
    %517 = vset.pattern.permute.xlu0 0
    %518 = vperm.xlu0 %517, %v461
    %v519 = vpop.permute.xlu0 %518
    %522 = vset.pattern.permute.xlu0 0
    %523 = vperm.xlu0 %522, %v462
    %v524 = vpop.permute.xlu0 %523
    %527 = vset.pattern.permute.xlu0 0
    %528 = vperm.xlu0 %527, %v463
    %v529 = vpop.permute.xlu0 %528
    %532 = vset.pattern.permute.xlu0 0
    %533 = vperm.xlu0 %532, %v464
    %v534 = vpop.permute.xlu0 %533
    %537 = vset.pattern.permute.xlu0 0
    %538 = vperm.xlu0 %537, %v465
    %v539 = vpop.permute.xlu0 %538
    %542 = vset.pattern.permute.xlu0 0
    %543 = vperm.xlu0 %542, %v466
    %v544 = vpop.permute.xlu0 %543
    %547 = vset.pattern.permute.xlu0 0
    %548 = vperm.xlu0 %547, %v467
    %v549 = vpop.permute.xlu0 %548
    %552 = vset.pattern.permute.xlu0 0
    %553 = vperm.xlu0 %552, %v468
    %v554 = vpop.permute.xlu0 %553
    %557 = vset.pattern.permute.xlu0 0
    %558 = vperm.xlu0 %557, %v469
    %v559 = vpop.permute.xlu0 %558
    %562 = vset.pattern.permute.xlu0 0
    %563 = vperm.xlu0 %562, %v470
    %v564 = vpop.permute.xlu0 %563
    %567 = vset.pattern.permute.xlu0 0
    %568 = vperm.xlu0 %567, %v471
    %v569 = vpop.permute.xlu0 %568
    %572 = vset.pattern.permute.xlu0 0
    %573 = vperm.xlu0 %572, %v472
    %v574 = vpop.permute.xlu0 %573
    %577 = vset.pattern.permute.xlu0 0
    %578 = vperm.xlu0 %577, %v473
    %v579 = vpop.permute.xlu0 %578
    %582 = vset.pattern.permute.xlu0 0
    %583 = vperm.xlu0 %582, %v474
    %v584 = vpop.permute.xlu0 %583
    %587 = vset.pattern.permute.xlu0 0
    %588 = vperm.xlu0 %587, %v475
    %v589 = vpop.permute.xlu0 %588
    %592 = vset.pattern.permute.xlu0 0
    %593 = vperm.xlu0 %592, %v476
    %v594 = vpop.permute.xlu0 %593
    %597 = vset.pattern.permute.xlu0 0
    %598 = vperm.xlu0 %597, %v477
    %v599 = vpop.permute.xlu0 %598
    %602 = vset.pattern.permute.xlu0 0
    %603 = vperm.xlu0 %602, %v478
    %v604 = vpop.permute.xlu0 %603
    %607 = vset.pattern.permute.xlu0 0
    %608 = vperm.xlu0 %607, %v479
    %v609 = vpop.permute.xlu0 %608
    %612 = vset.pattern.permute.xlu0 0
    %613 = vperm.xlu0 %612, %v480
    %v614 = vpop.permute.xlu0 %613
    %617 = vset.pattern.permute.xlu0 0
    %618 = vperm.xlu0 %617, %v481
    %v619 = vpop.permute.xlu0 %618
    %622 = vset.pattern.permute.xlu0 0
    %623 = vperm.xlu0 %622, %v482
    %v624 = vpop.permute.xlu0 %623
    %627 = vset.pattern.permute.xlu0 0
    %628 = vperm.xlu0 %627, %v483
    %v629 = vpop.permute.xlu0 %628
    %632 = vset.pattern.permute.xlu0 0
    %633 = vperm.xlu0 %632, %v484
    %v634 = vpop.permute.xlu0 %633
    %637 = vset.pattern.permute.xlu0 0
    %638 = vperm.xlu0 %637, %v485
    %v639 = vpop.permute.xlu0 %638
    %642 = vset.pattern.permute.xlu0 0
    %643 = vperm.xlu0 %642, %v486
    %v644 = vpop.permute.xlu0 %643
    %647 = vset.pattern.permute.xlu0 0
    %648 = vperm.xlu0 %647, %v487
    %v649 = vpop.permute.xlu0 %648
    %652 = vset.pattern.permute.xlu0 0
    %653 = vperm.xlu0 %652, %v488
    %v654 = vpop.permute.xlu0 %653
    %657 = vset.pattern.permute.xlu0 0
    %658 = vperm.xlu0 %657, %v489
    %v659 = vpop.permute.xlu0 %658
    %662 = vset.pattern.permute.xlu0 0
    %663 = vperm.xlu0 %662, %v490
    %v664 = vpop.permute.xlu0 %663
    %667 = vset.pattern.permute.xlu0 0
    %668 = vperm.xlu0 %667, %v491
    %v669 = vpop.permute.xlu0 %668
    %672 = vset.pattern.permute.xlu0 0
    %673 = vperm.xlu0 %672, %v492
    %v674 = vpop.permute.xlu0 %673
    %677 = vset.pattern.permute.xlu0 0
    %678 = vperm.xlu0 %677, %v493
    %v679 = vpop.permute.xlu0 %678
    %682 = vset.pattern.permute.xlu0 0
    %683 = vperm.xlu0 %682, %v494
    %v684 = vpop.permute.xlu0 %683
    %687 = vset.pattern.permute.xlu0 0
    %688 = vperm.xlu0 %687, %v495
    %v689 = vpop.permute.xlu0 %688
    %692 = vset.pattern.permute.xlu0 0
    %693 = vperm.xlu0 %692, %v496
    %v694 = vpop.permute.xlu0 %693
    %697 = vset.pattern.permute.xlu0 0
    %698 = vperm.xlu0 %697, %v497
    %v699 = vpop.permute.xlu0 %698
    %702 = vset.pattern.permute.xlu0 0
    %703 = vperm.xlu0 %702, %v498
    %v704 = vpop.permute.xlu0 %703
    %707 = vset.pattern.permute.xlu0 0
    %708 = vperm.xlu0 %707, %v499
    %v709 = vpop.permute.xlu0 %708
    %712 = vset.pattern.permute.xlu0 0
    %713 = vperm.xlu0 %712, %v500
    %v714 = vpop.permute.xlu0 %713
    %717 = vset.pattern.permute.xlu0 0
    %718 = vperm.xlu0 %717, %v501
    %v719 = vpop.permute.xlu0 %718
    %722 = vset.pattern.permute.xlu0 0
    %723 = vperm.xlu0 %722, %v502
    %v724 = vpop.permute.xlu0 %723
    %727 = vset.pattern.permute.xlu0 0
    %728 = vperm.xlu0 %727, %v503
    %v729 = vpop.permute.xlu0 %728
    %732 = vset.pattern.permute.xlu0 0
    %733 = vperm.xlu0 %732, %v504
    %v734 = vpop.permute.xlu0 %733
    %v736 = vperm.slane %v505, 0
    %v737 = vmul.f32 %v509, %v736
    %v738 = vmul.f32 %v514, %v736
    %v739 = vmul.f32 %v519, %v736
    %v740 = vmul.f32 %v524, %v736
    %v741 = vmul.f32 %v529, %v736
    %v742 = vmul.f32 %v534, %v736
    %v743 = vmul.f32 %v539, %v736
    %v744 = vmul.f32 %v544, %v736
    %v745 = vmul.f32 %v549, %v736
    %v746 = vmul.f32 %v554, %v736
    %v747 = vmul.f32 %v559, %v736
    %v748 = vmul.f32 %v564, %v736
    %v749 = vmul.f32 %v569, %v736
    %v750 = vmul.f32 %v574, %v736
    %v751 = vmul.f32 %v579, %v736
    %v752 = vmul.f32 %v584, %v736
    %v753 = vmul.f32 %v589, %v736
    %v754 = vmul.f32 %v594, %v736
    %v755 = vmul.f32 %v599, %v736
    %v756 = vmul.f32 %v604, %v736
    %v757 = vmul.f32 %v609, %v736
    %v758 = vmul.f32 %v614, %v736
    %v759 = vmul.f32 %v619, %v736
    %v760 = vmul.f32 %v624, %v736
    %v761 = vmul.f32 %v629, %v736
    %v762 = vmul.f32 %v634, %v736
    %v763 = vmul.f32 %v639, %v736
    %v764 = vmul.f32 %v644, %v736
    %v765 = vmul.f32 %v649, %v736
    %v766 = vmul.f32 %v654, %v736
    %v767 = vmul.f32 %v659, %v736
    %v768 = vmul.f32 %v664, %v736
    %v769 = vmul.f32 %v669, %v736
    %v770 = vmul.f32 %v674, %v736
    %v771 = vmul.f32 %v679, %v736
    %v772 = vmul.f32 %v684, %v736
    %v773 = vmul.f32 %v689, %v736
    %v774 = vmul.f32 %v694, %v736
    %v775 = vmul.f32 %v699, %v736
    %v776 = vmul.f32 %v704, %v736
    %v777 = vmul.f32 %v709, %v736
    %v778 = vmul.f32 %v714, %v736
    %v779 = vmul.f32 %v719, %v736
    %v780 = vmul.f32 %v724, %v736
    %v781 = vmul.f32 %v729, %v736
    %v782 = vmul.f32 %v734, %v736
    %v783 = vadd.f32 %v413, %v737
    %v784 = vadd.f32 %v414, %v738
    %v785 = vadd.f32 %v415, %v739
    %v786 = vadd.f32 %v416, %v740
    %v787 = vadd.f32 %v417, %v741
    %v788 = vadd.f32 %v418, %v742
    %v789 = vadd.f32 %v419, %v743
    %v790 = vadd.f32 %v420, %v744
    %v791 = vadd.f32 %v421, %v745
    %v792 = vadd.f32 %v422, %v746
    %v793 = vadd.f32 %v423, %v747
    %v794 = vadd.f32 %v424, %v748
    %v795 = vadd.f32 %v425, %v749
    %v796 = vadd.f32 %v426, %v750
    %v797 = vadd.f32 %v427, %v751
    %v798 = vadd.f32 %v428, %v752
    %v799 = vadd.f32 %v429, %v753
    %v800 = vadd.f32 %v430, %v754
    %v801 = vadd.f32 %v431, %v755
    %v802 = vadd.f32 %v432, %v756
    %v803 = vadd.f32 %v433, %v757
    %v804 = vadd.f32 %v434, %v758
    %v805 = vadd.f32 %v435, %v759
    %v806 = vadd.f32 %v436, %v760
    %v807 = vadd.f32 %v437, %v761
    %v808 = vadd.f32 %v438, %v762
    %v809 = vadd.f32 %v439, %v763
    %v810 = vadd.f32 %v440, %v764
    %v811 = vadd.f32 %v441, %v765
    %v812 = vadd.f32 %v442, %v766
    %v813 = vadd.f32 %v443, %v767
    %v814 = vadd.f32 %v444, %v768
    %v815 = vadd.f32 %v445, %v769
    %v816 = vadd.f32 %v446, %v770
    %v817 = vadd.f32 %v447, %v771
    %v818 = vadd.f32 %v448, %v772
    %v819 = vadd.f32 %v449, %v773
    %v820 = vadd.f32 %v450, %v774
    %v821 = vadd.f32 %v451, %v775
    %v822 = vadd.f32 %v452, %v776
    %v823 = vadd.f32 %v453, %v777
    %v824 = vadd.f32 %v454, %v778
    %v825 = vadd.f32 %v455, %v779
    %v826 = vadd.f32 %v456, %v780
    %v827 = vadd.f32 %v457, %v781
    %v828 = vadd.f32 %v458, %v782
    %v829 = vld [vmem:[%s0 + $0x2] sm:$0xff]
    %v830 = vld [vmem:[%s0 + $0xa] sm:$0xff]
    %v831 = vld [vmem:[%s0 + $0x12] sm:$0xff]
    %v832 = vld [vmem:[%s0 + $0x1a] sm:$0xff]
    %v833 = vld [vmem:[%s0 + $0x22] sm:$0xff]
    %v834 = vld [vmem:[%s0 + $0x2a] sm:$0xff]
    %v835 = vld [vmem:[%s0 + $0x32] sm:$0xff]
    %v836 = vld [vmem:[%s0 + $0x3a] sm:$0xff]
    %v837 = vld [vmem:[%s0 + $0x42] sm:$0xff]
    %v838 = vld [vmem:[%s0 + $0x4a] sm:$0xff]
    %v839 = vld [vmem:[%s0 + $0x52] sm:$0xff]
    %v840 = vld [vmem:[%s0 + $0x5a] sm:$0xff]
    %v841 = vld [vmem:[%s0 + $0x62] sm:$0xff]
    %v842 = vld [vmem:[%s0 + $0x6a] sm:$0xff]
    %v843 = vld [vmem:[%s0 + $0x72] sm:$0xff]
    %v844 = vld [vmem:[%s0 + $0x7a] sm:$0xff]
    %v845 = vld [vmem:[%s0 + $0x82] sm:$0xff]
    %v846 = vld [vmem:[%s0 + $0x8a] sm:$0xff]
    %v847 = vld [vmem:[%s0 + $0x92] sm:$0xff]
    %v848 = vld [vmem:[%s0 + $0x9a] sm:$0xff]
    %v849 = vld [vmem:[%s0 + $0xa2] sm:$0xff]
    %v850 = vld [vmem:[%s0 + $0xaa] sm:$0xff]
    %v851 = vld [vmem:[%s0 + $0xb2] sm:$0xff]
    %v852 = vld [vmem:[%s0 + $0xba] sm:$0xff]
    %v853 = vld [vmem:[%s0 + $0xc2] sm:$0xff]
    %v854 = vld [vmem:[%s0 + $0xca] sm:$0xff]
    %v855 = vld [vmem:[%s0 + $0xd2] sm:$0xff]
    %v856 = vld [vmem:[%s0 + $0xda] sm:$0xff]
    %v857 = vld [vmem:[%s0 + $0xe2] sm:$0xff]
    %v858 = vld [vmem:[%s0 + $0xea] sm:$0xff]
    %v859 = vld [vmem:[%s0 + $0xf2] sm:$0xff]
    %v860 = vld [vmem:[%s0 + $0xfa] sm:$0xff]
    %v861 = vld [vmem:[%s0 + $0x102] sm:$0xff]
    %v862 = vld [vmem:[%s0 + $0x10a] sm:$0xff]
    %v863 = vld [vmem:[%s0 + $0x112] sm:$0xff]
    %v864 = vld [vmem:[%s0 + $0x11a] sm:$0xff]
    %v865 = vld [vmem:[%s0 + $0x122] sm:$0xff]
    %v866 = vld [vmem:[%s0 + $0x12a] sm:$0xff]
    %v867 = vld [vmem:[%s0 + $0x132] sm:$0xff]
    %v868 = vld [vmem:[%s0 + $0x13a] sm:$0xff]
    %v869 = vld [vmem:[%s0 + $0x142] sm:$0xff]
    %v870 = vld [vmem:[%s0 + $0x14a] sm:$0xff]
    %v871 = vld [vmem:[%s0 + $0x152] sm:$0xff]
    %v872 = vld [vmem:[%s0 + $0x15a] sm:$0xff]
    %v873 = vld [vmem:[%s0 + $0x162] sm:$0xff]
    %v874 = vld [vmem:[%s0 + $0x16a] sm:$0x3]
    %v875 = vld [vmem:[%s1 + $0x2] sm:$0x1]
    %877 = vset.pattern.permute.xlu0 0
    %878 = vperm.xlu0 %877, %v829
    %v879 = vpop.permute.xlu0 %878
    %882 = vset.pattern.permute.xlu0 0
    %883 = vperm.xlu0 %882, %v830
    %v884 = vpop.permute.xlu0 %883
    %887 = vset.pattern.permute.xlu0 0
    %888 = vperm.xlu0 %887, %v831
    %v889 = vpop.permute.xlu0 %888
    %892 = vset.pattern.permute.xlu0 0
    %893 = vperm.xlu0 %892, %v832
    %v894 = vpop.permute.xlu0 %893
    %897 = vset.pattern.permute.xlu0 0
    %898 = vperm.xlu0 %897, %v833
    %v899 = vpop.permute.xlu0 %898
    %902 = vset.pattern.permute.xlu0 0
    %903 = vperm.xlu0 %902, %v834
    %v904 = vpop.permute.xlu0 %903
    %907 = vset.pattern.permute.xlu0 0
    %908 = vperm.xlu0 %907, %v835
    %v909 = vpop.permute.xlu0 %908
    %912 = vset.pattern.permute.xlu0 0
    %913 = vperm.xlu0 %912, %v836
    %v914 = vpop.permute.xlu0 %913
    %917 = vset.pattern.permute.xlu0 0
    %918 = vperm.xlu0 %917, %v837
    %v919 = vpop.permute.xlu0 %918
    %922 = vset.pattern.permute.xlu0 0
    %923 = vperm.xlu0 %922, %v838
    %v924 = vpop.permute.xlu0 %923
    %927 = vset.pattern.permute.xlu0 0
    %928 = vperm.xlu0 %927, %v839
    %v929 = vpop.permute.xlu0 %928
    %932 = vset.pattern.permute.xlu0 0
    %933 = vperm.xlu0 %932, %v840
    %v934 = vpop.permute.xlu0 %933
    %937 = vset.pattern.permute.xlu0 0
    %938 = vperm.xlu0 %937, %v841
    %v939 = vpop.permute.xlu0 %938
    %942 = vset.pattern.permute.xlu0 0
    %943 = vperm.xlu0 %942, %v842
    %v944 = vpop.permute.xlu0 %943
    %947 = vset.pattern.permute.xlu0 0
    %948 = vperm.xlu0 %947, %v843
    %v949 = vpop.permute.xlu0 %948
    %952 = vset.pattern.permute.xlu0 0
    %953 = vperm.xlu0 %952, %v844
    %v954 = vpop.permute.xlu0 %953
    %957 = vset.pattern.permute.xlu0 0
    %958 = vperm.xlu0 %957, %v845
    %v959 = vpop.permute.xlu0 %958
    %962 = vset.pattern.permute.xlu0 0
    %963 = vperm.xlu0 %962, %v846
    %v964 = vpop.permute.xlu0 %963
    %967 = vset.pattern.permute.xlu0 0
    %968 = vperm.xlu0 %967, %v847
    %v969 = vpop.permute.xlu0 %968
    %972 = vset.pattern.permute.xlu0 0
    %973 = vperm.xlu0 %972, %v848
    %v974 = vpop.permute.xlu0 %973
    %977 = vset.pattern.permute.xlu0 0
    %978 = vperm.xlu0 %977, %v849
    %v979 = vpop.permute.xlu0 %978
    %982 = vset.pattern.permute.xlu0 0
    %983 = vperm.xlu0 %982, %v850
    %v984 = vpop.permute.xlu0 %983
    %987 = vset.pattern.permute.xlu0 0
    %988 = vperm.xlu0 %987, %v851
    %v989 = vpop.permute.xlu0 %988
    %992 = vset.pattern.permute.xlu0 0
    %993 = vperm.xlu0 %992, %v852
    %v994 = vpop.permute.xlu0 %993
    %997 = vset.pattern.permute.xlu0 0
    %998 = vperm.xlu0 %997, %v853
    %v999 = vpop.permute.xlu0 %998
    %1002 = vset.pattern.permute.xlu0 0
    %1003 = vperm.xlu0 %1002, %v854
    %v1004 = vpop.permute.xlu0 %1003
    %1007 = vset.pattern.permute.xlu0 0
    %1008 = vperm.xlu0 %1007, %v855
    %v1009 = vpop.permute.xlu0 %1008
    %1012 = vset.pattern.permute.xlu0 0
    %1013 = vperm.xlu0 %1012, %v856
    %v1014 = vpop.permute.xlu0 %1013
    %1017 = vset.pattern.permute.xlu0 0
    %1018 = vperm.xlu0 %1017, %v857
    %v1019 = vpop.permute.xlu0 %1018
    %1022 = vset.pattern.permute.xlu0 0
    %1023 = vperm.xlu0 %1022, %v858
    %v1024 = vpop.permute.xlu0 %1023
    %1027 = vset.pattern.permute.xlu0 0
    %1028 = vperm.xlu0 %1027, %v859
    %v1029 = vpop.permute.xlu0 %1028
    %1032 = vset.pattern.permute.xlu0 0
    %1033 = vperm.xlu0 %1032, %v860
    %v1034 = vpop.permute.xlu0 %1033
    %1037 = vset.pattern.permute.xlu0 0
    %1038 = vperm.xlu0 %1037, %v861
    %v1039 = vpop.permute.xlu0 %1038
    %1042 = vset.pattern.permute.xlu0 0
    %1043 = vperm.xlu0 %1042, %v862
    %v1044 = vpop.permute.xlu0 %1043
    %1047 = vset.pattern.permute.xlu0 0
    %1048 = vperm.xlu0 %1047, %v863
    %v1049 = vpop.permute.xlu0 %1048
    %1052 = vset.pattern.permute.xlu0 0
    %1053 = vperm.xlu0 %1052, %v864
    %v1054 = vpop.permute.xlu0 %1053
    %1057 = vset.pattern.permute.xlu0 0
    %1058 = vperm.xlu0 %1057, %v865
    %v1059 = vpop.permute.xlu0 %1058
    %1062 = vset.pattern.permute.xlu0 0
    %1063 = vperm.xlu0 %1062, %v866
    %v1064 = vpop.permute.xlu0 %1063
    %1067 = vset.pattern.permute.xlu0 0
    %1068 = vperm.xlu0 %1067, %v867
    %v1069 = vpop.permute.xlu0 %1068
    %1072 = vset.pattern.permute.xlu0 0
    %1073 = vperm.xlu0 %1072, %v868
    %v1074 = vpop.permute.xlu0 %1073
    %1077 = vset.pattern.permute.xlu0 0
    %1078 = vperm.xlu0 %1077, %v869
    %v1079 = vpop.permute.xlu0 %1078
    %1082 = vset.pattern.permute.xlu0 0
    %1083 = vperm.xlu0 %1082, %v870
    %v1084 = vpop.permute.xlu0 %1083
    %1087 = vset.pattern.permute.xlu0 0
    %1088 = vperm.xlu0 %1087, %v871
    %v1089 = vpop.permute.xlu0 %1088
    %1092 = vset.pattern.permute.xlu0 0
    %1093 = vperm.xlu0 %1092, %v872
    %v1094 = vpop.permute.xlu0 %1093
    %1097 = vset.pattern.permute.xlu0 0
    %1098 = vperm.xlu0 %1097, %v873
    %v1099 = vpop.permute.xlu0 %1098
    %1102 = vset.pattern.permute.xlu0 0
    %1103 = vperm.xlu0 %1102, %v874
    %v1104 = vpop.permute.xlu0 %1103
    %v1106 = vperm.slane %v875, 0
    %v1107 = vmul.f32 %v879, %v1106
    %v1108 = vmul.f32 %v884, %v1106
    %v1109 = vmul.f32 %v889, %v1106
    %v1110 = vmul.f32 %v894, %v1106
    %v1111 = vmul.f32 %v899, %v1106
    %v1112 = vmul.f32 %v904, %v1106
    %v1113 = vmul.f32 %v909, %v1106
    %v1114 = vmul.f32 %v914, %v1106
    %v1115 = vmul.f32 %v919, %v1106
    %v1116 = vmul.f32 %v924, %v1106
    %v1117 = vmul.f32 %v929, %v1106
    %v1118 = vmul.f32 %v934, %v1106
    %v1119 = vmul.f32 %v939, %v1106
    %v1120 = vmul.f32 %v944, %v1106
    %v1121 = vmul.f32 %v949, %v1106
    %v1122 = vmul.f32 %v954, %v1106
    %v1123 = vmul.f32 %v959, %v1106
    %v1124 = vmul.f32 %v964, %v1106
    %v1125 = vmul.f32 %v969, %v1106
    %v1126 = vmul.f32 %v974, %v1106
    %v1127 = vmul.f32 %v979, %v1106
    %v1128 = vmul.f32 %v984, %v1106
    %v1129 = vmul.f32 %v989, %v1106
    %v1130 = vmul.f32 %v994, %v1106
    %v1131 = vmul.f32 %v999, %v1106
    %v1132 = vmul.f32 %v1004, %v1106
    %v1133 = vmul.f32 %v1009, %v1106
    %v1134 = vmul.f32 %v1014, %v1106
    %v1135 = vmul.f32 %v1019, %v1106
    %v1136 = vmul.f32 %v1024, %v1106
    %v1137 = vmul.f32 %v1029, %v1106
    %v1138 = vmul.f32 %v1034, %v1106
    %v1139 = vmul.f32 %v1039, %v1106
    %v1140 = vmul.f32 %v1044, %v1106
    %v1141 = vmul.f32 %v1049, %v1106
    %v1142 = vmul.f32 %v1054, %v1106
    %v1143 = vmul.f32 %v1059, %v1106
    %v1144 = vmul.f32 %v1064, %v1106
    %v1145 = vmul.f32 %v1069, %v1106
    %v1146 = vmul.f32 %v1074, %v1106
    %v1147 = vmul.f32 %v1079, %v1106
    %v1148 = vmul.f32 %v1084, %v1106
    %v1149 = vmul.f32 %v1089, %v1106
    %v1150 = vmul.f32 %v1094, %v1106
    %v1151 = vmul.f32 %v1099, %v1106
    %v1152 = vmul.f32 %v1104, %v1106
    %v1153 = vadd.f32 %v783, %v1107
    %v1154 = vadd.f32 %v784, %v1108
    %v1155 = vadd.f32 %v785, %v1109
    %v1156 = vadd.f32 %v786, %v1110
    %v1157 = vadd.f32 %v787, %v1111
    %v1158 = vadd.f32 %v788, %v1112
    %v1159 = vadd.f32 %v789, %v1113
    %v1160 = vadd.f32 %v790, %v1114
    %v1161 = vadd.f32 %v791, %v1115
    %v1162 = vadd.f32 %v792, %v1116
    %v1163 = vadd.f32 %v793, %v1117
    %v1164 = vadd.f32 %v794, %v1118
    %v1165 = vadd.f32 %v795, %v1119
    %v1166 = vadd.f32 %v796, %v1120
    %v1167 = vadd.f32 %v797, %v1121
    %v1168 = vadd.f32 %v798, %v1122
    %v1169 = vadd.f32 %v799, %v1123
    %v1170 = vadd.f32 %v800, %v1124
    %v1171 = vadd.f32 %v801, %v1125
    %v1172 = vadd.f32 %v802, %v1126
    %v1173 = vadd.f32 %v803, %v1127
    %v1174 = vadd.f32 %v804, %v1128
    %v1175 = vadd.f32 %v805, %v1129
    %v1176 = vadd.f32 %v806, %v1130
    %v1177 = vadd.f32 %v807, %v1131
    %v1178 = vadd.f32 %v808, %v1132
    %v1179 = vadd.f32 %v809, %v1133
    %v1180 = vadd.f32 %v810, %v1134
    %v1181 = vadd.f32 %v811, %v1135
    %v1182 = vadd.f32 %v812, %v1136
    %v1183 = vadd.f32 %v813, %v1137
    %v1184 = vadd.f32 %v814, %v1138
    %v1185 = vadd.f32 %v815, %v1139
    %v1186 = vadd.f32 %v816, %v1140
    %v1187 = vadd.f32 %v817, %v1141
    %v1188 = vadd.f32 %v818, %v1142
    %v1189 = vadd.f32 %v819, %v1143
    %v1190 = vadd.f32 %v820, %v1144
    %v1191 = vadd.f32 %v821, %v1145
    %v1192 = vadd.f32 %v822, %v1146
    %v1193 = vadd.f32 %v823, %v1147
    %v1194 = vadd.f32 %v824, %v1148
    %v1195 = vadd.f32 %v825, %v1149
    %v1196 = vadd.f32 %v826, %v1150
    %v1197 = vadd.f32 %v827, %v1151
    %v1198 = vadd.f32 %v828, %v1152
    %v1199 = vld [vmem:[%s0 + $0xe] sm:$0xff]
    %v1200 = vld [vmem:[%s0 + $0x16] sm:$0xff]
    %v1201 = vld [vmem:[%s0 + $0x1e] sm:$0xff]
    %v1202 = vld [vmem:[%s0 + $0x26] sm:$0xff]
    %v1203 = vld [vmem:[%s0 + $0x2e] sm:$0xff]
    %v1204 = vld [vmem:[%s0 + $0x36] sm:$0xff]
    %v1205 = vld [vmem:[%s0 + $0x3e] sm:$0xff]
    %v1206 = vld [vmem:[%s0 + $0x46] sm:$0xff]
    %v1207 = vld [vmem:[%s0 + $0x4e] sm:$0xff]
    %v1208 = vld [vmem:[%s0 + $0x56] sm:$0xff]
    %v1209 = vld [vmem:[%s0 + $0x5e] sm:$0xff]
    %v1210 = vld [vmem:[%s0 + $0x66] sm:$0xff]
    %v1211 = vld [vmem:[%s0 + $0x6e] sm:$0xff]
    %v1212 = vld [vmem:[%s0 + $0x76] sm:$0xff]
    %v1213 = vld [vmem:[%s0 + $0x7e] sm:$0xff]
    %v1214 = vld [vmem:[%s0 + $0x86] sm:$0xff]
    %v1215 = vld [vmem:[%s0 + $0x8e] sm:$0xff]
    %v1216 = vld [vmem:[%s0 + $0x96] sm:$0xff]
    %v1217 = vld [vmem:[%s0 + $0x9e] sm:$0xff]
    %v1218 = vld [vmem:[%s0 + $0xa6] sm:$0xff]
    %v1219 = vld [vmem:[%s0 + $0xae] sm:$0xff]
    %v1220 = vld [vmem:[%s0 + $0xb6] sm:$0xff]
    %v1221 = vld [vmem:[%s0 + $0xbe] sm:$0xff]
    %v1222 = vld [vmem:[%s0 + $0xc6] sm:$0xff]
    %v1223 = vld [vmem:[%s0 + $0xce] sm:$0xff]
    %v1224 = vld [vmem:[%s0 + $0xd6] sm:$0xff]
    %v1225 = vld [vmem:[%s0 + $0xde] sm:$0xff]
    %v1226 = vld [vmem:[%s0 + $0xe6] sm:$0xff]
    %v1227 = vld [vmem:[%s0 + $0xee] sm:$0xff]
    %v1228 = vld [vmem:[%s0 + $0xf6] sm:$0xff]
    %v1229 = vld [vmem:[%s0 + $0xfe] sm:$0xff]
    %v1230 = vld [vmem:[%s0 + $0x106] sm:$0xff]
    %v1231 = vld [vmem:[%s0 + $0x10e] sm:$0xff]
    %v1232 = vld [vmem:[%s0 + $0x116] sm:$0xff]
    %v1233 = vld [vmem:[%s0 + $0x11e] sm:$0xff]
    %v1234 = vld [vmem:[%s0 + $0x126] sm:$0xff]
    %v1235 = vld [vmem:[%s0 + $0x12e] sm:$0xff]
    %v1236 = vld [vmem:[%s0 + $0x136] sm:$0xff]
    %v1237 = vld [vmem:[%s0 + $0x13e] sm:$0xff]
    %v1238 = vld [vmem:[%s0 + $0x146] sm:$0xff]
    %v1239 = vld [vmem:[%s0 + $0x14e] sm:$0xff]
    %v1240 = vld [vmem:[%s0 + $0x156] sm:$0xff]
    %v1241 = vld [vmem:[%s0 + $0x15e] sm:$0xff]
    %v1242 = vld [vmem:[%s0 + $0x166] sm:$0xff]
    %v1243 = vld [vmem:[%s0 + $0x16e] sm:$0xff]
    %v1244 = vld [vmem:[%s0 + $0x176] sm:$0x3]
    %v1245 = vld [vmem:[%s1 + $0x3] sm:$0x1]
    %1247 = vset.pattern.permute.xlu0 0
    %1248 = vperm.xlu0 %1247, %v1199
    %v1249 = vpop.permute.xlu0 %1248
    %1252 = vset.pattern.permute.xlu0 0
    %1253 = vperm.xlu0 %1252, %v1200
    %v1254 = vpop.permute.xlu0 %1253
    %1257 = vset.pattern.permute.xlu0 0
    %1258 = vperm.xlu0 %1257, %v1201
    %v1259 = vpop.permute.xlu0 %1258
    %1262 = vset.pattern.permute.xlu0 0
    %1263 = vperm.xlu0 %1262, %v1202
    %v1264 = vpop.permute.xlu0 %1263
    %1267 = vset.pattern.permute.xlu0 0
    %1268 = vperm.xlu0 %1267, %v1203
    %v1269 = vpop.permute.xlu0 %1268
    %1272 = vset.pattern.permute.xlu0 0
    %1273 = vperm.xlu0 %1272, %v1204
    %v1274 = vpop.permute.xlu0 %1273
    %1277 = vset.pattern.permute.xlu0 0
    %1278 = vperm.xlu0 %1277, %v1205
    %v1279 = vpop.permute.xlu0 %1278
    %1282 = vset.pattern.permute.xlu0 0
    %1283 = vperm.xlu0 %1282, %v1206
    %v1284 = vpop.permute.xlu0 %1283
    %1287 = vset.pattern.permute.xlu0 0
    %1288 = vperm.xlu0 %1287, %v1207
    %v1289 = vpop.permute.xlu0 %1288
    %1292 = vset.pattern.permute.xlu0 0
    %1293 = vperm.xlu0 %1292, %v1208
    %v1294 = vpop.permute.xlu0 %1293
    %1297 = vset.pattern.permute.xlu0 0
    %1298 = vperm.xlu0 %1297, %v1209
    %v1299 = vpop.permute.xlu0 %1298
    %1302 = vset.pattern.permute.xlu0 0
    %1303 = vperm.xlu0 %1302, %v1210
    %v1304 = vpop.permute.xlu0 %1303
    %1307 = vset.pattern.permute.xlu0 0
    %1308 = vperm.xlu0 %1307, %v1211
    %v1309 = vpop.permute.xlu0 %1308
    %1312 = vset.pattern.permute.xlu0 0
    %1313 = vperm.xlu0 %1312, %v1212
    %v1314 = vpop.permute.xlu0 %1313
    %1317 = vset.pattern.permute.xlu0 0
    %1318 = vperm.xlu0 %1317, %v1213
    %v1319 = vpop.permute.xlu0 %1318
    %1322 = vset.pattern.permute.xlu0 0
    %1323 = vperm.xlu0 %1322, %v1214
    %v1324 = vpop.permute.xlu0 %1323
    %1327 = vset.pattern.permute.xlu0 0
    %1328 = vperm.xlu0 %1327, %v1215
    %v1329 = vpop.permute.xlu0 %1328
    %1332 = vset.pattern.permute.xlu0 0
    %1333 = vperm.xlu0 %1332, %v1216
    %v1334 = vpop.permute.xlu0 %1333
    %1337 = vset.pattern.permute.xlu0 0
    %1338 = vperm.xlu0 %1337, %v1217
    %v1339 = vpop.permute.xlu0 %1338
    %1342 = vset.pattern.permute.xlu0 0
    %1343 = vperm.xlu0 %1342, %v1218
    %v1344 = vpop.permute.xlu0 %1343
    %1347 = vset.pattern.permute.xlu0 0
    %1348 = vperm.xlu0 %1347, %v1219
    %v1349 = vpop.permute.xlu0 %1348
    %1352 = vset.pattern.permute.xlu0 0
    %1353 = vperm.xlu0 %1352, %v1220
    %v1354 = vpop.permute.xlu0 %1353
    %1357 = vset.pattern.permute.xlu0 0
    %1358 = vperm.xlu0 %1357, %v1221
    %v1359 = vpop.permute.xlu0 %1358
    %1362 = vset.pattern.permute.xlu0 0
    %1363 = vperm.xlu0 %1362, %v1222
    %v1364 = vpop.permute.xlu0 %1363
    %1367 = vset.pattern.permute.xlu0 0
    %1368 = vperm.xlu0 %1367, %v1223
    %v1369 = vpop.permute.xlu0 %1368
    %1372 = vset.pattern.permute.xlu0 0
    %1373 = vperm.xlu0 %1372, %v1224
    %v1374 = vpop.permute.xlu0 %1373
    %1377 = vset.pattern.permute.xlu0 0
    %1378 = vperm.xlu0 %1377, %v1225
    %v1379 = vpop.permute.xlu0 %1378
    %1382 = vset.pattern.permute.xlu0 0
    %1383 = vperm.xlu0 %1382, %v1226
    %v1384 = vpop.permute.xlu0 %1383
    %1387 = vset.pattern.permute.xlu0 0
    %1388 = vperm.xlu0 %1387, %v1227
    %v1389 = vpop.permute.xlu0 %1388
    %1392 = vset.pattern.permute.xlu0 0
    %1393 = vperm.xlu0 %1392, %v1228
    %v1394 = vpop.permute.xlu0 %1393
    %1397 = vset.pattern.permute.xlu0 0
    %1398 = vperm.xlu0 %1397, %v1229
    %v1399 = vpop.permute.xlu0 %1398
    %1402 = vset.pattern.permute.xlu0 0
    %1403 = vperm.xlu0 %1402, %v1230
    %v1404 = vpop.permute.xlu0 %1403
    %1407 = vset.pattern.permute.xlu0 0
    %1408 = vperm.xlu0 %1407, %v1231
    %v1409 = vpop.permute.xlu0 %1408
    %1412 = vset.pattern.permute.xlu0 0
    %1413 = vperm.xlu0 %1412, %v1232
    %v1414 = vpop.permute.xlu0 %1413
    %1417 = vset.pattern.permute.xlu0 0
    %1418 = vperm.xlu0 %1417, %v1233
    %v1419 = vpop.permute.xlu0 %1418
    %1422 = vset.pattern.permute.xlu0 0
    %1423 = vperm.xlu0 %1422, %v1234
    %v1424 = vpop.permute.xlu0 %1423
    %1427 = vset.pattern.permute.xlu0 0
    %1428 = vperm.xlu0 %1427, %v1235
    %v1429 = vpop.permute.xlu0 %1428
    %1432 = vset.pattern.permute.xlu0 0
    %1433 = vperm.xlu0 %1432, %v1236
    %v1434 = vpop.permute.xlu0 %1433
    %1437 = vset.pattern.permute.xlu0 0
    %1438 = vperm.xlu0 %1437, %v1237
    %v1439 = vpop.permute.xlu0 %1438
    %1442 = vset.pattern.permute.xlu0 0
    %1443 = vperm.xlu0 %1442, %v1238
    %v1444 = vpop.permute.xlu0 %1443
    %1447 = vset.pattern.permute.xlu0 0
    %1448 = vperm.xlu0 %1447, %v1239
    %v1449 = vpop.permute.xlu0 %1448
    %1452 = vset.pattern.permute.xlu0 0
    %1453 = vperm.xlu0 %1452, %v1240
    %v1454 = vpop.permute.xlu0 %1453
    %1457 = vset.pattern.permute.xlu0 0
    %1458 = vperm.xlu0 %1457, %v1241
    %v1459 = vpop.permute.xlu0 %1458
    %1462 = vset.pattern.permute.xlu0 0
    %1463 = vperm.xlu0 %1462, %v1242
    %v1464 = vpop.permute.xlu0 %1463
    %1467 = vset.pattern.permute.xlu0 0
    %1468 = vperm.xlu0 %1467, %v1243
    %v1469 = vpop.permute.xlu0 %1468
    %1472 = vset.pattern.permute.xlu0 0
    %1473 = vperm.xlu0 %1472, %v1244
    %v1474 = vpop.permute.xlu0 %1473
    %v1476 = vperm.slane %v1245, 0
    %v1477 = vmul.f32 %v1249, %v1476
    %v1478 = vmul.f32 %v1254, %v1476
    %v1479 = vmul.f32 %v1259, %v1476
    %v1480 = vmul.f32 %v1264, %v1476
    %v1481 = vmul.f32 %v1269, %v1476
    %v1482 = vmul.f32 %v1274, %v1476
    %v1483 = vmul.f32 %v1279, %v1476
    %v1484 = vmul.f32 %v1284, %v1476
    %v1485 = vmul.f32 %v1289, %v1476
    %v1486 = vmul.f32 %v1294, %v1476
    %v1487 = vmul.f32 %v1299, %v1476
    %v1488 = vmul.f32 %v1304, %v1476
    %v1489 = vmul.f32 %v1309, %v1476
    %v1490 = vmul.f32 %v1314, %v1476
    %v1491 = vmul.f32 %v1319, %v1476
    %v1492 = vmul.f32 %v1324, %v1476
    %v1493 = vmul.f32 %v1329, %v1476
    %v1494 = vmul.f32 %v1334, %v1476
    %v1495 = vmul.f32 %v1339, %v1476
    %v1496 = vmul.f32 %v1344, %v1476
    %v1497 = vmul.f32 %v1349, %v1476
    %v1498 = vmul.f32 %v1354, %v1476
    %v1499 = vmul.f32 %v1359, %v1476
    %v1500 = vmul.f32 %v1364, %v1476
    %v1501 = vmul.f32 %v1369, %v1476
    %v1502 = vmul.f32 %v1374, %v1476
    %v1503 = vmul.f32 %v1379, %v1476
    %v1504 = vmul.f32 %v1384, %v1476
    %v1505 = vmul.f32 %v1389, %v1476
    %v1506 = vmul.f32 %v1394, %v1476
    %v1507 = vmul.f32 %v1399, %v1476
    %v1508 = vmul.f32 %v1404, %v1476
    %v1509 = vmul.f32 %v1409, %v1476
    %v1510 = vmul.f32 %v1414, %v1476
    %v1511 = vmul.f32 %v1419, %v1476
    %v1512 = vmul.f32 %v1424, %v1476
    %v1513 = vmul.f32 %v1429, %v1476
    %v1514 = vmul.f32 %v1434, %v1476
    %v1515 = vmul.f32 %v1439, %v1476
    %v1516 = vmul.f32 %v1444, %v1476
    %v1517 = vmul.f32 %v1449, %v1476
    %v1518 = vmul.f32 %v1454, %v1476
    %v1519 = vmul.f32 %v1459, %v1476
    %v1520 = vmul.f32 %v1464, %v1476
    %v1521 = vmul.f32 %v1469, %v1476
    %v1522 = vmul.f32 %v1474, %v1476
    %v1523 = vadd.f32 %v1153, %v1477
    %v1524 = vadd.f32 %v1154, %v1478
    %v1525 = vadd.f32 %v1155, %v1479
    %v1526 = vadd.f32 %v1156, %v1480
    %v1527 = vadd.f32 %v1157, %v1481
    %v1528 = vadd.f32 %v1158, %v1482
    %v1529 = vadd.f32 %v1159, %v1483
    %v1530 = vadd.f32 %v1160, %v1484
    %v1531 = vadd.f32 %v1161, %v1485
    %v1532 = vadd.f32 %v1162, %v1486
    %v1533 = vadd.f32 %v1163, %v1487
    %v1534 = vadd.f32 %v1164, %v1488
    %v1535 = vadd.f32 %v1165, %v1489
    %v1536 = vadd.f32 %v1166, %v1490
    %v1537 = vadd.f32 %v1167, %v1491
    %v1538 = vadd.f32 %v1168, %v1492
    %v1539 = vadd.f32 %v1169, %v1493
    %v1540 = vadd.f32 %v1170, %v1494
    %v1541 = vadd.f32 %v1171, %v1495
    %v1542 = vadd.f32 %v1172, %v1496
    %v1543 = vadd.f32 %v1173, %v1497
    %v1544 = vadd.f32 %v1174, %v1498
    %v1545 = vadd.f32 %v1175, %v1499
    %v1546 = vadd.f32 %v1176, %v1500
    %v1547 = vadd.f32 %v1177, %v1501
    %v1548 = vadd.f32 %v1178, %v1502
    %v1549 = vadd.f32 %v1179, %v1503
    %v1550 = vadd.f32 %v1180, %v1504
    %v1551 = vadd.f32 %v1181, %v1505
    %v1552 = vadd.f32 %v1182, %v1506
    %v1553 = vadd.f32 %v1183, %v1507
    %v1554 = vadd.f32 %v1184, %v1508
    %v1555 = vadd.f32 %v1185, %v1509
    %v1556 = vadd.f32 %v1186, %v1510
    %v1557 = vadd.f32 %v1187, %v1511
    %v1558 = vadd.f32 %v1188, %v1512
    %v1559 = vadd.f32 %v1189, %v1513
    %v1560 = vadd.f32 %v1190, %v1514
    %v1561 = vadd.f32 %v1191, %v1515
    %v1562 = vadd.f32 %v1192, %v1516
    %v1563 = vadd.f32 %v1193, %v1517
    %v1564 = vadd.f32 %v1194, %v1518
    %v1565 = vadd.f32 %v1195, %v1519
    %v1566 = vadd.f32 %v1196, %v1520
    %v1567 = vadd.f32 %v1197, %v1521
    %v1568 = vadd.f32 %v1198, %v1522
    %v1569 = vld [vmem:[%s0 + $0xf] sm:$0xff]
    %v1570 = vld [vmem:[%s0 + $0x17] sm:$0xff]
    %v1571 = vld [vmem:[%s0 + $0x1f] sm:$0xff]
    %v1572 = vld [vmem:[%s0 + $0x27] sm:$0xff]
    %v1573 = vld [vmem:[%s0 + $0x2f] sm:$0xff]
    %v1574 = vld [vmem:[%s0 + $0x37] sm:$0xff]
    %v1575 = vld [vmem:[%s0 + $0x3f] sm:$0xff]
    %v1576 = vld [vmem:[%s0 + $0x47] sm:$0xff]
    %v1577 = vld [vmem:[%s0 + $0x4f] sm:$0xff]
    %v1578 = vld [vmem:[%s0 + $0x57] sm:$0xff]
    %v1579 = vld [vmem:[%s0 + $0x5f] sm:$0xff]
    %v1580 = vld [vmem:[%s0 + $0x67] sm:$0xff]
    %v1581 = vld [vmem:[%s0 + $0x6f] sm:$0xff]
    %v1582 = vld [vmem:[%s0 + $0x77] sm:$0xff]
    %v1583 = vld [vmem:[%s0 + $0x7f] sm:$0xff]
    %v1584 = vld [vmem:[%s0 + $0x87] sm:$0xff]
    %v1585 = vld [vmem:[%s0 + $0x8f] sm:$0xff]
    %v1586 = vld [vmem:[%s0 + $0x97] sm:$0xff]
    %v1587 = vld [vmem:[%s0 + $0x9f] sm:$0xff]
    %v1588 = vld [vmem:[%s0 + $0xa7] sm:$0xff]
    %v1589 = vld [vmem:[%s0 + $0xaf] sm:$0xff]
    %v1590 = vld [vmem:[%s0 + $0xb7] sm:$0xff]
    %v1591 = vld [vmem:[%s0 + $0xbf] sm:$0xff]
    %v1592 = vld [vmem:[%s0 + $0xc7] sm:$0xff]
    %v1593 = vld [vmem:[%s0 + $0xcf] sm:$0xff]
    %v1594 = vld [vmem:[%s0 + $0xd7] sm:$0xff]
    %v1595 = vld [vmem:[%s0 + $0xdf] sm:$0xff]
    %v1596 = vld [vmem:[%s0 + $0xe7] sm:$0xff]
    %v1597 = vld [vmem:[%s0 + $0xef] sm:$0xff]
    %v1598 = vld [vmem:[%s0 + $0xf7] sm:$0xff]
    %v1599 = vld [vmem:[%s0 + $0xff] sm:$0xff]
    %v1600 = vld [vmem:[%s0 + $0x107] sm:$0xff]
    %v1601 = vld [vmem:[%s0 + $0x10f] sm:$0xff]
    %v1602 = vld [vmem:[%s0 + $0x117] sm:$0xff]
    %v1603 = vld [vmem:[%s0 + $0x11f] sm:$0xff]
    %v1604 = vld [vmem:[%s0 + $0x127] sm:$0xff]
    %v1605 = vld [vmem:[%s0 + $0x12f] sm:$0xff]
    %v1606 = vld [vmem:[%s0 + $0x137] sm:$0xff]
    %v1607 = vld [vmem:[%s0 + $0x13f] sm:$0xff]
    %v1608 = vld [vmem:[%s0 + $0x147] sm:$0xff]
    %v1609 = vld [vmem:[%s0 + $0x14f] sm:$0xff]
    %v1610 = vld [vmem:[%s0 + $0x157] sm:$0xff]
    %v1611 = vld [vmem:[%s0 + $0x15f] sm:$0xff]
    %v1612 = vld [vmem:[%s0 + $0x167] sm:$0xff]
    %v1613 = vld [vmem:[%s0 + $0x16f] sm:$0xff]
    %v1614 = vld [vmem:[%s0 + $0x177] sm:$0x3]
    %v1615 = vld [vmem:[%s1 + $0x4] sm:$0x1]
    %1617 = vset.pattern.permute.xlu0 0
    %1618 = vperm.xlu0 %1617, %v1569
    %v1619 = vpop.permute.xlu0 %1618
    %1622 = vset.pattern.permute.xlu0 0
    %1623 = vperm.xlu0 %1622, %v1570
    %v1624 = vpop.permute.xlu0 %1623
    %1627 = vset.pattern.permute.xlu0 0
    %1628 = vperm.xlu0 %1627, %v1571
    %v1629 = vpop.permute.xlu0 %1628
    %1632 = vset.pattern.permute.xlu0 0
    %1633 = vperm.xlu0 %1632, %v1572
    %v1634 = vpop.permute.xlu0 %1633
    %1637 = vset.pattern.permute.xlu0 0
    %1638 = vperm.xlu0 %1637, %v1573
    %v1639 = vpop.permute.xlu0 %1638
    %1642 = vset.pattern.permute.xlu0 0
    %1643 = vperm.xlu0 %1642, %v1574
    %v1644 = vpop.permute.xlu0 %1643
    %1647 = vset.pattern.permute.xlu0 0
    %1648 = vperm.xlu0 %1647, %v1575
    %v1649 = vpop.permute.xlu0 %1648
    %1652 = vset.pattern.permute.xlu0 0
    %1653 = vperm.xlu0 %1652, %v1576
    %v1654 = vpop.permute.xlu0 %1653
    %1657 = vset.pattern.permute.xlu0 0
    %1658 = vperm.xlu0 %1657, %v1577
    %v1659 = vpop.permute.xlu0 %1658
    %1662 = vset.pattern.permute.xlu0 0
    %1663 = vperm.xlu0 %1662, %v1578
    %v1664 = vpop.permute.xlu0 %1663
    %1667 = vset.pattern.permute.xlu0 0
    %1668 = vperm.xlu0 %1667, %v1579
    %v1669 = vpop.permute.xlu0 %1668
    %1672 = vset.pattern.permute.xlu0 0
    %1673 = vperm.xlu0 %1672, %v1580
    %v1674 = vpop.permute.xlu0 %1673
    %1677 = vset.pattern.permute.xlu0 0
    %1678 = vperm.xlu0 %1677, %v1581
    %v1679 = vpop.permute.xlu0 %1678
    %1682 = vset.pattern.permute.xlu0 0
    %1683 = vperm.xlu0 %1682, %v1582
    %v1684 = vpop.permute.xlu0 %1683
    %1687 = vset.pattern.permute.xlu0 0
    %1688 = vperm.xlu0 %1687, %v1583
    %v1689 = vpop.permute.xlu0 %1688
    %1692 = vset.pattern.permute.xlu0 0
    %1693 = vperm.xlu0 %1692, %v1584
    %v1694 = vpop.permute.xlu0 %1693
    %1697 = vset.pattern.permute.xlu0 0
    %1698 = vperm.xlu0 %1697, %v1585
    %v1699 = vpop.permute.xlu0 %1698
    %1702 = vset.pattern.permute.xlu0 0
    %1703 = vperm.xlu0 %1702, %v1586
    %v1704 = vpop.permute.xlu0 %1703
    %1707 = vset.pattern.permute.xlu0 0
    %1708 = vperm.xlu0 %1707, %v1587
    %v1709 = vpop.permute.xlu0 %1708
    %1712 = vset.pattern.permute.xlu0 0
    %1713 = vperm.xlu0 %1712, %v1588
    %v1714 = vpop.permute.xlu0 %1713
    %1717 = vset.pattern.permute.xlu0 0
    %1718 = vperm.xlu0 %1717, %v1589
    %v1719 = vpop.permute.xlu0 %1718
    %1722 = vset.pattern.permute.xlu0 0
    %1723 = vperm.xlu0 %1722, %v1590
    %v1724 = vpop.permute.xlu0 %1723
    %1727 = vset.pattern.permute.xlu0 0
    %1728 = vperm.xlu0 %1727, %v1591
    %v1729 = vpop.permute.xlu0 %1728
    %1732 = vset.pattern.permute.xlu0 0
    %1733 = vperm.xlu0 %1732, %v1592
    %v1734 = vpop.permute.xlu0 %1733
    %1737 = vset.pattern.permute.xlu0 0
    %1738 = vperm.xlu0 %1737, %v1593
    %v1739 = vpop.permute.xlu0 %1738
    %1742 = vset.pattern.permute.xlu0 0
    %1743 = vperm.xlu0 %1742, %v1594
    %v1744 = vpop.permute.xlu0 %1743
    %1747 = vset.pattern.permute.xlu0 0
    %1748 = vperm.xlu0 %1747, %v1595
    %v1749 = vpop.permute.xlu0 %1748
    %1752 = vset.pattern.permute.xlu0 0
    %1753 = vperm.xlu0 %1752, %v1596
    %v1754 = vpop.permute.xlu0 %1753
    %1757 = vset.pattern.permute.xlu0 0
    %1758 = vperm.xlu0 %1757, %v1597
    %v1759 = vpop.permute.xlu0 %1758
    %1762 = vset.pattern.permute.xlu0 0
    %1763 = vperm.xlu0 %1762, %v1598
    %v1764 = vpop.permute.xlu0 %1763
    %1767 = vset.pattern.permute.xlu0 0
    %1768 = vperm.xlu0 %1767, %v1599
    %v1769 = vpop.permute.xlu0 %1768
    %1772 = vset.pattern.permute.xlu0 0
    %1773 = vperm.xlu0 %1772, %v1600
    %v1774 = vpop.permute.xlu0 %1773
    %1777 = vset.pattern.permute.xlu0 0
    %1778 = vperm.xlu0 %1777, %v1601
    %v1779 = vpop.permute.xlu0 %1778
    %1782 = vset.pattern.permute.xlu0 0
    %1783 = vperm.xlu0 %1782, %v1602
    %v1784 = vpop.permute.xlu0 %1783
    %1787 = vset.pattern.permute.xlu0 0
    %1788 = vperm.xlu0 %1787, %v1603
    %v1789 = vpop.permute.xlu0 %1788
    %1792 = vset.pattern.permute.xlu0 0
    %1793 = vperm.xlu0 %1792, %v1604
    %v1794 = vpop.permute.xlu0 %1793
    %1797 = vset.pattern.permute.xlu0 0
    %1798 = vperm.xlu0 %1797, %v1605
    %v1799 = vpop.permute.xlu0 %1798
    %1802 = vset.pattern.permute.xlu0 0
    %1803 = vperm.xlu0 %1802, %v1606
    %v1804 = vpop.permute.xlu0 %1803
    %1807 = vset.pattern.permute.xlu0 0
    %1808 = vperm.xlu0 %1807, %v1607
    %v1809 = vpop.permute.xlu0 %1808
    %1812 = vset.pattern.permute.xlu0 0
    %1813 = vperm.xlu0 %1812, %v1608
    %v1814 = vpop.permute.xlu0 %1813
    %1817 = vset.pattern.permute.xlu0 0
    %1818 = vperm.xlu0 %1817, %v1609
    %v1819 = vpop.permute.xlu0 %1818
    %1822 = vset.pattern.permute.xlu0 0
    %1823 = vperm.xlu0 %1822, %v1610
    %v1824 = vpop.permute.xlu0 %1823
    %1827 = vset.pattern.permute.xlu0 0
    %1828 = vperm.xlu0 %1827, %v1611
    %v1829 = vpop.permute.xlu0 %1828
    %1832 = vset.pattern.permute.xlu0 0
    %1833 = vperm.xlu0 %1832, %v1612
    %v1834 = vpop.permute.xlu0 %1833
    %1837 = vset.pattern.permute.xlu0 0
    %1838 = vperm.xlu0 %1837, %v1613
    %v1839 = vpop.permute.xlu0 %1838
    %1842 = vset.pattern.permute.xlu0 0
    %1843 = vperm.xlu0 %1842, %v1614
    %v1844 = vpop.permute.xlu0 %1843
    %v1846 = vperm.slane %v1615, 0
    %v1847 = vmul.f32 %v1619, %v1846
    %v1848 = vmul.f32 %v1624, %v1846
    %v1849 = vmul.f32 %v1629, %v1846
    %v1850 = vmul.f32 %v1634, %v1846
    %v1851 = vmul.f32 %v1639, %v1846
    %v1852 = vmul.f32 %v1644, %v1846
    %v1853 = vmul.f32 %v1649, %v1846
    %v1854 = vmul.f32 %v1654, %v1846
    %v1855 = vmul.f32 %v1659, %v1846
    %v1856 = vmul.f32 %v1664, %v1846
    %v1857 = vmul.f32 %v1669, %v1846
    %v1858 = vmul.f32 %v1674, %v1846
    %v1859 = vmul.f32 %v1679, %v1846
    %v1860 = vmul.f32 %v1684, %v1846
    %v1861 = vmul.f32 %v1689, %v1846
    %v1862 = vmul.f32 %v1694, %v1846
    %v1863 = vmul.f32 %v1699, %v1846
    %v1864 = vmul.f32 %v1704, %v1846
    %v1865 = vmul.f32 %v1709, %v1846
    %v1866 = vmul.f32 %v1714, %v1846
    %v1867 = vmul.f32 %v1719, %v1846
    %v1868 = vmul.f32 %v1724, %v1846
    %v1869 = vmul.f32 %v1729, %v1846
    %v1870 = vmul.f32 %v1734, %v1846
    %v1871 = vmul.f32 %v1739, %v1846
    %v1872 = vmul.f32 %v1744, %v1846
    %v1873 = vmul.f32 %v1749, %v1846
    %v1874 = vmul.f32 %v1754, %v1846
    %v1875 = vmul.f32 %v1759, %v1846
    %v1876 = vmul.f32 %v1764, %v1846
    %v1877 = vmul.f32 %v1769, %v1846
    %v1878 = vmul.f32 %v1774, %v1846
    %v1879 = vmul.f32 %v1779, %v1846
    %v1880 = vmul.f32 %v1784, %v1846
    %v1881 = vmul.f32 %v1789, %v1846
    %v1882 = vmul.f32 %v1794, %v1846
    %v1883 = vmul.f32 %v1799, %v1846
    %v1884 = vmul.f32 %v1804, %v1846
    %v1885 = vmul.f32 %v1809, %v1846
    %v1886 = vmul.f32 %v1814, %v1846
    %v1887 = vmul.f32 %v1819, %v1846
    %v1888 = vmul.f32 %v1824, %v1846
    %v1889 = vmul.f32 %v1829, %v1846
    %v1890 = vmul.f32 %v1834, %v1846
    %v1891 = vmul.f32 %v1839, %v1846
    %v1892 = vmul.f32 %v1844, %v1846
    %v1893 = vadd.f32 %v1523, %v1847
    %v1894 = vadd.f32 %v1524, %v1848
    %v1895 = vadd.f32 %v1525, %v1849
    %v1896 = vadd.f32 %v1526, %v1850
    %v1897 = vadd.f32 %v1527, %v1851
    %v1898 = vadd.f32 %v1528, %v1852
    %v1899 = vadd.f32 %v1529, %v1853
    %v1900 = vadd.f32 %v1530, %v1854
    %v1901 = vadd.f32 %v1531, %v1855
    %v1902 = vadd.f32 %v1532, %v1856
    %v1903 = vadd.f32 %v1533, %v1857
    %v1904 = vadd.f32 %v1534, %v1858
    %v1905 = vadd.f32 %v1535, %v1859
    %v1906 = vadd.f32 %v1536, %v1860
    %v1907 = vadd.f32 %v1537, %v1861
    %v1908 = vadd.f32 %v1538, %v1862
    %v1909 = vadd.f32 %v1539, %v1863
    %v1910 = vadd.f32 %v1540, %v1864
    %v1911 = vadd.f32 %v1541, %v1865
    %v1912 = vadd.f32 %v1542, %v1866
    %v1913 = vadd.f32 %v1543, %v1867
    %v1914 = vadd.f32 %v1544, %v1868
    %v1915 = vadd.f32 %v1545, %v1869
    %v1916 = vadd.f32 %v1546, %v1870
    %v1917 = vadd.f32 %v1547, %v1871
    %v1918 = vadd.f32 %v1548, %v1872
    %v1919 = vadd.f32 %v1549, %v1873
    %v1920 = vadd.f32 %v1550, %v1874
    %v1921 = vadd.f32 %v1551, %v1875
    %v1922 = vadd.f32 %v1552, %v1876
    %v1923 = vadd.f32 %v1553, %v1877
    %v1924 = vadd.f32 %v1554, %v1878
    %v1925 = vadd.f32 %v1555, %v1879
    %v1926 = vadd.f32 %v1556, %v1880
    %v1927 = vadd.f32 %v1557, %v1881
    %v1928 = vadd.f32 %v1558, %v1882
    %v1929 = vadd.f32 %v1559, %v1883
    %v1930 = vadd.f32 %v1560, %v1884
    %v1931 = vadd.f32 %v1561, %v1885
    %v1932 = vadd.f32 %v1562, %v1886
    %v1933 = vadd.f32 %v1563, %v1887
    %v1934 = vadd.f32 %v1564, %v1888
    %v1935 = vadd.f32 %v1565, %v1889
    %v1936 = vadd.f32 %v1566, %v1890
    %v1937 = vadd.f32 %v1567, %v1891
    %v1938 = vadd.f32 %v1568, %v1892
    %v1939 = vld [vmem:[%s0 + $0x10] sm:$0xff]
    %v1940 = vld [vmem:[%s0 + $0x18] sm:$0xff]
    %v1941 = vld [vmem:[%s0 + $0x20] sm:$0xff]
    %v1942 = vld [vmem:[%s0 + $0x28] sm:$0xff]
    %v1943 = vld [vmem:[%s0 + $0x30] sm:$0xff]
    %v1944 = vld [vmem:[%s0 + $0x38] sm:$0xff]
    %v1945 = vld [vmem:[%s0 + $0x40] sm:$0xff]
    %v1946 = vld [vmem:[%s0 + $0x48] sm:$0xff]
    %v1947 = vld [vmem:[%s0 + $0x50] sm:$0xff]
    %v1948 = vld [vmem:[%s0 + $0x58] sm:$0xff]
    %v1949 = vld [vmem:[%s0 + $0x60] sm:$0xff]
    %v1950 = vld [vmem:[%s0 + $0x68] sm:$0xff]
    %v1951 = vld [vmem:[%s0 + $0x70] sm:$0xff]
    %v1952 = vld [vmem:[%s0 + $0x78] sm:$0xff]
    %v1953 = vld [vmem:[%s0 + $0x80] sm:$0xff]
    %v1954 = vld [vmem:[%s0 + $0x88] sm:$0xff]
    %v1955 = vld [vmem:[%s0 + $0x90] sm:$0xff]
    %v1956 = vld [vmem:[%s0 + $0x98] sm:$0xff]
    %v1957 = vld [vmem:[%s0 + $0xa0] sm:$0xff]
    %v1958 = vld [vmem:[%s0 + $0xa8] sm:$0xff]
    %v1959 = vld [vmem:[%s0 + $0xb0] sm:$0xff]
    %v1960 = vld [vmem:[%s0 + $0xb8] sm:$0xff]
    %v1961 = vld [vmem:[%s0 + $0xc0] sm:$0xff]
    %v1962 = vld [vmem:[%s0 + $0xc8] sm:$0xff]
    %v1963 = vld [vmem:[%s0 + $0xd0] sm:$0xff]
    %v1964 = vld [vmem:[%s0 + $0xd8] sm:$0xff]
    %v1965 = vld [vmem:[%s0 + $0xe0] sm:$0xff]
    %v1966 = vld [vmem:[%s0 + $0xe8] sm:$0xff]
    %v1967 = vld [vmem:[%s0 + $0xf0] sm:$0xff]
    %v1968 = vld [vmem:[%s0 + $0xf8] sm:$0xff]
    %v1969 = vld [vmem:[%s0 + $0x100] sm:$0xff]
    %v1970 = vld [vmem:[%s0 + $0x108] sm:$0xff]
    %v1971 = vld [vmem:[%s0 + $0x110] sm:$0xff]
    %v1972 = vld [vmem:[%s0 + $0x118] sm:$0xff]
    %v1973 = vld [vmem:[%s0 + $0x120] sm:$0xff]
    %v1974 = vld [vmem:[%s0 + $0x128] sm:$0xff]
    %v1975 = vld [vmem:[%s0 + $0x130] sm:$0xff]
    %v1976 = vld [vmem:[%s0 + $0x138] sm:$0xff]
    %v1977 = vld [vmem:[%s0 + $0x140] sm:$0xff]
    %v1978 = vld [vmem:[%s0 + $0x148] sm:$0xff]
    %v1979 = vld [vmem:[%s0 + $0x150] sm:$0xff]
    %v1980 = vld [vmem:[%s0 + $0x158] sm:$0xff]
    %v1981 = vld [vmem:[%s0 + $0x160] sm:$0xff]
    %v1982 = vld [vmem:[%s0 + $0x168] sm:$0xff]
    %v1983 = vld [vmem:[%s0 + $0x170] sm:$0xff]
    %v1984 = vld [vmem:[%s0 + $0x178] sm:$0x3]
    %v1985 = vld [vmem:[%s1 + $0x5] sm:$0x1]
    %1987 = vset.pattern.permute.xlu0 0
    %1988 = vperm.xlu0 %1987, %v1939
    %v1989 = vpop.permute.xlu0 %1988
    %1992 = vset.pattern.permute.xlu0 0
    %1993 = vperm.xlu0 %1992, %v1940
    %v1994 = vpop.permute.xlu0 %1993
    %1997 = vset.pattern.permute.xlu0 0
    %1998 = vperm.xlu0 %1997, %v1941
    %v1999 = vpop.permute.xlu0 %1998
    %2002 = vset.pattern.permute.xlu0 0
    %2003 = vperm.xlu0 %2002, %v1942
    %v2004 = vpop.permute.xlu0 %2003
    %2007 = vset.pattern.permute.xlu0 0
    %2008 = vperm.xlu0 %2007, %v1943
    %v2009 = vpop.permute.xlu0 %2008
    %2012 = vset.pattern.permute.xlu0 0
    %2013 = vperm.xlu0 %2012, %v1944
    %v2014 = vpop.permute.xlu0 %2013
    %2017 = vset.pattern.permute.xlu0 0
    %2018 = vperm.xlu0 %2017, %v1945
    %v2019 = vpop.permute.xlu0 %2018
    %2022 = vset.pattern.permute.xlu0 0
    %2023 = vperm.xlu0 %2022, %v1946
    %v2024 = vpop.permute.xlu0 %2023
    %2027 = vset.pattern.permute.xlu0 0
    %2028 = vperm.xlu0 %2027, %v1947
    %v2029 = vpop.permute.xlu0 %2028
    %2032 = vset.pattern.permute.xlu0 0
    %2033 = vperm.xlu0 %2032, %v1948
    %v2034 = vpop.permute.xlu0 %2033
    %2037 = vset.pattern.permute.xlu0 0
    %2038 = vperm.xlu0 %2037, %v1949
    %v2039 = vpop.permute.xlu0 %2038
    %2042 = vset.pattern.permute.xlu0 0
    %2043 = vperm.xlu0 %2042, %v1950
    %v2044 = vpop.permute.xlu0 %2043
    %2047 = vset.pattern.permute.xlu0 0
    %2048 = vperm.xlu0 %2047, %v1951
    %v2049 = vpop.permute.xlu0 %2048
    %2052 = vset.pattern.permute.xlu0 0
    %2053 = vperm.xlu0 %2052, %v1952
    %v2054 = vpop.permute.xlu0 %2053
    %2057 = vset.pattern.permute.xlu0 0
    %2058 = vperm.xlu0 %2057, %v1953
    %v2059 = vpop.permute.xlu0 %2058
    %2062 = vset.pattern.permute.xlu0 0
    %2063 = vperm.xlu0 %2062, %v1954
    %v2064 = vpop.permute.xlu0 %2063
    %2067 = vset.pattern.permute.xlu0 0
    %2068 = vperm.xlu0 %2067, %v1955
    %v2069 = vpop.permute.xlu0 %2068
    %2072 = vset.pattern.permute.xlu0 0
    %2073 = vperm.xlu0 %2072, %v1956
    %v2074 = vpop.permute.xlu0 %2073
    %2077 = vset.pattern.permute.xlu0 0
    %2078 = vperm.xlu0 %2077, %v1957
    %v2079 = vpop.permute.xlu0 %2078
    %2082 = vset.pattern.permute.xlu0 0
    %2083 = vperm.xlu0 %2082, %v1958
    %v2084 = vpop.permute.xlu0 %2083
    %2087 = vset.pattern.permute.xlu0 0
    %2088 = vperm.xlu0 %2087, %v1959
    %v2089 = vpop.permute.xlu0 %2088
    %2092 = vset.pattern.permute.xlu0 0
    %2093 = vperm.xlu0 %2092, %v1960
    %v2094 = vpop.permute.xlu0 %2093
    %2097 = vset.pattern.permute.xlu0 0
    %2098 = vperm.xlu0 %2097, %v1961
    %v2099 = vpop.permute.xlu0 %2098
    %2102 = vset.pattern.permute.xlu0 0
    %2103 = vperm.xlu0 %2102, %v1962
    %v2104 = vpop.permute.xlu0 %2103
    %2107 = vset.pattern.permute.xlu0 0
    %2108 = vperm.xlu0 %2107, %v1963
    %v2109 = vpop.permute.xlu0 %2108
    %2112 = vset.pattern.permute.xlu0 0
    %2113 = vperm.xlu0 %2112, %v1964
    %v2114 = vpop.permute.xlu0 %2113
    %2117 = vset.pattern.permute.xlu0 0
    %2118 = vperm.xlu0 %2117, %v1965
    %v2119 = vpop.permute.xlu0 %2118
    %2122 = vset.pattern.permute.xlu0 0
    %2123 = vperm.xlu0 %2122, %v1966
    %v2124 = vpop.permute.xlu0 %2123
    %2127 = vset.pattern.permute.xlu0 0
    %2128 = vperm.xlu0 %2127, %v1967
    %v2129 = vpop.permute.xlu0 %2128
    %2132 = vset.pattern.permute.xlu0 0
    %2133 = vperm.xlu0 %2132, %v1968
    %v2134 = vpop.permute.xlu0 %2133
    %2137 = vset.pattern.permute.xlu0 0
    %2138 = vperm.xlu0 %2137, %v1969
    %v2139 = vpop.permute.xlu0 %2138
    %2142 = vset.pattern.permute.xlu0 0
    %2143 = vperm.xlu0 %2142, %v1970
    %v2144 = vpop.permute.xlu0 %2143
    %2147 = vset.pattern.permute.xlu0 0
    %2148 = vperm.xlu0 %2147, %v1971
    %v2149 = vpop.permute.xlu0 %2148
    %2152 = vset.pattern.permute.xlu0 0
    %2153 = vperm.xlu0 %2152, %v1972
    %v2154 = vpop.permute.xlu0 %2153
    %2157 = vset.pattern.permute.xlu0 0
    %2158 = vperm.xlu0 %2157, %v1973
    %v2159 = vpop.permute.xlu0 %2158
    %2162 = vset.pattern.permute.xlu0 0
    %2163 = vperm.xlu0 %2162, %v1974
    %v2164 = vpop.permute.xlu0 %2163
    %2167 = vset.pattern.permute.xlu0 0
    %2168 = vperm.xlu0 %2167, %v1975
    %v2169 = vpop.permute.xlu0 %2168
    %2172 = vset.pattern.permute.xlu0 0
    %2173 = vperm.xlu0 %2172, %v1976
    %v2174 = vpop.permute.xlu0 %2173
    %2177 = vset.pattern.permute.xlu0 0
    %2178 = vperm.xlu0 %2177, %v1977
    %v2179 = vpop.permute.xlu0 %2178
    %2182 = vset.pattern.permute.xlu0 0
    %2183 = vperm.xlu0 %2182, %v1978
    %v2184 = vpop.permute.xlu0 %2183
    %2187 = vset.pattern.permute.xlu0 0
    %2188 = vperm.xlu0 %2187, %v1979
    %v2189 = vpop.permute.xlu0 %2188
    %2192 = vset.pattern.permute.xlu0 0
    %2193 = vperm.xlu0 %2192, %v1980
    %v2194 = vpop.permute.xlu0 %2193
    %2197 = vset.pattern.permute.xlu0 0
    %2198 = vperm.xlu0 %2197, %v1981
    %v2199 = vpop.permute.xlu0 %2198
    %2202 = vset.pattern.permute.xlu0 0
    %2203 = vperm.xlu0 %2202, %v1982
    %v2204 = vpop.permute.xlu0 %2203
    %2207 = vset.pattern.permute.xlu0 0
    %2208 = vperm.xlu0 %2207, %v1983
    %v2209 = vpop.permute.xlu0 %2208
    %2212 = vset.pattern.permute.xlu0 0
    %2213 = vperm.xlu0 %2212, %v1984
    %v2214 = vpop.permute.xlu0 %2213
    %v2216 = vperm.slane %v1985, 0
    %v2217 = vmul.f32 %v1989, %v2216
    %v2218 = vmul.f32 %v1994, %v2216
    %v2219 = vmul.f32 %v1999, %v2216
    %v2220 = vmul.f32 %v2004, %v2216
    %v2221 = vmul.f32 %v2009, %v2216
    %v2222 = vmul.f32 %v2014, %v2216
    %v2223 = vmul.f32 %v2019, %v2216
    %v2224 = vmul.f32 %v2024, %v2216
    %v2225 = vmul.f32 %v2029, %v2216
    %v2226 = vmul.f32 %v2034, %v2216
    %v2227 = vmul.f32 %v2039, %v2216
    %v2228 = vmul.f32 %v2044, %v2216
    %v2229 = vmul.f32 %v2049, %v2216
    %v2230 = vmul.f32 %v2054, %v2216
    %v2231 = vmul.f32 %v2059, %v2216
    %v2232 = vmul.f32 %v2064, %v2216
    %v2233 = vmul.f32 %v2069, %v2216
    %v2234 = vmul.f32 %v2074, %v2216
    %v2235 = vmul.f32 %v2079, %v2216
    %v2236 = vmul.f32 %v2084, %v2216
    %v2237 = vmul.f32 %v2089, %v2216
    %v2238 = vmul.f32 %v2094, %v2216
    %v2239 = vmul.f32 %v2099, %v2216
    %v2240 = vmul.f32 %v2104, %v2216
    %v2241 = vmul.f32 %v2109, %v2216
    %v2242 = vmul.f32 %v2114, %v2216
    %v2243 = vmul.f32 %v2119, %v2216
    %v2244 = vmul.f32 %v2124, %v2216
    %v2245 = vmul.f32 %v2129, %v2216
    %v2246 = vmul.f32 %v2134, %v2216
    %v2247 = vmul.f32 %v2139, %v2216
    %v2248 = vmul.f32 %v2144, %v2216
    %v2249 = vmul.f32 %v2149, %v2216
    %v2250 = vmul.f32 %v2154, %v2216
    %v2251 = vmul.f32 %v2159, %v2216
    %v2252 = vmul.f32 %v2164, %v2216
    %v2253 = vmul.f32 %v2169, %v2216
    %v2254 = vmul.f32 %v2174, %v2216
    %v2255 = vmul.f32 %v2179, %v2216
    %v2256 = vmul.f32 %v2184, %v2216
    %v2257 = vmul.f32 %v2189, %v2216
    %v2258 = vmul.f32 %v2194, %v2216
    %v2259 = vmul.f32 %v2199, %v2216
    %v2260 = vmul.f32 %v2204, %v2216
    %v2261 = vmul.f32 %v2209, %v2216
    %v2262 = vmul.f32 %v2214, %v2216
    %v2263 = vadd.f32 %v1893, %v2217
    %v2264 = vadd.f32 %v1894, %v2218
    %v2265 = vadd.f32 %v1895, %v2219
    %v2266 = vadd.f32 %v1896, %v2220
    %v2267 = vadd.f32 %v1897, %v2221
    %v2268 = vadd.f32 %v1898, %v2222
    %v2269 = vadd.f32 %v1899, %v2223
    %v2270 = vadd.f32 %v1900, %v2224
    %v2271 = vadd.f32 %v1901, %v2225
    %v2272 = vadd.f32 %v1902, %v2226
    %v2273 = vadd.f32 %v1903, %v2227
    %v2274 = vadd.f32 %v1904, %v2228
    %v2275 = vadd.f32 %v1905, %v2229
    %v2276 = vadd.f32 %v1906, %v2230
    %v2277 = vadd.f32 %v1907, %v2231
    %v2278 = vadd.f32 %v1908, %v2232
    %v2279 = vadd.f32 %v1909, %v2233
    %v2280 = vadd.f32 %v1910, %v2234
    %v2281 = vadd.f32 %v1911, %v2235
    %v2282 = vadd.f32 %v1912, %v2236
    %v2283 = vadd.f32 %v1913, %v2237
    %v2284 = vadd.f32 %v1914, %v2238
    %v2285 = vadd.f32 %v1915, %v2239
    %v2286 = vadd.f32 %v1916, %v2240
    %v2287 = vadd.f32 %v1917, %v2241
    %v2288 = vadd.f32 %v1918, %v2242
    %v2289 = vadd.f32 %v1919, %v2243
    %v2290 = vadd.f32 %v1920, %v2244
    %v2291 = vadd.f32 %v1921, %v2245
    %v2292 = vadd.f32 %v1922, %v2246
    %v2293 = vadd.f32 %v1923, %v2247
    %v2294 = vadd.f32 %v1924, %v2248
    %v2295 = vadd.f32 %v1925, %v2249
    %v2296 = vadd.f32 %v1926, %v2250
    %v2297 = vadd.f32 %v1927, %v2251
    %v2298 = vadd.f32 %v1928, %v2252
    %v2299 = vadd.f32 %v1929, %v2253
    %v2300 = vadd.f32 %v1930, %v2254
    %v2301 = vadd.f32 %v1931, %v2255
    %v2302 = vadd.f32 %v1932, %v2256
    %v2303 = vadd.f32 %v1933, %v2257
    %v2304 = vadd.f32 %v1934, %v2258
    %v2305 = vadd.f32 %v1935, %v2259
    %v2306 = vadd.f32 %v1936, %v2260
    %v2307 = vadd.f32 %v1937, %v2261
    %v2308 = vadd.f32 %v1938, %v2262
    %v2309 = vld [vmem:[%s0 + $0x1c] sm:$0xff]
    %v2310 = vld [vmem:[%s0 + $0x24] sm:$0xff]
    %v2311 = vld [vmem:[%s0 + $0x2c] sm:$0xff]
    %v2312 = vld [vmem:[%s0 + $0x34] sm:$0xff]
    %v2313 = vld [vmem:[%s0 + $0x3c] sm:$0xff]
    %v2314 = vld [vmem:[%s0 + $0x44] sm:$0xff]
    %v2315 = vld [vmem:[%s0 + $0x4c] sm:$0xff]
    %v2316 = vld [vmem:[%s0 + $0x54] sm:$0xff]
    %v2317 = vld [vmem:[%s0 + $0x5c] sm:$0xff]
    %v2318 = vld [vmem:[%s0 + $0x64] sm:$0xff]
    %v2319 = vld [vmem:[%s0 + $0x6c] sm:$0xff]
    %v2320 = vld [vmem:[%s0 + $0x74] sm:$0xff]
    %v2321 = vld [vmem:[%s0 + $0x7c] sm:$0xff]
    %v2322 = vld [vmem:[%s0 + $0x84] sm:$0xff]
    %v2323 = vld [vmem:[%s0 + $0x8c] sm:$0xff]
    %v2324 = vld [vmem:[%s0 + $0x94] sm:$0xff]
    %v2325 = vld [vmem:[%s0 + $0x9c] sm:$0xff]
    %v2326 = vld [vmem:[%s0 + $0xa4] sm:$0xff]
    %v2327 = vld [vmem:[%s0 + $0xac] sm:$0xff]
    %v2328 = vld [vmem:[%s0 + $0xb4] sm:$0xff]
    %v2329 = vld [vmem:[%s0 + $0xbc] sm:$0xff]
    %v2330 = vld [vmem:[%s0 + $0xc4] sm:$0xff]
    %v2331 = vld [vmem:[%s0 + $0xcc] sm:$0xff]
    %v2332 = vld [vmem:[%s0 + $0xd4] sm:$0xff]
    %v2333 = vld [vmem:[%s0 + $0xdc] sm:$0xff]
    %v2334 = vld [vmem:[%s0 + $0xe4] sm:$0xff]
    %v2335 = vld [vmem:[%s0 + $0xec] sm:$0xff]
    %v2336 = vld [vmem:[%s0 + $0xf4] sm:$0xff]
    %v2337 = vld [vmem:[%s0 + $0xfc] sm:$0xff]
    %v2338 = vld [vmem:[%s0 + $0x104] sm:$0xff]
    %v2339 = vld [vmem:[%s0 + $0x10c] sm:$0xff]
    %v2340 = vld [vmem:[%s0 + $0x114] sm:$0xff]
    %v2341 = vld [vmem:[%s0 + $0x11c] sm:$0xff]
    %v2342 = vld [vmem:[%s0 + $0x124] sm:$0xff]
    %v2343 = vld [vmem:[%s0 + $0x12c] sm:$0xff]
    %v2344 = vld [vmem:[%s0 + $0x134] sm:$0xff]
    %v2345 = vld [vmem:[%s0 + $0x13c] sm:$0xff]
    %v2346 = vld [vmem:[%s0 + $0x144] sm:$0xff]
    %v2347 = vld [vmem:[%s0 + $0x14c] sm:$0xff]
    %v2348 = vld [vmem:[%s0 + $0x154] sm:$0xff]
    %v2349 = vld [vmem:[%s0 + $0x15c] sm:$0xff]
    %v2350 = vld [vmem:[%s0 + $0x164] sm:$0xff]
    %v2351 = vld [vmem:[%s0 + $0x16c] sm:$0xff]
    %v2352 = vld [vmem:[%s0 + $0x174] sm:$0xff]
    %v2353 = vld [vmem:[%s0 + $0x17c] sm:$0xff]
    %v2354 = vld [vmem:[%s0 + $0x184] sm:$0x3]
    %v2355 = vld [vmem:[%s1 + $0x6] sm:$0x1]
    %2357 = vset.pattern.permute.xlu0 0
    %2358 = vperm.xlu0 %2357, %v2309
    %v2359 = vpop.permute.xlu0 %2358
    %2362 = vset.pattern.permute.xlu0 0
    %2363 = vperm.xlu0 %2362, %v2310
    %v2364 = vpop.permute.xlu0 %2363
    %2367 = vset.pattern.permute.xlu0 0
    %2368 = vperm.xlu0 %2367, %v2311
    %v2369 = vpop.permute.xlu0 %2368
    %2372 = vset.pattern.permute.xlu0 0
    %2373 = vperm.xlu0 %2372, %v2312
    %v2374 = vpop.permute.xlu0 %2373
    %2377 = vset.pattern.permute.xlu0 0
    %2378 = vperm.xlu0 %2377, %v2313
    %v2379 = vpop.permute.xlu0 %2378
    %2382 = vset.pattern.permute.xlu0 0
    %2383 = vperm.xlu0 %2382, %v2314
    %v2384 = vpop.permute.xlu0 %2383
    %2387 = vset.pattern.permute.xlu0 0
    %2388 = vperm.xlu0 %2387, %v2315
    %v2389 = vpop.permute.xlu0 %2388
    %2392 = vset.pattern.permute.xlu0 0
    %2393 = vperm.xlu0 %2392, %v2316
    %v2394 = vpop.permute.xlu0 %2393
    %2397 = vset.pattern.permute.xlu0 0
    %2398 = vperm.xlu0 %2397, %v2317
    %v2399 = vpop.permute.xlu0 %2398
    %2402 = vset.pattern.permute.xlu0 0
    %2403 = vperm.xlu0 %2402, %v2318
    %v2404 = vpop.permute.xlu0 %2403
    %2407 = vset.pattern.permute.xlu0 0
    %2408 = vperm.xlu0 %2407, %v2319
    %v2409 = vpop.permute.xlu0 %2408
    %2412 = vset.pattern.permute.xlu0 0
    %2413 = vperm.xlu0 %2412, %v2320
    %v2414 = vpop.permute.xlu0 %2413
    %2417 = vset.pattern.permute.xlu0 0
    %2418 = vperm.xlu0 %2417, %v2321
    %v2419 = vpop.permute.xlu0 %2418
    %2422 = vset.pattern.permute.xlu0 0
    %2423 = vperm.xlu0 %2422, %v2322
    %v2424 = vpop.permute.xlu0 %2423
    %2427 = vset.pattern.permute.xlu0 0
    %2428 = vperm.xlu0 %2427, %v2323
    %v2429 = vpop.permute.xlu0 %2428
    %2432 = vset.pattern.permute.xlu0 0
    %2433 = vperm.xlu0 %2432, %v2324
    %v2434 = vpop.permute.xlu0 %2433
    %2437 = vset.pattern.permute.xlu0 0
    %2438 = vperm.xlu0 %2437, %v2325
    %v2439 = vpop.permute.xlu0 %2438
    %2442 = vset.pattern.permute.xlu0 0
    %2443 = vperm.xlu0 %2442, %v2326
    %v2444 = vpop.permute.xlu0 %2443
    %2447 = vset.pattern.permute.xlu0 0
    %2448 = vperm.xlu0 %2447, %v2327
    %v2449 = vpop.permute.xlu0 %2448
    %2452 = vset.pattern.permute.xlu0 0
    %2453 = vperm.xlu0 %2452, %v2328
    %v2454 = vpop.permute.xlu0 %2453
    %2457 = vset.pattern.permute.xlu0 0
    %2458 = vperm.xlu0 %2457, %v2329
    %v2459 = vpop.permute.xlu0 %2458
    %2462 = vset.pattern.permute.xlu0 0
    %2463 = vperm.xlu0 %2462, %v2330
    %v2464 = vpop.permute.xlu0 %2463
    %2467 = vset.pattern.permute.xlu0 0
    %2468 = vperm.xlu0 %2467, %v2331
    %v2469 = vpop.permute.xlu0 %2468
    %2472 = vset.pattern.permute.xlu0 0
    %2473 = vperm.xlu0 %2472, %v2332
    %v2474 = vpop.permute.xlu0 %2473
    %2477 = vset.pattern.permute.xlu0 0
    %2478 = vperm.xlu0 %2477, %v2333
    %v2479 = vpop.permute.xlu0 %2478
    %2482 = vset.pattern.permute.xlu0 0
    %2483 = vperm.xlu0 %2482, %v2334
    %v2484 = vpop.permute.xlu0 %2483
    %2487 = vset.pattern.permute.xlu0 0
    %2488 = vperm.xlu0 %2487, %v2335
    %v2489 = vpop.permute.xlu0 %2488
    %2492 = vset.pattern.permute.xlu0 0
    %2493 = vperm.xlu0 %2492, %v2336
    %v2494 = vpop.permute.xlu0 %2493
    %2497 = vset.pattern.permute.xlu0 0
    %2498 = vperm.xlu0 %2497, %v2337
    %v2499 = vpop.permute.xlu0 %2498
    %2502 = vset.pattern.permute.xlu0 0
    %2503 = vperm.xlu0 %2502, %v2338
    %v2504 = vpop.permute.xlu0 %2503
    %2507 = vset.pattern.permute.xlu0 0
    %2508 = vperm.xlu0 %2507, %v2339
    %v2509 = vpop.permute.xlu0 %2508
    %2512 = vset.pattern.permute.xlu0 0
    %2513 = vperm.xlu0 %2512, %v2340
    %v2514 = vpop.permute.xlu0 %2513
    %2517 = vset.pattern.permute.xlu0 0
    %2518 = vperm.xlu0 %2517, %v2341
    %v2519 = vpop.permute.xlu0 %2518
    %2522 = vset.pattern.permute.xlu0 0
    %2523 = vperm.xlu0 %2522, %v2342
    %v2524 = vpop.permute.xlu0 %2523
    %2527 = vset.pattern.permute.xlu0 0
    %2528 = vperm.xlu0 %2527, %v2343
    %v2529 = vpop.permute.xlu0 %2528
    %2532 = vset.pattern.permute.xlu0 0
    %2533 = vperm.xlu0 %2532, %v2344
    %v2534 = vpop.permute.xlu0 %2533
    %2537 = vset.pattern.permute.xlu0 0
    %2538 = vperm.xlu0 %2537, %v2345
    %v2539 = vpop.permute.xlu0 %2538
    %2542 = vset.pattern.permute.xlu0 0
    %2543 = vperm.xlu0 %2542, %v2346
    %v2544 = vpop.permute.xlu0 %2543
    %2547 = vset.pattern.permute.xlu0 0
    %2548 = vperm.xlu0 %2547, %v2347
    %v2549 = vpop.permute.xlu0 %2548
    %2552 = vset.pattern.permute.xlu0 0
    %2553 = vperm.xlu0 %2552, %v2348
    %v2554 = vpop.permute.xlu0 %2553
    %2557 = vset.pattern.permute.xlu0 0
    %2558 = vperm.xlu0 %2557, %v2349
    %v2559 = vpop.permute.xlu0 %2558
    %2562 = vset.pattern.permute.xlu0 0
    %2563 = vperm.xlu0 %2562, %v2350
    %v2564 = vpop.permute.xlu0 %2563
    %2567 = vset.pattern.permute.xlu0 0
    %2568 = vperm.xlu0 %2567, %v2351
    %v2569 = vpop.permute.xlu0 %2568
    %2572 = vset.pattern.permute.xlu0 0
    %2573 = vperm.xlu0 %2572, %v2352
    %v2574 = vpop.permute.xlu0 %2573
    %2577 = vset.pattern.permute.xlu0 0
    %2578 = vperm.xlu0 %2577, %v2353
    %v2579 = vpop.permute.xlu0 %2578
    %2582 = vset.pattern.permute.xlu0 0
    %2583 = vperm.xlu0 %2582, %v2354
    %v2584 = vpop.permute.xlu0 %2583
    %v2586 = vperm.slane %v2355, 0
    %v2587 = vmul.f32 %v2359, %v2586
    %v2588 = vmul.f32 %v2364, %v2586
    %v2589 = vmul.f32 %v2369, %v2586
    %v2590 = vmul.f32 %v2374, %v2586
    %v2591 = vmul.f32 %v2379, %v2586
    %v2592 = vmul.f32 %v2384, %v2586
    %v2593 = vmul.f32 %v2389, %v2586
    %v2594 = vmul.f32 %v2394, %v2586
    %v2595 = vmul.f32 %v2399, %v2586
    %v2596 = vmul.f32 %v2404, %v2586
    %v2597 = vmul.f32 %v2409, %v2586
    %v2598 = vmul.f32 %v2414, %v2586
    %v2599 = vmul.f32 %v2419, %v2586
    %v2600 = vmul.f32 %v2424, %v2586
    %v2601 = vmul.f32 %v2429, %v2586
    %v2602 = vmul.f32 %v2434, %v2586
    %v2603 = vmul.f32 %v2439, %v2586
    %v2604 = vmul.f32 %v2444, %v2586
    %v2605 = vmul.f32 %v2449, %v2586
    %v2606 = vmul.f32 %v2454, %v2586
    %v2607 = vmul.f32 %v2459, %v2586
    %v2608 = vmul.f32 %v2464, %v2586
    %v2609 = vmul.f32 %v2469, %v2586
    %v2610 = vmul.f32 %v2474, %v2586
    %v2611 = vmul.f32 %v2479, %v2586
    %v2612 = vmul.f32 %v2484, %v2586
    %v2613 = vmul.f32 %v2489, %v2586
    %v2614 = vmul.f32 %v2494, %v2586
    %v2615 = vmul.f32 %v2499, %v2586
    %v2616 = vmul.f32 %v2504, %v2586
    %v2617 = vmul.f32 %v2509, %v2586
    %v2618 = vmul.f32 %v2514, %v2586
    %v2619 = vmul.f32 %v2519, %v2586
    %v2620 = vmul.f32 %v2524, %v2586
    %v2621 = vmul.f32 %v2529, %v2586
    %v2622 = vmul.f32 %v2534, %v2586
    %v2623 = vmul.f32 %v2539, %v2586
    %v2624 = vmul.f32 %v2544, %v2586
    %v2625 = vmul.f32 %v2549, %v2586
    %v2626 = vmul.f32 %v2554, %v2586
    %v2627 = vmul.f32 %v2559, %v2586
    %v2628 = vmul.f32 %v2564, %v2586
    %v2629 = vmul.f32 %v2569, %v2586
    %v2630 = vmul.f32 %v2574, %v2586
    %v2631 = vmul.f32 %v2579, %v2586
    %v2632 = vmul.f32 %v2584, %v2586
    %v2633 = vadd.f32 %v2263, %v2587
    %v2634 = vadd.f32 %v2264, %v2588
    %v2635 = vadd.f32 %v2265, %v2589
    %v2636 = vadd.f32 %v2266, %v2590
    %v2637 = vadd.f32 %v2267, %v2591
    %v2638 = vadd.f32 %v2268, %v2592
    %v2639 = vadd.f32 %v2269, %v2593
    %v2640 = vadd.f32 %v2270, %v2594
    %v2641 = vadd.f32 %v2271, %v2595
    %v2642 = vadd.f32 %v2272, %v2596
    %v2643 = vadd.f32 %v2273, %v2597
    %v2644 = vadd.f32 %v2274, %v2598
    %v2645 = vadd.f32 %v2275, %v2599
    %v2646 = vadd.f32 %v2276, %v2600
    %v2647 = vadd.f32 %v2277, %v2601
    %v2648 = vadd.f32 %v2278, %v2602
    %v2649 = vadd.f32 %v2279, %v2603
    %v2650 = vadd.f32 %v2280, %v2604
    %v2651 = vadd.f32 %v2281, %v2605
    %v2652 = vadd.f32 %v2282, %v2606
    %v2653 = vadd.f32 %v2283, %v2607
    %v2654 = vadd.f32 %v2284, %v2608
    %v2655 = vadd.f32 %v2285, %v2609
    %v2656 = vadd.f32 %v2286, %v2610
    %v2657 = vadd.f32 %v2287, %v2611
    %v2658 = vadd.f32 %v2288, %v2612
    %v2659 = vadd.f32 %v2289, %v2613
    %v2660 = vadd.f32 %v2290, %v2614
    %v2661 = vadd.f32 %v2291, %v2615
    %v2662 = vadd.f32 %v2292, %v2616
    %v2663 = vadd.f32 %v2293, %v2617
    %v2664 = vadd.f32 %v2294, %v2618
    %v2665 = vadd.f32 %v2295, %v2619
    %v2666 = vadd.f32 %v2296, %v2620
    %v2667 = vadd.f32 %v2297, %v2621
    %v2668 = vadd.f32 %v2298, %v2622
    %v2669 = vadd.f32 %v2299, %v2623
    %v2670 = vadd.f32 %v2300, %v2624
    %v2671 = vadd.f32 %v2301, %v2625
    %v2672 = vadd.f32 %v2302, %v2626
    %v2673 = vadd.f32 %v2303, %v2627
    %v2674 = vadd.f32 %v2304, %v2628
    %v2675 = vadd.f32 %v2305, %v2629
    %v2676 = vadd.f32 %v2306, %v2630
    %v2677 = vadd.f32 %v2307, %v2631
    %v2678 = vadd.f32 %v2308, %v2632
    %v2679 = vld [vmem:[%s0 + $0x1d] sm:$0xff]
    %v2680 = vld [vmem:[%s0 + $0x25] sm:$0xff]
    %v2681 = vld [vmem:[%s0 + $0x2d] sm:$0xff]
    %v2682 = vld [vmem:[%s0 + $0x35] sm:$0xff]
    %v2683 = vld [vmem:[%s0 + $0x3d] sm:$0xff]
    %v2684 = vld [vmem:[%s0 + $0x45] sm:$0xff]
    %v2685 = vld [vmem:[%s0 + $0x4d] sm:$0xff]
    %v2686 = vld [vmem:[%s0 + $0x55] sm:$0xff]
    %v2687 = vld [vmem:[%s0 + $0x5d] sm:$0xff]
    %v2688 = vld [vmem:[%s0 + $0x65] sm:$0xff]
    %v2689 = vld [vmem:[%s0 + $0x6d] sm:$0xff]
    %v2690 = vld [vmem:[%s0 + $0x75] sm:$0xff]
    %v2691 = vld [vmem:[%s0 + $0x7d] sm:$0xff]
    %v2692 = vld [vmem:[%s0 + $0x85] sm:$0xff]
    %v2693 = vld [vmem:[%s0 + $0x8d] sm:$0xff]
    %v2694 = vld [vmem:[%s0 + $0x95] sm:$0xff]
    %v2695 = vld [vmem:[%s0 + $0x9d] sm:$0xff]
    %v2696 = vld [vmem:[%s0 + $0xa5] sm:$0xff]
    %v2697 = vld [vmem:[%s0 + $0xad] sm:$0xff]
    %v2698 = vld [vmem:[%s0 + $0xb5] sm:$0xff]
    %v2699 = vld [vmem:[%s0 + $0xbd] sm:$0xff]
    %v2700 = vld [vmem:[%s0 + $0xc5] sm:$0xff]
    %v2701 = vld [vmem:[%s0 + $0xcd] sm:$0xff]
    %v2702 = vld [vmem:[%s0 + $0xd5] sm:$0xff]
    %v2703 = vld [vmem:[%s0 + $0xdd] sm:$0xff]
    %v2704 = vld [vmem:[%s0 + $0xe5] sm:$0xff]
    %v2705 = vld [vmem:[%s0 + $0xed] sm:$0xff]
    %v2706 = vld [vmem:[%s0 + $0xf5] sm:$0xff]
    %v2707 = vld [vmem:[%s0 + $0xfd] sm:$0xff]
    %v2708 = vld [vmem:[%s0 + $0x105] sm:$0xff]
    %v2709 = vld [vmem:[%s0 + $0x10d] sm:$0xff]
    %v2710 = vld [vmem:[%s0 + $0x115] sm:$0xff]
    %v2711 = vld [vmem:[%s0 + $0x11d] sm:$0xff]
    %v2712 = vld [vmem:[%s0 + $0x125] sm:$0xff]
    %v2713 = vld [vmem:[%s0 + $0x12d] sm:$0xff]
    %v2714 = vld [vmem:[%s0 + $0x135] sm:$0xff]
    %v2715 = vld [vmem:[%s0 + $0x13d] sm:$0xff]
    %v2716 = vld [vmem:[%s0 + $0x145] sm:$0xff]
    %v2717 = vld [vmem:[%s0 + $0x14d] sm:$0xff]
    %v2718 = vld [vmem:[%s0 + $0x155] sm:$0xff]
    %v2719 = vld [vmem:[%s0 + $0x15d] sm:$0xff]
    %v2720 = vld [vmem:[%s0 + $0x165] sm:$0xff]
    %v2721 = vld [vmem:[%s0 + $0x16d] sm:$0xff]
    %v2722 = vld [vmem:[%s0 + $0x175] sm:$0xff]
    %v2723 = vld [vmem:[%s0 + $0x17d] sm:$0xff]
    %v2724 = vld [vmem:[%s0 + $0x185] sm:$0x3]
    %v2725 = vld [vmem:[%s1 + $0x7] sm:$0x1]
    %2727 = vset.pattern.permute.xlu0 0
    %2728 = vperm.xlu0 %2727, %v2679
    %v2729 = vpop.permute.xlu0 %2728
    %2732 = vset.pattern.permute.xlu0 0
    %2733 = vperm.xlu0 %2732, %v2680
    %v2734 = vpop.permute.xlu0 %2733
    %2737 = vset.pattern.permute.xlu0 0
    %2738 = vperm.xlu0 %2737, %v2681
    %v2739 = vpop.permute.xlu0 %2738
    %2742 = vset.pattern.permute.xlu0 0
    %2743 = vperm.xlu0 %2742, %v2682
    %v2744 = vpop.permute.xlu0 %2743
    %2747 = vset.pattern.permute.xlu0 0
    %2748 = vperm.xlu0 %2747, %v2683
    %v2749 = vpop.permute.xlu0 %2748
    %2752 = vset.pattern.permute.xlu0 0
    %2753 = vperm.xlu0 %2752, %v2684
    %v2754 = vpop.permute.xlu0 %2753
    %2757 = vset.pattern.permute.xlu0 0
    %2758 = vperm.xlu0 %2757, %v2685
    %v2759 = vpop.permute.xlu0 %2758
    %2762 = vset.pattern.permute.xlu0 0
    %2763 = vperm.xlu0 %2762, %v2686
    %v2764 = vpop.permute.xlu0 %2763
    %2767 = vset.pattern.permute.xlu0 0
    %2768 = vperm.xlu0 %2767, %v2687
    %v2769 = vpop.permute.xlu0 %2768
    %2772 = vset.pattern.permute.xlu0 0
    %2773 = vperm.xlu0 %2772, %v2688
    %v2774 = vpop.permute.xlu0 %2773
    %2777 = vset.pattern.permute.xlu0 0
    %2778 = vperm.xlu0 %2777, %v2689
    %v2779 = vpop.permute.xlu0 %2778
    %2782 = vset.pattern.permute.xlu0 0
    %2783 = vperm.xlu0 %2782, %v2690
    %v2784 = vpop.permute.xlu0 %2783
    %2787 = vset.pattern.permute.xlu0 0
    %2788 = vperm.xlu0 %2787, %v2691
    %v2789 = vpop.permute.xlu0 %2788
    %2792 = vset.pattern.permute.xlu0 0
    %2793 = vperm.xlu0 %2792, %v2692
    %v2794 = vpop.permute.xlu0 %2793
    %2797 = vset.pattern.permute.xlu0 0
    %2798 = vperm.xlu0 %2797, %v2693
    %v2799 = vpop.permute.xlu0 %2798
    %2802 = vset.pattern.permute.xlu0 0
    %2803 = vperm.xlu0 %2802, %v2694
    %v2804 = vpop.permute.xlu0 %2803
    %2807 = vset.pattern.permute.xlu0 0
    %2808 = vperm.xlu0 %2807, %v2695
    %v2809 = vpop.permute.xlu0 %2808
    %2812 = vset.pattern.permute.xlu0 0
    %2813 = vperm.xlu0 %2812, %v2696
    %v2814 = vpop.permute.xlu0 %2813
    %2817 = vset.pattern.permute.xlu0 0
    %2818 = vperm.xlu0 %2817, %v2697
    %v2819 = vpop.permute.xlu0 %2818
    %2822 = vset.pattern.permute.xlu0 0
    %2823 = vperm.xlu0 %2822, %v2698
    %v2824 = vpop.permute.xlu0 %2823
    %2827 = vset.pattern.permute.xlu0 0
    %2828 = vperm.xlu0 %2827, %v2699
    %v2829 = vpop.permute.xlu0 %2828
    %2832 = vset.pattern.permute.xlu0 0
    %2833 = vperm.xlu0 %2832, %v2700
    %v2834 = vpop.permute.xlu0 %2833
    %2837 = vset.pattern.permute.xlu0 0
    %2838 = vperm.xlu0 %2837, %v2701
    %v2839 = vpop.permute.xlu0 %2838
    %2842 = vset.pattern.permute.xlu0 0
    %2843 = vperm.xlu0 %2842, %v2702
    %v2844 = vpop.permute.xlu0 %2843
    %2847 = vset.pattern.permute.xlu0 0
    %2848 = vperm.xlu0 %2847, %v2703
    %v2849 = vpop.permute.xlu0 %2848
    %2852 = vset.pattern.permute.xlu0 0
    %2853 = vperm.xlu0 %2852, %v2704
    %v2854 = vpop.permute.xlu0 %2853
    %2857 = vset.pattern.permute.xlu0 0
    %2858 = vperm.xlu0 %2857, %v2705
    %v2859 = vpop.permute.xlu0 %2858
    %2862 = vset.pattern.permute.xlu0 0
    %2863 = vperm.xlu0 %2862, %v2706
    %v2864 = vpop.permute.xlu0 %2863
    %2867 = vset.pattern.permute.xlu0 0
    %2868 = vperm.xlu0 %2867, %v2707
    %v2869 = vpop.permute.xlu0 %2868
    %2872 = vset.pattern.permute.xlu0 0
    %2873 = vperm.xlu0 %2872, %v2708
    %v2874 = vpop.permute.xlu0 %2873
    %2877 = vset.pattern.permute.xlu0 0
    %2878 = vperm.xlu0 %2877, %v2709
    %v2879 = vpop.permute.xlu0 %2878
    %2882 = vset.pattern.permute.xlu0 0
    %2883 = vperm.xlu0 %2882, %v2710
    %v2884 = vpop.permute.xlu0 %2883
    %2887 = vset.pattern.permute.xlu0 0
    %2888 = vperm.xlu0 %2887, %v2711
    %v2889 = vpop.permute.xlu0 %2888
    %2892 = vset.pattern.permute.xlu0 0
    %2893 = vperm.xlu0 %2892, %v2712
    %v2894 = vpop.permute.xlu0 %2893
    %2897 = vset.pattern.permute.xlu0 0
    %2898 = vperm.xlu0 %2897, %v2713
    %v2899 = vpop.permute.xlu0 %2898
    %2902 = vset.pattern.permute.xlu0 0
    %2903 = vperm.xlu0 %2902, %v2714
    %v2904 = vpop.permute.xlu0 %2903
    %2907 = vset.pattern.permute.xlu0 0
    %2908 = vperm.xlu0 %2907, %v2715
    %v2909 = vpop.permute.xlu0 %2908
    %2912 = vset.pattern.permute.xlu0 0
    %2913 = vperm.xlu0 %2912, %v2716
    %v2914 = vpop.permute.xlu0 %2913
    %2917 = vset.pattern.permute.xlu0 0
    %2918 = vperm.xlu0 %2917, %v2717
    %v2919 = vpop.permute.xlu0 %2918
    %2922 = vset.pattern.permute.xlu0 0
    %2923 = vperm.xlu0 %2922, %v2718
    %v2924 = vpop.permute.xlu0 %2923
    %2927 = vset.pattern.permute.xlu0 0
    %2928 = vperm.xlu0 %2927, %v2719
    %v2929 = vpop.permute.xlu0 %2928
    %2932 = vset.pattern.permute.xlu0 0
    %2933 = vperm.xlu0 %2932, %v2720
    %v2934 = vpop.permute.xlu0 %2933
    %2937 = vset.pattern.permute.xlu0 0
    %2938 = vperm.xlu0 %2937, %v2721
    %v2939 = vpop.permute.xlu0 %2938
    %2942 = vset.pattern.permute.xlu0 0
    %2943 = vperm.xlu0 %2942, %v2722
    %v2944 = vpop.permute.xlu0 %2943
    %2947 = vset.pattern.permute.xlu0 0
    %2948 = vperm.xlu0 %2947, %v2723
    %v2949 = vpop.permute.xlu0 %2948
    %2952 = vset.pattern.permute.xlu0 0
    %2953 = vperm.xlu0 %2952, %v2724
    %v2954 = vpop.permute.xlu0 %2953
    %v2956 = vperm.slane %v2725, 0
    %v2957 = vmul.f32 %v2729, %v2956
    %v2958 = vmul.f32 %v2734, %v2956
    %v2959 = vmul.f32 %v2739, %v2956
    %v2960 = vmul.f32 %v2744, %v2956
    %v2961 = vmul.f32 %v2749, %v2956
    %v2962 = vmul.f32 %v2754, %v2956
    %v2963 = vmul.f32 %v2759, %v2956
    %v2964 = vmul.f32 %v2764, %v2956
    %v2965 = vmul.f32 %v2769, %v2956
    %v2966 = vmul.f32 %v2774, %v2956
    %v2967 = vmul.f32 %v2779, %v2956
    %v2968 = vmul.f32 %v2784, %v2956
    %v2969 = vmul.f32 %v2789, %v2956
    %v2970 = vmul.f32 %v2794, %v2956
    %v2971 = vmul.f32 %v2799, %v2956
    %v2972 = vmul.f32 %v2804, %v2956
    %v2973 = vmul.f32 %v2809, %v2956
    %v2974 = vmul.f32 %v2814, %v2956
    %v2975 = vmul.f32 %v2819, %v2956
    %v2976 = vmul.f32 %v2824, %v2956
    %v2977 = vmul.f32 %v2829, %v2956
    %v2978 = vmul.f32 %v2834, %v2956
    %v2979 = vmul.f32 %v2839, %v2956
    %v2980 = vmul.f32 %v2844, %v2956
    %v2981 = vmul.f32 %v2849, %v2956
    %v2982 = vmul.f32 %v2854, %v2956
    %v2983 = vmul.f32 %v2859, %v2956
    %v2984 = vmul.f32 %v2864, %v2956
    %v2985 = vmul.f32 %v2869, %v2956
    %v2986 = vmul.f32 %v2874, %v2956
    %v2987 = vmul.f32 %v2879, %v2956
    %v2988 = vmul.f32 %v2884, %v2956
    %v2989 = vmul.f32 %v2889, %v2956
    %v2990 = vmul.f32 %v2894, %v2956
    %v2991 = vmul.f32 %v2899, %v2956
    %v2992 = vmul.f32 %v2904, %v2956
    %v2993 = vmul.f32 %v2909, %v2956
    %v2994 = vmul.f32 %v2914, %v2956
    %v2995 = vmul.f32 %v2919, %v2956
    %v2996 = vmul.f32 %v2924, %v2956
    %v2997 = vmul.f32 %v2929, %v2956
    %v2998 = vmul.f32 %v2934, %v2956
    %v2999 = vmul.f32 %v2939, %v2956
    %v3000 = vmul.f32 %v2944, %v2956
    %v3001 = vmul.f32 %v2949, %v2956
    %v3002 = vmul.f32 %v2954, %v2956
    %v3003 = vadd.f32 %v2633, %v2957
    %v3004 = vadd.f32 %v2634, %v2958
    %v3005 = vadd.f32 %v2635, %v2959
    %v3006 = vadd.f32 %v2636, %v2960
    %v3007 = vadd.f32 %v2637, %v2961
    %v3008 = vadd.f32 %v2638, %v2962
    %v3009 = vadd.f32 %v2639, %v2963
    %v3010 = vadd.f32 %v2640, %v2964
    %v3011 = vadd.f32 %v2641, %v2965
    %v3012 = vadd.f32 %v2642, %v2966
    %v3013 = vadd.f32 %v2643, %v2967
    %v3014 = vadd.f32 %v2644, %v2968
    %v3015 = vadd.f32 %v2645, %v2969
    %v3016 = vadd.f32 %v2646, %v2970
    %v3017 = vadd.f32 %v2647, %v2971
    %v3018 = vadd.f32 %v2648, %v2972
    %v3019 = vadd.f32 %v2649, %v2973
    %v3020 = vadd.f32 %v2650, %v2974
    %v3021 = vadd.f32 %v2651, %v2975
    %v3022 = vadd.f32 %v2652, %v2976
    %v3023 = vadd.f32 %v2653, %v2977
    %v3024 = vadd.f32 %v2654, %v2978
    %v3025 = vadd.f32 %v2655, %v2979
    %v3026 = vadd.f32 %v2656, %v2980
    %v3027 = vadd.f32 %v2657, %v2981
    %v3028 = vadd.f32 %v2658, %v2982
    %v3029 = vadd.f32 %v2659, %v2983
    %v3030 = vadd.f32 %v2660, %v2984
    %v3031 = vadd.f32 %v2661, %v2985
    %v3032 = vadd.f32 %v2662, %v2986
    %v3033 = vadd.f32 %v2663, %v2987
    %v3034 = vadd.f32 %v2664, %v2988
    %v3035 = vadd.f32 %v2665, %v2989
    %v3036 = vadd.f32 %v2666, %v2990
    %v3037 = vadd.f32 %v2667, %v2991
    %v3038 = vadd.f32 %v2668, %v2992
    %v3039 = vadd.f32 %v2669, %v2993
    %v3040 = vadd.f32 %v2670, %v2994
    %v3041 = vadd.f32 %v2671, %v2995
    %v3042 = vadd.f32 %v2672, %v2996
    %v3043 = vadd.f32 %v2673, %v2997
    %v3044 = vadd.f32 %v2674, %v2998
    %v3045 = vadd.f32 %v2675, %v2999
    %v3046 = vadd.f32 %v2676, %v3000
    %v3047 = vadd.f32 %v2677, %v3001
    %v3048 = vadd.f32 %v2678, %v3002
    %v3049 = vld [vmem:[%s0 + $0x1e] sm:$0xff]
    %v3050 = vld [vmem:[%s0 + $0x26] sm:$0xff]
    %v3051 = vld [vmem:[%s0 + $0x2e] sm:$0xff]
    %v3052 = vld [vmem:[%s0 + $0x36] sm:$0xff]
    %v3053 = vld [vmem:[%s0 + $0x3e] sm:$0xff]
    %v3054 = vld [vmem:[%s0 + $0x46] sm:$0xff]
    %v3055 = vld [vmem:[%s0 + $0x4e] sm:$0xff]
    %v3056 = vld [vmem:[%s0 + $0x56] sm:$0xff]
    %v3057 = vld [vmem:[%s0 + $0x5e] sm:$0xff]
    %v3058 = vld [vmem:[%s0 + $0x66] sm:$0xff]
    %v3059 = vld [vmem:[%s0 + $0x6e] sm:$0xff]
    %v3060 = vld [vmem:[%s0 + $0x76] sm:$0xff]
    %v3061 = vld [vmem:[%s0 + $0x7e] sm:$0xff]
    %v3062 = vld [vmem:[%s0 + $0x86] sm:$0xff]
    %v3063 = vld [vmem:[%s0 + $0x8e] sm:$0xff]
    %v3064 = vld [vmem:[%s0 + $0x96] sm:$0xff]
    %v3065 = vld [vmem:[%s0 + $0x9e] sm:$0xff]
    %v3066 = vld [vmem:[%s0 + $0xa6] sm:$0xff]
    %v3067 = vld [vmem:[%s0 + $0xae] sm:$0xff]
    %v3068 = vld [vmem:[%s0 + $0xb6] sm:$0xff]
    %v3069 = vld [vmem:[%s0 + $0xbe] sm:$0xff]
    %v3070 = vld [vmem:[%s0 + $0xc6] sm:$0xff]
    %v3071 = vld [vmem:[%s0 + $0xce] sm:$0xff]
    %v3072 = vld [vmem:[%s0 + $0xd6] sm:$0xff]
    %v3073 = vld [vmem:[%s0 + $0xde] sm:$0xff]
    %v3074 = vld [vmem:[%s0 + $0xe6] sm:$0xff]
    %v3075 = vld [vmem:[%s0 + $0xee] sm:$0xff]
    %v3076 = vld [vmem:[%s0 + $0xf6] sm:$0xff]
    %v3077 = vld [vmem:[%s0 + $0xfe] sm:$0xff]
    %v3078 = vld [vmem:[%s0 + $0x106] sm:$0xff]
    %v3079 = vld [vmem:[%s0 + $0x10e] sm:$0xff]
    %v3080 = vld [vmem:[%s0 + $0x116] sm:$0xff]
    %v3081 = vld [vmem:[%s0 + $0x11e] sm:$0xff]
    %v3082 = vld [vmem:[%s0 + $0x126] sm:$0xff]
    %v3083 = vld [vmem:[%s0 + $0x12e] sm:$0xff]
    %v3084 = vld [vmem:[%s0 + $0x136] sm:$0xff]
    %v3085 = vld [vmem:[%s0 + $0x13e] sm:$0xff]
    %v3086 = vld [vmem:[%s0 + $0x146] sm:$0xff]
    %v3087 = vld [vmem:[%s0 + $0x14e] sm:$0xff]
    %v3088 = vld [vmem:[%s0 + $0x156] sm:$0xff]
    %v3089 = vld [vmem:[%s0 + $0x15e] sm:$0xff]
    %v3090 = vld [vmem:[%s0 + $0x166] sm:$0xff]
    %v3091 = vld [vmem:[%s0 + $0x16e] sm:$0xff]
    %v3092 = vld [vmem:[%s0 + $0x176] sm:$0xff]
    %v3093 = vld [vmem:[%s0 + $0x17e] sm:$0xff]
    %v3094 = vld [vmem:[%s0 + $0x186] sm:$0x3]
    %v3095 = vld [vmem:[%s1 + $0x8] sm:$0x1]
    %3097 = vset.pattern.permute.xlu0 0
    %3098 = vperm.xlu0 %3097, %v3049
    %v3099 = vpop.permute.xlu0 %3098
    %3102 = vset.pattern.permute.xlu0 0
    %3103 = vperm.xlu0 %3102, %v3050
    %v3104 = vpop.permute.xlu0 %3103
    %3107 = vset.pattern.permute.xlu0 0
    %3108 = vperm.xlu0 %3107, %v3051
    %v3109 = vpop.permute.xlu0 %3108
    %3112 = vset.pattern.permute.xlu0 0
    %3113 = vperm.xlu0 %3112, %v3052
    %v3114 = vpop.permute.xlu0 %3113
    %3117 = vset.pattern.permute.xlu0 0
    %3118 = vperm.xlu0 %3117, %v3053
    %v3119 = vpop.permute.xlu0 %3118
    %3122 = vset.pattern.permute.xlu0 0
    %3123 = vperm.xlu0 %3122, %v3054
    %v3124 = vpop.permute.xlu0 %3123
    %3127 = vset.pattern.permute.xlu0 0
    %3128 = vperm.xlu0 %3127, %v3055
    %v3129 = vpop.permute.xlu0 %3128
    %3132 = vset.pattern.permute.xlu0 0
    %3133 = vperm.xlu0 %3132, %v3056
    %v3134 = vpop.permute.xlu0 %3133
    %3137 = vset.pattern.permute.xlu0 0
    %3138 = vperm.xlu0 %3137, %v3057
    %v3139 = vpop.permute.xlu0 %3138
    %3142 = vset.pattern.permute.xlu0 0
    %3143 = vperm.xlu0 %3142, %v3058
    %v3144 = vpop.permute.xlu0 %3143
    %3147 = vset.pattern.permute.xlu0 0
    %3148 = vperm.xlu0 %3147, %v3059
    %v3149 = vpop.permute.xlu0 %3148
    %3152 = vset.pattern.permute.xlu0 0
    %3153 = vperm.xlu0 %3152, %v3060
    %v3154 = vpop.permute.xlu0 %3153
    %3157 = vset.pattern.permute.xlu0 0
    %3158 = vperm.xlu0 %3157, %v3061
    %v3159 = vpop.permute.xlu0 %3158
    %3162 = vset.pattern.permute.xlu0 0
    %3163 = vperm.xlu0 %3162, %v3062
    %v3164 = vpop.permute.xlu0 %3163
    %3167 = vset.pattern.permute.xlu0 0
    %3168 = vperm.xlu0 %3167, %v3063
    %v3169 = vpop.permute.xlu0 %3168
    %3172 = vset.pattern.permute.xlu0 0
    %3173 = vperm.xlu0 %3172, %v3064
    %v3174 = vpop.permute.xlu0 %3173
    %3177 = vset.pattern.permute.xlu0 0
    %3178 = vperm.xlu0 %3177, %v3065
    %v3179 = vpop.permute.xlu0 %3178
    %3182 = vset.pattern.permute.xlu0 0
    %3183 = vperm.xlu0 %3182, %v3066
    %v3184 = vpop.permute.xlu0 %3183
    %3187 = vset.pattern.permute.xlu0 0
    %3188 = vperm.xlu0 %3187, %v3067
    %v3189 = vpop.permute.xlu0 %3188
    %3192 = vset.pattern.permute.xlu0 0
    %3193 = vperm.xlu0 %3192, %v3068
    %v3194 = vpop.permute.xlu0 %3193
    %3197 = vset.pattern.permute.xlu0 0
    %3198 = vperm.xlu0 %3197, %v3069
    %v3199 = vpop.permute.xlu0 %3198
    %3202 = vset.pattern.permute.xlu0 0
    %3203 = vperm.xlu0 %3202, %v3070
    %v3204 = vpop.permute.xlu0 %3203
    %3207 = vset.pattern.permute.xlu0 0
    %3208 = vperm.xlu0 %3207, %v3071
    %v3209 = vpop.permute.xlu0 %3208
    %3212 = vset.pattern.permute.xlu0 0
    %3213 = vperm.xlu0 %3212, %v3072
    %v3214 = vpop.permute.xlu0 %3213
    %3217 = vset.pattern.permute.xlu0 0
    %3218 = vperm.xlu0 %3217, %v3073
    %v3219 = vpop.permute.xlu0 %3218
    %3222 = vset.pattern.permute.xlu0 0
    %3223 = vperm.xlu0 %3222, %v3074
    %v3224 = vpop.permute.xlu0 %3223
    %3227 = vset.pattern.permute.xlu0 0
    %3228 = vperm.xlu0 %3227, %v3075
    %v3229 = vpop.permute.xlu0 %3228
    %3232 = vset.pattern.permute.xlu0 0
    %3233 = vperm.xlu0 %3232, %v3076
    %v3234 = vpop.permute.xlu0 %3233
    %3237 = vset.pattern.permute.xlu0 0
    %3238 = vperm.xlu0 %3237, %v3077
    %v3239 = vpop.permute.xlu0 %3238
    %3242 = vset.pattern.permute.xlu0 0
    %3243 = vperm.xlu0 %3242, %v3078
    %v3244 = vpop.permute.xlu0 %3243
    %3247 = vset.pattern.permute.xlu0 0
    %3248 = vperm.xlu0 %3247, %v3079
    %v3249 = vpop.permute.xlu0 %3248
    %3252 = vset.pattern.permute.xlu0 0
    %3253 = vperm.xlu0 %3252, %v3080
    %v3254 = vpop.permute.xlu0 %3253
    %3257 = vset.pattern.permute.xlu0 0
    %3258 = vperm.xlu0 %3257, %v3081
    %v3259 = vpop.permute.xlu0 %3258
    %3262 = vset.pattern.permute.xlu0 0
    %3263 = vperm.xlu0 %3262, %v3082
    %v3264 = vpop.permute.xlu0 %3263
    %3267 = vset.pattern.permute.xlu0 0
    %3268 = vperm.xlu0 %3267, %v3083
    %v3269 = vpop.permute.xlu0 %3268
    %3272 = vset.pattern.permute.xlu0 0
    %3273 = vperm.xlu0 %3272, %v3084
    %v3274 = vpop.permute.xlu0 %3273
    %3277 = vset.pattern.permute.xlu0 0
    %3278 = vperm.xlu0 %3277, %v3085
    %v3279 = vpop.permute.xlu0 %3278
    %3282 = vset.pattern.permute.xlu0 0
    %3283 = vperm.xlu0 %3282, %v3086
    %v3284 = vpop.permute.xlu0 %3283
    %3287 = vset.pattern.permute.xlu0 0
    %3288 = vperm.xlu0 %3287, %v3087
    %v3289 = vpop.permute.xlu0 %3288
    %3292 = vset.pattern.permute.xlu0 0
    %3293 = vperm.xlu0 %3292, %v3088
    %v3294 = vpop.permute.xlu0 %3293
    %3297 = vset.pattern.permute.xlu0 0
    %3298 = vperm.xlu0 %3297, %v3089
    %v3299 = vpop.permute.xlu0 %3298
    %3302 = vset.pattern.permute.xlu0 0
    %3303 = vperm.xlu0 %3302, %v3090
    %v3304 = vpop.permute.xlu0 %3303
    %3307 = vset.pattern.permute.xlu0 0
    %3308 = vperm.xlu0 %3307, %v3091
    %v3309 = vpop.permute.xlu0 %3308
    %3312 = vset.pattern.permute.xlu0 0
    %3313 = vperm.xlu0 %3312, %v3092
    %v3314 = vpop.permute.xlu0 %3313
    %3317 = vset.pattern.permute.xlu0 0
    %3318 = vperm.xlu0 %3317, %v3093
    %v3319 = vpop.permute.xlu0 %3318
    %3322 = vset.pattern.permute.xlu0 0
    %3323 = vperm.xlu0 %3322, %v3094
    %v3324 = vpop.permute.xlu0 %3323
    %v3326 = vperm.slane %v3095, 0
    %v3327 = vmul.f32 %v3099, %v3326
    %v3328 = vmul.f32 %v3104, %v3326
    %v3329 = vmul.f32 %v3109, %v3326
    %v3330 = vmul.f32 %v3114, %v3326
    %v3331 = vmul.f32 %v3119, %v3326
    %v3332 = vmul.f32 %v3124, %v3326
    %v3333 = vmul.f32 %v3129, %v3326
    %v3334 = vmul.f32 %v3134, %v3326
    %v3335 = vmul.f32 %v3139, %v3326
    %v3336 = vmul.f32 %v3144, %v3326
    %v3337 = vmul.f32 %v3149, %v3326
    %v3338 = vmul.f32 %v3154, %v3326
    %v3339 = vmul.f32 %v3159, %v3326
    %v3340 = vmul.f32 %v3164, %v3326
    %v3341 = vmul.f32 %v3169, %v3326
    %v3342 = vmul.f32 %v3174, %v3326
    %v3343 = vmul.f32 %v3179, %v3326
    %v3344 = vmul.f32 %v3184, %v3326
    %v3345 = vmul.f32 %v3189, %v3326
    %v3346 = vmul.f32 %v3194, %v3326
    %v3347 = vmul.f32 %v3199, %v3326
    %v3348 = vmul.f32 %v3204, %v3326
    %v3349 = vmul.f32 %v3209, %v3326
    %v3350 = vmul.f32 %v3214, %v3326
    %v3351 = vmul.f32 %v3219, %v3326
    %v3352 = vmul.f32 %v3224, %v3326
    %v3353 = vmul.f32 %v3229, %v3326
    %v3354 = vmul.f32 %v3234, %v3326
    %v3355 = vmul.f32 %v3239, %v3326
    %v3356 = vmul.f32 %v3244, %v3326
    %v3357 = vmul.f32 %v3249, %v3326
    %v3358 = vmul.f32 %v3254, %v3326
    %v3359 = vmul.f32 %v3259, %v3326
    %v3360 = vmul.f32 %v3264, %v3326
    %v3361 = vmul.f32 %v3269, %v3326
    %v3362 = vmul.f32 %v3274, %v3326
    %v3363 = vmul.f32 %v3279, %v3326
    %v3364 = vmul.f32 %v3284, %v3326
    %v3365 = vmul.f32 %v3289, %v3326
    %v3366 = vmul.f32 %v3294, %v3326
    %v3367 = vmul.f32 %v3299, %v3326
    %v3368 = vmul.f32 %v3304, %v3326
    %v3369 = vmul.f32 %v3309, %v3326
    %v3370 = vmul.f32 %v3314, %v3326
    %v3371 = vmul.f32 %v3319, %v3326
    %v3372 = vmul.f32 %v3324, %v3326
    %v3373 = vadd.f32 %v3003, %v3327
    %v3374 = vadd.f32 %v3004, %v3328
    %v3375 = vadd.f32 %v3005, %v3329
    %v3376 = vadd.f32 %v3006, %v3330
    %v3377 = vadd.f32 %v3007, %v3331
    %v3378 = vadd.f32 %v3008, %v3332
    %v3379 = vadd.f32 %v3009, %v3333
    %v3380 = vadd.f32 %v3010, %v3334
    %v3381 = vadd.f32 %v3011, %v3335
    %v3382 = vadd.f32 %v3012, %v3336
    %v3383 = vadd.f32 %v3013, %v3337
    %v3384 = vadd.f32 %v3014, %v3338
    %v3385 = vadd.f32 %v3015, %v3339
    %v3386 = vadd.f32 %v3016, %v3340
    %v3387 = vadd.f32 %v3017, %v3341
    %v3388 = vadd.f32 %v3018, %v3342
    %v3389 = vadd.f32 %v3019, %v3343
    %v3390 = vadd.f32 %v3020, %v3344
    %v3391 = vadd.f32 %v3021, %v3345
    %v3392 = vadd.f32 %v3022, %v3346
    %v3393 = vadd.f32 %v3023, %v3347
    %v3394 = vadd.f32 %v3024, %v3348
    %v3395 = vadd.f32 %v3025, %v3349
    %v3396 = vadd.f32 %v3026, %v3350
    %v3397 = vadd.f32 %v3027, %v3351
    %v3398 = vadd.f32 %v3028, %v3352
    %v3399 = vadd.f32 %v3029, %v3353
    %v3400 = vadd.f32 %v3030, %v3354
    %v3401 = vadd.f32 %v3031, %v3355
    %v3402 = vadd.f32 %v3032, %v3356
    %v3403 = vadd.f32 %v3033, %v3357
    %v3404 = vadd.f32 %v3034, %v3358
    %v3405 = vadd.f32 %v3035, %v3359
    %v3406 = vadd.f32 %v3036, %v3360
    %v3407 = vadd.f32 %v3037, %v3361
    %v3408 = vadd.f32 %v3038, %v3362
    %v3409 = vadd.f32 %v3039, %v3363
    %v3410 = vadd.f32 %v3040, %v3364
    %v3411 = vadd.f32 %v3041, %v3365
    %v3412 = vadd.f32 %v3042, %v3366
    %v3413 = vadd.f32 %v3043, %v3367
    %v3414 = vadd.f32 %v3044, %v3368
    %v3415 = vadd.f32 %v3045, %v3369
    %v3416 = vadd.f32 %v3046, %v3370
    %v3417 = vadd.f32 %v3047, %v3371
    %v3418 = vadd.f32 %v3048, %v3372
    %v3419 = vld [vmem:[%s2] sm:$0x1]
    %v3420 = vperm.slane %v3419, 0
    %v3421 = vmul.f32 %v3373, %v3420
    %v3422 = vmul.f32 %v3374, %v3420
    %v3423 = vmul.f32 %v3375, %v3420
    %v3424 = vmul.f32 %v3376, %v3420
    %v3425 = vmul.f32 %v3377, %v3420
    %v3426 = vmul.f32 %v3378, %v3420
    %v3427 = vmul.f32 %v3379, %v3420
    %v3428 = vmul.f32 %v3380, %v3420
    %v3429 = vmul.f32 %v3381, %v3420
    %v3430 = vmul.f32 %v3382, %v3420
    %v3431 = vmul.f32 %v3383, %v3420
    %v3432 = vmul.f32 %v3384, %v3420
    %v3433 = vmul.f32 %v3385, %v3420
    %v3434 = vmul.f32 %v3386, %v3420
    %v3435 = vmul.f32 %v3387, %v3420
    %v3436 = vmul.f32 %v3388, %v3420
    %v3437 = vmul.f32 %v3389, %v3420
    %v3438 = vmul.f32 %v3390, %v3420
    %v3439 = vmul.f32 %v3391, %v3420
    %v3440 = vmul.f32 %v3392, %v3420
    %v3441 = vmul.f32 %v3393, %v3420
    %v3442 = vmul.f32 %v3394, %v3420
    %v3443 = vmul.f32 %v3395, %v3420
    %v3444 = vmul.f32 %v3396, %v3420
    %v3445 = vmul.f32 %v3397, %v3420
    %v3446 = vmul.f32 %v3398, %v3420
    %v3447 = vmul.f32 %v3399, %v3420
    %v3448 = vmul.f32 %v3400, %v3420
    %v3449 = vmul.f32 %v3401, %v3420
    %v3450 = vmul.f32 %v3402, %v3420
    %v3451 = vmul.f32 %v3403, %v3420
    %v3452 = vmul.f32 %v3404, %v3420
    %v3453 = vmul.f32 %v3405, %v3420
    %v3454 = vmul.f32 %v3406, %v3420
    %v3455 = vmul.f32 %v3407, %v3420
    %v3456 = vmul.f32 %v3408, %v3420
    %v3457 = vmul.f32 %v3409, %v3420
    %v3458 = vmul.f32 %v3410, %v3420
    %v3459 = vmul.f32 %v3411, %v3420
    %v3460 = vmul.f32 %v3412, %v3420
    %v3461 = vmul.f32 %v3413, %v3420
    %v3462 = vmul.f32 %v3414, %v3420
    %v3463 = vmul.f32 %v3415, %v3420
    %v3464 = vmul.f32 %v3416, %v3420
    %v3465 = vmul.f32 %v3417, %v3420
    %v3466 = vmul.f32 %v3418, %v3420
    %v3467 = vld [vmem:[%s2 + $0x1] sm:$0x1]
    %v3468 = vperm.slane %v3467, 0
    %v3469 = vadd.f32 %v3421, %v3468
    %v3470 = vadd.f32 %v3422, %v3468
    %v3471 = vadd.f32 %v3423, %v3468
    %v3472 = vadd.f32 %v3424, %v3468
    %v3473 = vadd.f32 %v3425, %v3468
    %v3474 = vadd.f32 %v3426, %v3468
    %v3475 = vadd.f32 %v3427, %v3468
    %v3476 = vadd.f32 %v3428, %v3468
    %v3477 = vadd.f32 %v3429, %v3468
    %v3478 = vadd.f32 %v3430, %v3468
    %v3479 = vadd.f32 %v3431, %v3468
    %v3480 = vadd.f32 %v3432, %v3468
    %v3481 = vadd.f32 %v3433, %v3468
    %v3482 = vadd.f32 %v3434, %v3468
    %v3483 = vadd.f32 %v3435, %v3468
    %v3484 = vadd.f32 %v3436, %v3468
    %v3485 = vadd.f32 %v3437, %v3468
    %v3486 = vadd.f32 %v3438, %v3468
    %v3487 = vadd.f32 %v3439, %v3468
    %v3488 = vadd.f32 %v3440, %v3468
    %v3489 = vadd.f32 %v3441, %v3468
    %v3490 = vadd.f32 %v3442, %v3468
    %v3491 = vadd.f32 %v3443, %v3468
    %v3492 = vadd.f32 %v3444, %v3468
    %v3493 = vadd.f32 %v3445, %v3468
    %v3494 = vadd.f32 %v3446, %v3468
    %v3495 = vadd.f32 %v3447, %v3468
    %v3496 = vadd.f32 %v3448, %v3468
    %v3497 = vadd.f32 %v3449, %v3468
    %v3498 = vadd.f32 %v3450, %v3468
    %v3499 = vadd.f32 %v3451, %v3468
    %v3500 = vadd.f32 %v3452, %v3468
    %v3501 = vadd.f32 %v3453, %v3468
    %v3502 = vadd.f32 %v3454, %v3468
    %v3503 = vadd.f32 %v3455, %v3468
    %v3504 = vadd.f32 %v3456, %v3468
    %v3505 = vadd.f32 %v3457, %v3468
    %v3506 = vadd.f32 %v3458, %v3468
    %v3507 = vadd.f32 %v3459, %v3468
    %v3508 = vadd.f32 %v3460, %v3468
    %v3509 = vadd.f32 %v3461, %v3468
    %v3510 = vadd.f32 %v3462, %v3468
    %v3511 = vadd.f32 %v3463, %v3468
    %v3512 = vadd.f32 %v3464, %v3468
    %v3513 = vadd.f32 %v3465, %v3468
    %v3514 = vadd.f32 %v3466, %v3468
    %v3515 = vmax.f32 %v3469, 0.0
    %v3516 = vmax.f32 %v3470, 0.0
    %v3517 = vmax.f32 %v3471, 0.0
    %v3518 = vmax.f32 %v3472, 0.0
    %v3519 = vmax.f32 %v3473, 0.0
    %v3520 = vmax.f32 %v3474, 0.0
    %v3521 = vmax.f32 %v3475, 0.0
    %v3522 = vmax.f32 %v3476, 0.0
    %v3523 = vmax.f32 %v3477, 0.0
    %v3524 = vmax.f32 %v3478, 0.0
    %v3525 = vmax.f32 %v3479, 0.0
    %v3526 = vmax.f32 %v3480, 0.0
    %v3527 = vmax.f32 %v3481, 0.0
    %v3528 = vmax.f32 %v3482, 0.0
    %v3529 = vmax.f32 %v3483, 0.0
    %v3530 = vmax.f32 %v3484, 0.0
    %v3531 = vmax.f32 %v3485, 0.0
    %v3532 = vmax.f32 %v3486, 0.0
    %v3533 = vmax.f32 %v3487, 0.0
    %v3534 = vmax.f32 %v3488, 0.0
    %v3535 = vmax.f32 %v3489, 0.0
    %v3536 = vmax.f32 %v3490, 0.0
    %v3537 = vmax.f32 %v3491, 0.0
    %v3538 = vmax.f32 %v3492, 0.0
    %v3539 = vmax.f32 %v3493, 0.0
    %v3540 = vmax.f32 %v3494, 0.0
    %v3541 = vmax.f32 %v3495, 0.0
    %v3542 = vmax.f32 %v3496, 0.0
    %v3543 = vmax.f32 %v3497, 0.0
    %v3544 = vmax.f32 %v3498, 0.0
    %v3545 = vmax.f32 %v3499, 0.0
    %v3546 = vmax.f32 %v3500, 0.0
    %v3547 = vmax.f32 %v3501, 0.0
    %v3548 = vmax.f32 %v3502, 0.0
    %v3549 = vmax.f32 %v3503, 0.0
    %v3550 = vmax.f32 %v3504, 0.0
    %v3551 = vmax.f32 %v3505, 0.0
    %v3552 = vmax.f32 %v3506, 0.0
    %v3553 = vmax.f32 %v3507, 0.0
    %v3554 = vmax.f32 %v3508, 0.0
    %v3555 = vmax.f32 %v3509, 0.0
    %v3556 = vmax.f32 %v3510, 0.0
    %v3557 = vmax.f32 %v3511, 0.0
    %v3558 = vmax.f32 %v3512, 0.0
    %v3559 = vmax.f32 %v3513, 0.0
    %v3560 = vmax.f32 %v3514, 0.0
    %vm3561 = vcmask 523264
    %3562 = vst.msk [vmem:[#allocation2] sm:$0xff] %vm3561, %v3515
    %3563 = vst.msk [vmem:[#allocation2 + $0x8] sm:$0xff] %vm3561, %v3516
    %3564 = vst.msk [vmem:[#allocation2 + $0x10] sm:$0xff] %vm3561, %v3517
    %3565 = vst.msk [vmem:[#allocation2 + $0x18] sm:$0xff] %vm3561, %v3518
    %3566 = vst.msk [vmem:[#allocation2 + $0x20] sm:$0xff] %vm3561, %v3519
    %3567 = vst.msk [vmem:[#allocation2 + $0x28] sm:$0xff] %vm3561, %v3520
    %3568 = vst.msk [vmem:[#allocation2 + $0x30] sm:$0xff] %vm3561, %v3521
    %3569 = vst.msk [vmem:[#allocation2 + $0x38] sm:$0xff] %vm3561, %v3522
    %3570 = vst.msk [vmem:[#allocation2 + $0x40] sm:$0xff] %vm3561, %v3523
    %3571 = vst.msk [vmem:[#allocation2 + $0x48] sm:$0xff] %vm3561, %v3524
    %3572 = vst.msk [vmem:[#allocation2 + $0x50] sm:$0xff] %vm3561, %v3525
    %3573 = vst.msk [vmem:[#allocation2 + $0x58] sm:$0xff] %vm3561, %v3526
    %3574 = vst.msk [vmem:[#allocation2 + $0x60] sm:$0xff] %vm3561, %v3527
    %3575 = vst.msk [vmem:[#allocation2 + $0x68] sm:$0xff] %vm3561, %v3528
    %3576 = vst.msk [vmem:[#allocation2 + $0x70] sm:$0xff] %vm3561, %v3529
    %3577 = vst.msk [vmem:[#allocation2 + $0x78] sm:$0xff] %vm3561, %v3530
    %3578 = vst.msk [vmem:[#allocation2 + $0x80] sm:$0xff] %vm3561, %v3531
    %3579 = vst.msk [vmem:[#allocation2 + $0x88] sm:$0xff] %vm3561, %v3532
    %3580 = vst.msk [vmem:[#allocation2 + $0x90] sm:$0xff] %vm3561, %v3533
    %3581 = vst.msk [vmem:[#allocation2 + $0x98] sm:$0xff] %vm3561, %v3534
    %3582 = vst.msk [vmem:[#allocation2 + $0xa0] sm:$0xff] %vm3561, %v3535
    %3583 = vst.msk [vmem:[#allocation2 + $0xa8] sm:$0xff] %vm3561, %v3536
    %3584 = vst.msk [vmem:[#allocation2 + $0xb0] sm:$0xff] %vm3561, %v3537
    %3585 = vst.msk [vmem:[#allocation2 + $0xb8] sm:$0xff] %vm3561, %v3538
    %3586 = vst.msk [vmem:[#allocation2 + $0xc0] sm:$0xff] %vm3561, %v3539
    %3587 = vst.msk [vmem:[#allocation2 + $0xc8] sm:$0xff] %vm3561, %v3540
    %3588 = vst.msk [vmem:[#allocation2 + $0xd0] sm:$0xff] %vm3561, %v3541
    %3589 = vst.msk [vmem:[#allocation2 + $0xd8] sm:$0xff] %vm3561, %v3542
    %3590 = vst.msk [vmem:[#allocation2 + $0xe0] sm:$0xff] %vm3561, %v3543
    %3591 = vst.msk [vmem:[#allocation2 + $0xe8] sm:$0xff] %vm3561, %v3544
    %3592 = vst.msk [vmem:[#allocation2 + $0xf0] sm:$0xff] %vm3561, %v3545
    %3593 = vst.msk [vmem:[#allocation2 + $0xf8] sm:$0xff] %vm3561, %v3546
    %3594 = vst.msk [vmem:[#allocation2 + $0x100] sm:$0xff] %vm3561, %v3547
    %3595 = vst.msk [vmem:[#allocation2 + $0x108] sm:$0xff] %vm3561, %v3548
    %3596 = vst.msk [vmem:[#allocation2 + $0x110] sm:$0xff] %vm3561, %v3549
    %3597 = vst.msk [vmem:[#allocation2 + $0x118] sm:$0xff] %vm3561, %v3550
    %3598 = vst.msk [vmem:[#allocation2 + $0x120] sm:$0xff] %vm3561, %v3551
    %3599 = vst.msk [vmem:[#allocation2 + $0x128] sm:$0xff] %vm3561, %v3552
    %3600 = vst.msk [vmem:[#allocation2 + $0x130] sm:$0xff] %vm3561, %v3553
    %3601 = vst.msk [vmem:[#allocation2 + $0x138] sm:$0xff] %vm3561, %v3554
    %3602 = vst.msk [vmem:[#allocation2 + $0x140] sm:$0xff] %vm3561, %v3555
    %3603 = vst.msk [vmem:[#allocation2 + $0x148] sm:$0xff] %vm3561, %v3556
    %3604 = vst.msk [vmem:[#allocation2 + $0x150] sm:$0xff] %vm3561, %v3557
    %3605 = vst.msk [vmem:[#allocation2 + $0x158] sm:$0xff] %vm3561, %v3558
    %3606 = vst.msk [vmem:[#allocation2 + $0x160] sm:$0xff] %vm3561, %v3559
    %vm3607 = vcmask 517120
    %3608 = vst.msk [vmem:[#allocation2 + $0x168] sm:$0x3] %vm3607, %v3560
    %v3609 = vld [vmem:[#allocation2] sm:$0xff]
    %v3610 = vld [vmem:[#allocation2 + $0x8] sm:$0xff]
    %v3611 = vld [vmem:[#allocation2 + $0x10] sm:$0xff]
    %v3612 = vld [vmem:[#allocation2 + $0x18] sm:$0xff]
    %v3613 = vld [vmem:[#allocation2 + $0x20] sm:$0xff]
    %v3614 = vld [vmem:[#allocation2 + $0x28] sm:$0xff]
    %v3615 = vld [vmem:[#allocation2 + $0x30] sm:$0xff]
    %v3616 = vld [vmem:[#allocation2 + $0x38] sm:$0xff]
    %v3617 = vld [vmem:[#allocation2 + $0x40] sm:$0xff]
    %v3618 = vld [vmem:[#allocation2 + $0x48] sm:$0xff]
    %v3619 = vld [vmem:[#allocation2 + $0x50] sm:$0xff]
    %v3620 = vld [vmem:[#allocation2 + $0x58] sm:$0xff]
    %v3621 = vld [vmem:[#allocation2 + $0x60] sm:$0xff]
    %v3622 = vld [vmem:[#allocation2 + $0x68] sm:$0xff]
    %v3623 = vld [vmem:[#allocation2 + $0x70] sm:$0xff]
    %v3624 = vld [vmem:[#allocation2 + $0x78] sm:$0xff]
    %v3625 = vld [vmem:[#allocation2 + $0x80] sm:$0xff]
    %v3626 = vld [vmem:[#allocation2 + $0x88] sm:$0xff]
    %v3627 = vld [vmem:[#allocation2 + $0x90] sm:$0xff]
    %v3628 = vld [vmem:[#allocation2 + $0x98] sm:$0xff]
    %v3629 = vld [vmem:[#allocation2 + $0xa0] sm:$0xff]
    %v3630 = vld [vmem:[#allocation2 + $0xa8] sm:$0xff]
    %v3631 = vld [vmem:[#allocation2 + $0xb0] sm:$0xff]
    %v3632 = vld [vmem:[#allocation2 + $0xb8] sm:$0xff]
    %v3633 = vld [vmem:[#allocation2 + $0xc0] sm:$0xff]
    %v3634 = vld [vmem:[#allocation2 + $0xc8] sm:$0xff]
    %v3635 = vld [vmem:[#allocation2 + $0xd0] sm:$0xff]
    %v3636 = vld [vmem:[#allocation2 + $0xd8] sm:$0xff]
    %v3637 = vld [vmem:[#allocation2 + $0xe0] sm:$0xff]
    %v3638 = vld [vmem:[#allocation2 + $0xe8] sm:$0xff]
    %v3639 = vld [vmem:[#allocation2 + $0xf0] sm:$0xff]
    %v3640 = vld [vmem:[#allocation2 + $0xf8] sm:$0xff]
    %v3641 = vld [vmem:[#allocation2 + $0x100] sm:$0xff]
    %v3642 = vld [vmem:[#allocation2 + $0x108] sm:$0xff]
    %v3643 = vld [vmem:[#allocation2 + $0x110] sm:$0xff]
    %v3644 = vld [vmem:[#allocation2 + $0x118] sm:$0xff]
    %v3645 = vld [vmem:[#allocation2 + $0x120] sm:$0xff]
    %v3646 = vld [vmem:[#allocation2 + $0x128] sm:$0xff]
    %v3647 = vld [vmem:[#allocation2 + $0x130] sm:$0xff]
    %v3648 = vld [vmem:[#allocation2 + $0x138] sm:$0xff]
    %v3649 = vld [vmem:[#allocation2 + $0x140] sm:$0xff]
    %v3650 = vld [vmem:[#allocation2 + $0x148] sm:$0xf]
    %v3651 = vld [vmem:[%s3] sm:$0xff]
    %v3652 = vld [vmem:[%s3 + $0x8] sm:$0xff]
    %v3653 = vld [vmem:[%s3 + $0x10] sm:$0xff]
    %v3654 = vld [vmem:[%s3 + $0x18] sm:$0xff]
    %v3655 = vld [vmem:[%s3 + $0x20] sm:$0xff]
    %v3656 = vld [vmem:[%s3 + $0x28] sm:$0xff]
    %v3657 = vld [vmem:[%s3 + $0x30] sm:$0xff]
    %v3658 = vld [vmem:[%s3 + $0x38] sm:$0xff]
    %v3659 = vld [vmem:[#allocation2 + $0x1] sm:$0xff]
    %v3660 = vld [vmem:[#allocation2 + $0x9] sm:$0xff]
    %v3661 = vld [vmem:[#allocation2 + $0x11] sm:$0xff]
    %v3662 = vld [vmem:[#allocation2 + $0x19] sm:$0xff]
    %v3663 = vld [vmem:[#allocation2 + $0x21] sm:$0xff]
    %v3664 = vld [vmem:[#allocation2 + $0x29] sm:$0xff]
    %v3665 = vld [vmem:[#allocation2 + $0x31] sm:$0xff]
    %v3666 = vld [vmem:[#allocation2 + $0x39] sm:$0xff]
    %v3667 = vld [vmem:[#allocation2 + $0x41] sm:$0xff]
    %v3668 = vld [vmem:[#allocation2 + $0x49] sm:$0xff]
    %v3669 = vld [vmem:[#allocation2 + $0x51] sm:$0xff]
    %v3670 = vld [vmem:[#allocation2 + $0x59] sm:$0xff]
    %v3671 = vld [vmem:[#allocation2 + $0x61] sm:$0xff]
    %v3672 = vld [vmem:[#allocation2 + $0x69] sm:$0xff]
    %v3673 = vld [vmem:[#allocation2 + $0x71] sm:$0xff]
    %v3674 = vld [vmem:[#allocation2 + $0x79] sm:$0xff]
    %v3675 = vld [vmem:[#allocation2 + $0x81] sm:$0xff]
    %v3676 = vld [vmem:[#allocation2 + $0x89] sm:$0xff]
    %v3677 = vld [vmem:[#allocation2 + $0x91] sm:$0xff]
    %v3678 = vld [vmem:[#allocation2 + $0x99] sm:$0xff]
    %v3679 = vld [vmem:[#allocation2 + $0xa1] sm:$0xff]
    %v3680 = vld [vmem:[#allocation2 + $0xa9] sm:$0xff]
    %v3681 = vld [vmem:[#allocation2 + $0xb1] sm:$0xff]
    %v3682 = vld [vmem:[#allocation2 + $0xb9] sm:$0xff]
    %v3683 = vld [vmem:[#allocation2 + $0xc1] sm:$0xff]
    %v3684 = vld [vmem:[#allocation2 + $0xc9] sm:$0xff]
    %v3685 = vld [vmem:[#allocation2 + $0xd1] sm:$0xff]
    %v3686 = vld [vmem:[#allocation2 + $0xd9] sm:$0xff]
    %v3687 = vld [vmem:[#allocation2 + $0xe1] sm:$0xff]
    %v3688 = vld [vmem:[#allocation2 + $0xe9] sm:$0xff]
    %v3689 = vld [vmem:[#allocation2 + $0xf1] sm:$0xff]
    %v3690 = vld [vmem:[#allocation2 + $0xf9] sm:$0xff]
    %v3691 = vld [vmem:[#allocation2 + $0x101] sm:$0xff]
    %v3692 = vld [vmem:[#allocation2 + $0x109] sm:$0xff]
    %v3693 = vld [vmem:[#allocation2 + $0x111] sm:$0xff]
    %v3694 = vld [vmem:[#allocation2 + $0x119] sm:$0xff]
    %v3695 = vld [vmem:[#allocation2 + $0x121] sm:$0xff]
    %v3696 = vld [vmem:[#allocation2 + $0x129] sm:$0xff]
    %v3697 = vld [vmem:[#allocation2 + $0x131] sm:$0xff]
    %v3698 = vld [vmem:[#allocation2 + $0x139] sm:$0xff]
    %v3699 = vld [vmem:[#allocation2 + $0x141] sm:$0xff]
    %v3700 = vld [vmem:[#allocation2 + $0x149] sm:$0xf]
    %s3701 = scalar_lea.vmem %s3, 64
    %v3702 = vld [vmem:[%s3701] sm:$0xff]
    %v3703 = vld [vmem:[%s3701 + $0x8] sm:$0xff]
    %v3704 = vld [vmem:[%s3701 + $0x10] sm:$0xff]
    %v3705 = vld [vmem:[%s3701 + $0x18] sm:$0xff]
    %v3706 = vld [vmem:[%s3701 + $0x20] sm:$0xff]
    %v3707 = vld [vmem:[%s3701 + $0x28] sm:$0xff]
    %v3708 = vld [vmem:[%s3701 + $0x30] sm:$0xff]
    %v3709 = vld [vmem:[%s3701 + $0x38] sm:$0xff]
    %v3711 = vsel %vm3561, %v3659, 0
    %v3714 = vsel %vm3561, %v3660, 0
    %v3717 = vsel %vm3561, %v3661, 0
    %v3720 = vsel %vm3561, %v3662, 0
    %v3723 = vsel %vm3561, %v3663, 0
    %v3726 = vsel %vm3561, %v3664, 0
    %v3729 = vsel %vm3561, %v3665, 0
    %v3732 = vsel %vm3561, %v3666, 0
    %v3735 = vsel %vm3561, %v3667, 0
    %v3738 = vsel %vm3561, %v3668, 0
    %v3741 = vsel %vm3561, %v3669, 0
    %v3744 = vsel %vm3561, %v3670, 0
    %v3747 = vsel %vm3561, %v3671, 0
    %v3750 = vsel %vm3561, %v3672, 0
    %v3753 = vsel %vm3561, %v3673, 0
    %v3756 = vsel %vm3561, %v3674, 0
    %v3759 = vsel %vm3561, %v3675, 0
    %v3762 = vsel %vm3561, %v3676, 0
    %v3765 = vsel %vm3561, %v3677, 0
    %v3768 = vsel %vm3561, %v3678, 0
    %v3771 = vsel %vm3561, %v3679, 0
    %v3774 = vsel %vm3561, %v3680, 0
    %v3777 = vsel %vm3561, %v3681, 0
    %v3780 = vsel %vm3561, %v3682, 0
    %v3783 = vsel %vm3561, %v3683, 0
    %v3786 = vsel %vm3561, %v3684, 0
    %v3789 = vsel %vm3561, %v3685, 0
    %v3792 = vsel %vm3561, %v3686, 0
    %v3795 = vsel %vm3561, %v3687, 0
    %v3798 = vsel %vm3561, %v3688, 0
    %v3801 = vsel %vm3561, %v3689, 0
    %v3804 = vsel %vm3561, %v3690, 0
    %v3807 = vsel %vm3561, %v3691, 0
    %v3810 = vsel %vm3561, %v3692, 0
    %v3813 = vsel %vm3561, %v3693, 0
    %v3816 = vsel %vm3561, %v3694, 0
    %v3819 = vsel %vm3561, %v3695, 0
    %v3822 = vsel %vm3561, %v3696, 0
    %v3825 = vsel %vm3561, %v3697, 0
    %v3828 = vsel %vm3561, %v3698, 0
    %v3831 = vsel %vm3561, %v3699, 0
    %v3834 = vsel %vm3561, %v3700, 0
    %3836 = vmatpush.msra.mxu0 0.0
    %3837 = vmatpush.msra.mxu0 0.0
    %3838 = vmatpush.msra.mxu0 0.0
    %3839 = vmatpush.msra.mxu0 0.0
    %3840 = vmatpush.msra.mxu0 0.0
    %3841 = vmatpush.msra.mxu0 0.0
    %3842 = vmatpush.msra.mxu0 0.0
    %3843 = vmatpush.msra.mxu0 0.0
    %3844 = vmatpush.msra.mxu0 %v3709
    %3845 = vmatpush.msra.mxu0 %v3708
    %3846 = vmatpush.msra.mxu0 %v3707
    %3847 = vmatpush.msra.mxu0 %v3706
    %3848 = vmatpush.msra.mxu0 %v3705
    %3849 = vmatpush.msra.mxu0 %v3704
    %3850 = vmatpush.msra.mxu0 %v3703
    %3851 = vmatpush.msra.mxu0 %v3702
    %3852 = vmatmul.f32.gmra.mxu0 %v3711
    %v3853 = vpop.f32.mrf.mxu0
    %v3854 = vadd.f32 0.0, %v3853
    %3855 = vmatmul.f32.gmra.mxu0 %v3714
    %v3856 = vpop.f32.mrf.mxu0
    %v3857 = vadd.f32 0.0, %v3856
    %3858 = vmatmul.f32.gmra.mxu0 %v3717
    %v3859 = vpop.f32.mrf.mxu0
    %v3860 = vadd.f32 0.0, %v3859
    %3861 = vmatmul.f32.gmra.mxu0 %v3720
    %v3862 = vpop.f32.mrf.mxu0
    %v3863 = vadd.f32 0.0, %v3862
    %3864 = vmatmul.f32.gmra.mxu0 %v3723
    %v3865 = vpop.f32.mrf.mxu0
    %v3866 = vadd.f32 0.0, %v3865
    %3867 = vmatmul.f32.gmra.mxu0 %v3726
    %v3868 = vpop.f32.mrf.mxu0
    %v3869 = vadd.f32 0.0, %v3868
    %3870 = vmatmul.f32.gmra.mxu0 %v3729
    %v3871 = vpop.f32.mrf.mxu0
    %v3872 = vadd.f32 0.0, %v3871
    %3873 = vmatmul.f32.gmra.mxu0 %v3732
    %v3874 = vpop.f32.mrf.mxu0
    %v3875 = vadd.f32 0.0, %v3874
    %3876 = vmatmul.f32.gmra.mxu0 %v3735
    %v3877 = vpop.f32.mrf.mxu0
    %v3878 = vadd.f32 0.0, %v3877
    %3879 = vmatmul.f32.gmra.mxu0 %v3738
    %v3880 = vpop.f32.mrf.mxu0
    %v3881 = vadd.f32 0.0, %v3880
    %3882 = vmatmul.f32.gmra.mxu0 %v3741
    %v3883 = vpop.f32.mrf.mxu0
    %v3884 = vadd.f32 0.0, %v3883
    %3885 = vmatmul.f32.gmra.mxu0 %v3744
    %v3886 = vpop.f32.mrf.mxu0
    %v3887 = vadd.f32 0.0, %v3886
    %3888 = vmatmul.f32.gmra.mxu0 %v3747
    %v3889 = vpop.f32.mrf.mxu0
    %v3890 = vadd.f32 0.0, %v3889
    %3891 = vmatmul.f32.gmra.mxu0 %v3750
    %v3892 = vpop.f32.mrf.mxu0
    %v3893 = vadd.f32 0.0, %v3892
    %3894 = vmatmul.f32.gmra.mxu0 %v3753
    %v3895 = vpop.f32.mrf.mxu0
    %v3896 = vadd.f32 0.0, %v3895
    %3897 = vmatmul.f32.gmra.mxu0 %v3756
    %v3898 = vpop.f32.mrf.mxu0
    %v3899 = vadd.f32 0.0, %v3898
    %3900 = vmatmul.f32.gmra.mxu0 %v3759
    %v3901 = vpop.f32.mrf.mxu0
    %v3902 = vadd.f32 0.0, %v3901
    %3903 = vmatmul.f32.gmra.mxu0 %v3762
    %v3904 = vpop.f32.mrf.mxu0
    %v3905 = vadd.f32 0.0, %v3904
    %3906 = vmatmul.f32.gmra.mxu0 %v3765
    %v3907 = vpop.f32.mrf.mxu0
    %v3908 = vadd.f32 0.0, %v3907
    %3909 = vmatmul.f32.gmra.mxu0 %v3768
    %v3910 = vpop.f32.mrf.mxu0
    %v3911 = vadd.f32 0.0, %v3910
    %3912 = vmatmul.f32.gmra.mxu0 %v3771
    %v3913 = vpop.f32.mrf.mxu0
    %v3914 = vadd.f32 0.0, %v3913
    %3915 = vmatmul.f32.gmra.mxu0 %v3774
    %v3916 = vpop.f32.mrf.mxu0
    %v3917 = vadd.f32 0.0, %v3916
    %3918 = vmatmul.f32.gmra.mxu0 %v3777
    %v3919 = vpop.f32.mrf.mxu0
    %v3920 = vadd.f32 0.0, %v3919
    %3921 = vmatmul.f32.gmra.mxu0 %v3780
    %v3922 = vpop.f32.mrf.mxu0
    %v3923 = vadd.f32 0.0, %v3922
    %3924 = vmatmul.f32.gmra.mxu0 %v3783
    %v3925 = vpop.f32.mrf.mxu0
    %v3926 = vadd.f32 0.0, %v3925
    %3927 = vmatmul.f32.gmra.mxu0 %v3786
    %v3928 = vpop.f32.mrf.mxu0
    %v3929 = vadd.f32 0.0, %v3928
    %3930 = vmatmul.f32.gmra.mxu0 %v3789
    %v3931 = vpop.f32.mrf.mxu0
    %v3932 = vadd.f32 0.0, %v3931
    %3933 = vmatmul.f32.gmra.mxu0 %v3792
    %v3934 = vpop.f32.mrf.mxu0
    %v3935 = vadd.f32 0.0, %v3934
    %3936 = vmatmul.f32.gmra.mxu0 %v3795
    %v3937 = vpop.f32.mrf.mxu0
    %v3938 = vadd.f32 0.0, %v3937
    %3939 = vmatmul.f32.gmra.mxu0 %v3798
    %v3940 = vpop.f32.mrf.mxu0
    %v3941 = vadd.f32 0.0, %v3940
    %3942 = vmatmul.f32.gmra.mxu0 %v3801
    %v3943 = vpop.f32.mrf.mxu0
    %v3944 = vadd.f32 0.0, %v3943
    %3945 = vmatmul.f32.gmra.mxu0 %v3804
    %v3946 = vpop.f32.mrf.mxu0
    %v3947 = vadd.f32 0.0, %v3946
    %3948 = vmatmul.f32.gmra.mxu0 %v3807
    %v3949 = vpop.f32.mrf.mxu0
    %v3950 = vadd.f32 0.0, %v3949
    %3951 = vmatmul.f32.gmra.mxu0 %v3810
    %v3952 = vpop.f32.mrf.mxu0
    %v3953 = vadd.f32 0.0, %v3952
    %3954 = vmatmul.f32.gmra.mxu0 %v3813
    %v3955 = vpop.f32.mrf.mxu0
    %v3956 = vadd.f32 0.0, %v3955
    %3957 = vmatmul.f32.gmra.mxu0 %v3816
    %v3958 = vpop.f32.mrf.mxu0
    %v3959 = vadd.f32 0.0, %v3958
    %3960 = vmatmul.f32.gmra.mxu0 %v3819
    %v3961 = vpop.f32.mrf.mxu0
    %v3962 = vadd.f32 0.0, %v3961
    %3963 = vmatmul.f32.gmra.mxu0 %v3822
    %v3964 = vpop.f32.mrf.mxu0
    %v3965 = vadd.f32 0.0, %v3964
    %3966 = vmatmul.f32.gmra.mxu0 %v3825
    %v3967 = vpop.f32.mrf.mxu0
    %v3968 = vadd.f32 0.0, %v3967
    %3969 = vmatmul.f32.gmra.mxu0 %v3828
    %v3970 = vpop.f32.mrf.mxu0
    %v3971 = vadd.f32 0.0, %v3970
    %3972 = vmatmul.f32.gmra.mxu0 %v3831
    %v3973 = vpop.f32.mrf.mxu0
    %v3974 = vadd.f32 0.0, %v3973
    %3975 = vmatmul.f32.gmra.mxu0 %v3834
    %v3976 = vpop.f32.mrf.mxu0
    %v3977 = vadd.f32 0.0, %v3976
    %3978 = vdwg.mxu0
    %v3980 = vsel %vm3561, %v3609, 0
    %v3983 = vsel %vm3561, %v3610, 0
    %v3986 = vsel %vm3561, %v3611, 0
    %v3989 = vsel %vm3561, %v3612, 0
    %v3992 = vsel %vm3561, %v3613, 0
    %v3995 = vsel %vm3561, %v3614, 0
    %v3998 = vsel %vm3561, %v3615, 0
    %v4001 = vsel %vm3561, %v3616, 0
    %v4004 = vsel %vm3561, %v3617, 0
    %v4007 = vsel %vm3561, %v3618, 0
    %v4010 = vsel %vm3561, %v3619, 0
    %v4013 = vsel %vm3561, %v3620, 0
    %v4016 = vsel %vm3561, %v3621, 0
    %v4019 = vsel %vm3561, %v3622, 0
    %v4022 = vsel %vm3561, %v3623, 0
    %v4025 = vsel %vm3561, %v3624, 0
    %v4028 = vsel %vm3561, %v3625, 0
    %v4031 = vsel %vm3561, %v3626, 0
    %v4034 = vsel %vm3561, %v3627, 0
    %v4037 = vsel %vm3561, %v3628, 0
    %v4040 = vsel %vm3561, %v3629, 0
    %v4043 = vsel %vm3561, %v3630, 0
    %v4046 = vsel %vm3561, %v3631, 0
    %v4049 = vsel %vm3561, %v3632, 0
    %v4052 = vsel %vm3561, %v3633, 0
    %v4055 = vsel %vm3561, %v3634, 0
    %v4058 = vsel %vm3561, %v3635, 0
    %v4061 = vsel %vm3561, %v3636, 0
    %v4064 = vsel %vm3561, %v3637, 0
    %v4067 = vsel %vm3561, %v3638, 0
    %v4070 = vsel %vm3561, %v3639, 0
    %v4073 = vsel %vm3561, %v3640, 0
    %v4076 = vsel %vm3561, %v3641, 0
    %v4079 = vsel %vm3561, %v3642, 0
    %v4082 = vsel %vm3561, %v3643, 0
    %v4085 = vsel %vm3561, %v3644, 0
    %v4088 = vsel %vm3561, %v3645, 0
    %v4091 = vsel %vm3561, %v3646, 0
    %v4094 = vsel %vm3561, %v3647, 0
    %v4097 = vsel %vm3561, %v3648, 0
    %v4100 = vsel %vm3561, %v3649, 0
    %v4103 = vsel %vm3561, %v3650, 0
    %4105 = vmatpush.msra.mxu0 0.0
    %4106 = vmatpush.msra.mxu0 0.0
    %4107 = vmatpush.msra.mxu0 0.0
    %4108 = vmatpush.msra.mxu0 0.0
    %4109 = vmatpush.msra.mxu0 0.0
    %4110 = vmatpush.msra.mxu0 0.0
    %4111 = vmatpush.msra.mxu0 0.0
    %4112 = vmatpush.msra.mxu0 0.0
    %4113 = vmatpush.msra.mxu0 %v3658
    %4114 = vmatpush.msra.mxu0 %v3657
    %4115 = vmatpush.msra.mxu0 %v3656
    %4116 = vmatpush.msra.mxu0 %v3655
    %4117 = vmatpush.msra.mxu0 %v3654
    %4118 = vmatpush.msra.mxu0 %v3653
    %4119 = vmatpush.msra.mxu0 %v3652
    %4120 = vmatpush.msra.mxu0 %v3651
    %4121 = vmatmul.f32.gmra.mxu0 %v3980
    %v4122 = vpop.f32.mrf.mxu0
    %v4123 = vadd.f32 %v3854, %v4122
    %4124 = vmatmul.f32.gmra.mxu0 %v3983
    %v4125 = vpop.f32.mrf.mxu0
    %v4126 = vadd.f32 %v3857, %v4125
    %4127 = vmatmul.f32.gmra.mxu0 %v3986
    %v4128 = vpop.f32.mrf.mxu0
    %v4129 = vadd.f32 %v3860, %v4128
    %4130 = vmatmul.f32.gmra.mxu0 %v3989
    %v4131 = vpop.f32.mrf.mxu0
    %v4132 = vadd.f32 %v3863, %v4131
    %4133 = vmatmul.f32.gmra.mxu0 %v3992
    %v4134 = vpop.f32.mrf.mxu0
    %v4135 = vadd.f32 %v3866, %v4134
    %4136 = vmatmul.f32.gmra.mxu0 %v3995
    %v4137 = vpop.f32.mrf.mxu0
    %v4138 = vadd.f32 %v3869, %v4137
    %4139 = vmatmul.f32.gmra.mxu0 %v3998
    %v4140 = vpop.f32.mrf.mxu0
    %v4141 = vadd.f32 %v3872, %v4140
    %4142 = vmatmul.f32.gmra.mxu0 %v4001
    %v4143 = vpop.f32.mrf.mxu0
    %v4144 = vadd.f32 %v3875, %v4143
    %4145 = vmatmul.f32.gmra.mxu0 %v4004
    %v4146 = vpop.f32.mrf.mxu0
    %v4147 = vadd.f32 %v3878, %v4146
    %4148 = vmatmul.f32.gmra.mxu0 %v4007
    %v4149 = vpop.f32.mrf.mxu0
    %v4150 = vadd.f32 %v3881, %v4149
    %4151 = vmatmul.f32.gmra.mxu0 %v4010
    %v4152 = vpop.f32.mrf.mxu0
    %v4153 = vadd.f32 %v3884, %v4152
    %4154 = vmatmul.f32.gmra.mxu0 %v4013
    %v4155 = vpop.f32.mrf.mxu0
    %v4156 = vadd.f32 %v3887, %v4155
    %4157 = vmatmul.f32.gmra.mxu0 %v4016
    %v4158 = vpop.f32.mrf.mxu0
    %v4159 = vadd.f32 %v3890, %v4158
    %4160 = vmatmul.f32.gmra.mxu0 %v4019
    %v4161 = vpop.f32.mrf.mxu0
    %v4162 = vadd.f32 %v3893, %v4161
    %4163 = vmatmul.f32.gmra.mxu0 %v4022
    %v4164 = vpop.f32.mrf.mxu0
    %v4165 = vadd.f32 %v3896, %v4164
    %4166 = vmatmul.f32.gmra.mxu0 %v4025
    %v4167 = vpop.f32.mrf.mxu0
    %v4168 = vadd.f32 %v3899, %v4167
    %4169 = vmatmul.f32.gmra.mxu0 %v4028
    %v4170 = vpop.f32.mrf.mxu0
    %v4171 = vadd.f32 %v3902, %v4170
    %4172 = vmatmul.f32.gmra.mxu0 %v4031
    %v4173 = vpop.f32.mrf.mxu0
    %v4174 = vadd.f32 %v3905, %v4173
    %4175 = vmatmul.f32.gmra.mxu0 %v4034
    %v4176 = vpop.f32.mrf.mxu0
    %v4177 = vadd.f32 %v3908, %v4176
    %4178 = vmatmul.f32.gmra.mxu0 %v4037
    %v4179 = vpop.f32.mrf.mxu0
    %v4180 = vadd.f32 %v3911, %v4179
    %4181 = vmatmul.f32.gmra.mxu0 %v4040
    %v4182 = vpop.f32.mrf.mxu0
    %v4183 = vadd.f32 %v3914, %v4182
    %4184 = vmatmul.f32.gmra.mxu0 %v4043
    %v4185 = vpop.f32.mrf.mxu0
    %v4186 = vadd.f32 %v3917, %v4185
    %4187 = vmatmul.f32.gmra.mxu0 %v4046
    %v4188 = vpop.f32.mrf.mxu0
    %v4189 = vadd.f32 %v3920, %v4188
    %4190 = vmatmul.f32.gmra.mxu0 %v4049
    %v4191 = vpop.f32.mrf.mxu0
    %v4192 = vadd.f32 %v3923, %v4191
    %4193 = vmatmul.f32.gmra.mxu0 %v4052
    %v4194 = vpop.f32.mrf.mxu0
    %v4195 = vadd.f32 %v3926, %v4194
    %4196 = vmatmul.f32.gmra.mxu0 %v4055
    %v4197 = vpop.f32.mrf.mxu0
    %v4198 = vadd.f32 %v3929, %v4197
    %4199 = vmatmul.f32.gmra.mxu0 %v4058
    %v4200 = vpop.f32.mrf.mxu0
    %v4201 = vadd.f32 %v3932, %v4200
    %4202 = vmatmul.f32.gmra.mxu0 %v4061
    %v4203 = vpop.f32.mrf.mxu0
    %v4204 = vadd.f32 %v3935, %v4203
    %4205 = vmatmul.f32.gmra.mxu0 %v4064
    %v4206 = vpop.f32.mrf.mxu0
    %v4207 = vadd.f32 %v3938, %v4206
    %4208 = vmatmul.f32.gmra.mxu0 %v4067
    %v4209 = vpop.f32.mrf.mxu0
    %v4210 = vadd.f32 %v3941, %v4209
    %4211 = vmatmul.f32.gmra.mxu0 %v4070
    %v4212 = vpop.f32.mrf.mxu0
    %v4213 = vadd.f32 %v3944, %v4212
    %4214 = vmatmul.f32.gmra.mxu0 %v4073
    %v4215 = vpop.f32.mrf.mxu0
    %v4216 = vadd.f32 %v3947, %v4215
    %4217 = vmatmul.f32.gmra.mxu0 %v4076
    %v4218 = vpop.f32.mrf.mxu0
    %v4219 = vadd.f32 %v3950, %v4218
    %4220 = vmatmul.f32.gmra.mxu0 %v4079
    %v4221 = vpop.f32.mrf.mxu0
    %v4222 = vadd.f32 %v3953, %v4221
    %4223 = vmatmul.f32.gmra.mxu0 %v4082
    %v4224 = vpop.f32.mrf.mxu0
    %v4225 = vadd.f32 %v3956, %v4224
    %4226 = vmatmul.f32.gmra.mxu0 %v4085
    %v4227 = vpop.f32.mrf.mxu0
    %v4228 = vadd.f32 %v3959, %v4227
    %4229 = vmatmul.f32.gmra.mxu0 %v4088
    %v4230 = vpop.f32.mrf.mxu0
    %v4231 = vadd.f32 %v3962, %v4230
    %4232 = vmatmul.f32.gmra.mxu0 %v4091
    %v4233 = vpop.f32.mrf.mxu0
    %v4234 = vadd.f32 %v3965, %v4233
    %4235 = vmatmul.f32.gmra.mxu0 %v4094
    %v4236 = vpop.f32.mrf.mxu0
    %v4237 = vadd.f32 %v3968, %v4236
    %4238 = vmatmul.f32.gmra.mxu0 %v4097
    %v4239 = vpop.f32.mrf.mxu0
    %v4240 = vadd.f32 %v3971, %v4239
    %4241 = vmatmul.f32.gmra.mxu0 %v4100
    %v4242 = vpop.f32.mrf.mxu0
    %v4243 = vadd.f32 %v3974, %v4242
    %4244 = vmatmul.f32.gmra.mxu0 %v4103
    %v4245 = vpop.f32.mrf.mxu0
    %v4246 = vadd.f32 %v3977, %v4245
    %4247 = vdwg.mxu0
    %v4248 = vld [vmem:[#allocation2 + $0x2] sm:$0xff]
    %v4249 = vld [vmem:[#allocation2 + $0xa] sm:$0xff]
    %v4250 = vld [vmem:[#allocation2 + $0x12] sm:$0xff]
    %v4251 = vld [vmem:[#allocation2 + $0x1a] sm:$0xff]
    %v4252 = vld [vmem:[#allocation2 + $0x22] sm:$0xff]
    %v4253 = vld [vmem:[#allocation2 + $0x2a] sm:$0xff]
    %v4254 = vld [vmem:[#allocation2 + $0x32] sm:$0xff]
    %v4255 = vld [vmem:[#allocation2 + $0x3a] sm:$0xff]
    %v4256 = vld [vmem:[#allocation2 + $0x42] sm:$0xff]
    %v4257 = vld [vmem:[#allocation2 + $0x4a] sm:$0xff]
    %v4258 = vld [vmem:[#allocation2 + $0x52] sm:$0xff]
    %v4259 = vld [vmem:[#allocation2 + $0x5a] sm:$0xff]
    %v4260 = vld [vmem:[#allocation2 + $0x62] sm:$0xff]
    %v4261 = vld [vmem:[#allocation2 + $0x6a] sm:$0xff]
    %v4262 = vld [vmem:[#allocation2 + $0x72] sm:$0xff]
    %v4263 = vld [vmem:[#allocation2 + $0x7a] sm:$0xff]
    %v4264 = vld [vmem:[#allocation2 + $0x82] sm:$0xff]
    %v4265 = vld [vmem:[#allocation2 + $0x8a] sm:$0xff]
    %v4266 = vld [vmem:[#allocation2 + $0x92] sm:$0xff]
    %v4267 = vld [vmem:[#allocation2 + $0x9a] sm:$0xff]
    %v4268 = vld [vmem:[#allocation2 + $0xa2] sm:$0xff]
    %v4269 = vld [vmem:[#allocation2 + $0xaa] sm:$0xff]
    %v4270 = vld [vmem:[#allocation2 + $0xb2] sm:$0xff]
    %v4271 = vld [vmem:[#allocation2 + $0xba] sm:$0xff]
    %v4272 = vld [vmem:[#allocation2 + $0xc2] sm:$0xff]
    %v4273 = vld [vmem:[#allocation2 + $0xca] sm:$0xff]
    %v4274 = vld [vmem:[#allocation2 + $0xd2] sm:$0xff]
    %v4275 = vld [vmem:[#allocation2 + $0xda] sm:$0xff]
    %v4276 = vld [vmem:[#allocation2 + $0xe2] sm:$0xff]
    %v4277 = vld [vmem:[#allocation2 + $0xea] sm:$0xff]
    %v4278 = vld [vmem:[#allocation2 + $0xf2] sm:$0xff]
    %v4279 = vld [vmem:[#allocation2 + $0xfa] sm:$0xff]
    %v4280 = vld [vmem:[#allocation2 + $0x102] sm:$0xff]
    %v4281 = vld [vmem:[#allocation2 + $0x10a] sm:$0xff]
    %v4282 = vld [vmem:[#allocation2 + $0x112] sm:$0xff]
    %v4283 = vld [vmem:[#allocation2 + $0x11a] sm:$0xff]
    %v4284 = vld [vmem:[#allocation2 + $0x122] sm:$0xff]
    %v4285 = vld [vmem:[#allocation2 + $0x12a] sm:$0xff]
    %v4286 = vld [vmem:[#allocation2 + $0x132] sm:$0xff]
    %v4287 = vld [vmem:[#allocation2 + $0x13a] sm:$0xff]
    %v4288 = vld [vmem:[#allocation2 + $0x142] sm:$0xff]
    %v4289 = vld [vmem:[#allocation2 + $0x14a] sm:$0xf]
    %s4290 = scalar_lea.vmem %s3, 128
    %v4291 = vld [vmem:[%s4290] sm:$0xff]
    %v4292 = vld [vmem:[%s4290 + $0x8] sm:$0xff]
    %v4293 = vld [vmem:[%s4290 + $0x10] sm:$0xff]
    %v4294 = vld [vmem:[%s4290 + $0x18] sm:$0xff]
    %v4295 = vld [vmem:[%s4290 + $0x20] sm:$0xff]
    %v4296 = vld [vmem:[%s4290 + $0x28] sm:$0xff]
    %v4297 = vld [vmem:[%s4290 + $0x30] sm:$0xff]
    %v4298 = vld [vmem:[%s4290 + $0x38] sm:$0xff]
    %v4300 = vsel %vm3561, %v4248, 0
    %v4303 = vsel %vm3561, %v4249, 0
    %v4306 = vsel %vm3561, %v4250, 0
    %v4309 = vsel %vm3561, %v4251, 0
    %v4312 = vsel %vm3561, %v4252, 0
    %v4315 = vsel %vm3561, %v4253, 0
    %v4318 = vsel %vm3561, %v4254, 0
    %v4321 = vsel %vm3561, %v4255, 0
    %v4324 = vsel %vm3561, %v4256, 0
    %v4327 = vsel %vm3561, %v4257, 0
    %v4330 = vsel %vm3561, %v4258, 0
    %v4333 = vsel %vm3561, %v4259, 0
    %v4336 = vsel %vm3561, %v4260, 0
    %v4339 = vsel %vm3561, %v4261, 0
    %v4342 = vsel %vm3561, %v4262, 0
    %v4345 = vsel %vm3561, %v4263, 0
    %v4348 = vsel %vm3561, %v4264, 0
    %v4351 = vsel %vm3561, %v4265, 0
    %v4354 = vsel %vm3561, %v4266, 0
    %v4357 = vsel %vm3561, %v4267, 0
    %v4360 = vsel %vm3561, %v4268, 0
    %v4363 = vsel %vm3561, %v4269, 0
    %v4366 = vsel %vm3561, %v4270, 0
    %v4369 = vsel %vm3561, %v4271, 0
    %v4372 = vsel %vm3561, %v4272, 0
    %v4375 = vsel %vm3561, %v4273, 0
    %v4378 = vsel %vm3561, %v4274, 0
    %v4381 = vsel %vm3561, %v4275, 0
    %v4384 = vsel %vm3561, %v4276, 0
    %v4387 = vsel %vm3561, %v4277, 0
    %v4390 = vsel %vm3561, %v4278, 0
    %v4393 = vsel %vm3561, %v4279, 0
    %v4396 = vsel %vm3561, %v4280, 0
    %v4399 = vsel %vm3561, %v4281, 0
    %v4402 = vsel %vm3561, %v4282, 0
    %v4405 = vsel %vm3561, %v4283, 0
    %v4408 = vsel %vm3561, %v4284, 0
    %v4411 = vsel %vm3561, %v4285, 0
    %v4414 = vsel %vm3561, %v4286, 0
    %v4417 = vsel %vm3561, %v4287, 0
    %v4420 = vsel %vm3561, %v4288, 0
    %v4423 = vsel %vm3561, %v4289, 0
    %4425 = vmatpush.msra.mxu0 0.0
    %4426 = vmatpush.msra.mxu0 0.0
    %4427 = vmatpush.msra.mxu0 0.0
    %4428 = vmatpush.msra.mxu0 0.0
    %4429 = vmatpush.msra.mxu0 0.0
    %4430 = vmatpush.msra.mxu0 0.0
    %4431 = vmatpush.msra.mxu0 0.0
    %4432 = vmatpush.msra.mxu0 0.0
    %4433 = vmatpush.msra.mxu0 %v4298
    %4434 = vmatpush.msra.mxu0 %v4297
    %4435 = vmatpush.msra.mxu0 %v4296
    %4436 = vmatpush.msra.mxu0 %v4295
    %4437 = vmatpush.msra.mxu0 %v4294
    %4438 = vmatpush.msra.mxu0 %v4293
    %4439 = vmatpush.msra.mxu0 %v4292
    %4440 = vmatpush.msra.mxu0 %v4291
    %4441 = vmatmul.f32.gmra.mxu0 %v4300
    %v4442 = vpop.f32.mrf.mxu0
    %v4443 = vadd.f32 0.0, %v4442
    %4444 = vmatmul.f32.gmra.mxu0 %v4303
    %v4445 = vpop.f32.mrf.mxu0
    %v4446 = vadd.f32 0.0, %v4445
    %4447 = vmatmul.f32.gmra.mxu0 %v4306
    %v4448 = vpop.f32.mrf.mxu0
    %v4449 = vadd.f32 0.0, %v4448
    %4450 = vmatmul.f32.gmra.mxu0 %v4309
    %v4451 = vpop.f32.mrf.mxu0
    %v4452 = vadd.f32 0.0, %v4451
    %4453 = vmatmul.f32.gmra.mxu0 %v4312
    %v4454 = vpop.f32.mrf.mxu0
    %v4455 = vadd.f32 0.0, %v4454
    %4456 = vmatmul.f32.gmra.mxu0 %v4315
    %v4457 = vpop.f32.mrf.mxu0
    %v4458 = vadd.f32 0.0, %v4457
    %4459 = vmatmul.f32.gmra.mxu0 %v4318
    %v4460 = vpop.f32.mrf.mxu0
    %v4461 = vadd.f32 0.0, %v4460
    %4462 = vmatmul.f32.gmra.mxu0 %v4321
    %v4463 = vpop.f32.mrf.mxu0
    %v4464 = vadd.f32 0.0, %v4463
    %4465 = vmatmul.f32.gmra.mxu0 %v4324
    %v4466 = vpop.f32.mrf.mxu0
    %v4467 = vadd.f32 0.0, %v4466
    %4468 = vmatmul.f32.gmra.mxu0 %v4327
    %v4469 = vpop.f32.mrf.mxu0
    %v4470 = vadd.f32 0.0, %v4469
    %4471 = vmatmul.f32.gmra.mxu0 %v4330
    %v4472 = vpop.f32.mrf.mxu0
    %v4473 = vadd.f32 0.0, %v4472
    %4474 = vmatmul.f32.gmra.mxu0 %v4333
    %v4475 = vpop.f32.mrf.mxu0
    %v4476 = vadd.f32 0.0, %v4475
    %4477 = vmatmul.f32.gmra.mxu0 %v4336
    %v4478 = vpop.f32.mrf.mxu0
    %v4479 = vadd.f32 0.0, %v4478
    %4480 = vmatmul.f32.gmra.mxu0 %v4339
    %v4481 = vpop.f32.mrf.mxu0
    %v4482 = vadd.f32 0.0, %v4481
    %4483 = vmatmul.f32.gmra.mxu0 %v4342
    %v4484 = vpop.f32.mrf.mxu0
    %v4485 = vadd.f32 0.0, %v4484
    %4486 = vmatmul.f32.gmra.mxu0 %v4345
    %v4487 = vpop.f32.mrf.mxu0
    %v4488 = vadd.f32 0.0, %v4487
    %4489 = vmatmul.f32.gmra.mxu0 %v4348
    %v4490 = vpop.f32.mrf.mxu0
    %v4491 = vadd.f32 0.0, %v4490
    %4492 = vmatmul.f32.gmra.mxu0 %v4351
    %v4493 = vpop.f32.mrf.mxu0
    %v4494 = vadd.f32 0.0, %v4493
    %4495 = vmatmul.f32.gmra.mxu0 %v4354
    %v4496 = vpop.f32.mrf.mxu0
    %v4497 = vadd.f32 0.0, %v4496
    %4498 = vmatmul.f32.gmra.mxu0 %v4357
    %v4499 = vpop.f32.mrf.mxu0
    %v4500 = vadd.f32 0.0, %v4499
    %4501 = vmatmul.f32.gmra.mxu0 %v4360
    %v4502 = vpop.f32.mrf.mxu0
    %v4503 = vadd.f32 0.0, %v4502
    %4504 = vmatmul.f32.gmra.mxu0 %v4363
    %v4505 = vpop.f32.mrf.mxu0
    %v4506 = vadd.f32 0.0, %v4505
    %4507 = vmatmul.f32.gmra.mxu0 %v4366
    %v4508 = vpop.f32.mrf.mxu0
    %v4509 = vadd.f32 0.0, %v4508
    %4510 = vmatmul.f32.gmra.mxu0 %v4369
    %v4511 = vpop.f32.mrf.mxu0
    %v4512 = vadd.f32 0.0, %v4511
    %4513 = vmatmul.f32.gmra.mxu0 %v4372
    %v4514 = vpop.f32.mrf.mxu0
    %v4515 = vadd.f32 0.0, %v4514
    %4516 = vmatmul.f32.gmra.mxu0 %v4375
    %v4517 = vpop.f32.mrf.mxu0
    %v4518 = vadd.f32 0.0, %v4517
    %4519 = vmatmul.f32.gmra.mxu0 %v4378
    %v4520 = vpop.f32.mrf.mxu0
    %v4521 = vadd.f32 0.0, %v4520
    %4522 = vmatmul.f32.gmra.mxu0 %v4381
    %v4523 = vpop.f32.mrf.mxu0
    %v4524 = vadd.f32 0.0, %v4523
    %4525 = vmatmul.f32.gmra.mxu0 %v4384
    %v4526 = vpop.f32.mrf.mxu0
    %v4527 = vadd.f32 0.0, %v4526
    %4528 = vmatmul.f32.gmra.mxu0 %v4387
    %v4529 = vpop.f32.mrf.mxu0
    %v4530 = vadd.f32 0.0, %v4529
    %4531 = vmatmul.f32.gmra.mxu0 %v4390
    %v4532 = vpop.f32.mrf.mxu0
    %v4533 = vadd.f32 0.0, %v4532
    %4534 = vmatmul.f32.gmra.mxu0 %v4393
    %v4535 = vpop.f32.mrf.mxu0
    %v4536 = vadd.f32 0.0, %v4535
    %4537 = vmatmul.f32.gmra.mxu0 %v4396
    %v4538 = vpop.f32.mrf.mxu0
    %v4539 = vadd.f32 0.0, %v4538
    %4540 = vmatmul.f32.gmra.mxu0 %v4399
    %v4541 = vpop.f32.mrf.mxu0
    %v4542 = vadd.f32 0.0, %v4541
    %4543 = vmatmul.f32.gmra.mxu0 %v4402
    %v4544 = vpop.f32.mrf.mxu0
    %v4545 = vadd.f32 0.0, %v4544
    %4546 = vmatmul.f32.gmra.mxu0 %v4405
    %v4547 = vpop.f32.mrf.mxu0
    %v4548 = vadd.f32 0.0, %v4547
    %4549 = vmatmul.f32.gmra.mxu0 %v4408
    %v4550 = vpop.f32.mrf.mxu0
    %v4551 = vadd.f32 0.0, %v4550
    %4552 = vmatmul.f32.gmra.mxu0 %v4411
    %v4553 = vpop.f32.mrf.mxu0
    %v4554 = vadd.f32 0.0, %v4553
    %4555 = vmatmul.f32.gmra.mxu0 %v4414
    %v4556 = vpop.f32.mrf.mxu0
    %v4557 = vadd.f32 0.0, %v4556
    %4558 = vmatmul.f32.gmra.mxu0 %v4417
    %v4559 = vpop.f32.mrf.mxu0
    %v4560 = vadd.f32 0.0, %v4559
    %4561 = vmatmul.f32.gmra.mxu0 %v4420
    %v4562 = vpop.f32.mrf.mxu0
    %v4563 = vadd.f32 0.0, %v4562
    %4564 = vmatmul.f32.gmra.mxu0 %v4423
    %v4565 = vpop.f32.mrf.mxu0
    %v4566 = vadd.f32 0.0, %v4565
    %4567 = vdwg.mxu0
    %v4568 = vadd.f32 %v4123, %v4443
    %v4569 = vadd.f32 %v4126, %v4446
    %v4570 = vadd.f32 %v4129, %v4449
    %v4571 = vadd.f32 %v4132, %v4452
    %v4572 = vadd.f32 %v4135, %v4455
    %v4573 = vadd.f32 %v4138, %v4458
    %v4574 = vadd.f32 %v4141, %v4461
    %v4575 = vadd.f32 %v4144, %v4464
    %v4576 = vadd.f32 %v4147, %v4467
    %v4577 = vadd.f32 %v4150, %v4470
    %v4578 = vadd.f32 %v4153, %v4473
    %v4579 = vadd.f32 %v4156, %v4476
    %v4580 = vadd.f32 %v4159, %v4479
    %v4581 = vadd.f32 %v4162, %v4482
    %v4582 = vadd.f32 %v4165, %v4485
    %v4583 = vadd.f32 %v4168, %v4488
    %v4584 = vadd.f32 %v4171, %v4491
    %v4585 = vadd.f32 %v4174, %v4494
    %v4586 = vadd.f32 %v4177, %v4497
    %v4587 = vadd.f32 %v4180, %v4500
    %v4588 = vadd.f32 %v4183, %v4503
    %v4589 = vadd.f32 %v4186, %v4506
    %v4590 = vadd.f32 %v4189, %v4509
    %v4591 = vadd.f32 %v4192, %v4512
    %v4592 = vadd.f32 %v4195, %v4515
    %v4593 = vadd.f32 %v4198, %v4518
    %v4594 = vadd.f32 %v4201, %v4521
    %v4595 = vadd.f32 %v4204, %v4524
    %v4596 = vadd.f32 %v4207, %v4527
    %v4597 = vadd.f32 %v4210, %v4530
    %v4598 = vadd.f32 %v4213, %v4533
    %v4599 = vadd.f32 %v4216, %v4536
    %v4600 = vadd.f32 %v4219, %v4539
    %v4601 = vadd.f32 %v4222, %v4542
    %v4602 = vadd.f32 %v4225, %v4545
    %v4603 = vadd.f32 %v4228, %v4548
    %v4604 = vadd.f32 %v4231, %v4551
    %v4605 = vadd.f32 %v4234, %v4554
    %v4606 = vadd.f32 %v4237, %v4557
    %v4607 = vadd.f32 %v4240, %v4560
    %v4608 = vadd.f32 %v4243, %v4563
    %v4609 = vadd.f32 %v4246, %v4566
    %v4610 = vld [vmem:[#allocation2 + $0xe] sm:$0xff]
    %v4611 = vld [vmem:[#allocation2 + $0x16] sm:$0xff]
    %v4612 = vld [vmem:[#allocation2 + $0x1e] sm:$0xff]
    %v4613 = vld [vmem:[#allocation2 + $0x26] sm:$0xff]
    %v4614 = vld [vmem:[#allocation2 + $0x2e] sm:$0xff]
    %v4615 = vld [vmem:[#allocation2 + $0x36] sm:$0xff]
    %v4616 = vld [vmem:[#allocation2 + $0x3e] sm:$0xff]
    %v4617 = vld [vmem:[#allocation2 + $0x46] sm:$0xff]
    %v4618 = vld [vmem:[#allocation2 + $0x4e] sm:$0xff]
    %v4619 = vld [vmem:[#allocation2 + $0x56] sm:$0xff]
    %v4620 = vld [vmem:[#allocation2 + $0x5e] sm:$0xff]
    %v4621 = vld [vmem:[#allocation2 + $0x66] sm:$0xff]
    %v4622 = vld [vmem:[#allocation2 + $0x6e] sm:$0xff]
    %v4623 = vld [vmem:[#allocation2 + $0x76] sm:$0xff]
    %v4624 = vld [vmem:[#allocation2 + $0x7e] sm:$0xff]
    %v4625 = vld [vmem:[#allocation2 + $0x86] sm:$0xff]
    %v4626 = vld [vmem:[#allocation2 + $0x8e] sm:$0xff]
    %v4627 = vld [vmem:[#allocation2 + $0x96] sm:$0xff]
    %v4628 = vld [vmem:[#allocation2 + $0x9e] sm:$0xff]
    %v4629 = vld [vmem:[#allocation2 + $0xa6] sm:$0xff]
    %v4630 = vld [vmem:[#allocation2 + $0xae] sm:$0xff]
    %v4631 = vld [vmem:[#allocation2 + $0xb6] sm:$0xff]
    %v4632 = vld [vmem:[#allocation2 + $0xbe] sm:$0xff]
    %v4633 = vld [vmem:[#allocation2 + $0xc6] sm:$0xff]
    %v4634 = vld [vmem:[#allocation2 + $0xce] sm:$0xff]
    %v4635 = vld [vmem:[#allocation2 + $0xd6] sm:$0xff]
    %v4636 = vld [vmem:[#allocation2 + $0xde] sm:$0xff]
    %v4637 = vld [vmem:[#allocation2 + $0xe6] sm:$0xff]
    %v4638 = vld [vmem:[#allocation2 + $0xee] sm:$0xff]
    %v4639 = vld [vmem:[#allocation2 + $0xf6] sm:$0xff]
    %v4640 = vld [vmem:[#allocation2 + $0xfe] sm:$0xff]
    %v4641 = vld [vmem:[#allocation2 + $0x106] sm:$0xff]
    %v4642 = vld [vmem:[#allocation2 + $0x10e] sm:$0xff]
    %v4643 = vld [vmem:[#allocation2 + $0x116] sm:$0xff]
    %v4644 = vld [vmem:[#allocation2 + $0x11e] sm:$0xff]
    %v4645 = vld [vmem:[#allocation2 + $0x126] sm:$0xff]
    %v4646 = vld [vmem:[#allocation2 + $0x12e] sm:$0xff]
    %v4647 = vld [vmem:[#allocation2 + $0x136] sm:$0xff]
    %v4648 = vld [vmem:[#allocation2 + $0x13e] sm:$0xff]
    %v4649 = vld [vmem:[#allocation2 + $0x146] sm:$0xff]
    %v4650 = vld [vmem:[#allocation2 + $0x14e] sm:$0xff]
    %v4651 = vld [vmem:[#allocation2 + $0x156] sm:$0xf]
    %s4652 = scalar_lea.vmem %s3, 192
    %v4653 = vld [vmem:[%s4652] sm:$0xff]
    %v4654 = vld [vmem:[%s4652 + $0x8] sm:$0xff]
    %v4655 = vld [vmem:[%s4652 + $0x10] sm:$0xff]
    %v4656 = vld [vmem:[%s4652 + $0x18] sm:$0xff]
    %v4657 = vld [vmem:[%s4652 + $0x20] sm:$0xff]
    %v4658 = vld [vmem:[%s4652 + $0x28] sm:$0xff]
    %v4659 = vld [vmem:[%s4652 + $0x30] sm:$0xff]
    %v4660 = vld [vmem:[%s4652 + $0x38] sm:$0xff]
    %v4662 = vsel %vm3561, %v4610, 0
    %v4665 = vsel %vm3561, %v4611, 0
    %v4668 = vsel %vm3561, %v4612, 0
    %v4671 = vsel %vm3561, %v4613, 0
    %v4674 = vsel %vm3561, %v4614, 0
    %v4677 = vsel %vm3561, %v4615, 0
    %v4680 = vsel %vm3561, %v4616, 0
    %v4683 = vsel %vm3561, %v4617, 0
    %v4686 = vsel %vm3561, %v4618, 0
    %v4689 = vsel %vm3561, %v4619, 0
    %v4692 = vsel %vm3561, %v4620, 0
    %v4695 = vsel %vm3561, %v4621, 0
    %v4698 = vsel %vm3561, %v4622, 0
    %v4701 = vsel %vm3561, %v4623, 0
    %v4704 = vsel %vm3561, %v4624, 0
    %v4707 = vsel %vm3561, %v4625, 0
    %v4710 = vsel %vm3561, %v4626, 0
    %v4713 = vsel %vm3561, %v4627, 0
    %v4716 = vsel %vm3561, %v4628, 0
    %v4719 = vsel %vm3561, %v4629, 0
    %v4722 = vsel %vm3561, %v4630, 0
    %v4725 = vsel %vm3561, %v4631, 0
    %v4728 = vsel %vm3561, %v4632, 0
    %v4731 = vsel %vm3561, %v4633, 0
    %v4734 = vsel %vm3561, %v4634, 0
    %v4737 = vsel %vm3561, %v4635, 0
    %v4740 = vsel %vm3561, %v4636, 0
    %v4743 = vsel %vm3561, %v4637, 0
    %v4746 = vsel %vm3561, %v4638, 0
    %v4749 = vsel %vm3561, %v4639, 0
    %v4752 = vsel %vm3561, %v4640, 0
    %v4755 = vsel %vm3561, %v4641, 0
    %v4758 = vsel %vm3561, %v4642, 0
    %v4761 = vsel %vm3561, %v4643, 0
    %v4764 = vsel %vm3561, %v4644, 0
    %v4767 = vsel %vm3561, %v4645, 0
    %v4770 = vsel %vm3561, %v4646, 0
    %v4773 = vsel %vm3561, %v4647, 0
    %v4776 = vsel %vm3561, %v4648, 0
    %v4779 = vsel %vm3561, %v4649, 0
    %v4782 = vsel %vm3561, %v4650, 0
    %v4785 = vsel %vm3561, %v4651, 0
    %4787 = vmatpush.msra.mxu0 0.0
    %4788 = vmatpush.msra.mxu0 0.0
    %4789 = vmatpush.msra.mxu0 0.0
    %4790 = vmatpush.msra.mxu0 0.0
    %4791 = vmatpush.msra.mxu0 0.0
    %4792 = vmatpush.msra.mxu0 0.0
    %4793 = vmatpush.msra.mxu0 0.0
    %4794 = vmatpush.msra.mxu0 0.0
    %4795 = vmatpush.msra.mxu0 %v4660
    %4796 = vmatpush.msra.mxu0 %v4659
    %4797 = vmatpush.msra.mxu0 %v4658
    %4798 = vmatpush.msra.mxu0 %v4657
    %4799 = vmatpush.msra.mxu0 %v4656
    %4800 = vmatpush.msra.mxu0 %v4655
    %4801 = vmatpush.msra.mxu0 %v4654
    %4802 = vmatpush.msra.mxu0 %v4653
    %4803 = vmatmul.f32.gmra.mxu0 %v4662
    %v4804 = vpop.f32.mrf.mxu0
    %v4805 = vadd.f32 0.0, %v4804
    %4806 = vmatmul.f32.gmra.mxu0 %v4665
    %v4807 = vpop.f32.mrf.mxu0
    %v4808 = vadd.f32 0.0, %v4807
    %4809 = vmatmul.f32.gmra.mxu0 %v4668
    %v4810 = vpop.f32.mrf.mxu0
    %v4811 = vadd.f32 0.0, %v4810
    %4812 = vmatmul.f32.gmra.mxu0 %v4671
    %v4813 = vpop.f32.mrf.mxu0
    %v4814 = vadd.f32 0.0, %v4813
    %4815 = vmatmul.f32.gmra.mxu0 %v4674
    %v4816 = vpop.f32.mrf.mxu0
    %v4817 = vadd.f32 0.0, %v4816
    %4818 = vmatmul.f32.gmra.mxu0 %v4677
    %v4819 = vpop.f32.mrf.mxu0
    %v4820 = vadd.f32 0.0, %v4819
    %4821 = vmatmul.f32.gmra.mxu0 %v4680
    %v4822 = vpop.f32.mrf.mxu0
    %v4823 = vadd.f32 0.0, %v4822
    %4824 = vmatmul.f32.gmra.mxu0 %v4683
    %v4825 = vpop.f32.mrf.mxu0
    %v4826 = vadd.f32 0.0, %v4825
    %4827 = vmatmul.f32.gmra.mxu0 %v4686
    %v4828 = vpop.f32.mrf.mxu0
    %v4829 = vadd.f32 0.0, %v4828
    %4830 = vmatmul.f32.gmra.mxu0 %v4689
    %v4831 = vpop.f32.mrf.mxu0
    %v4832 = vadd.f32 0.0, %v4831
    %4833 = vmatmul.f32.gmra.mxu0 %v4692
    %v4834 = vpop.f32.mrf.mxu0
    %v4835 = vadd.f32 0.0, %v4834
    %4836 = vmatmul.f32.gmra.mxu0 %v4695
    %v4837 = vpop.f32.mrf.mxu0
    %v4838 = vadd.f32 0.0, %v4837
    %4839 = vmatmul.f32.gmra.mxu0 %v4698
    %v4840 = vpop.f32.mrf.mxu0
    %v4841 = vadd.f32 0.0, %v4840
    %4842 = vmatmul.f32.gmra.mxu0 %v4701
    %v4843 = vpop.f32.mrf.mxu0
    %v4844 = vadd.f32 0.0, %v4843
    %4845 = vmatmul.f32.gmra.mxu0 %v4704
    %v4846 = vpop.f32.mrf.mxu0
    %v4847 = vadd.f32 0.0, %v4846
    %4848 = vmatmul.f32.gmra.mxu0 %v4707
    %v4849 = vpop.f32.mrf.mxu0
    %v4850 = vadd.f32 0.0, %v4849
    %4851 = vmatmul.f32.gmra.mxu0 %v4710
    %v4852 = vpop.f32.mrf.mxu0
    %v4853 = vadd.f32 0.0, %v4852
    %4854 = vmatmul.f32.gmra.mxu0 %v4713
    %v4855 = vpop.f32.mrf.mxu0
    %v4856 = vadd.f32 0.0, %v4855
    %4857 = vmatmul.f32.gmra.mxu0 %v4716
    %v4858 = vpop.f32.mrf.mxu0
    %v4859 = vadd.f32 0.0, %v4858
    %4860 = vmatmul.f32.gmra.mxu0 %v4719
    %v4861 = vpop.f32.mrf.mxu0
    %v4862 = vadd.f32 0.0, %v4861
    %4863 = vmatmul.f32.gmra.mxu0 %v4722
    %v4864 = vpop.f32.mrf.mxu0
    %v4865 = vadd.f32 0.0, %v4864
    %4866 = vmatmul.f32.gmra.mxu0 %v4725
    %v4867 = vpop.f32.mrf.mxu0
    %v4868 = vadd.f32 0.0, %v4867
    %4869 = vmatmul.f32.gmra.mxu0 %v4728
    %v4870 = vpop.f32.mrf.mxu0
    %v4871 = vadd.f32 0.0, %v4870
    %4872 = vmatmul.f32.gmra.mxu0 %v4731
    %v4873 = vpop.f32.mrf.mxu0
    %v4874 = vadd.f32 0.0, %v4873
    %4875 = vmatmul.f32.gmra.mxu0 %v4734
    %v4876 = vpop.f32.mrf.mxu0
    %v4877 = vadd.f32 0.0, %v4876
    %4878 = vmatmul.f32.gmra.mxu0 %v4737
    %v4879 = vpop.f32.mrf.mxu0
    %v4880 = vadd.f32 0.0, %v4879
    %4881 = vmatmul.f32.gmra.mxu0 %v4740
    %v4882 = vpop.f32.mrf.mxu0
    %v4883 = vadd.f32 0.0, %v4882
    %4884 = vmatmul.f32.gmra.mxu0 %v4743
    %v4885 = vpop.f32.mrf.mxu0
    %v4886 = vadd.f32 0.0, %v4885
    %4887 = vmatmul.f32.gmra.mxu0 %v4746
    %v4888 = vpop.f32.mrf.mxu0
    %v4889 = vadd.f32 0.0, %v4888
    %4890 = vmatmul.f32.gmra.mxu0 %v4749
    %v4891 = vpop.f32.mrf.mxu0
    %v4892 = vadd.f32 0.0, %v4891
    %4893 = vmatmul.f32.gmra.mxu0 %v4752
    %v4894 = vpop.f32.mrf.mxu0
    %v4895 = vadd.f32 0.0, %v4894
    %4896 = vmatmul.f32.gmra.mxu0 %v4755
    %v4897 = vpop.f32.mrf.mxu0
    %v4898 = vadd.f32 0.0, %v4897
    %4899 = vmatmul.f32.gmra.mxu0 %v4758
    %v4900 = vpop.f32.mrf.mxu0
    %v4901 = vadd.f32 0.0, %v4900
    %4902 = vmatmul.f32.gmra.mxu0 %v4761
    %v4903 = vpop.f32.mrf.mxu0
    %v4904 = vadd.f32 0.0, %v4903
    %4905 = vmatmul.f32.gmra.mxu0 %v4764
    %v4906 = vpop.f32.mrf.mxu0
    %v4907 = vadd.f32 0.0, %v4906
    %4908 = vmatmul.f32.gmra.mxu0 %v4767
    %v4909 = vpop.f32.mrf.mxu0
    %v4910 = vadd.f32 0.0, %v4909
    %4911 = vmatmul.f32.gmra.mxu0 %v4770
    %v4912 = vpop.f32.mrf.mxu0
    %v4913 = vadd.f32 0.0, %v4912
    %4914 = vmatmul.f32.gmra.mxu0 %v4773
    %v4915 = vpop.f32.mrf.mxu0
    %v4916 = vadd.f32 0.0, %v4915
    %4917 = vmatmul.f32.gmra.mxu0 %v4776
    %v4918 = vpop.f32.mrf.mxu0
    %v4919 = vadd.f32 0.0, %v4918
    %4920 = vmatmul.f32.gmra.mxu0 %v4779
    %v4921 = vpop.f32.mrf.mxu0
    %v4922 = vadd.f32 0.0, %v4921
    %4923 = vmatmul.f32.gmra.mxu0 %v4782
    %v4924 = vpop.f32.mrf.mxu0
    %v4925 = vadd.f32 0.0, %v4924
    %4926 = vmatmul.f32.gmra.mxu0 %v4785
    %v4927 = vpop.f32.mrf.mxu0
    %v4928 = vadd.f32 0.0, %v4927
    %4929 = vdwg.mxu0
    %v4930 = vadd.f32 %v4568, %v4805
    %v4931 = vadd.f32 %v4569, %v4808
    %v4932 = vadd.f32 %v4570, %v4811
    %v4933 = vadd.f32 %v4571, %v4814
    %v4934 = vadd.f32 %v4572, %v4817
    %v4935 = vadd.f32 %v4573, %v4820
    %v4936 = vadd.f32 %v4574, %v4823
    %v4937 = vadd.f32 %v4575, %v4826
    %v4938 = vadd.f32 %v4576, %v4829
    %v4939 = vadd.f32 %v4577, %v4832
    %v4940 = vadd.f32 %v4578, %v4835
    %v4941 = vadd.f32 %v4579, %v4838
    %v4942 = vadd.f32 %v4580, %v4841
    %v4943 = vadd.f32 %v4581, %v4844
    %v4944 = vadd.f32 %v4582, %v4847
    %v4945 = vadd.f32 %v4583, %v4850
    %v4946 = vadd.f32 %v4584, %v4853
    %v4947 = vadd.f32 %v4585, %v4856
    %v4948 = vadd.f32 %v4586, %v4859
    %v4949 = vadd.f32 %v4587, %v4862
    %v4950 = vadd.f32 %v4588, %v4865
    %v4951 = vadd.f32 %v4589, %v4868
    %v4952 = vadd.f32 %v4590, %v4871
    %v4953 = vadd.f32 %v4591, %v4874
    %v4954 = vadd.f32 %v4592, %v4877
    %v4955 = vadd.f32 %v4593, %v4880
    %v4956 = vadd.f32 %v4594, %v4883
    %v4957 = vadd.f32 %v4595, %v4886
    %v4958 = vadd.f32 %v4596, %v4889
    %v4959 = vadd.f32 %v4597, %v4892
    %v4960 = vadd.f32 %v4598, %v4895
    %v4961 = vadd.f32 %v4599, %v4898
    %v4962 = vadd.f32 %v4600, %v4901
    %v4963 = vadd.f32 %v4601, %v4904
    %v4964 = vadd.f32 %v4602, %v4907
    %v4965 = vadd.f32 %v4603, %v4910
    %v4966 = vadd.f32 %v4604, %v4913
    %v4967 = vadd.f32 %v4605, %v4916
    %v4968 = vadd.f32 %v4606, %v4919
    %v4969 = vadd.f32 %v4607, %v4922
    %v4970 = vadd.f32 %v4608, %v4925
    %v4971 = vadd.f32 %v4609, %v4928
    %v4972 = vld [vmem:[#allocation2 + $0xf] sm:$0xff]
    %v4973 = vld [vmem:[#allocation2 + $0x17] sm:$0xff]
    %v4974 = vld [vmem:[#allocation2 + $0x1f] sm:$0xff]
    %v4975 = vld [vmem:[#allocation2 + $0x27] sm:$0xff]
    %v4976 = vld [vmem:[#allocation2 + $0x2f] sm:$0xff]
    %v4977 = vld [vmem:[#allocation2 + $0x37] sm:$0xff]
    %v4978 = vld [vmem:[#allocation2 + $0x3f] sm:$0xff]
    %v4979 = vld [vmem:[#allocation2 + $0x47] sm:$0xff]
    %v4980 = vld [vmem:[#allocation2 + $0x4f] sm:$0xff]
    %v4981 = vld [vmem:[#allocation2 + $0x57] sm:$0xff]
    %v4982 = vld [vmem:[#allocation2 + $0x5f] sm:$0xff]
    %v4983 = vld [vmem:[#allocation2 + $0x67] sm:$0xff]
    %v4984 = vld [vmem:[#allocation2 + $0x6f] sm:$0xff]
    %v4985 = vld [vmem:[#allocation2 + $0x77] sm:$0xff]
    %v4986 = vld [vmem:[#allocation2 + $0x7f] sm:$0xff]
    %v4987 = vld [vmem:[#allocation2 + $0x87] sm:$0xff]
    %v4988 = vld [vmem:[#allocation2 + $0x8f] sm:$0xff]
    %v4989 = vld [vmem:[#allocation2 + $0x97] sm:$0xff]
    %v4990 = vld [vmem:[#allocation2 + $0x9f] sm:$0xff]
    %v4991 = vld [vmem:[#allocation2 + $0xa7] sm:$0xff]
    %v4992 = vld [vmem:[#allocation2 + $0xaf] sm:$0xff]
    %v4993 = vld [vmem:[#allocation2 + $0xb7] sm:$0xff]
    %v4994 = vld [vmem:[#allocation2 + $0xbf] sm:$0xff]
    %v4995 = vld [vmem:[#allocation2 + $0xc7] sm:$0xff]
    %v4996 = vld [vmem:[#allocation2 + $0xcf] sm:$0xff]
    %v4997 = vld [vmem:[#allocation2 + $0xd7] sm:$0xff]
    %v4998 = vld [vmem:[#allocation2 + $0xdf] sm:$0xff]
    %v4999 = vld [vmem:[#allocation2 + $0xe7] sm:$0xff]
    %v5000 = vld [vmem:[#allocation2 + $0xef] sm:$0xff]
    %v5001 = vld [vmem:[#allocation2 + $0xf7] sm:$0xff]
    %v5002 = vld [vmem:[#allocation2 + $0xff] sm:$0xff]
    %v5003 = vld [vmem:[#allocation2 + $0x107] sm:$0xff]
    %v5004 = vld [vmem:[#allocation2 + $0x10f] sm:$0xff]
    %v5005 = vld [vmem:[#allocation2 + $0x117] sm:$0xff]
    %v5006 = vld [vmem:[#allocation2 + $0x11f] sm:$0xff]
    %v5007 = vld [vmem:[#allocation2 + $0x127] sm:$0xff]
    %v5008 = vld [vmem:[#allocation2 + $0x12f] sm:$0xff]
    %v5009 = vld [vmem:[#allocation2 + $0x137] sm:$0xff]
    %v5010 = vld [vmem:[#allocation2 + $0x13f] sm:$0xff]
    %v5011 = vld [vmem:[#allocation2 + $0x147] sm:$0xff]
    %v5012 = vld [vmem:[#allocation2 + $0x14f] sm:$0xff]
    %v5013 = vld [vmem:[#allocation2 + $0x157] sm:$0xf]
    %s5014 = scalar_lea.vmem %s3, 256
    %v5015 = vld [vmem:[%s5014] sm:$0xff]
    %v5016 = vld [vmem:[%s5014 + $0x8] sm:$0xff]
    %v5017 = vld [vmem:[%s5014 + $0x10] sm:$0xff]
    %v5018 = vld [vmem:[%s5014 + $0x18] sm:$0xff]
    %v5019 = vld [vmem:[%s5014 + $0x20] sm:$0xff]
    %v5020 = vld [vmem:[%s5014 + $0x28] sm:$0xff]
    %v5021 = vld [vmem:[%s5014 + $0x30] sm:$0xff]
    %v5022 = vld [vmem:[%s5014 + $0x38] sm:$0xff]
    %v5024 = vsel %vm3561, %v4972, 0
    %v5027 = vsel %vm3561, %v4973, 0
    %v5030 = vsel %vm3561, %v4974, 0
    %v5033 = vsel %vm3561, %v4975, 0
    %v5036 = vsel %vm3561, %v4976, 0
    %v5039 = vsel %vm3561, %v4977, 0
    %v5042 = vsel %vm3561, %v4978, 0
    %v5045 = vsel %vm3561, %v4979, 0
    %v5048 = vsel %vm3561, %v4980, 0
    %v5051 = vsel %vm3561, %v4981, 0
    %v5054 = vsel %vm3561, %v4982, 0
    %v5057 = vsel %vm3561, %v4983, 0
    %v5060 = vsel %vm3561, %v4984, 0
    %v5063 = vsel %vm3561, %v4985, 0
    %v5066 = vsel %vm3561, %v4986, 0
    %v5069 = vsel %vm3561, %v4987, 0
    %v5072 = vsel %vm3561, %v4988, 0
    %v5075 = vsel %vm3561, %v4989, 0
    %v5078 = vsel %vm3561, %v4990, 0
    %v5081 = vsel %vm3561, %v4991, 0
    %v5084 = vsel %vm3561, %v4992, 0
    %v5087 = vsel %vm3561, %v4993, 0
    %v5090 = vsel %vm3561, %v4994, 0
    %v5093 = vsel %vm3561, %v4995, 0
    %v5096 = vsel %vm3561, %v4996, 0
    %v5099 = vsel %vm3561, %v4997, 0
    %v5102 = vsel %vm3561, %v4998, 0
    %v5105 = vsel %vm3561, %v4999, 0
    %v5108 = vsel %vm3561, %v5000, 0
    %v5111 = vsel %vm3561, %v5001, 0
    %v5114 = vsel %vm3561, %v5002, 0
    %v5117 = vsel %vm3561, %v5003, 0
    %v5120 = vsel %vm3561, %v5004, 0
    %v5123 = vsel %vm3561, %v5005, 0
    %v5126 = vsel %vm3561, %v5006, 0
    %v5129 = vsel %vm3561, %v5007, 0
    %v5132 = vsel %vm3561, %v5008, 0
    %v5135 = vsel %vm3561, %v5009, 0
    %v5138 = vsel %vm3561, %v5010, 0
    %v5141 = vsel %vm3561, %v5011, 0
    %v5144 = vsel %vm3561, %v5012, 0
    %v5147 = vsel %vm3561, %v5013, 0
    %5149 = vmatpush.msra.mxu0 0.0
    %5150 = vmatpush.msra.mxu0 0.0
    %5151 = vmatpush.msra.mxu0 0.0
    %5152 = vmatpush.msra.mxu0 0.0
    %5153 = vmatpush.msra.mxu0 0.0
    %5154 = vmatpush.msra.mxu0 0.0
    %5155 = vmatpush.msra.mxu0 0.0
    %5156 = vmatpush.msra.mxu0 0.0
    %5157 = vmatpush.msra.mxu0 %v5022
    %5158 = vmatpush.msra.mxu0 %v5021
    %5159 = vmatpush.msra.mxu0 %v5020
    %5160 = vmatpush.msra.mxu0 %v5019
    %5161 = vmatpush.msra.mxu0 %v5018
    %5162 = vmatpush.msra.mxu0 %v5017
    %5163 = vmatpush.msra.mxu0 %v5016
    %5164 = vmatpush.msra.mxu0 %v5015
    %5165 = vmatmul.f32.gmra.mxu0 %v5024
    %v5166 = vpop.f32.mrf.mxu0
    %v5167 = vadd.f32 0.0, %v5166
    %5168 = vmatmul.f32.gmra.mxu0 %v5027
    %v5169 = vpop.f32.mrf.mxu0
    %v5170 = vadd.f32 0.0, %v5169
    %5171 = vmatmul.f32.gmra.mxu0 %v5030
    %v5172 = vpop.f32.mrf.mxu0
    %v5173 = vadd.f32 0.0, %v5172
    %5174 = vmatmul.f32.gmra.mxu0 %v5033
    %v5175 = vpop.f32.mrf.mxu0
    %v5176 = vadd.f32 0.0, %v5175
    %5177 = vmatmul.f32.gmra.mxu0 %v5036
    %v5178 = vpop.f32.mrf.mxu0
    %v5179 = vadd.f32 0.0, %v5178
    %5180 = vmatmul.f32.gmra.mxu0 %v5039
    %v5181 = vpop.f32.mrf.mxu0
    %v5182 = vadd.f32 0.0, %v5181
    %5183 = vmatmul.f32.gmra.mxu0 %v5042
    %v5184 = vpop.f32.mrf.mxu0
    %v5185 = vadd.f32 0.0, %v5184
    %5186 = vmatmul.f32.gmra.mxu0 %v5045
    %v5187 = vpop.f32.mrf.mxu0
    %v5188 = vadd.f32 0.0, %v5187
    %5189 = vmatmul.f32.gmra.mxu0 %v5048
    %v5190 = vpop.f32.mrf.mxu0
    %v5191 = vadd.f32 0.0, %v5190
    %5192 = vmatmul.f32.gmra.mxu0 %v5051
    %v5193 = vpop.f32.mrf.mxu0
    %v5194 = vadd.f32 0.0, %v5193
    %5195 = vmatmul.f32.gmra.mxu0 %v5054
    %v5196 = vpop.f32.mrf.mxu0
    %v5197 = vadd.f32 0.0, %v5196
    %5198 = vmatmul.f32.gmra.mxu0 %v5057
    %v5199 = vpop.f32.mrf.mxu0
    %v5200 = vadd.f32 0.0, %v5199
    %5201 = vmatmul.f32.gmra.mxu0 %v5060
    %v5202 = vpop.f32.mrf.mxu0
    %v5203 = vadd.f32 0.0, %v5202
    %5204 = vmatmul.f32.gmra.mxu0 %v5063
    %v5205 = vpop.f32.mrf.mxu0
    %v5206 = vadd.f32 0.0, %v5205
    %5207 = vmatmul.f32.gmra.mxu0 %v5066
    %v5208 = vpop.f32.mrf.mxu0
    %v5209 = vadd.f32 0.0, %v5208
    %5210 = vmatmul.f32.gmra.mxu0 %v5069
    %v5211 = vpop.f32.mrf.mxu0
    %v5212 = vadd.f32 0.0, %v5211
    %5213 = vmatmul.f32.gmra.mxu0 %v5072
    %v5214 = vpop.f32.mrf.mxu0
    %v5215 = vadd.f32 0.0, %v5214
    %5216 = vmatmul.f32.gmra.mxu0 %v5075
    %v5217 = vpop.f32.mrf.mxu0
    %v5218 = vadd.f32 0.0, %v5217
    %5219 = vmatmul.f32.gmra.mxu0 %v5078
    %v5220 = vpop.f32.mrf.mxu0
    %v5221 = vadd.f32 0.0, %v5220
    %5222 = vmatmul.f32.gmra.mxu0 %v5081
    %v5223 = vpop.f32.mrf.mxu0
    %v5224 = vadd.f32 0.0, %v5223
    %5225 = vmatmul.f32.gmra.mxu0 %v5084
    %v5226 = vpop.f32.mrf.mxu0
    %v5227 = vadd.f32 0.0, %v5226
    %5228 = vmatmul.f32.gmra.mxu0 %v5087
    %v5229 = vpop.f32.mrf.mxu0
    %v5230 = vadd.f32 0.0, %v5229
    %5231 = vmatmul.f32.gmra.mxu0 %v5090
    %v5232 = vpop.f32.mrf.mxu0
    %v5233 = vadd.f32 0.0, %v5232
    %5234 = vmatmul.f32.gmra.mxu0 %v5093
    %v5235 = vpop.f32.mrf.mxu0
    %v5236 = vadd.f32 0.0, %v5235
    %5237 = vmatmul.f32.gmra.mxu0 %v5096
    %v5238 = vpop.f32.mrf.mxu0
    %v5239 = vadd.f32 0.0, %v5238
    %5240 = vmatmul.f32.gmra.mxu0 %v5099
    %v5241 = vpop.f32.mrf.mxu0
    %v5242 = vadd.f32 0.0, %v5241
    %5243 = vmatmul.f32.gmra.mxu0 %v5102
    %v5244 = vpop.f32.mrf.mxu0
    %v5245 = vadd.f32 0.0, %v5244
    %5246 = vmatmul.f32.gmra.mxu0 %v5105
    %v5247 = vpop.f32.mrf.mxu0
    %v5248 = vadd.f32 0.0, %v5247
    %5249 = vmatmul.f32.gmra.mxu0 %v5108
    %v5250 = vpop.f32.mrf.mxu0
    %v5251 = vadd.f32 0.0, %v5250
    %5252 = vmatmul.f32.gmra.mxu0 %v5111
    %v5253 = vpop.f32.mrf.mxu0
    %v5254 = vadd.f32 0.0, %v5253
    %5255 = vmatmul.f32.gmra.mxu0 %v5114
    %v5256 = vpop.f32.mrf.mxu0
    %v5257 = vadd.f32 0.0, %v5256
    %5258 = vmatmul.f32.gmra.mxu0 %v5117
    %v5259 = vpop.f32.mrf.mxu0
    %v5260 = vadd.f32 0.0, %v5259
    %5261 = vmatmul.f32.gmra.mxu0 %v5120
    %v5262 = vpop.f32.mrf.mxu0
    %v5263 = vadd.f32 0.0, %v5262
    %5264 = vmatmul.f32.gmra.mxu0 %v5123
    %v5265 = vpop.f32.mrf.mxu0
    %v5266 = vadd.f32 0.0, %v5265
    %5267 = vmatmul.f32.gmra.mxu0 %v5126
    %v5268 = vpop.f32.mrf.mxu0
    %v5269 = vadd.f32 0.0, %v5268
    %5270 = vmatmul.f32.gmra.mxu0 %v5129
    %v5271 = vpop.f32.mrf.mxu0
    %v5272 = vadd.f32 0.0, %v5271
    %5273 = vmatmul.f32.gmra.mxu0 %v5132
    %v5274 = vpop.f32.mrf.mxu0
    %v5275 = vadd.f32 0.0, %v5274
    %5276 = vmatmul.f32.gmra.mxu0 %v5135
    %v5277 = vpop.f32.mrf.mxu0
    %v5278 = vadd.f32 0.0, %v5277
    %5279 = vmatmul.f32.gmra.mxu0 %v5138
    %v5280 = vpop.f32.mrf.mxu0
    %v5281 = vadd.f32 0.0, %v5280
    %5282 = vmatmul.f32.gmra.mxu0 %v5141
    %v5283 = vpop.f32.mrf.mxu0
    %v5284 = vadd.f32 0.0, %v5283
    %5285 = vmatmul.f32.gmra.mxu0 %v5144
    %v5286 = vpop.f32.mrf.mxu0
    %v5287 = vadd.f32 0.0, %v5286
    %5288 = vmatmul.f32.gmra.mxu0 %v5147
    %v5289 = vpop.f32.mrf.mxu0
    %v5290 = vadd.f32 0.0, %v5289
    %5291 = vdwg.mxu0
    %v5292 = vadd.f32 %v4930, %v5167
    %v5293 = vadd.f32 %v4931, %v5170
    %v5294 = vadd.f32 %v4932, %v5173
    %v5295 = vadd.f32 %v4933, %v5176
    %v5296 = vadd.f32 %v4934, %v5179
    %v5297 = vadd.f32 %v4935, %v5182
    %v5298 = vadd.f32 %v4936, %v5185
    %v5299 = vadd.f32 %v4937, %v5188
    %v5300 = vadd.f32 %v4938, %v5191
    %v5301 = vadd.f32 %v4939, %v5194
    %v5302 = vadd.f32 %v4940, %v5197
    %v5303 = vadd.f32 %v4941, %v5200
    %v5304 = vadd.f32 %v4942, %v5203
    %v5305 = vadd.f32 %v4943, %v5206
    %v5306 = vadd.f32 %v4944, %v5209
    %v5307 = vadd.f32 %v4945, %v5212
    %v5308 = vadd.f32 %v4946, %v5215
    %v5309 = vadd.f32 %v4947, %v5218
    %v5310 = vadd.f32 %v4948, %v5221
    %v5311 = vadd.f32 %v4949, %v5224
    %v5312 = vadd.f32 %v4950, %v5227
    %v5313 = vadd.f32 %v4951, %v5230
    %v5314 = vadd.f32 %v4952, %v5233
    %v5315 = vadd.f32 %v4953, %v5236
    %v5316 = vadd.f32 %v4954, %v5239
    %v5317 = vadd.f32 %v4955, %v5242
    %v5318 = vadd.f32 %v4956, %v5245
    %v5319 = vadd.f32 %v4957, %v5248
    %v5320 = vadd.f32 %v4958, %v5251
    %v5321 = vadd.f32 %v4959, %v5254
    %v5322 = vadd.f32 %v4960, %v5257
    %v5323 = vadd.f32 %v4961, %v5260
    %v5324 = vadd.f32 %v4962, %v5263
    %v5325 = vadd.f32 %v4963, %v5266
    %v5326 = vadd.f32 %v4964, %v5269
    %v5327 = vadd.f32 %v4965, %v5272
    %v5328 = vadd.f32 %v4966, %v5275
    %v5329 = vadd.f32 %v4967, %v5278
    %v5330 = vadd.f32 %v4968, %v5281
    %v5331 = vadd.f32 %v4969, %v5284
    %v5332 = vadd.f32 %v4970, %v5287
    %v5333 = vadd.f32 %v4971, %v5290
    %v5334 = vld [vmem:[#allocation2 + $0x10] sm:$0xff]
    %v5335 = vld [vmem:[#allocation2 + $0x18] sm:$0xff]
    %v5336 = vld [vmem:[#allocation2 + $0x20] sm:$0xff]
    %v5337 = vld [vmem:[#allocation2 + $0x28] sm:$0xff]
    %v5338 = vld [vmem:[#allocation2 + $0x30] sm:$0xff]
    %v5339 = vld [vmem:[#allocation2 + $0x38] sm:$0xff]
    %v5340 = vld [vmem:[#allocation2 + $0x40] sm:$0xff]
    %v5341 = vld [vmem:[#allocation2 + $0x48] sm:$0xff]
    %v5342 = vld [vmem:[#allocation2 + $0x50] sm:$0xff]
    %v5343 = vld [vmem:[#allocation2 + $0x58] sm:$0xff]
    %v5344 = vld [vmem:[#allocation2 + $0x60] sm:$0xff]
    %v5345 = vld [vmem:[#allocation2 + $0x68] sm:$0xff]
    %v5346 = vld [vmem:[#allocation2 + $0x70] sm:$0xff]
    %v5347 = vld [vmem:[#allocation2 + $0x78] sm:$0xff]
    %v5348 = vld [vmem:[#allocation2 + $0x80] sm:$0xff]
    %v5349 = vld [vmem:[#allocation2 + $0x88] sm:$0xff]
    %v5350 = vld [vmem:[#allocation2 + $0x90] sm:$0xff]
    %v5351 = vld [vmem:[#allocation2 + $0x98] sm:$0xff]
    %v5352 = vld [vmem:[#allocation2 + $0xa0] sm:$0xff]
    %v5353 = vld [vmem:[#allocation2 + $0xa8] sm:$0xff]
    %v5354 = vld [vmem:[#allocation2 + $0xb0] sm:$0xff]
    %v5355 = vld [vmem:[#allocation2 + $0xb8] sm:$0xff]
    %v5356 = vld [vmem:[#allocation2 + $0xc0] sm:$0xff]
    %v5357 = vld [vmem:[#allocation2 + $0xc8] sm:$0xff]
    %v5358 = vld [vmem:[#allocation2 + $0xd0] sm:$0xff]
    %v5359 = vld [vmem:[#allocation2 + $0xd8] sm:$0xff]
    %v5360 = vld [vmem:[#allocation2 + $0xe0] sm:$0xff]
    %v5361 = vld [vmem:[#allocation2 + $0xe8] sm:$0xff]
    %v5362 = vld [vmem:[#allocation2 + $0xf0] sm:$0xff]
    %v5363 = vld [vmem:[#allocation2 + $0xf8] sm:$0xff]
    %v5364 = vld [vmem:[#allocation2 + $0x100] sm:$0xff]
    %v5365 = vld [vmem:[#allocation2 + $0x108] sm:$0xff]
    %v5366 = vld [vmem:[#allocation2 + $0x110] sm:$0xff]
    %v5367 = vld [vmem:[#allocation2 + $0x118] sm:$0xff]
    %v5368 = vld [vmem:[#allocation2 + $0x120] sm:$0xff]
    %v5369 = vld [vmem:[#allocation2 + $0x128] sm:$0xff]
    %v5370 = vld [vmem:[#allocation2 + $0x130] sm:$0xff]
    %v5371 = vld [vmem:[#allocation2 + $0x138] sm:$0xff]
    %v5372 = vld [vmem:[#allocation2 + $0x140] sm:$0xff]
    %v5373 = vld [vmem:[#allocation2 + $0x148] sm:$0xff]
    %v5374 = vld [vmem:[#allocation2 + $0x150] sm:$0xff]
    %v5375 = vld [vmem:[#allocation2 + $0x158] sm:$0xf]
    %s5376 = scalar_lea.vmem %s3, 320
    %v5377 = vld [vmem:[%s5376] sm:$0xff]
    %v5378 = vld [vmem:[%s5376 + $0x8] sm:$0xff]
    %v5379 = vld [vmem:[%s5376 + $0x10] sm:$0xff]
    %v5380 = vld [vmem:[%s5376 + $0x18] sm:$0xff]
    %v5381 = vld [vmem:[%s5376 + $0x20] sm:$0xff]
    %v5382 = vld [vmem:[%s5376 + $0x28] sm:$0xff]
    %v5383 = vld [vmem:[%s5376 + $0x30] sm:$0xff]
    %v5384 = vld [vmem:[%s5376 + $0x38] sm:$0xff]
    %v5386 = vsel %vm3561, %v5334, 0
    %v5389 = vsel %vm3561, %v5335, 0
    %v5392 = vsel %vm3561, %v5336, 0
    %v5395 = vsel %vm3561, %v5337, 0
    %v5398 = vsel %vm3561, %v5338, 0
    %v5401 = vsel %vm3561, %v5339, 0
    %v5404 = vsel %vm3561, %v5340, 0
    %v5407 = vsel %vm3561, %v5341, 0
    %v5410 = vsel %vm3561, %v5342, 0
    %v5413 = vsel %vm3561, %v5343, 0
    %v5416 = vsel %vm3561, %v5344, 0
    %v5419 = vsel %vm3561, %v5345, 0
    %v5422 = vsel %vm3561, %v5346, 0
    %v5425 = vsel %vm3561, %v5347, 0
    %v5428 = vsel %vm3561, %v5348, 0
    %v5431 = vsel %vm3561, %v5349, 0
    %v5434 = vsel %vm3561, %v5350, 0
    %v5437 = vsel %vm3561, %v5351, 0
    %v5440 = vsel %vm3561, %v5352, 0
    %v5443 = vsel %vm3561, %v5353, 0
    %v5446 = vsel %vm3561, %v5354, 0
    %v5449 = vsel %vm3561, %v5355, 0
    %v5452 = vsel %vm3561, %v5356, 0
    %v5455 = vsel %vm3561, %v5357, 0
    %v5458 = vsel %vm3561, %v5358, 0
    %v5461 = vsel %vm3561, %v5359, 0
    %v5464 = vsel %vm3561, %v5360, 0
    %v5467 = vsel %vm3561, %v5361, 0
    %v5470 = vsel %vm3561, %v5362, 0
    %v5473 = vsel %vm3561, %v5363, 0
    %v5476 = vsel %vm3561, %v5364, 0
    %v5479 = vsel %vm3561, %v5365, 0
    %v5482 = vsel %vm3561, %v5366, 0
    %v5485 = vsel %vm3561, %v5367, 0
    %v5488 = vsel %vm3561, %v5368, 0
    %v5491 = vsel %vm3561, %v5369, 0
    %v5494 = vsel %vm3561, %v5370, 0
    %v5497 = vsel %vm3561, %v5371, 0
    %v5500 = vsel %vm3561, %v5372, 0
    %v5503 = vsel %vm3561, %v5373, 0
    %v5506 = vsel %vm3561, %v5374, 0
    %v5509 = vsel %vm3561, %v5375, 0
    %5511 = vmatpush.msra.mxu0 0.0
    %5512 = vmatpush.msra.mxu0 0.0
    %5513 = vmatpush.msra.mxu0 0.0
    %5514 = vmatpush.msra.mxu0 0.0
    %5515 = vmatpush.msra.mxu0 0.0
    %5516 = vmatpush.msra.mxu0 0.0
    %5517 = vmatpush.msra.mxu0 0.0
    %5518 = vmatpush.msra.mxu0 0.0
    %5519 = vmatpush.msra.mxu0 %v5384
    %5520 = vmatpush.msra.mxu0 %v5383
    %5521 = vmatpush.msra.mxu0 %v5382
    %5522 = vmatpush.msra.mxu0 %v5381
    %5523 = vmatpush.msra.mxu0 %v5380
    %5524 = vmatpush.msra.mxu0 %v5379
    %5525 = vmatpush.msra.mxu0 %v5378
    %5526 = vmatpush.msra.mxu0 %v5377
    %5527 = vmatmul.f32.gmra.mxu0 %v5386
    %v5528 = vpop.f32.mrf.mxu0
    %v5529 = vadd.f32 0.0, %v5528
    %5530 = vmatmul.f32.gmra.mxu0 %v5389
    %v5531 = vpop.f32.mrf.mxu0
    %v5532 = vadd.f32 0.0, %v5531
    %5533 = vmatmul.f32.gmra.mxu0 %v5392
    %v5534 = vpop.f32.mrf.mxu0
    %v5535 = vadd.f32 0.0, %v5534
    %5536 = vmatmul.f32.gmra.mxu0 %v5395
    %v5537 = vpop.f32.mrf.mxu0
    %v5538 = vadd.f32 0.0, %v5537
    %5539 = vmatmul.f32.gmra.mxu0 %v5398
    %v5540 = vpop.f32.mrf.mxu0
    %v5541 = vadd.f32 0.0, %v5540
    %5542 = vmatmul.f32.gmra.mxu0 %v5401
    %v5543 = vpop.f32.mrf.mxu0
    %v5544 = vadd.f32 0.0, %v5543
    %5545 = vmatmul.f32.gmra.mxu0 %v5404
    %v5546 = vpop.f32.mrf.mxu0
    %v5547 = vadd.f32 0.0, %v5546
    %5548 = vmatmul.f32.gmra.mxu0 %v5407
    %v5549 = vpop.f32.mrf.mxu0
    %v5550 = vadd.f32 0.0, %v5549
    %5551 = vmatmul.f32.gmra.mxu0 %v5410
    %v5552 = vpop.f32.mrf.mxu0
    %v5553 = vadd.f32 0.0, %v5552
    %5554 = vmatmul.f32.gmra.mxu0 %v5413
    %v5555 = vpop.f32.mrf.mxu0
    %v5556 = vadd.f32 0.0, %v5555
    %5557 = vmatmul.f32.gmra.mxu0 %v5416
    %v5558 = vpop.f32.mrf.mxu0
    %v5559 = vadd.f32 0.0, %v5558
    %5560 = vmatmul.f32.gmra.mxu0 %v5419
    %v5561 = vpop.f32.mrf.mxu0
    %v5562 = vadd.f32 0.0, %v5561
    %5563 = vmatmul.f32.gmra.mxu0 %v5422
    %v5564 = vpop.f32.mrf.mxu0
    %v5565 = vadd.f32 0.0, %v5564
    %5566 = vmatmul.f32.gmra.mxu0 %v5425
    %v5567 = vpop.f32.mrf.mxu0
    %v5568 = vadd.f32 0.0, %v5567
    %5569 = vmatmul.f32.gmra.mxu0 %v5428
    %v5570 = vpop.f32.mrf.mxu0
    %v5571 = vadd.f32 0.0, %v5570
    %5572 = vmatmul.f32.gmra.mxu0 %v5431
    %v5573 = vpop.f32.mrf.mxu0
    %v5574 = vadd.f32 0.0, %v5573
    %5575 = vmatmul.f32.gmra.mxu0 %v5434
    %v5576 = vpop.f32.mrf.mxu0
    %v5577 = vadd.f32 0.0, %v5576
    %5578 = vmatmul.f32.gmra.mxu0 %v5437
    %v5579 = vpop.f32.mrf.mxu0
    %v5580 = vadd.f32 0.0, %v5579
    %5581 = vmatmul.f32.gmra.mxu0 %v5440
    %v5582 = vpop.f32.mrf.mxu0
    %v5583 = vadd.f32 0.0, %v5582
    %5584 = vmatmul.f32.gmra.mxu0 %v5443
    %v5585 = vpop.f32.mrf.mxu0
    %v5586 = vadd.f32 0.0, %v5585
    %5587 = vmatmul.f32.gmra.mxu0 %v5446
    %v5588 = vpop.f32.mrf.mxu0
    %v5589 = vadd.f32 0.0, %v5588
    %5590 = vmatmul.f32.gmra.mxu0 %v5449
    %v5591 = vpop.f32.mrf.mxu0
    %v5592 = vadd.f32 0.0, %v5591
    %5593 = vmatmul.f32.gmra.mxu0 %v5452
    %v5594 = vpop.f32.mrf.mxu0
    %v5595 = vadd.f32 0.0, %v5594
    %5596 = vmatmul.f32.gmra.mxu0 %v5455
    %v5597 = vpop.f32.mrf.mxu0
    %v5598 = vadd.f32 0.0, %v5597
    %5599 = vmatmul.f32.gmra.mxu0 %v5458
    %v5600 = vpop.f32.mrf.mxu0
    %v5601 = vadd.f32 0.0, %v5600
    %5602 = vmatmul.f32.gmra.mxu0 %v5461
    %v5603 = vpop.f32.mrf.mxu0
    %v5604 = vadd.f32 0.0, %v5603
    %5605 = vmatmul.f32.gmra.mxu0 %v5464
    %v5606 = vpop.f32.mrf.mxu0
    %v5607 = vadd.f32 0.0, %v5606
    %5608 = vmatmul.f32.gmra.mxu0 %v5467
    %v5609 = vpop.f32.mrf.mxu0
    %v5610 = vadd.f32 0.0, %v5609
    %5611 = vmatmul.f32.gmra.mxu0 %v5470
    %v5612 = vpop.f32.mrf.mxu0
    %v5613 = vadd.f32 0.0, %v5612
    %5614 = vmatmul.f32.gmra.mxu0 %v5473
    %v5615 = vpop.f32.mrf.mxu0
    %v5616 = vadd.f32 0.0, %v5615
    %5617 = vmatmul.f32.gmra.mxu0 %v5476
    %v5618 = vpop.f32.mrf.mxu0
    %v5619 = vadd.f32 0.0, %v5618
    %5620 = vmatmul.f32.gmra.mxu0 %v5479
    %v5621 = vpop.f32.mrf.mxu0
    %v5622 = vadd.f32 0.0, %v5621
    %5623 = vmatmul.f32.gmra.mxu0 %v5482
    %v5624 = vpop.f32.mrf.mxu0
    %v5625 = vadd.f32 0.0, %v5624
    %5626 = vmatmul.f32.gmra.mxu0 %v5485
    %v5627 = vpop.f32.mrf.mxu0
    %v5628 = vadd.f32 0.0, %v5627
    %5629 = vmatmul.f32.gmra.mxu0 %v5488
    %v5630 = vpop.f32.mrf.mxu0
    %v5631 = vadd.f32 0.0, %v5630
    %5632 = vmatmul.f32.gmra.mxu0 %v5491
    %v5633 = vpop.f32.mrf.mxu0
    %v5634 = vadd.f32 0.0, %v5633
    %5635 = vmatmul.f32.gmra.mxu0 %v5494
    %v5636 = vpop.f32.mrf.mxu0
    %v5637 = vadd.f32 0.0, %v5636
    %5638 = vmatmul.f32.gmra.mxu0 %v5497
    %v5639 = vpop.f32.mrf.mxu0
    %v5640 = vadd.f32 0.0, %v5639
    %5641 = vmatmul.f32.gmra.mxu0 %v5500
    %v5642 = vpop.f32.mrf.mxu0
    %v5643 = vadd.f32 0.0, %v5642
    %5644 = vmatmul.f32.gmra.mxu0 %v5503
    %v5645 = vpop.f32.mrf.mxu0
    %v5646 = vadd.f32 0.0, %v5645
    %5647 = vmatmul.f32.gmra.mxu0 %v5506
    %v5648 = vpop.f32.mrf.mxu0
    %v5649 = vadd.f32 0.0, %v5648
    %5650 = vmatmul.f32.gmra.mxu0 %v5509
    %v5651 = vpop.f32.mrf.mxu0
    %v5652 = vadd.f32 0.0, %v5651
    %5653 = vdwg.mxu0
    %v5654 = vadd.f32 %v5292, %v5529
    %v5655 = vadd.f32 %v5293, %v5532
    %v5656 = vadd.f32 %v5294, %v5535
    %v5657 = vadd.f32 %v5295, %v5538
    %v5658 = vadd.f32 %v5296, %v5541
    %v5659 = vadd.f32 %v5297, %v5544
    %v5660 = vadd.f32 %v5298, %v5547
    %v5661 = vadd.f32 %v5299, %v5550
    %v5662 = vadd.f32 %v5300, %v5553
    %v5663 = vadd.f32 %v5301, %v5556
    %v5664 = vadd.f32 %v5302, %v5559
    %v5665 = vadd.f32 %v5303, %v5562
    %v5666 = vadd.f32 %v5304, %v5565
    %v5667 = vadd.f32 %v5305, %v5568
    %v5668 = vadd.f32 %v5306, %v5571
    %v5669 = vadd.f32 %v5307, %v5574
    %v5670 = vadd.f32 %v5308, %v5577
    %v5671 = vadd.f32 %v5309, %v5580
    %v5672 = vadd.f32 %v5310, %v5583
    %v5673 = vadd.f32 %v5311, %v5586
    %v5674 = vadd.f32 %v5312, %v5589
    %v5675 = vadd.f32 %v5313, %v5592
    %v5676 = vadd.f32 %v5314, %v5595
    %v5677 = vadd.f32 %v5315, %v5598
    %v5678 = vadd.f32 %v5316, %v5601
    %v5679 = vadd.f32 %v5317, %v5604
    %v5680 = vadd.f32 %v5318, %v5607
    %v5681 = vadd.f32 %v5319, %v5610
    %v5682 = vadd.f32 %v5320, %v5613
    %v5683 = vadd.f32 %v5321, %v5616
    %v5684 = vadd.f32 %v5322, %v5619
    %v5685 = vadd.f32 %v5323, %v5622
    %v5686 = vadd.f32 %v5324, %v5625
    %v5687 = vadd.f32 %v5325, %v5628
    %v5688 = vadd.f32 %v5326, %v5631
    %v5689 = vadd.f32 %v5327, %v5634
    %v5690 = vadd.f32 %v5328, %v5637
    %v5691 = vadd.f32 %v5329, %v5640
    %v5692 = vadd.f32 %v5330, %v5643
    %v5693 = vadd.f32 %v5331, %v5646
    %v5694 = vadd.f32 %v5332, %v5649
    %v5695 = vadd.f32 %v5333, %v5652
    %v5696 = vld [vmem:[#allocation2 + $0x1c] sm:$0xff]
    %v5697 = vld [vmem:[#allocation2 + $0x24] sm:$0xff]
    %v5698 = vld [vmem:[#allocation2 + $0x2c] sm:$0xff]
    %v5699 = vld [vmem:[#allocation2 + $0x34] sm:$0xff]
    %v5700 = vld [vmem:[#allocation2 + $0x3c] sm:$0xff]
    %v5701 = vld [vmem:[#allocation2 + $0x44] sm:$0xff]
    %v5702 = vld [vmem:[#allocation2 + $0x4c] sm:$0xff]
    %v5703 = vld [vmem:[#allocation2 + $0x54] sm:$0xff]
    %v5704 = vld [vmem:[#allocation2 + $0x5c] sm:$0xff]
    %v5705 = vld [vmem:[#allocation2 + $0x64] sm:$0xff]
    %v5706 = vld [vmem:[#allocation2 + $0x6c] sm:$0xff]
    %v5707 = vld [vmem:[#allocation2 + $0x74] sm:$0xff]
    %v5708 = vld [vmem:[#allocation2 + $0x7c] sm:$0xff]
    %v5709 = vld [vmem:[#allocation2 + $0x84] sm:$0xff]
    %v5710 = vld [vmem:[#allocation2 + $0x8c] sm:$0xff]
    %v5711 = vld [vmem:[#allocation2 + $0x94] sm:$0xff]
    %v5712 = vld [vmem:[#allocation2 + $0x9c] sm:$0xff]
    %v5713 = vld [vmem:[#allocation2 + $0xa4] sm:$0xff]
    %v5714 = vld [vmem:[#allocation2 + $0xac] sm:$0xff]
    %v5715 = vld [vmem:[#allocation2 + $0xb4] sm:$0xff]
    %v5716 = vld [vmem:[#allocation2 + $0xbc] sm:$0xff]
    %v5717 = vld [vmem:[#allocation2 + $0xc4] sm:$0xff]
    %v5718 = vld [vmem:[#allocation2 + $0xcc] sm:$0xff]
    %v5719 = vld [vmem:[#allocation2 + $0xd4] sm:$0xff]
    %v5720 = vld [vmem:[#allocation2 + $0xdc] sm:$0xff]
    %v5721 = vld [vmem:[#allocation2 + $0xe4] sm:$0xff]
    %v5722 = vld [vmem:[#allocation2 + $0xec] sm:$0xff]
    %v5723 = vld [vmem:[#allocation2 + $0xf4] sm:$0xff]
    %v5724 = vld [vmem:[#allocation2 + $0xfc] sm:$0xff]
    %v5725 = vld [vmem:[#allocation2 + $0x104] sm:$0xff]
    %v5726 = vld [vmem:[#allocation2 + $0x10c] sm:$0xff]
    %v5727 = vld [vmem:[#allocation2 + $0x114] sm:$0xff]
    %v5728 = vld [vmem:[#allocation2 + $0x11c] sm:$0xff]
    %v5729 = vld [vmem:[#allocation2 + $0x124] sm:$0xff]
    %v5730 = vld [vmem:[#allocation2 + $0x12c] sm:$0xff]
    %v5731 = vld [vmem:[#allocation2 + $0x134] sm:$0xff]
    %v5732 = vld [vmem:[#allocation2 + $0x13c] sm:$0xff]
    %v5733 = vld [vmem:[#allocation2 + $0x144] sm:$0xff]
    %v5734 = vld [vmem:[#allocation2 + $0x14c] sm:$0xff]
    %v5735 = vld [vmem:[#allocation2 + $0x154] sm:$0xff]
    %v5736 = vld [vmem:[#allocation2 + $0x15c] sm:$0xff]
    %v5737 = vld [vmem:[#allocation2 + $0x164] sm:$0xf]
    %s5738 = scalar_lea.vmem %s3, 384
    %v5739 = vld [vmem:[%s5738] sm:$0xff]
    %v5740 = vld [vmem:[%s5738 + $0x8] sm:$0xff]
    %v5741 = vld [vmem:[%s5738 + $0x10] sm:$0xff]
    %v5742 = vld [vmem:[%s5738 + $0x18] sm:$0xff]
    %v5743 = vld [vmem:[%s5738 + $0x20] sm:$0xff]
    %v5744 = vld [vmem:[%s5738 + $0x28] sm:$0xff]
    %v5745 = vld [vmem:[%s5738 + $0x30] sm:$0xff]
    %v5746 = vld [vmem:[%s5738 + $0x38] sm:$0xff]
    %v5748 = vsel %vm3561, %v5696, 0
    %v5751 = vsel %vm3561, %v5697, 0
    %v5754 = vsel %vm3561, %v5698, 0
    %v5757 = vsel %vm3561, %v5699, 0
    %v5760 = vsel %vm3561, %v5700, 0
    %v5763 = vsel %vm3561, %v5701, 0
    %v5766 = vsel %vm3561, %v5702, 0
    %v5769 = vsel %vm3561, %v5703, 0
    %v5772 = vsel %vm3561, %v5704, 0
    %v5775 = vsel %vm3561, %v5705, 0
    %v5778 = vsel %vm3561, %v5706, 0
    %v5781 = vsel %vm3561, %v5707, 0
    %v5784 = vsel %vm3561, %v5708, 0
    %v5787 = vsel %vm3561, %v5709, 0
    %v5790 = vsel %vm3561, %v5710, 0
    %v5793 = vsel %vm3561, %v5711, 0
    %v5796 = vsel %vm3561, %v5712, 0
    %v5799 = vsel %vm3561, %v5713, 0
    %v5802 = vsel %vm3561, %v5714, 0
    %v5805 = vsel %vm3561, %v5715, 0
    %v5808 = vsel %vm3561, %v5716, 0
    %v5811 = vsel %vm3561, %v5717, 0
    %v5814 = vsel %vm3561, %v5718, 0
    %v5817 = vsel %vm3561, %v5719, 0
    %v5820 = vsel %vm3561, %v5720, 0
    %v5823 = vsel %vm3561, %v5721, 0
    %v5826 = vsel %vm3561, %v5722, 0
    %v5829 = vsel %vm3561, %v5723, 0
    %v5832 = vsel %vm3561, %v5724, 0
    %v5835 = vsel %vm3561, %v5725, 0
    %v5838 = vsel %vm3561, %v5726, 0
    %v5841 = vsel %vm3561, %v5727, 0
    %v5844 = vsel %vm3561, %v5728, 0
    %v5847 = vsel %vm3561, %v5729, 0
    %v5850 = vsel %vm3561, %v5730, 0
    %v5853 = vsel %vm3561, %v5731, 0
    %v5856 = vsel %vm3561, %v5732, 0
    %v5859 = vsel %vm3561, %v5733, 0
    %v5862 = vsel %vm3561, %v5734, 0
    %v5865 = vsel %vm3561, %v5735, 0
    %v5868 = vsel %vm3561, %v5736, 0
    %v5871 = vsel %vm3561, %v5737, 0
    %5873 = vmatpush.msra.mxu0 0.0
    %5874 = vmatpush.msra.mxu0 0.0
    %5875 = vmatpush.msra.mxu0 0.0
    %5876 = vmatpush.msra.mxu0 0.0
    %5877 = vmatpush.msra.mxu0 0.0
    %5878 = vmatpush.msra.mxu0 0.0
    %5879 = vmatpush.msra.mxu0 0.0
    %5880 = vmatpush.msra.mxu0 0.0
    %5881 = vmatpush.msra.mxu0 %v5746
    %5882 = vmatpush.msra.mxu0 %v5745
    %5883 = vmatpush.msra.mxu0 %v5744
    %5884 = vmatpush.msra.mxu0 %v5743
    %5885 = vmatpush.msra.mxu0 %v5742
    %5886 = vmatpush.msra.mxu0 %v5741
    %5887 = vmatpush.msra.mxu0 %v5740
    %5888 = vmatpush.msra.mxu0 %v5739
    %5889 = vmatmul.f32.gmra.mxu0 %v5748
    %v5890 = vpop.f32.mrf.mxu0
    %v5891 = vadd.f32 0.0, %v5890
    %5892 = vmatmul.f32.gmra.mxu0 %v5751
    %v5893 = vpop.f32.mrf.mxu0
    %v5894 = vadd.f32 0.0, %v5893
    %5895 = vmatmul.f32.gmra.mxu0 %v5754
    %v5896 = vpop.f32.mrf.mxu0
    %v5897 = vadd.f32 0.0, %v5896
    %5898 = vmatmul.f32.gmra.mxu0 %v5757
    %v5899 = vpop.f32.mrf.mxu0
    %v5900 = vadd.f32 0.0, %v5899
    %5901 = vmatmul.f32.gmra.mxu0 %v5760
    %v5902 = vpop.f32.mrf.mxu0
    %v5903 = vadd.f32 0.0, %v5902
    %5904 = vmatmul.f32.gmra.mxu0 %v5763
    %v5905 = vpop.f32.mrf.mxu0
    %v5906 = vadd.f32 0.0, %v5905
    %5907 = vmatmul.f32.gmra.mxu0 %v5766
    %v5908 = vpop.f32.mrf.mxu0
    %v5909 = vadd.f32 0.0, %v5908
    %5910 = vmatmul.f32.gmra.mxu0 %v5769
    %v5911 = vpop.f32.mrf.mxu0
    %v5912 = vadd.f32 0.0, %v5911
    %5913 = vmatmul.f32.gmra.mxu0 %v5772
    %v5914 = vpop.f32.mrf.mxu0
    %v5915 = vadd.f32 0.0, %v5914
    %5916 = vmatmul.f32.gmra.mxu0 %v5775
    %v5917 = vpop.f32.mrf.mxu0
    %v5918 = vadd.f32 0.0, %v5917
    %5919 = vmatmul.f32.gmra.mxu0 %v5778
    %v5920 = vpop.f32.mrf.mxu0
    %v5921 = vadd.f32 0.0, %v5920
    %5922 = vmatmul.f32.gmra.mxu0 %v5781
    %v5923 = vpop.f32.mrf.mxu0
    %v5924 = vadd.f32 0.0, %v5923
    %5925 = vmatmul.f32.gmra.mxu0 %v5784
    %v5926 = vpop.f32.mrf.mxu0
    %v5927 = vadd.f32 0.0, %v5926
    %5928 = vmatmul.f32.gmra.mxu0 %v5787
    %v5929 = vpop.f32.mrf.mxu0
    %v5930 = vadd.f32 0.0, %v5929
    %5931 = vmatmul.f32.gmra.mxu0 %v5790
    %v5932 = vpop.f32.mrf.mxu0
    %v5933 = vadd.f32 0.0, %v5932
    %5934 = vmatmul.f32.gmra.mxu0 %v5793
    %v5935 = vpop.f32.mrf.mxu0
    %v5936 = vadd.f32 0.0, %v5935
    %5937 = vmatmul.f32.gmra.mxu0 %v5796
    %v5938 = vpop.f32.mrf.mxu0
    %v5939 = vadd.f32 0.0, %v5938
    %5940 = vmatmul.f32.gmra.mxu0 %v5799
    %v5941 = vpop.f32.mrf.mxu0
    %v5942 = vadd.f32 0.0, %v5941
    %5943 = vmatmul.f32.gmra.mxu0 %v5802
    %v5944 = vpop.f32.mrf.mxu0
    %v5945 = vadd.f32 0.0, %v5944
    %5946 = vmatmul.f32.gmra.mxu0 %v5805
    %v5947 = vpop.f32.mrf.mxu0
    %v5948 = vadd.f32 0.0, %v5947
    %5949 = vmatmul.f32.gmra.mxu0 %v5808
    %v5950 = vpop.f32.mrf.mxu0
    %v5951 = vadd.f32 0.0, %v5950
    %5952 = vmatmul.f32.gmra.mxu0 %v5811
    %v5953 = vpop.f32.mrf.mxu0
    %v5954 = vadd.f32 0.0, %v5953
    %5955 = vmatmul.f32.gmra.mxu0 %v5814
    %v5956 = vpop.f32.mrf.mxu0
    %v5957 = vadd.f32 0.0, %v5956
    %5958 = vmatmul.f32.gmra.mxu0 %v5817
    %v5959 = vpop.f32.mrf.mxu0
    %v5960 = vadd.f32 0.0, %v5959
    %5961 = vmatmul.f32.gmra.mxu0 %v5820
    %v5962 = vpop.f32.mrf.mxu0
    %v5963 = vadd.f32 0.0, %v5962
    %5964 = vmatmul.f32.gmra.mxu0 %v5823
    %v5965 = vpop.f32.mrf.mxu0
    %v5966 = vadd.f32 0.0, %v5965
    %5967 = vmatmul.f32.gmra.mxu0 %v5826
    %v5968 = vpop.f32.mrf.mxu0
    %v5969 = vadd.f32 0.0, %v5968
    %5970 = vmatmul.f32.gmra.mxu0 %v5829
    %v5971 = vpop.f32.mrf.mxu0
    %v5972 = vadd.f32 0.0, %v5971
    %5973 = vmatmul.f32.gmra.mxu0 %v5832
    %v5974 = vpop.f32.mrf.mxu0
    %v5975 = vadd.f32 0.0, %v5974
    %5976 = vmatmul.f32.gmra.mxu0 %v5835
    %v5977 = vpop.f32.mrf.mxu0
    %v5978 = vadd.f32 0.0, %v5977
    %5979 = vmatmul.f32.gmra.mxu0 %v5838
    %v5980 = vpop.f32.mrf.mxu0
    %v5981 = vadd.f32 0.0, %v5980
    %5982 = vmatmul.f32.gmra.mxu0 %v5841
    %v5983 = vpop.f32.mrf.mxu0
    %v5984 = vadd.f32 0.0, %v5983
    %5985 = vmatmul.f32.gmra.mxu0 %v5844
    %v5986 = vpop.f32.mrf.mxu0
    %v5987 = vadd.f32 0.0, %v5986
    %5988 = vmatmul.f32.gmra.mxu0 %v5847
    %v5989 = vpop.f32.mrf.mxu0
    %v5990 = vadd.f32 0.0, %v5989
    %5991 = vmatmul.f32.gmra.mxu0 %v5850
    %v5992 = vpop.f32.mrf.mxu0
    %v5993 = vadd.f32 0.0, %v5992
    %5994 = vmatmul.f32.gmra.mxu0 %v5853
    %v5995 = vpop.f32.mrf.mxu0
    %v5996 = vadd.f32 0.0, %v5995
    %5997 = vmatmul.f32.gmra.mxu0 %v5856
    %v5998 = vpop.f32.mrf.mxu0
    %v5999 = vadd.f32 0.0, %v5998
    %6000 = vmatmul.f32.gmra.mxu0 %v5859
    %v6001 = vpop.f32.mrf.mxu0
    %v6002 = vadd.f32 0.0, %v6001
    %6003 = vmatmul.f32.gmra.mxu0 %v5862
    %v6004 = vpop.f32.mrf.mxu0
    %v6005 = vadd.f32 0.0, %v6004
    %6006 = vmatmul.f32.gmra.mxu0 %v5865
    %v6007 = vpop.f32.mrf.mxu0
    %v6008 = vadd.f32 0.0, %v6007
    %6009 = vmatmul.f32.gmra.mxu0 %v5868
    %v6010 = vpop.f32.mrf.mxu0
    %v6011 = vadd.f32 0.0, %v6010
    %6012 = vmatmul.f32.gmra.mxu0 %v5871
    %v6013 = vpop.f32.mrf.mxu0
    %v6014 = vadd.f32 0.0, %v6013
    %6015 = vdwg.mxu0
    %v6016 = vadd.f32 %v5654, %v5891
    %v6017 = vadd.f32 %v5655, %v5894
    %v6018 = vadd.f32 %v5656, %v5897
    %v6019 = vadd.f32 %v5657, %v5900
    %v6020 = vadd.f32 %v5658, %v5903
    %v6021 = vadd.f32 %v5659, %v5906
    %v6022 = vadd.f32 %v5660, %v5909
    %v6023 = vadd.f32 %v5661, %v5912
    %v6024 = vadd.f32 %v5662, %v5915
    %v6025 = vadd.f32 %v5663, %v5918
    %v6026 = vadd.f32 %v5664, %v5921
    %v6027 = vadd.f32 %v5665, %v5924
    %v6028 = vadd.f32 %v5666, %v5927
    %v6029 = vadd.f32 %v5667, %v5930
    %v6030 = vadd.f32 %v5668, %v5933
    %v6031 = vadd.f32 %v5669, %v5936
    %v6032 = vadd.f32 %v5670, %v5939
    %v6033 = vadd.f32 %v5671, %v5942
    %v6034 = vadd.f32 %v5672, %v5945
    %v6035 = vadd.f32 %v5673, %v5948
    %v6036 = vadd.f32 %v5674, %v5951
    %v6037 = vadd.f32 %v5675, %v5954
    %v6038 = vadd.f32 %v5676, %v5957
    %v6039 = vadd.f32 %v5677, %v5960
    %v6040 = vadd.f32 %v5678, %v5963
    %v6041 = vadd.f32 %v5679, %v5966
    %v6042 = vadd.f32 %v5680, %v5969
    %v6043 = vadd.f32 %v5681, %v5972
    %v6044 = vadd.f32 %v5682, %v5975
    %v6045 = vadd.f32 %v5683, %v5978
    %v6046 = vadd.f32 %v5684, %v5981
    %v6047 = vadd.f32 %v5685, %v5984
    %v6048 = vadd.f32 %v5686, %v5987
    %v6049 = vadd.f32 %v5687, %v5990
    %v6050 = vadd.f32 %v5688, %v5993
    %v6051 = vadd.f32 %v5689, %v5996
    %v6052 = vadd.f32 %v5690, %v5999
    %v6053 = vadd.f32 %v5691, %v6002
    %v6054 = vadd.f32 %v5692, %v6005
    %v6055 = vadd.f32 %v5693, %v6008
    %v6056 = vadd.f32 %v5694, %v6011
    %v6057 = vadd.f32 %v5695, %v6014
    %v6058 = vld [vmem:[#allocation2 + $0x1d] sm:$0xff]
    %v6059 = vld [vmem:[#allocation2 + $0x25] sm:$0xff]
    %v6060 = vld [vmem:[#allocation2 + $0x2d] sm:$0xff]
    %v6061 = vld [vmem:[#allocation2 + $0x35] sm:$0xff]
    %v6062 = vld [vmem:[#allocation2 + $0x3d] sm:$0xff]
    %v6063 = vld [vmem:[#allocation2 + $0x45] sm:$0xff]
    %v6064 = vld [vmem:[#allocation2 + $0x4d] sm:$0xff]
    %v6065 = vld [vmem:[#allocation2 + $0x55] sm:$0xff]
    %v6066 = vld [vmem:[#allocation2 + $0x5d] sm:$0xff]
    %v6067 = vld [vmem:[#allocation2 + $0x65] sm:$0xff]
    %v6068 = vld [vmem:[#allocation2 + $0x6d] sm:$0xff]
    %v6069 = vld [vmem:[#allocation2 + $0x75] sm:$0xff]
    %v6070 = vld [vmem:[#allocation2 + $0x7d] sm:$0xff]
    %v6071 = vld [vmem:[#allocation2 + $0x85] sm:$0xff]
    %v6072 = vld [vmem:[#allocation2 + $0x8d] sm:$0xff]
    %v6073 = vld [vmem:[#allocation2 + $0x95] sm:$0xff]
    %v6074 = vld [vmem:[#allocation2 + $0x9d] sm:$0xff]
    %v6075 = vld [vmem:[#allocation2 + $0xa5] sm:$0xff]
    %v6076 = vld [vmem:[#allocation2 + $0xad] sm:$0xff]
    %v6077 = vld [vmem:[#allocation2 + $0xb5] sm:$0xff]
    %v6078 = vld [vmem:[#allocation2 + $0xbd] sm:$0xff]
    %v6079 = vld [vmem:[#allocation2 + $0xc5] sm:$0xff]
    %v6080 = vld [vmem:[#allocation2 + $0xcd] sm:$0xff]
    %v6081 = vld [vmem:[#allocation2 + $0xd5] sm:$0xff]
    %v6082 = vld [vmem:[#allocation2 + $0xdd] sm:$0xff]
    %v6083 = vld [vmem:[#allocation2 + $0xe5] sm:$0xff]
    %v6084 = vld [vmem:[#allocation2 + $0xed] sm:$0xff]
    %v6085 = vld [vmem:[#allocation2 + $0xf5] sm:$0xff]
    %v6086 = vld [vmem:[#allocation2 + $0xfd] sm:$0xff]
    %v6087 = vld [vmem:[#allocation2 + $0x105] sm:$0xff]
    %v6088 = vld [vmem:[#allocation2 + $0x10d] sm:$0xff]
    %v6089 = vld [vmem:[#allocation2 + $0x115] sm:$0xff]
    %v6090 = vld [vmem:[#allocation2 + $0x11d] sm:$0xff]
    %v6091 = vld [vmem:[#allocation2 + $0x125] sm:$0xff]
    %v6092 = vld [vmem:[#allocation2 + $0x12d] sm:$0xff]
    %v6093 = vld [vmem:[#allocation2 + $0x135] sm:$0xff]
    %v6094 = vld [vmem:[#allocation2 + $0x13d] sm:$0xff]
    %v6095 = vld [vmem:[#allocation2 + $0x145] sm:$0xff]
    %v6096 = vld [vmem:[#allocation2 + $0x14d] sm:$0xff]
    %v6097 = vld [vmem:[#allocation2 + $0x155] sm:$0xff]
    %v6098 = vld [vmem:[#allocation2 + $0x15d] sm:$0xff]
    %v6099 = vld [vmem:[#allocation2 + $0x165] sm:$0xf]
    %s6100 = scalar_lea.vmem %s3, 448
    %v6101 = vld [vmem:[%s6100] sm:$0xff]
    %v6102 = vld [vmem:[%s6100 + $0x8] sm:$0xff]
    %v6103 = vld [vmem:[%s6100 + $0x10] sm:$0xff]
    %v6104 = vld [vmem:[%s6100 + $0x18] sm:$0xff]
    %v6105 = vld [vmem:[%s6100 + $0x20] sm:$0xff]
    %v6106 = vld [vmem:[%s6100 + $0x28] sm:$0xff]
    %v6107 = vld [vmem:[%s6100 + $0x30] sm:$0xff]
    %v6108 = vld [vmem:[%s6100 + $0x38] sm:$0xff]
    %v6110 = vsel %vm3561, %v6058, 0
    %v6113 = vsel %vm3561, %v6059, 0
    %v6116 = vsel %vm3561, %v6060, 0
    %v6119 = vsel %vm3561, %v6061, 0
    %v6122 = vsel %vm3561, %v6062, 0
    %v6125 = vsel %vm3561, %v6063, 0
    %v6128 = vsel %vm3561, %v6064, 0
    %v6131 = vsel %vm3561, %v6065, 0
    %v6134 = vsel %vm3561, %v6066, 0
    %v6137 = vsel %vm3561, %v6067, 0
    %v6140 = vsel %vm3561, %v6068, 0
    %v6143 = vsel %vm3561, %v6069, 0
    %v6146 = vsel %vm3561, %v6070, 0
    %v6149 = vsel %vm3561, %v6071, 0
    %v6152 = vsel %vm3561, %v6072, 0
    %v6155 = vsel %vm3561, %v6073, 0
    %v6158 = vsel %vm3561, %v6074, 0
    %v6161 = vsel %vm3561, %v6075, 0
    %v6164 = vsel %vm3561, %v6076, 0
    %v6167 = vsel %vm3561, %v6077, 0
    %v6170 = vsel %vm3561, %v6078, 0
    %v6173 = vsel %vm3561, %v6079, 0
    %v6176 = vsel %vm3561, %v6080, 0
    %v6179 = vsel %vm3561, %v6081, 0
    %v6182 = vsel %vm3561, %v6082, 0
    %v6185 = vsel %vm3561, %v6083, 0
    %v6188 = vsel %vm3561, %v6084, 0
    %v6191 = vsel %vm3561, %v6085, 0
    %v6194 = vsel %vm3561, %v6086, 0
    %v6197 = vsel %vm3561, %v6087, 0
    %v6200 = vsel %vm3561, %v6088, 0
    %v6203 = vsel %vm3561, %v6089, 0
    %v6206 = vsel %vm3561, %v6090, 0
    %v6209 = vsel %vm3561, %v6091, 0
    %v6212 = vsel %vm3561, %v6092, 0
    %v6215 = vsel %vm3561, %v6093, 0
    %v6218 = vsel %vm3561, %v6094, 0
    %v6221 = vsel %vm3561, %v6095, 0
    %v6224 = vsel %vm3561, %v6096, 0
    %v6227 = vsel %vm3561, %v6097, 0
    %v6230 = vsel %vm3561, %v6098, 0
    %v6233 = vsel %vm3561, %v6099, 0
    %6235 = vmatpush.msra.mxu0 0.0
    %6236 = vmatpush.msra.mxu0 0.0
    %6237 = vmatpush.msra.mxu0 0.0
    %6238 = vmatpush.msra.mxu0 0.0
    %6239 = vmatpush.msra.mxu0 0.0
    %6240 = vmatpush.msra.mxu0 0.0
    %6241 = vmatpush.msra.mxu0 0.0
    %6242 = vmatpush.msra.mxu0 0.0
    %6243 = vmatpush.msra.mxu0 %v6108
    %6244 = vmatpush.msra.mxu0 %v6107
    %6245 = vmatpush.msra.mxu0 %v6106
    %6246 = vmatpush.msra.mxu0 %v6105
    %6247 = vmatpush.msra.mxu0 %v6104
    %6248 = vmatpush.msra.mxu0 %v6103
    %6249 = vmatpush.msra.mxu0 %v6102
    %6250 = vmatpush.msra.mxu0 %v6101
    %6251 = vmatmul.f32.gmra.mxu0 %v6110
    %v6252 = vpop.f32.mrf.mxu0
    %v6253 = vadd.f32 0.0, %v6252
    %6254 = vmatmul.f32.gmra.mxu0 %v6113
    %v6255 = vpop.f32.mrf.mxu0
    %v6256 = vadd.f32 0.0, %v6255
    %6257 = vmatmul.f32.gmra.mxu0 %v6116
    %v6258 = vpop.f32.mrf.mxu0
    %v6259 = vadd.f32 0.0, %v6258
    %6260 = vmatmul.f32.gmra.mxu0 %v6119
    %v6261 = vpop.f32.mrf.mxu0
    %v6262 = vadd.f32 0.0, %v6261
    %6263 = vmatmul.f32.gmra.mxu0 %v6122
    %v6264 = vpop.f32.mrf.mxu0
    %v6265 = vadd.f32 0.0, %v6264
    %6266 = vmatmul.f32.gmra.mxu0 %v6125
    %v6267 = vpop.f32.mrf.mxu0
    %v6268 = vadd.f32 0.0, %v6267
    %6269 = vmatmul.f32.gmra.mxu0 %v6128
    %v6270 = vpop.f32.mrf.mxu0
    %v6271 = vadd.f32 0.0, %v6270
    %6272 = vmatmul.f32.gmra.mxu0 %v6131
    %v6273 = vpop.f32.mrf.mxu0
    %v6274 = vadd.f32 0.0, %v6273
    %6275 = vmatmul.f32.gmra.mxu0 %v6134
    %v6276 = vpop.f32.mrf.mxu0
    %v6277 = vadd.f32 0.0, %v6276
    %6278 = vmatmul.f32.gmra.mxu0 %v6137
    %v6279 = vpop.f32.mrf.mxu0
    %v6280 = vadd.f32 0.0, %v6279
    %6281 = vmatmul.f32.gmra.mxu0 %v6140
    %v6282 = vpop.f32.mrf.mxu0
    %v6283 = vadd.f32 0.0, %v6282
    %6284 = vmatmul.f32.gmra.mxu0 %v6143
    %v6285 = vpop.f32.mrf.mxu0
    %v6286 = vadd.f32 0.0, %v6285
    %6287 = vmatmul.f32.gmra.mxu0 %v6146
    %v6288 = vpop.f32.mrf.mxu0
    %v6289 = vadd.f32 0.0, %v6288
    %6290 = vmatmul.f32.gmra.mxu0 %v6149
    %v6291 = vpop.f32.mrf.mxu0
    %v6292 = vadd.f32 0.0, %v6291
    %6293 = vmatmul.f32.gmra.mxu0 %v6152
    %v6294 = vpop.f32.mrf.mxu0
    %v6295 = vadd.f32 0.0, %v6294
    %6296 = vmatmul.f32.gmra.mxu0 %v6155
    %v6297 = vpop.f32.mrf.mxu0
    %v6298 = vadd.f32 0.0, %v6297
    %6299 = vmatmul.f32.gmra.mxu0 %v6158
    %v6300 = vpop.f32.mrf.mxu0
    %v6301 = vadd.f32 0.0, %v6300
    %6302 = vmatmul.f32.gmra.mxu0 %v6161
    %v6303 = vpop.f32.mrf.mxu0
    %v6304 = vadd.f32 0.0, %v6303
    %6305 = vmatmul.f32.gmra.mxu0 %v6164
    %v6306 = vpop.f32.mrf.mxu0
    %v6307 = vadd.f32 0.0, %v6306
    %6308 = vmatmul.f32.gmra.mxu0 %v6167
    %v6309 = vpop.f32.mrf.mxu0
    %v6310 = vadd.f32 0.0, %v6309
    %6311 = vmatmul.f32.gmra.mxu0 %v6170
    %v6312 = vpop.f32.mrf.mxu0
    %v6313 = vadd.f32 0.0, %v6312
    %6314 = vmatmul.f32.gmra.mxu0 %v6173
    %v6315 = vpop.f32.mrf.mxu0
    %v6316 = vadd.f32 0.0, %v6315
    %6317 = vmatmul.f32.gmra.mxu0 %v6176
    %v6318 = vpop.f32.mrf.mxu0
    %v6319 = vadd.f32 0.0, %v6318
    %6320 = vmatmul.f32.gmra.mxu0 %v6179
    %v6321 = vpop.f32.mrf.mxu0
    %v6322 = vadd.f32 0.0, %v6321
    %6323 = vmatmul.f32.gmra.mxu0 %v6182
    %v6324 = vpop.f32.mrf.mxu0
    %v6325 = vadd.f32 0.0, %v6324
    %6326 = vmatmul.f32.gmra.mxu0 %v6185
    %v6327 = vpop.f32.mrf.mxu0
    %v6328 = vadd.f32 0.0, %v6327
    %6329 = vmatmul.f32.gmra.mxu0 %v6188
    %v6330 = vpop.f32.mrf.mxu0
    %v6331 = vadd.f32 0.0, %v6330
    %6332 = vmatmul.f32.gmra.mxu0 %v6191
    %v6333 = vpop.f32.mrf.mxu0
    %v6334 = vadd.f32 0.0, %v6333
    %6335 = vmatmul.f32.gmra.mxu0 %v6194
    %v6336 = vpop.f32.mrf.mxu0
    %v6337 = vadd.f32 0.0, %v6336
    %6338 = vmatmul.f32.gmra.mxu0 %v6197
    %v6339 = vpop.f32.mrf.mxu0
    %v6340 = vadd.f32 0.0, %v6339
    %6341 = vmatmul.f32.gmra.mxu0 %v6200
    %v6342 = vpop.f32.mrf.mxu0
    %v6343 = vadd.f32 0.0, %v6342
    %6344 = vmatmul.f32.gmra.mxu0 %v6203
    %v6345 = vpop.f32.mrf.mxu0
    %v6346 = vadd.f32 0.0, %v6345
    %6347 = vmatmul.f32.gmra.mxu0 %v6206
    %v6348 = vpop.f32.mrf.mxu0
    %v6349 = vadd.f32 0.0, %v6348
    %6350 = vmatmul.f32.gmra.mxu0 %v6209
    %v6351 = vpop.f32.mrf.mxu0
    %v6352 = vadd.f32 0.0, %v6351
    %6353 = vmatmul.f32.gmra.mxu0 %v6212
    %v6354 = vpop.f32.mrf.mxu0
    %v6355 = vadd.f32 0.0, %v6354
    %6356 = vmatmul.f32.gmra.mxu0 %v6215
    %v6357 = vpop.f32.mrf.mxu0
    %v6358 = vadd.f32 0.0, %v6357
    %6359 = vmatmul.f32.gmra.mxu0 %v6218
    %v6360 = vpop.f32.mrf.mxu0
    %v6361 = vadd.f32 0.0, %v6360
    %6362 = vmatmul.f32.gmra.mxu0 %v6221
    %v6363 = vpop.f32.mrf.mxu0
    %v6364 = vadd.f32 0.0, %v6363
    %6365 = vmatmul.f32.gmra.mxu0 %v6224
    %v6366 = vpop.f32.mrf.mxu0
    %v6367 = vadd.f32 0.0, %v6366
    %6368 = vmatmul.f32.gmra.mxu0 %v6227
    %v6369 = vpop.f32.mrf.mxu0
    %v6370 = vadd.f32 0.0, %v6369
    %6371 = vmatmul.f32.gmra.mxu0 %v6230
    %v6372 = vpop.f32.mrf.mxu0
    %v6373 = vadd.f32 0.0, %v6372
    %6374 = vmatmul.f32.gmra.mxu0 %v6233
    %v6375 = vpop.f32.mrf.mxu0
    %v6376 = vadd.f32 0.0, %v6375
    %6377 = vdwg.mxu0
    %v6378 = vadd.f32 %v6016, %v6253
    %v6379 = vadd.f32 %v6017, %v6256
    %v6380 = vadd.f32 %v6018, %v6259
    %v6381 = vadd.f32 %v6019, %v6262
    %v6382 = vadd.f32 %v6020, %v6265
    %v6383 = vadd.f32 %v6021, %v6268
    %v6384 = vadd.f32 %v6022, %v6271
    %v6385 = vadd.f32 %v6023, %v6274
    %v6386 = vadd.f32 %v6024, %v6277
    %v6387 = vadd.f32 %v6025, %v6280
    %v6388 = vadd.f32 %v6026, %v6283
    %v6389 = vadd.f32 %v6027, %v6286
    %v6390 = vadd.f32 %v6028, %v6289
    %v6391 = vadd.f32 %v6029, %v6292
    %v6392 = vadd.f32 %v6030, %v6295
    %v6393 = vadd.f32 %v6031, %v6298
    %v6394 = vadd.f32 %v6032, %v6301
    %v6395 = vadd.f32 %v6033, %v6304
    %v6396 = vadd.f32 %v6034, %v6307
    %v6397 = vadd.f32 %v6035, %v6310
    %v6398 = vadd.f32 %v6036, %v6313
    %v6399 = vadd.f32 %v6037, %v6316
    %v6400 = vadd.f32 %v6038, %v6319
    %v6401 = vadd.f32 %v6039, %v6322
    %v6402 = vadd.f32 %v6040, %v6325
    %v6403 = vadd.f32 %v6041, %v6328
    %v6404 = vadd.f32 %v6042, %v6331
    %v6405 = vadd.f32 %v6043, %v6334
    %v6406 = vadd.f32 %v6044, %v6337
    %v6407 = vadd.f32 %v6045, %v6340
    %v6408 = vadd.f32 %v6046, %v6343
    %v6409 = vadd.f32 %v6047, %v6346
    %v6410 = vadd.f32 %v6048, %v6349
    %v6411 = vadd.f32 %v6049, %v6352
    %v6412 = vadd.f32 %v6050, %v6355
    %v6413 = vadd.f32 %v6051, %v6358
    %v6414 = vadd.f32 %v6052, %v6361
    %v6415 = vadd.f32 %v6053, %v6364
    %v6416 = vadd.f32 %v6054, %v6367
    %v6417 = vadd.f32 %v6055, %v6370
    %v6418 = vadd.f32 %v6056, %v6373
    %v6419 = vadd.f32 %v6057, %v6376
    %v6420 = vld [vmem:[#allocation2 + $0x1e] sm:$0xff]
    %v6421 = vld [vmem:[#allocation2 + $0x26] sm:$0xff]
    %v6422 = vld [vmem:[#allocation2 + $0x2e] sm:$0xff]
    %v6423 = vld [vmem:[#allocation2 + $0x36] sm:$0xff]
    %v6424 = vld [vmem:[#allocation2 + $0x3e] sm:$0xff]
    %v6425 = vld [vmem:[#allocation2 + $0x46] sm:$0xff]
    %v6426 = vld [vmem:[#allocation2 + $0x4e] sm:$0xff]
    %v6427 = vld [vmem:[#allocation2 + $0x56] sm:$0xff]
    %v6428 = vld [vmem:[#allocation2 + $0x5e] sm:$0xff]
    %v6429 = vld [vmem:[#allocation2 + $0x66] sm:$0xff]
    %v6430 = vld [vmem:[#allocation2 + $0x6e] sm:$0xff]
    %v6431 = vld [vmem:[#allocation2 + $0x76] sm:$0xff]
    %v6432 = vld [vmem:[#allocation2 + $0x7e] sm:$0xff]
    %v6433 = vld [vmem:[#allocation2 + $0x86] sm:$0xff]
    %v6434 = vld [vmem:[#allocation2 + $0x8e] sm:$0xff]
    %v6435 = vld [vmem:[#allocation2 + $0x96] sm:$0xff]
    %v6436 = vld [vmem:[#allocation2 + $0x9e] sm:$0xff]
    %v6437 = vld [vmem:[#allocation2 + $0xa6] sm:$0xff]
    %v6438 = vld [vmem:[#allocation2 + $0xae] sm:$0xff]
    %v6439 = vld [vmem:[#allocation2 + $0xb6] sm:$0xff]
    %v6440 = vld [vmem:[#allocation2 + $0xbe] sm:$0xff]
    %v6441 = vld [vmem:[#allocation2 + $0xc6] sm:$0xff]
    %v6442 = vld [vmem:[#allocation2 + $0xce] sm:$0xff]
    %v6443 = vld [vmem:[#allocation2 + $0xd6] sm:$0xff]
    %v6444 = vld [vmem:[#allocation2 + $0xde] sm:$0xff]
    %v6445 = vld [vmem:[#allocation2 + $0xe6] sm:$0xff]
    %v6446 = vld [vmem:[#allocation2 + $0xee] sm:$0xff]
    %v6447 = vld [vmem:[#allocation2 + $0xf6] sm:$0xff]
    %v6448 = vld [vmem:[#allocation2 + $0xfe] sm:$0xff]
    %v6449 = vld [vmem:[#allocation2 + $0x106] sm:$0xff]
    %v6450 = vld [vmem:[#allocation2 + $0x10e] sm:$0xff]
    %v6451 = vld [vmem:[#allocation2 + $0x116] sm:$0xff]
    %v6452 = vld [vmem:[#allocation2 + $0x11e] sm:$0xff]
    %v6453 = vld [vmem:[#allocation2 + $0x126] sm:$0xff]
    %v6454 = vld [vmem:[#allocation2 + $0x12e] sm:$0xff]
    %v6455 = vld [vmem:[#allocation2 + $0x136] sm:$0xff]
    %v6456 = vld [vmem:[#allocation2 + $0x13e] sm:$0xff]
    %v6457 = vld [vmem:[#allocation2 + $0x146] sm:$0xff]
    %v6458 = vld [vmem:[#allocation2 + $0x14e] sm:$0xff]
    %v6459 = vld [vmem:[#allocation2 + $0x156] sm:$0xff]
    %v6460 = vld [vmem:[#allocation2 + $0x15e] sm:$0xff]
    %v6461 = vld [vmem:[#allocation2 + $0x166] sm:$0xf]
    %s6462 = scalar_lea.vmem %s3, 512
    %v6463 = vld [vmem:[%s6462] sm:$0xff]
    %v6464 = vld [vmem:[%s6462 + $0x8] sm:$0xff]
    %v6465 = vld [vmem:[%s6462 + $0x10] sm:$0xff]
    %v6466 = vld [vmem:[%s6462 + $0x18] sm:$0xff]
    %v6467 = vld [vmem:[%s6462 + $0x20] sm:$0xff]
    %v6468 = vld [vmem:[%s6462 + $0x28] sm:$0xff]
    %v6469 = vld [vmem:[%s6462 + $0x30] sm:$0xff]
    %v6470 = vld [vmem:[%s6462 + $0x38] sm:$0xff]
    %v6472 = vsel %vm3561, %v6420, 0
    %v6475 = vsel %vm3561, %v6421, 0
    %v6478 = vsel %vm3561, %v6422, 0
    %v6481 = vsel %vm3561, %v6423, 0
    %v6484 = vsel %vm3561, %v6424, 0
    %v6487 = vsel %vm3561, %v6425, 0
    %v6490 = vsel %vm3561, %v6426, 0
    %v6493 = vsel %vm3561, %v6427, 0
    %v6496 = vsel %vm3561, %v6428, 0
    %v6499 = vsel %vm3561, %v6429, 0
    %v6502 = vsel %vm3561, %v6430, 0
    %v6505 = vsel %vm3561, %v6431, 0
    %v6508 = vsel %vm3561, %v6432, 0
    %v6511 = vsel %vm3561, %v6433, 0
    %v6514 = vsel %vm3561, %v6434, 0
    %v6517 = vsel %vm3561, %v6435, 0
    %v6520 = vsel %vm3561, %v6436, 0
    %v6523 = vsel %vm3561, %v6437, 0
    %v6526 = vsel %vm3561, %v6438, 0
    %v6529 = vsel %vm3561, %v6439, 0
    %v6532 = vsel %vm3561, %v6440, 0
    %v6535 = vsel %vm3561, %v6441, 0
    %v6538 = vsel %vm3561, %v6442, 0
    %v6541 = vsel %vm3561, %v6443, 0
    %v6544 = vsel %vm3561, %v6444, 0
    %v6547 = vsel %vm3561, %v6445, 0
    %v6550 = vsel %vm3561, %v6446, 0
    %v6553 = vsel %vm3561, %v6447, 0
    %v6556 = vsel %vm3561, %v6448, 0
    %v6559 = vsel %vm3561, %v6449, 0
    %v6562 = vsel %vm3561, %v6450, 0
    %v6565 = vsel %vm3561, %v6451, 0
    %v6568 = vsel %vm3561, %v6452, 0
    %v6571 = vsel %vm3561, %v6453, 0
    %v6574 = vsel %vm3561, %v6454, 0
    %v6577 = vsel %vm3561, %v6455, 0
    %v6580 = vsel %vm3561, %v6456, 0
    %v6583 = vsel %vm3561, %v6457, 0
    %v6586 = vsel %vm3561, %v6458, 0
    %v6589 = vsel %vm3561, %v6459, 0
    %v6592 = vsel %vm3561, %v6460, 0
    %v6595 = vsel %vm3561, %v6461, 0
    %6597 = vmatpush.msra.mxu0 0.0
    %6598 = vmatpush.msra.mxu0 0.0
    %6599 = vmatpush.msra.mxu0 0.0
    %6600 = vmatpush.msra.mxu0 0.0
    %6601 = vmatpush.msra.mxu0 0.0
    %6602 = vmatpush.msra.mxu0 0.0
    %6603 = vmatpush.msra.mxu0 0.0
    %6604 = vmatpush.msra.mxu0 0.0
    %6605 = vmatpush.msra.mxu0 %v6470
    %6606 = vmatpush.msra.mxu0 %v6469
    %6607 = vmatpush.msra.mxu0 %v6468
    %6608 = vmatpush.msra.mxu0 %v6467
    %6609 = vmatpush.msra.mxu0 %v6466
    %6610 = vmatpush.msra.mxu0 %v6465
    %6611 = vmatpush.msra.mxu0 %v6464
    %6612 = vmatpush.msra.mxu0 %v6463
    %6613 = vmatmul.f32.gmra.mxu0 %v6472
    %v6614 = vpop.f32.mrf.mxu0
    %v6615 = vadd.f32 0.0, %v6614
    %6616 = vmatmul.f32.gmra.mxu0 %v6475
    %v6617 = vpop.f32.mrf.mxu0
    %v6618 = vadd.f32 0.0, %v6617
    %6619 = vmatmul.f32.gmra.mxu0 %v6478
    %v6620 = vpop.f32.mrf.mxu0
    %v6621 = vadd.f32 0.0, %v6620
    %6622 = vmatmul.f32.gmra.mxu0 %v6481
    %v6623 = vpop.f32.mrf.mxu0
    %v6624 = vadd.f32 0.0, %v6623
    %6625 = vmatmul.f32.gmra.mxu0 %v6484
    %v6626 = vpop.f32.mrf.mxu0
    %v6627 = vadd.f32 0.0, %v6626
    %6628 = vmatmul.f32.gmra.mxu0 %v6487
    %v6629 = vpop.f32.mrf.mxu0
    %v6630 = vadd.f32 0.0, %v6629
    %6631 = vmatmul.f32.gmra.mxu0 %v6490
    %v6632 = vpop.f32.mrf.mxu0
    %v6633 = vadd.f32 0.0, %v6632
    %6634 = vmatmul.f32.gmra.mxu0 %v6493
    %v6635 = vpop.f32.mrf.mxu0
    %v6636 = vadd.f32 0.0, %v6635
    %6637 = vmatmul.f32.gmra.mxu0 %v6496
    %v6638 = vpop.f32.mrf.mxu0
    %v6639 = vadd.f32 0.0, %v6638
    %6640 = vmatmul.f32.gmra.mxu0 %v6499
    %v6641 = vpop.f32.mrf.mxu0
    %v6642 = vadd.f32 0.0, %v6641
    %6643 = vmatmul.f32.gmra.mxu0 %v6502
    %v6644 = vpop.f32.mrf.mxu0
    %v6645 = vadd.f32 0.0, %v6644
    %6646 = vmatmul.f32.gmra.mxu0 %v6505
    %v6647 = vpop.f32.mrf.mxu0
    %v6648 = vadd.f32 0.0, %v6647
    %6649 = vmatmul.f32.gmra.mxu0 %v6508
    %v6650 = vpop.f32.mrf.mxu0
    %v6651 = vadd.f32 0.0, %v6650
    %6652 = vmatmul.f32.gmra.mxu0 %v6511
    %v6653 = vpop.f32.mrf.mxu0
    %v6654 = vadd.f32 0.0, %v6653
    %6655 = vmatmul.f32.gmra.mxu0 %v6514
    %v6656 = vpop.f32.mrf.mxu0
    %v6657 = vadd.f32 0.0, %v6656
    %6658 = vmatmul.f32.gmra.mxu0 %v6517
    %v6659 = vpop.f32.mrf.mxu0
    %v6660 = vadd.f32 0.0, %v6659
    %6661 = vmatmul.f32.gmra.mxu0 %v6520
    %v6662 = vpop.f32.mrf.mxu0
    %v6663 = vadd.f32 0.0, %v6662
    %6664 = vmatmul.f32.gmra.mxu0 %v6523
    %v6665 = vpop.f32.mrf.mxu0
    %v6666 = vadd.f32 0.0, %v6665
    %6667 = vmatmul.f32.gmra.mxu0 %v6526
    %v6668 = vpop.f32.mrf.mxu0
    %v6669 = vadd.f32 0.0, %v6668
    %6670 = vmatmul.f32.gmra.mxu0 %v6529
    %v6671 = vpop.f32.mrf.mxu0
    %v6672 = vadd.f32 0.0, %v6671
    %6673 = vmatmul.f32.gmra.mxu0 %v6532
    %v6674 = vpop.f32.mrf.mxu0
    %v6675 = vadd.f32 0.0, %v6674
    %6676 = vmatmul.f32.gmra.mxu0 %v6535
    %v6677 = vpop.f32.mrf.mxu0
    %v6678 = vadd.f32 0.0, %v6677
    %6679 = vmatmul.f32.gmra.mxu0 %v6538
    %v6680 = vpop.f32.mrf.mxu0
    %v6681 = vadd.f32 0.0, %v6680
    %6682 = vmatmul.f32.gmra.mxu0 %v6541
    %v6683 = vpop.f32.mrf.mxu0
    %v6684 = vadd.f32 0.0, %v6683
    %6685 = vmatmul.f32.gmra.mxu0 %v6544
    %v6686 = vpop.f32.mrf.mxu0
    %v6687 = vadd.f32 0.0, %v6686
    %6688 = vmatmul.f32.gmra.mxu0 %v6547
    %v6689 = vpop.f32.mrf.mxu0
    %v6690 = vadd.f32 0.0, %v6689
    %6691 = vmatmul.f32.gmra.mxu0 %v6550
    %v6692 = vpop.f32.mrf.mxu0
    %v6693 = vadd.f32 0.0, %v6692
    %6694 = vmatmul.f32.gmra.mxu0 %v6553
    %v6695 = vpop.f32.mrf.mxu0
    %v6696 = vadd.f32 0.0, %v6695
    %6697 = vmatmul.f32.gmra.mxu0 %v6556
    %v6698 = vpop.f32.mrf.mxu0
    %v6699 = vadd.f32 0.0, %v6698
    %6700 = vmatmul.f32.gmra.mxu0 %v6559
    %v6701 = vpop.f32.mrf.mxu0
    %v6702 = vadd.f32 0.0, %v6701
    %6703 = vmatmul.f32.gmra.mxu0 %v6562
    %v6704 = vpop.f32.mrf.mxu0
    %v6705 = vadd.f32 0.0, %v6704
    %6706 = vmatmul.f32.gmra.mxu0 %v6565
    %v6707 = vpop.f32.mrf.mxu0
    %v6708 = vadd.f32 0.0, %v6707
    %6709 = vmatmul.f32.gmra.mxu0 %v6568
    %v6710 = vpop.f32.mrf.mxu0
    %v6711 = vadd.f32 0.0, %v6710
    %6712 = vmatmul.f32.gmra.mxu0 %v6571
    %v6713 = vpop.f32.mrf.mxu0
    %v6714 = vadd.f32 0.0, %v6713
    %6715 = vmatmul.f32.gmra.mxu0 %v6574
    %v6716 = vpop.f32.mrf.mxu0
    %v6717 = vadd.f32 0.0, %v6716
    %6718 = vmatmul.f32.gmra.mxu0 %v6577
    %v6719 = vpop.f32.mrf.mxu0
    %v6720 = vadd.f32 0.0, %v6719
    %6721 = vmatmul.f32.gmra.mxu0 %v6580
    %v6722 = vpop.f32.mrf.mxu0
    %v6723 = vadd.f32 0.0, %v6722
    %6724 = vmatmul.f32.gmra.mxu0 %v6583
    %v6725 = vpop.f32.mrf.mxu0
    %v6726 = vadd.f32 0.0, %v6725
    %6727 = vmatmul.f32.gmra.mxu0 %v6586
    %v6728 = vpop.f32.mrf.mxu0
    %v6729 = vadd.f32 0.0, %v6728
    %6730 = vmatmul.f32.gmra.mxu0 %v6589
    %v6731 = vpop.f32.mrf.mxu0
    %v6732 = vadd.f32 0.0, %v6731
    %6733 = vmatmul.f32.gmra.mxu0 %v6592
    %v6734 = vpop.f32.mrf.mxu0
    %v6735 = vadd.f32 0.0, %v6734
    %6736 = vmatmul.f32.gmra.mxu0 %v6595
    %v6737 = vpop.f32.mrf.mxu0
    %v6738 = vadd.f32 0.0, %v6737
    %6739 = vdwg.mxu0
    %v6740 = vadd.f32 %v6378, %v6615
    %v6741 = vadd.f32 %v6379, %v6618
    %v6742 = vadd.f32 %v6380, %v6621
    %v6743 = vadd.f32 %v6381, %v6624
    %v6744 = vadd.f32 %v6382, %v6627
    %v6745 = vadd.f32 %v6383, %v6630
    %v6746 = vadd.f32 %v6384, %v6633
    %v6747 = vadd.f32 %v6385, %v6636
    %v6748 = vadd.f32 %v6386, %v6639
    %v6749 = vadd.f32 %v6387, %v6642
    %v6750 = vadd.f32 %v6388, %v6645
    %v6751 = vadd.f32 %v6389, %v6648
    %v6752 = vadd.f32 %v6390, %v6651
    %v6753 = vadd.f32 %v6391, %v6654
    %v6754 = vadd.f32 %v6392, %v6657
    %v6755 = vadd.f32 %v6393, %v6660
    %v6756 = vadd.f32 %v6394, %v6663
    %v6757 = vadd.f32 %v6395, %v6666
    %v6758 = vadd.f32 %v6396, %v6669
    %v6759 = vadd.f32 %v6397, %v6672
    %v6760 = vadd.f32 %v6398, %v6675
    %v6761 = vadd.f32 %v6399, %v6678
    %v6762 = vadd.f32 %v6400, %v6681
    %v6763 = vadd.f32 %v6401, %v6684
    %v6764 = vadd.f32 %v6402, %v6687
    %v6765 = vadd.f32 %v6403, %v6690
    %v6766 = vadd.f32 %v6404, %v6693
    %v6767 = vadd.f32 %v6405, %v6696
    %v6768 = vadd.f32 %v6406, %v6699
    %v6769 = vadd.f32 %v6407, %v6702
    %v6770 = vadd.f32 %v6408, %v6705
    %v6771 = vadd.f32 %v6409, %v6708
    %v6772 = vadd.f32 %v6410, %v6711
    %v6773 = vadd.f32 %v6411, %v6714
    %v6774 = vadd.f32 %v6412, %v6717
    %v6775 = vadd.f32 %v6413, %v6720
    %v6776 = vadd.f32 %v6414, %v6723
    %v6777 = vadd.f32 %v6415, %v6726
    %v6778 = vadd.f32 %v6416, %v6729
    %v6779 = vadd.f32 %v6417, %v6732
    %v6780 = vadd.f32 %v6418, %v6735
    %v6781 = vadd.f32 %v6419, %v6738
    %v6782 = vld [vmem:[%s4] sm:$0x1]
    %v6783 = vperm.slane %v6782, 0
    %v6784 = vmul.f32 %v6740, %v6783
    %v6785 = vmul.f32 %v6741, %v6783
    %v6786 = vmul.f32 %v6742, %v6783
    %v6787 = vmul.f32 %v6743, %v6783
    %v6788 = vmul.f32 %v6744, %v6783
    %v6789 = vmul.f32 %v6745, %v6783
    %v6790 = vmul.f32 %v6746, %v6783
    %v6791 = vmul.f32 %v6747, %v6783
    %v6792 = vmul.f32 %v6748, %v6783
    %v6793 = vmul.f32 %v6749, %v6783
    %v6794 = vmul.f32 %v6750, %v6783
    %v6795 = vmul.f32 %v6751, %v6783
    %v6796 = vmul.f32 %v6752, %v6783
    %v6797 = vmul.f32 %v6753, %v6783
    %v6798 = vmul.f32 %v6754, %v6783
    %v6799 = vmul.f32 %v6755, %v6783
    %v6800 = vmul.f32 %v6756, %v6783
    %v6801 = vmul.f32 %v6757, %v6783
    %v6802 = vmul.f32 %v6758, %v6783
    %v6803 = vmul.f32 %v6759, %v6783
    %v6804 = vmul.f32 %v6760, %v6783
    %v6805 = vmul.f32 %v6761, %v6783
    %v6806 = vmul.f32 %v6762, %v6783
    %v6807 = vmul.f32 %v6763, %v6783
    %v6808 = vmul.f32 %v6764, %v6783
    %v6809 = vmul.f32 %v6765, %v6783
    %v6810 = vmul.f32 %v6766, %v6783
    %v6811 = vmul.f32 %v6767, %v6783
    %v6812 = vmul.f32 %v6768, %v6783
    %v6813 = vmul.f32 %v6769, %v6783
    %v6814 = vmul.f32 %v6770, %v6783
    %v6815 = vmul.f32 %v6771, %v6783
    %v6816 = vmul.f32 %v6772, %v6783
    %v6817 = vmul.f32 %v6773, %v6783
    %v6818 = vmul.f32 %v6774, %v6783
    %v6819 = vmul.f32 %v6775, %v6783
    %v6820 = vmul.f32 %v6776, %v6783
    %v6821 = vmul.f32 %v6777, %v6783
    %v6822 = vmul.f32 %v6778, %v6783
    %v6823 = vmul.f32 %v6779, %v6783
    %v6824 = vmul.f32 %v6780, %v6783
    %v6825 = vmul.f32 %v6781, %v6783
    %v6826 = vld [vmem:[%s4 + $0x1] sm:$0x1]
    %v6827 = vperm.slane %v6826, 0
    %v6828 = vadd.f32 %v6784, %v6827
    %v6829 = vadd.f32 %v6785, %v6827
    %v6830 = vadd.f32 %v6786, %v6827
    %v6831 = vadd.f32 %v6787, %v6827
    %v6832 = vadd.f32 %v6788, %v6827
    %v6833 = vadd.f32 %v6789, %v6827
    %v6834 = vadd.f32 %v6790, %v6827
    %v6835 = vadd.f32 %v6791, %v6827
    %v6836 = vadd.f32 %v6792, %v6827
    %v6837 = vadd.f32 %v6793, %v6827
    %v6838 = vadd.f32 %v6794, %v6827
    %v6839 = vadd.f32 %v6795, %v6827
    %v6840 = vadd.f32 %v6796, %v6827
    %v6841 = vadd.f32 %v6797, %v6827
    %v6842 = vadd.f32 %v6798, %v6827
    %v6843 = vadd.f32 %v6799, %v6827
    %v6844 = vadd.f32 %v6800, %v6827
    %v6845 = vadd.f32 %v6801, %v6827
    %v6846 = vadd.f32 %v6802, %v6827
    %v6847 = vadd.f32 %v6803, %v6827
    %v6848 = vadd.f32 %v6804, %v6827
    %v6849 = vadd.f32 %v6805, %v6827
    %v6850 = vadd.f32 %v6806, %v6827
    %v6851 = vadd.f32 %v6807, %v6827
    %v6852 = vadd.f32 %v6808, %v6827
    %v6853 = vadd.f32 %v6809, %v6827
    %v6854 = vadd.f32 %v6810, %v6827
    %v6855 = vadd.f32 %v6811, %v6827
    %v6856 = vadd.f32 %v6812, %v6827
    %v6857 = vadd.f32 %v6813, %v6827
    %v6858 = vadd.f32 %v6814, %v6827
    %v6859 = vadd.f32 %v6815, %v6827
    %v6860 = vadd.f32 %v6816, %v6827
    %v6861 = vadd.f32 %v6817, %v6827
    %v6862 = vadd.f32 %v6818, %v6827
    %v6863 = vadd.f32 %v6819, %v6827
    %v6864 = vadd.f32 %v6820, %v6827
    %v6865 = vadd.f32 %v6821, %v6827
    %v6866 = vadd.f32 %v6822, %v6827
    %v6867 = vadd.f32 %v6823, %v6827
    %v6868 = vadd.f32 %v6824, %v6827
    %v6869 = vadd.f32 %v6825, %v6827
    %6870 = vst [vmem:[#allocation3] sm:$0xff] %v6828
    %6871 = vst [vmem:[#allocation3 + $0x8] sm:$0xff] %v6829
    %6872 = vst [vmem:[#allocation3 + $0x10] sm:$0xff] %v6830
    %6873 = vst [vmem:[#allocation3 + $0x18] sm:$0xff] %v6831
    %6874 = vst [vmem:[#allocation3 + $0x20] sm:$0xff] %v6832
    %6875 = vst [vmem:[#allocation3 + $0x28] sm:$0xff] %v6833
    %6876 = vst [vmem:[#allocation3 + $0x30] sm:$0xff] %v6834
    %6877 = vst [vmem:[#allocation3 + $0x38] sm:$0xff] %v6835
    %6878 = vst [vmem:[#allocation3 + $0x40] sm:$0xff] %v6836
    %6879 = vst [vmem:[#allocation3 + $0x48] sm:$0xff] %v6837
    %6880 = vst [vmem:[#allocation3 + $0x50] sm:$0xff] %v6838
    %6881 = vst [vmem:[#allocation3 + $0x58] sm:$0xff] %v6839
    %6882 = vst [vmem:[#allocation3 + $0x60] sm:$0xff] %v6840
    %6883 = vst [vmem:[#allocation3 + $0x68] sm:$0xff] %v6841
    %6884 = vst [vmem:[#allocation3 + $0x70] sm:$0xff] %v6842
    %6885 = vst [vmem:[#allocation3 + $0x78] sm:$0xff] %v6843
    %6886 = vst [vmem:[#allocation3 + $0x80] sm:$0xff] %v6844
    %6887 = vst [vmem:[#allocation3 + $0x88] sm:$0xff] %v6845
    %6888 = vst [vmem:[#allocation3 + $0x90] sm:$0xff] %v6846
    %6889 = vst [vmem:[#allocation3 + $0x98] sm:$0xff] %v6847
    %6890 = vst [vmem:[#allocation3 + $0xa0] sm:$0xff] %v6848
    %6891 = vst [vmem:[#allocation3 + $0xa8] sm:$0xff] %v6849
    %6892 = vst [vmem:[#allocation3 + $0xb0] sm:$0xff] %v6850
    %6893 = vst [vmem:[#allocation3 + $0xb8] sm:$0xff] %v6851
    %6894 = vst [vmem:[#allocation3 + $0xc0] sm:$0xff] %v6852
    %6895 = vst [vmem:[#allocation3 + $0xc8] sm:$0xff] %v6853
    %6896 = vst [vmem:[#allocation3 + $0xd0] sm:$0xff] %v6854
    %6897 = vst [vmem:[#allocation3 + $0xd8] sm:$0xff] %v6855
    %6898 = vst [vmem:[#allocation3 + $0xe0] sm:$0xff] %v6856
    %6899 = vst [vmem:[#allocation3 + $0xe8] sm:$0xff] %v6857
    %6900 = vst [vmem:[#allocation3 + $0xf0] sm:$0xff] %v6858
    %6901 = vst [vmem:[#allocation3 + $0xf8] sm:$0xff] %v6859
    %6902 = vst [vmem:[#allocation3 + $0x100] sm:$0xff] %v6860
    %6903 = vst [vmem:[#allocation3 + $0x108] sm:$0xff] %v6861
    %6904 = vst [vmem:[#allocation3 + $0x110] sm:$0xff] %v6862
    %6905 = vst [vmem:[#allocation3 + $0x118] sm:$0xff] %v6863
    %6906 = vst [vmem:[#allocation3 + $0x120] sm:$0xff] %v6864
    %6907 = vst [vmem:[#allocation3 + $0x128] sm:$0xff] %v6865
    %6908 = vst [vmem:[#allocation3 + $0x130] sm:$0xff] %v6866
    %6909 = vst [vmem:[#allocation3 + $0x138] sm:$0xff] %v6867
    %6910 = vst [vmem:[#allocation3 + $0x140] sm:$0xff] %v6868
    %6911 = vst [vmem:[#allocation3 + $0x148] sm:$0xf] %v6869
    %v6912 = vld [vmem:[#allocation3] sm:$0xff]
    %v6913 = vld [vmem:[#allocation3 + $0x8] sm:$0xff]
    %v6914 = vld [vmem:[#allocation3 + $0x10] sm:$0xff]
    %v6915 = vld [vmem:[#allocation3 + $0x18] sm:$0xff]
    %v6916 = vld [vmem:[#allocation3 + $0x20] sm:$0xff]
    %v6917 = vld [vmem:[#allocation3 + $0x28] sm:$0xff]
    %v6918 = vld [vmem:[#allocation3 + $0x30] sm:$0xff]
    %v6919 = vld [vmem:[#allocation3 + $0x38] sm:$0xff]
    %v6920 = vld [vmem:[#allocation3 + $0x40] sm:$0xff]
    %v6921 = vld [vmem:[#allocation3 + $0x48] sm:$0xff]
    %v6922 = vld [vmem:[#allocation3 + $0x50] sm:$0xff]
    %v6923 = vld [vmem:[#allocation3 + $0x58] sm:$0xff]
    %v6924 = vld [vmem:[#allocation3 + $0x60] sm:$0xff]
    %v6925 = vld [vmem:[#allocation3 + $0x68] sm:$0xff]
    %v6926 = vld [vmem:[#allocation3 + $0x70] sm:$0xff]
    %v6927 = vld [vmem:[#allocation3 + $0x78] sm:$0xff]
    %v6928 = vld [vmem:[#allocation3 + $0x80] sm:$0xff]
    %v6929 = vld [vmem:[#allocation3 + $0x88] sm:$0xff]
    %v6930 = vld [vmem:[#allocation3 + $0x90] sm:$0xff]
    %v6931 = vld [vmem:[#allocation3 + $0x98] sm:$0xff]
    %v6932 = vld [vmem:[#allocation3 + $0xa0] sm:$0xff]
    %v6933 = vld [vmem:[#allocation3 + $0xa8] sm:$0xff]
    %v6934 = vld [vmem:[#allocation3 + $0xb0] sm:$0xff]
    %v6935 = vld [vmem:[#allocation3 + $0xb8] sm:$0xff]
    %v6936 = vld [vmem:[#allocation3 + $0xc0] sm:$0xff]
    %v6937 = vld [vmem:[#allocation3 + $0xc8] sm:$0xff]
    %v6938 = vld [vmem:[#allocation3 + $0xd0] sm:$0xff]
    %v6939 = vld [vmem:[#allocation3 + $0xd8] sm:$0xff]
    %v6940 = vld [vmem:[#allocation3 + $0xe0] sm:$0xff]
    %v6941 = vld [vmem:[#allocation3 + $0xe8] sm:$0xff]
    %v6942 = vld [vmem:[#allocation3 + $0xf0] sm:$0xff]
    %v6943 = vld [vmem:[#allocation3 + $0xf8] sm:$0xff]
    %v6944 = vld [vmem:[#allocation3 + $0x100] sm:$0xff]
    %v6945 = vld [vmem:[#allocation3 + $0x108] sm:$0xff]
    %v6946 = vld [vmem:[#allocation3 + $0x110] sm:$0xff]
    %v6947 = vld [vmem:[#allocation3 + $0x118] sm:$0xff]
    %v6948 = vld [vmem:[#allocation3 + $0x120] sm:$0xff]
    %v6949 = vld [vmem:[#allocation3 + $0x128] sm:$0xff]
    %v6950 = vld [vmem:[#allocation3 + $0x130] sm:$0xff]
    %v6951 = vld [vmem:[#allocation3 + $0x138] sm:$0x1f]
    %v6952 = vld [vmem:[#allocation3 + $0x1] sm:$0xff]
    %v6953 = vld [vmem:[#allocation3 + $0x9] sm:$0xff]
    %v6954 = vld [vmem:[#allocation3 + $0x11] sm:$0xff]
    %v6955 = vld [vmem:[#allocation3 + $0x19] sm:$0xff]
    %v6956 = vld [vmem:[#allocation3 + $0x21] sm:$0xff]
    %v6957 = vld [vmem:[#allocation3 + $0x29] sm:$0xff]
    %v6958 = vld [vmem:[#allocation3 + $0x31] sm:$0xff]
    %v6959 = vld [vmem:[#allocation3 + $0x39] sm:$0xff]
    %v6960 = vld [vmem:[#allocation3 + $0x41] sm:$0xff]
    %v6961 = vld [vmem:[#allocation3 + $0x49] sm:$0xff]
    %v6962 = vld [vmem:[#allocation3 + $0x51] sm:$0xff]
    %v6963 = vld [vmem:[#allocation3 + $0x59] sm:$0xff]
    %v6964 = vld [vmem:[#allocation3 + $0x61] sm:$0xff]
    %v6965 = vld [vmem:[#allocation3 + $0x69] sm:$0xff]
    %v6966 = vld [vmem:[#allocation3 + $0x71] sm:$0xff]
    %v6967 = vld [vmem:[#allocation3 + $0x79] sm:$0xff]
    %v6968 = vld [vmem:[#allocation3 + $0x81] sm:$0xff]
    %v6969 = vld [vmem:[#allocation3 + $0x89] sm:$0xff]
    %v6970 = vld [vmem:[#allocation3 + $0x91] sm:$0xff]
    %v6971 = vld [vmem:[#allocation3 + $0x99] sm:$0xff]
    %v6972 = vld [vmem:[#allocation3 + $0xa1] sm:$0xff]
    %v6973 = vld [vmem:[#allocation3 + $0xa9] sm:$0xff]
    %v6974 = vld [vmem:[#allocation3 + $0xb1] sm:$0xff]
    %v6975 = vld [vmem:[#allocation3 + $0xb9] sm:$0xff]
    %v6976 = vld [vmem:[#allocation3 + $0xc1] sm:$0xff]
    %v6977 = vld [vmem:[#allocation3 + $0xc9] sm:$0xff]
    %v6978 = vld [vmem:[#allocation3 + $0xd1] sm:$0xff]
    %v6979 = vld [vmem:[#allocation3 + $0xd9] sm:$0xff]
    %v6980 = vld [vmem:[#allocation3 + $0xe1] sm:$0xff]
    %v6981 = vld [vmem:[#allocation3 + $0xe9] sm:$0xff]
    %v6982 = vld [vmem:[#allocation3 + $0xf1] sm:$0xff]
    %v6983 = vld [vmem:[#allocation3 + $0xf9] sm:$0xff]
    %v6984 = vld [vmem:[#allocation3 + $0x101] sm:$0xff]
    %v6985 = vld [vmem:[#allocation3 + $0x109] sm:$0xff]
    %v6986 = vld [vmem:[#allocation3 + $0x111] sm:$0xff]
    %v6987 = vld [vmem:[#allocation3 + $0x119] sm:$0xff]
    %v6988 = vld [vmem:[#allocation3 + $0x121] sm:$0xff]
    %v6989 = vld [vmem:[#allocation3 + $0x129] sm:$0xff]
    %v6990 = vld [vmem:[#allocation3 + $0x131] sm:$0xff]
    %v6991 = vld [vmem:[#allocation3 + $0x139] sm:$0x1f]
    %v6992 = vmax.f32 %v6912, %v6952
    %v6993 = vmax.f32 %v6913, %v6953
    %v6994 = vmax.f32 %v6914, %v6954
    %v6995 = vmax.f32 %v6915, %v6955
    %v6996 = vmax.f32 %v6916, %v6956
    %v6997 = vmax.f32 %v6917, %v6957
    %v6998 = vmax.f32 %v6918, %v6958
    %v6999 = vmax.f32 %v6919, %v6959
    %v7000 = vmax.f32 %v6920, %v6960
    %v7001 = vmax.f32 %v6921, %v6961
    %v7002 = vmax.f32 %v6922, %v6962
    %v7003 = vmax.f32 %v6923, %v6963
    %v7004 = vmax.f32 %v6924, %v6964
    %v7005 = vmax.f32 %v6925, %v6965
    %v7006 = vmax.f32 %v6926, %v6966
    %v7007 = vmax.f32 %v6927, %v6967
    %v7008 = vmax.f32 %v6928, %v6968
    %v7009 = vmax.f32 %v6929, %v6969
    %v7010 = vmax.f32 %v6930, %v6970
    %v7011 = vmax.f32 %v6931, %v6971
    %v7012 = vmax.f32 %v6932, %v6972
    %v7013 = vmax.f32 %v6933, %v6973
    %v7014 = vmax.f32 %v6934, %v6974
    %v7015 = vmax.f32 %v6935, %v6975
    %v7016 = vmax.f32 %v6936, %v6976
    %v7017 = vmax.f32 %v6937, %v6977
    %v7018 = vmax.f32 %v6938, %v6978
    %v7019 = vmax.f32 %v6939, %v6979
    %v7020 = vmax.f32 %v6940, %v6980
    %v7021 = vmax.f32 %v6941, %v6981
    %v7022 = vmax.f32 %v6942, %v6982
    %v7023 = vmax.f32 %v6943, %v6983
    %v7024 = vmax.f32 %v6944, %v6984
    %v7025 = vmax.f32 %v6945, %v6985
    %v7026 = vmax.f32 %v6946, %v6986
    %v7027 = vmax.f32 %v6947, %v6987
    %v7028 = vmax.f32 %v6948, %v6988
    %v7029 = vmax.f32 %v6949, %v6989
    %v7030 = vmax.f32 %v6950, %v6990
    %v7031 = vmax.f32 %v6951, %v6991
    %v7032 = vld [vmem:[#allocation3 + $0xe] sm:$0xff]
    %v7033 = vld [vmem:[#allocation3 + $0x16] sm:$0xff]
    %v7034 = vld [vmem:[#allocation3 + $0x1e] sm:$0xff]
    %v7035 = vld [vmem:[#allocation3 + $0x26] sm:$0xff]
    %v7036 = vld [vmem:[#allocation3 + $0x2e] sm:$0xff]
    %v7037 = vld [vmem:[#allocation3 + $0x36] sm:$0xff]
    %v7038 = vld [vmem:[#allocation3 + $0x3e] sm:$0xff]
    %v7039 = vld [vmem:[#allocation3 + $0x46] sm:$0xff]
    %v7040 = vld [vmem:[#allocation3 + $0x4e] sm:$0xff]
    %v7041 = vld [vmem:[#allocation3 + $0x56] sm:$0xff]
    %v7042 = vld [vmem:[#allocation3 + $0x5e] sm:$0xff]
    %v7043 = vld [vmem:[#allocation3 + $0x66] sm:$0xff]
    %v7044 = vld [vmem:[#allocation3 + $0x6e] sm:$0xff]
    %v7045 = vld [vmem:[#allocation3 + $0x76] sm:$0xff]
    %v7046 = vld [vmem:[#allocation3 + $0x7e] sm:$0xff]
    %v7047 = vld [vmem:[#allocation3 + $0x86] sm:$0xff]
    %v7048 = vld [vmem:[#allocation3 + $0x8e] sm:$0xff]
    %v7049 = vld [vmem:[#allocation3 + $0x96] sm:$0xff]
    %v7050 = vld [vmem:[#allocation3 + $0x9e] sm:$0xff]
    %v7051 = vld [vmem:[#allocation3 + $0xa6] sm:$0xff]
    %v7052 = vld [vmem:[#allocation3 + $0xae] sm:$0xff]
    %v7053 = vld [vmem:[#allocation3 + $0xb6] sm:$0xff]
    %v7054 = vld [vmem:[#allocation3 + $0xbe] sm:$0xff]
    %v7055 = vld [vmem:[#allocation3 + $0xc6] sm:$0xff]
    %v7056 = vld [vmem:[#allocation3 + $0xce] sm:$0xff]
    %v7057 = vld [vmem:[#allocation3 + $0xd6] sm:$0xff]
    %v7058 = vld [vmem:[#allocation3 + $0xde] sm:$0xff]
    %v7059 = vld [vmem:[#allocation3 + $0xe6] sm:$0xff]
    %v7060 = vld [vmem:[#allocation3 + $0xee] sm:$0xff]
    %v7061 = vld [vmem:[#allocation3 + $0xf6] sm:$0xff]
    %v7062 = vld [vmem:[#allocation3 + $0xfe] sm:$0xff]
    %v7063 = vld [vmem:[#allocation3 + $0x106] sm:$0xff]
    %v7064 = vld [vmem:[#allocation3 + $0x10e] sm:$0xff]
    %v7065 = vld [vmem:[#allocation3 + $0x116] sm:$0xff]
    %v7066 = vld [vmem:[#allocation3 + $0x11e] sm:$0xff]
    %v7067 = vld [vmem:[#allocation3 + $0x126] sm:$0xff]
    %v7068 = vld [vmem:[#allocation3 + $0x12e] sm:$0xff]
    %v7069 = vld [vmem:[#allocation3 + $0x136] sm:$0xff]
    %v7070 = vld [vmem:[#allocation3 + $0x13e] sm:$0xff]
    %v7071 = vld [vmem:[#allocation3 + $0x146] sm:$0x1f]
    %v7072 = vld [vmem:[#allocation3 + $0xf] sm:$0xff]
    %v7073 = vld [vmem:[#allocation3 + $0x17] sm:$0xff]
    %v7074 = vld [vmem:[#allocation3 + $0x1f] sm:$0xff]
    %v7075 = vld [vmem:[#allocation3 + $0x27] sm:$0xff]
    %v7076 = vld [vmem:[#allocation3 + $0x2f] sm:$0xff]
    %v7077 = vld [vmem:[#allocation3 + $0x37] sm:$0xff]
    %v7078 = vld [vmem:[#allocation3 + $0x3f] sm:$0xff]
    %v7079 = vld [vmem:[#allocation3 + $0x47] sm:$0xff]
    %v7080 = vld [vmem:[#allocation3 + $0x4f] sm:$0xff]
    %v7081 = vld [vmem:[#allocation3 + $0x57] sm:$0xff]
    %v7082 = vld [vmem:[#allocation3 + $0x5f] sm:$0xff]
    %v7083 = vld [vmem:[#allocation3 + $0x67] sm:$0xff]
    %v7084 = vld [vmem:[#allocation3 + $0x6f] sm:$0xff]
    %v7085 = vld [vmem:[#allocation3 + $0x77] sm:$0xff]
    %v7086 = vld [vmem:[#allocation3 + $0x7f] sm:$0xff]
    %v7087 = vld [vmem:[#allocation3 + $0x87] sm:$0xff]
    %v7088 = vld [vmem:[#allocation3 + $0x8f] sm:$0xff]
    %v7089 = vld [vmem:[#allocation3 + $0x97] sm:$0xff]
    %v7090 = vld [vmem:[#allocation3 + $0x9f] sm:$0xff]
    %v7091 = vld [vmem:[#allocation3 + $0xa7] sm:$0xff]
    %v7092 = vld [vmem:[#allocation3 + $0xaf] sm:$0xff]
    %v7093 = vld [vmem:[#allocation3 + $0xb7] sm:$0xff]
    %v7094 = vld [vmem:[#allocation3 + $0xbf] sm:$0xff]
    %v7095 = vld [vmem:[#allocation3 + $0xc7] sm:$0xff]
    %v7096 = vld [vmem:[#allocation3 + $0xcf] sm:$0xff]
    %v7097 = vld [vmem:[#allocation3 + $0xd7] sm:$0xff]
    %v7098 = vld [vmem:[#allocation3 + $0xdf] sm:$0xff]
    %v7099 = vld [vmem:[#allocation3 + $0xe7] sm:$0xff]
    %v7100 = vld [vmem:[#allocation3 + $0xef] sm:$0xff]
    %v7101 = vld [vmem:[#allocation3 + $0xf7] sm:$0xff]
    %v7102 = vld [vmem:[#allocation3 + $0xff] sm:$0xff]
    %v7103 = vld [vmem:[#allocation3 + $0x107] sm:$0xff]
    %v7104 = vld [vmem:[#allocation3 + $0x10f] sm:$0xff]
    %v7105 = vld [vmem:[#allocation3 + $0x117] sm:$0xff]
    %v7106 = vld [vmem:[#allocation3 + $0x11f] sm:$0xff]
    %v7107 = vld [vmem:[#allocation3 + $0x127] sm:$0xff]
    %v7108 = vld [vmem:[#allocation3 + $0x12f] sm:$0xff]
    %v7109 = vld [vmem:[#allocation3 + $0x137] sm:$0xff]
    %v7110 = vld [vmem:[#allocation3 + $0x13f] sm:$0xff]
    %v7111 = vld [vmem:[#allocation3 + $0x147] sm:$0x1f]
    %v7112 = vmax.f32 %v7032, %v7072
    %v7113 = vmax.f32 %v7033, %v7073
    %v7114 = vmax.f32 %v7034, %v7074
    %v7115 = vmax.f32 %v7035, %v7075
    %v7116 = vmax.f32 %v7036, %v7076
    %v7117 = vmax.f32 %v7037, %v7077
    %v7118 = vmax.f32 %v7038, %v7078
    %v7119 = vmax.f32 %v7039, %v7079
    %v7120 = vmax.f32 %v7040, %v7080
    %v7121 = vmax.f32 %v7041, %v7081
    %v7122 = vmax.f32 %v7042, %v7082
    %v7123 = vmax.f32 %v7043, %v7083
    %v7124 = vmax.f32 %v7044, %v7084
    %v7125 = vmax.f32 %v7045, %v7085
    %v7126 = vmax.f32 %v7046, %v7086
    %v7127 = vmax.f32 %v7047, %v7087
    %v7128 = vmax.f32 %v7048, %v7088
    %v7129 = vmax.f32 %v7049, %v7089
    %v7130 = vmax.f32 %v7050, %v7090
    %v7131 = vmax.f32 %v7051, %v7091
    %v7132 = vmax.f32 %v7052, %v7092
    %v7133 = vmax.f32 %v7053, %v7093
    %v7134 = vmax.f32 %v7054, %v7094
    %v7135 = vmax.f32 %v7055, %v7095
    %v7136 = vmax.f32 %v7056, %v7096
    %v7137 = vmax.f32 %v7057, %v7097
    %v7138 = vmax.f32 %v7058, %v7098
    %v7139 = vmax.f32 %v7059, %v7099
    %v7140 = vmax.f32 %v7060, %v7100
    %v7141 = vmax.f32 %v7061, %v7101
    %v7142 = vmax.f32 %v7062, %v7102
    %v7143 = vmax.f32 %v7063, %v7103
    %v7144 = vmax.f32 %v7064, %v7104
    %v7145 = vmax.f32 %v7065, %v7105
    %v7146 = vmax.f32 %v7066, %v7106
    %v7147 = vmax.f32 %v7067, %v7107
    %v7148 = vmax.f32 %v7068, %v7108
    %v7149 = vmax.f32 %v7069, %v7109
    %v7150 = vmax.f32 %v7070, %v7110
    %v7151 = vmax.f32 %v7071, %v7111
    %v7152 = vmax.f32 %v6992, %v7112
    %v7153 = vmax.f32 %v6993, %v7113
    %v7154 = vmax.f32 %v6994, %v7114
    %v7155 = vmax.f32 %v6995, %v7115
    %v7156 = vmax.f32 %v6996, %v7116
    %v7157 = vmax.f32 %v6997, %v7117
    %v7158 = vmax.f32 %v6998, %v7118
    %v7159 = vmax.f32 %v6999, %v7119
    %v7160 = vmax.f32 %v7000, %v7120
    %v7161 = vmax.f32 %v7001, %v7121
    %v7162 = vmax.f32 %v7002, %v7122
    %v7163 = vmax.f32 %v7003, %v7123
    %v7164 = vmax.f32 %v7004, %v7124
    %v7165 = vmax.f32 %v7005, %v7125
    %v7166 = vmax.f32 %v7006, %v7126
    %v7167 = vmax.f32 %v7007, %v7127
    %v7168 = vmax.f32 %v7008, %v7128
    %v7169 = vmax.f32 %v7009, %v7129
    %v7170 = vmax.f32 %v7010, %v7130
    %v7171 = vmax.f32 %v7011, %v7131
    %v7172 = vmax.f32 %v7012, %v7132
    %v7173 = vmax.f32 %v7013, %v7133
    %v7174 = vmax.f32 %v7014, %v7134
    %v7175 = vmax.f32 %v7015, %v7135
    %v7176 = vmax.f32 %v7016, %v7136
    %v7177 = vmax.f32 %v7017, %v7137
    %v7178 = vmax.f32 %v7018, %v7138
    %v7179 = vmax.f32 %v7019, %v7139
    %v7180 = vmax.f32 %v7020, %v7140
    %v7181 = vmax.f32 %v7021, %v7141
    %v7182 = vmax.f32 %v7022, %v7142
    %v7183 = vmax.f32 %v7023, %v7143
    %v7184 = vmax.f32 %v7024, %v7144
    %v7185 = vmax.f32 %v7025, %v7145
    %v7186 = vmax.f32 %v7026, %v7146
    %v7187 = vmax.f32 %v7027, %v7147
    %v7188 = vmax.f32 %v7028, %v7148
    %v7189 = vmax.f32 %v7029, %v7149
    %v7190 = vmax.f32 %v7030, %v7150
    %v7191 = vmax.f32 %v7031, %v7151
    %v7192 = vld [vmem:[%s5] sm:$0xff]
    %v7193 = vld [vmem:[%s5 + $0x8] sm:$0xff]
    %v7194 = vld [vmem:[%s5 + $0x10] sm:$0xff]
    %v7195 = vld [vmem:[%s5 + $0x18] sm:$0xff]
    %v7196 = vld [vmem:[%s5 + $0x20] sm:$0xff]
    %v7197 = vld [vmem:[%s5 + $0x28] sm:$0xff]
    %v7198 = vld [vmem:[%s5 + $0x30] sm:$0xff]
    %v7199 = vld [vmem:[%s5 + $0x38] sm:$0xff]
    %v7200 = vld [vmem:[%s5 + $0x40] sm:$0xff]
    %v7201 = vld [vmem:[%s5 + $0x48] sm:$0xff]
    %v7202 = vld [vmem:[%s5 + $0x50] sm:$0xff]
    %v7203 = vld [vmem:[%s5 + $0x58] sm:$0xff]
    %v7204 = vld [vmem:[%s5 + $0x60] sm:$0xff]
    %v7205 = vld [vmem:[%s5 + $0x68] sm:$0xff]
    %v7206 = vld [vmem:[%s5 + $0x70] sm:$0xff]
    %v7207 = vld [vmem:[%s5 + $0x78] sm:$0xff]
    %v7208 = vld [vmem:[%s5 + $0x80] sm:$0xff]
    %v7209 = vld [vmem:[%s5 + $0x88] sm:$0xff]
    %v7210 = vld [vmem:[%s5 + $0x90] sm:$0x3]
    %v7211 = vld [vmem:[%s5 + $0x98] sm:$0x3]
    %v7212 = vld [vmem:[%s5 + $0xa0] sm:$0x3]
    %vm7213 = vcmask 498688
    %v7215 = vsel %vm7213, %v7194, 0
    %v7218 = vsel %vm7213, %v7197, 0
    %v7221 = vsel %vm7213, %v7200, 0
    %v7224 = vsel %vm7213, %v7203, 0
    %v7227 = vsel %vm7213, %v7206, 0
    %v7230 = vsel %vm7213, %v7209, 0
    %v7233 = vsel %vm7213, %v7212, 0
    %vm7235 = vcmask 1044480
    %v7237 = vsel %vm7235, %v7191, 0
    %7239 = vmatpush.msra.mxu0 %v7167
    %7240 = vmatpush.msra.mxu0 %v7166
    %7241 = vmatpush.msra.mxu0 %v7165
    %7242 = vmatpush.msra.mxu0 %v7164
    %7243 = vmatpush.msra.mxu0 %v7163
    %7244 = vmatpush.msra.mxu0 %v7162
    %7245 = vmatpush.msra.mxu0 %v7161
    %7246 = vmatpush.msra.mxu0 %v7160
    %7247 = vmatpush.msra.mxu0 %v7159
    %7248 = vmatpush.msra.mxu0 %v7158
    %7249 = vmatpush.msra.mxu0 %v7157
    %7250 = vmatpush.msra.mxu0 %v7156
    %7251 = vmatpush.msra.mxu0 %v7155
    %7252 = vmatpush.msra.mxu0 %v7154
    %7253 = vmatpush.msra.mxu0 %v7153
    %7254 = vmatpush.msra.mxu0 %v7152
    %7255 = vmatmul.f32.gmra.mxu0 %v7192
    %v7256 = vpop.f32.mrf.mxu0
    %v7257 = vadd.f32 0.0, %v7256
    %7258 = vmatmul.f32.gmra.mxu0 %v7195
    %v7259 = vpop.f32.mrf.mxu0
    %v7260 = vadd.f32 0.0, %v7259
    %7261 = vmatmul.f32.gmra.mxu0 %v7198
    %v7262 = vpop.f32.mrf.mxu0
    %v7263 = vadd.f32 0.0, %v7262
    %7264 = vmatmul.f32.gmra.mxu0 %v7201
    %v7265 = vpop.f32.mrf.mxu0
    %v7266 = vadd.f32 0.0, %v7265
    %7267 = vmatmul.f32.gmra.mxu0 %v7204
    %v7268 = vpop.f32.mrf.mxu0
    %v7269 = vadd.f32 0.0, %v7268
    %7270 = vmatmul.f32.gmra.mxu0 %v7207
    %v7271 = vpop.f32.mrf.mxu0
    %v7272 = vadd.f32 0.0, %v7271
    %7273 = vmatmul.f32.gmra.mxu0 %v7210
    %v7274 = vpop.f32.mrf.mxu0
    %v7275 = vadd.f32 0.0, %v7274
    %7276 = vdwg.mxu0
    %7277 = vmatpush.msra.mxu0 %v7183
    %7278 = vmatpush.msra.mxu0 %v7182
    %7279 = vmatpush.msra.mxu0 %v7181
    %7280 = vmatpush.msra.mxu0 %v7180
    %7281 = vmatpush.msra.mxu0 %v7179
    %7282 = vmatpush.msra.mxu0 %v7178
    %7283 = vmatpush.msra.mxu0 %v7177
    %7284 = vmatpush.msra.mxu0 %v7176
    %7285 = vmatpush.msra.mxu0 %v7175
    %7286 = vmatpush.msra.mxu0 %v7174
    %7287 = vmatpush.msra.mxu0 %v7173
    %7288 = vmatpush.msra.mxu0 %v7172
    %7289 = vmatpush.msra.mxu0 %v7171
    %7290 = vmatpush.msra.mxu0 %v7170
    %7291 = vmatpush.msra.mxu0 %v7169
    %7292 = vmatpush.msra.mxu0 %v7168
    %7293 = vmatmul.f32.gmra.mxu0 %v7193
    %v7294 = vpop.f32.mrf.mxu0
    %v7295 = vadd.f32 %v7257, %v7294
    %7296 = vmatmul.f32.gmra.mxu0 %v7196
    %v7297 = vpop.f32.mrf.mxu0
    %v7298 = vadd.f32 %v7260, %v7297
    %7299 = vmatmul.f32.gmra.mxu0 %v7199
    %v7300 = vpop.f32.mrf.mxu0
    %v7301 = vadd.f32 %v7263, %v7300
    %7302 = vmatmul.f32.gmra.mxu0 %v7202
    %v7303 = vpop.f32.mrf.mxu0
    %v7304 = vadd.f32 %v7266, %v7303
    %7305 = vmatmul.f32.gmra.mxu0 %v7205
    %v7306 = vpop.f32.mrf.mxu0
    %v7307 = vadd.f32 %v7269, %v7306
    %7308 = vmatmul.f32.gmra.mxu0 %v7208
    %v7309 = vpop.f32.mrf.mxu0
    %v7310 = vadd.f32 %v7272, %v7309
    %7311 = vmatmul.f32.gmra.mxu0 %v7211
    %v7312 = vpop.f32.mrf.mxu0
    %v7313 = vadd.f32 %v7275, %v7312
    %7314 = vdwg.mxu0
    %7315 = vmatpush.msra.mxu0 0.0
    %7316 = vmatpush.msra.mxu0 0.0
    %7317 = vmatpush.msra.mxu0 0.0
    %7318 = vmatpush.msra.mxu0 0.0
    %7319 = vmatpush.msra.mxu0 0.0
    %7320 = vmatpush.msra.mxu0 0.0
    %7321 = vmatpush.msra.mxu0 0.0
    %7322 = vmatpush.msra.mxu0 0.0
    %7323 = vmatpush.msra.mxu0 %v7237
    %7324 = vmatpush.msra.mxu0 %v7190
    %7325 = vmatpush.msra.mxu0 %v7189
    %7326 = vmatpush.msra.mxu0 %v7188
    %7327 = vmatpush.msra.mxu0 %v7187
    %7328 = vmatpush.msra.mxu0 %v7186
    %7329 = vmatpush.msra.mxu0 %v7185
    %7330 = vmatpush.msra.mxu0 %v7184
    %7331 = vmatmul.f32.gmra.mxu0 %v7215
    %v7332 = vpop.f32.mrf.mxu0
    %v7333 = vadd.f32 %v7295, %v7332
    %7334 = vmatmul.f32.gmra.mxu0 %v7218
    %v7335 = vpop.f32.mrf.mxu0
    %v7336 = vadd.f32 %v7298, %v7335
    %7337 = vmatmul.f32.gmra.mxu0 %v7221
    %v7338 = vpop.f32.mrf.mxu0
    %v7339 = vadd.f32 %v7301, %v7338
    %7340 = vmatmul.f32.gmra.mxu0 %v7224
    %v7341 = vpop.f32.mrf.mxu0
    %v7342 = vadd.f32 %v7304, %v7341
    %7343 = vmatmul.f32.gmra.mxu0 %v7227
    %v7344 = vpop.f32.mrf.mxu0
    %v7345 = vadd.f32 %v7307, %v7344
    %7346 = vmatmul.f32.gmra.mxu0 %v7230
    %v7347 = vpop.f32.mrf.mxu0
    %v7348 = vadd.f32 %v7310, %v7347
    %7349 = vmatmul.f32.gmra.mxu0 %v7233
    %v7350 = vpop.f32.mrf.mxu0
    %v7351 = vadd.f32 %v7313, %v7350
    %7352 = vdwg.mxu0
    %v7353 = vmax.f32 %v7333, 0.0
    %v7354 = vmax.f32 %v7336, 0.0
    %v7355 = vmax.f32 %v7339, 0.0
    %v7356 = vmax.f32 %v7342, 0.0
    %v7357 = vmax.f32 %v7345, 0.0
    %v7358 = vmax.f32 %v7348, 0.0
    %v7359 = vmax.f32 %v7351, 0.0
    %7360 = vst [vmem:[#allocation4] sm:$0xff] %v7353
    %7361 = vst [vmem:[#allocation4 + $0x8] sm:$0xff] %v7354
    %7362 = vst [vmem:[#allocation4 + $0x10] sm:$0xff] %v7355
    %7363 = vst [vmem:[#allocation4 + $0x18] sm:$0xff] %v7356
    %7364 = vst [vmem:[#allocation4 + $0x20] sm:$0xff] %v7357
    %7365 = vst [vmem:[#allocation4 + $0x28] sm:$0xff] %v7358
    %7366 = vst [vmem:[#allocation4 + $0x30] sm:$0x3] %v7359
    %v7367 = vld [vmem:[#allocation4] sm:$0xff]
    %v7368 = vld [vmem:[#allocation4 + $0x8] sm:$0xff]
    %v7369 = vld [vmem:[#allocation4 + $0x10] sm:$0xff]
    %v7370 = vld [vmem:[#allocation4 + $0x18] sm:$0xff]
    %v7371 = vld [vmem:[#allocation4 + $0x20] sm:$0x3f]
    %v7372 = vld [vmem:[#allocation6] sm:$0xff]
    %v7373 = vld [vmem:[#allocation6 + $0x8] sm:$0xff]
    %v7374 = vld [vmem:[#allocation6 + $0x10] sm:$0xff]
    %v7375 = vld [vmem:[#allocation6 + $0x18] sm:$0xff]
    %v7376 = vld [vmem:[#allocation6 + $0x20] sm:$0xff]
    %v7377 = vld [vmem:[#allocation6 + $0x28] sm:$0xff]
    %v7378 = vld [vmem:[#allocation6 + $0x30] sm:$0xff]
    %v7379 = vld [vmem:[#allocation6 + $0x38] sm:$0xff]
    %v7380 = vld [vmem:[#allocation6 + $0x40] sm:$0xff]
    %v7381 = vld [vmem:[#allocation6 + $0x48] sm:$0xff]
    %v7382 = vld [vmem:[#allocation6 + $0x50] sm:$0xff]
    %v7383 = vld [vmem:[#allocation6 + $0x58] sm:$0xff]
    %v7384 = vld [vmem:[#allocation6 + $0x60] sm:$0xff]
    %v7385 = vld [vmem:[#allocation6 + $0x68] sm:$0xff]
    %v7386 = vld [vmem:[#allocation6 + $0x70] sm:$0xff]
    %v7387 = vld [vmem:[#allocation6 + $0x78] sm:$0xff]
    %v7388 = vld [vmem:[#allocation4 + $0x1] sm:$0xff]
    %v7389 = vld [vmem:[#allocation4 + $0x9] sm:$0xff]
    %v7390 = vld [vmem:[#allocation4 + $0x11] sm:$0xff]
    %v7391 = vld [vmem:[#allocation4 + $0x19] sm:$0xff]
    %v7392 = vld [vmem:[#allocation4 + $0x21] sm:$0x3f]
    %s7393 = scalar_lea.vmem [#allocation6], 128
    %v7394 = vld [vmem:[%s7393] sm:$0xff]
    %v7395 = vld [vmem:[%s7393 + $0x8] sm:$0xff]
    %v7396 = vld [vmem:[%s7393 + $0x10] sm:$0xff]
    %v7397 = vld [vmem:[%s7393 + $0x18] sm:$0xff]
    %v7398 = vld [vmem:[%s7393 + $0x20] sm:$0xff]
    %v7399 = vld [vmem:[%s7393 + $0x28] sm:$0xff]
    %v7400 = vld [vmem:[%s7393 + $0x30] sm:$0xff]
    %v7401 = vld [vmem:[%s7393 + $0x38] sm:$0xff]
    %v7402 = vld [vmem:[%s7393 + $0x40] sm:$0xff]
    %v7403 = vld [vmem:[%s7393 + $0x48] sm:$0xff]
    %v7404 = vld [vmem:[%s7393 + $0x50] sm:$0xff]
    %v7405 = vld [vmem:[%s7393 + $0x58] sm:$0xff]
    %v7406 = vld [vmem:[%s7393 + $0x60] sm:$0xff]
    %v7407 = vld [vmem:[%s7393 + $0x68] sm:$0xff]
    %v7408 = vld [vmem:[%s7393 + $0x70] sm:$0xff]
    %v7409 = vld [vmem:[%s7393 + $0x78] sm:$0xff]
    %7410 = vmatpush.msra.mxu0 %v7409
    %7411 = vmatpush.msra.mxu0 %v7408
    %7412 = vmatpush.msra.mxu0 %v7407
    %7413 = vmatpush.msra.mxu0 %v7406
    %7414 = vmatpush.msra.mxu0 %v7405
    %7415 = vmatpush.msra.mxu0 %v7404
    %7416 = vmatpush.msra.mxu0 %v7403
    %7417 = vmatpush.msra.mxu0 %v7402
    %7418 = vmatpush.msra.mxu0 %v7401
    %7419 = vmatpush.msra.mxu0 %v7400
    %7420 = vmatpush.msra.mxu0 %v7399
    %7421 = vmatpush.msra.mxu0 %v7398
    %7422 = vmatpush.msra.mxu0 %v7397
    %7423 = vmatpush.msra.mxu0 %v7396
    %7424 = vmatpush.msra.mxu0 %v7395
    %7425 = vmatpush.msra.mxu0 %v7394
    %7426 = vmatmul.f32.gmra.mxu0 %v7388
    %v7427 = vpop.f32.mrf.mxu0
    %v7428 = vadd.f32 0.0, %v7427
    %7429 = vmatmul.f32.gmra.mxu0 %v7389
    %v7430 = vpop.f32.mrf.mxu0
    %v7431 = vadd.f32 0.0, %v7430
    %7432 = vmatmul.f32.gmra.mxu0 %v7390
    %v7433 = vpop.f32.mrf.mxu0
    %v7434 = vadd.f32 0.0, %v7433
    %7435 = vmatmul.f32.gmra.mxu0 %v7391
    %v7436 = vpop.f32.mrf.mxu0
    %v7437 = vadd.f32 0.0, %v7436
    %7438 = vmatmul.f32.gmra.mxu0 %v7392
    %v7439 = vpop.f32.mrf.mxu0
    %v7440 = vadd.f32 0.0, %v7439
    %7441 = vdwg.mxu0
    %7442 = vmatpush.msra.mxu0 %v7387
    %7443 = vmatpush.msra.mxu0 %v7386
    %7444 = vmatpush.msra.mxu0 %v7385
    %7445 = vmatpush.msra.mxu0 %v7384
    %7446 = vmatpush.msra.mxu0 %v7383
    %7447 = vmatpush.msra.mxu0 %v7382
    %7448 = vmatpush.msra.mxu0 %v7381
    %7449 = vmatpush.msra.mxu0 %v7380
    %7450 = vmatpush.msra.mxu0 %v7379
    %7451 = vmatpush.msra.mxu0 %v7378
    %7452 = vmatpush.msra.mxu0 %v7377
    %7453 = vmatpush.msra.mxu0 %v7376
    %7454 = vmatpush.msra.mxu0 %v7375
    %7455 = vmatpush.msra.mxu0 %v7374
    %7456 = vmatpush.msra.mxu0 %v7373
    %7457 = vmatpush.msra.mxu0 %v7372
    %7458 = vmatmul.f32.gmra.mxu0 %v7367
    %v7459 = vpop.f32.mrf.mxu0
    %v7460 = vadd.f32 %v7428, %v7459
    %7461 = vmatmul.f32.gmra.mxu0 %v7368
    %v7462 = vpop.f32.mrf.mxu0
    %v7463 = vadd.f32 %v7431, %v7462
    %7464 = vmatmul.f32.gmra.mxu0 %v7369
    %v7465 = vpop.f32.mrf.mxu0
    %v7466 = vadd.f32 %v7434, %v7465
    %7467 = vmatmul.f32.gmra.mxu0 %v7370
    %v7468 = vpop.f32.mrf.mxu0
    %v7469 = vadd.f32 %v7437, %v7468
    %7470 = vmatmul.f32.gmra.mxu0 %v7371
    %v7471 = vpop.f32.mrf.mxu0
    %v7472 = vadd.f32 %v7440, %v7471
    %7473 = vdwg.mxu0
    %v7474 = vld [vmem:[#allocation4 + $0x2] sm:$0xff]
    %v7475 = vld [vmem:[#allocation4 + $0xa] sm:$0xff]
    %v7476 = vld [vmem:[#allocation4 + $0x12] sm:$0xff]
    %v7477 = vld [vmem:[#allocation4 + $0x1a] sm:$0xff]
    %v7478 = vld [vmem:[#allocation4 + $0x22] sm:$0x3f]
    %s7479 = scalar_lea.vmem [#allocation6], 256
    %v7480 = vld [vmem:[%s7479] sm:$0xff]
    %v7481 = vld [vmem:[%s7479 + $0x8] sm:$0xff]
    %v7482 = vld [vmem:[%s7479 + $0x10] sm:$0xff]
    %v7483 = vld [vmem:[%s7479 + $0x18] sm:$0xff]
    %v7484 = vld [vmem:[%s7479 + $0x20] sm:$0xff]
    %v7485 = vld [vmem:[%s7479 + $0x28] sm:$0xff]
    %v7486 = vld [vmem:[%s7479 + $0x30] sm:$0xff]
    %v7487 = vld [vmem:[%s7479 + $0x38] sm:$0xff]
    %v7488 = vld [vmem:[%s7479 + $0x40] sm:$0xff]
    %v7489 = vld [vmem:[%s7479 + $0x48] sm:$0xff]
    %v7490 = vld [vmem:[%s7479 + $0x50] sm:$0xff]
    %v7491 = vld [vmem:[%s7479 + $0x58] sm:$0xff]
    %v7492 = vld [vmem:[%s7479 + $0x60] sm:$0xff]
    %v7493 = vld [vmem:[%s7479 + $0x68] sm:$0xff]
    %v7494 = vld [vmem:[%s7479 + $0x70] sm:$0xff]
    %v7495 = vld [vmem:[%s7479 + $0x78] sm:$0xff]
    %7496 = vmatpush.msra.mxu0 %v7495
    %7497 = vmatpush.msra.mxu0 %v7494
    %7498 = vmatpush.msra.mxu0 %v7493
    %7499 = vmatpush.msra.mxu0 %v7492
    %7500 = vmatpush.msra.mxu0 %v7491
    %7501 = vmatpush.msra.mxu0 %v7490
    %7502 = vmatpush.msra.mxu0 %v7489
    %7503 = vmatpush.msra.mxu0 %v7488
    %7504 = vmatpush.msra.mxu0 %v7487
    %7505 = vmatpush.msra.mxu0 %v7486
    %7506 = vmatpush.msra.mxu0 %v7485
    %7507 = vmatpush.msra.mxu0 %v7484
    %7508 = vmatpush.msra.mxu0 %v7483
    %7509 = vmatpush.msra.mxu0 %v7482
    %7510 = vmatpush.msra.mxu0 %v7481
    %7511 = vmatpush.msra.mxu0 %v7480
    %7512 = vmatmul.f32.gmra.mxu0 %v7474
    %v7513 = vpop.f32.mrf.mxu0
    %v7514 = vadd.f32 0.0, %v7513
    %7515 = vmatmul.f32.gmra.mxu0 %v7475
    %v7516 = vpop.f32.mrf.mxu0
    %v7517 = vadd.f32 0.0, %v7516
    %7518 = vmatmul.f32.gmra.mxu0 %v7476
    %v7519 = vpop.f32.mrf.mxu0
    %v7520 = vadd.f32 0.0, %v7519
    %7521 = vmatmul.f32.gmra.mxu0 %v7477
    %v7522 = vpop.f32.mrf.mxu0
    %v7523 = vadd.f32 0.0, %v7522
    %7524 = vmatmul.f32.gmra.mxu0 %v7478
    %v7525 = vpop.f32.mrf.mxu0
    %v7526 = vadd.f32 0.0, %v7525
    %7527 = vdwg.mxu0
    %v7528 = vadd.f32 %v7460, %v7514
    %v7529 = vadd.f32 %v7463, %v7517
    %v7530 = vadd.f32 %v7466, %v7520
    %v7531 = vadd.f32 %v7469, %v7523
    %v7532 = vadd.f32 %v7472, %v7526
    %v7533 = vld [vmem:[#allocation4 + $0x5] sm:$0xff]
    %v7534 = vld [vmem:[#allocation4 + $0xd] sm:$0xff]
    %v7535 = vld [vmem:[#allocation4 + $0x15] sm:$0xff]
    %v7536 = vld [vmem:[#allocation4 + $0x1d] sm:$0xff]
    %v7537 = vld [vmem:[#allocation4 + $0x25] sm:$0x3f]
    %s7538 = scalar_lea.vmem [#allocation6], 384
    %v7539 = vld [vmem:[%s7538] sm:$0xff]
    %v7540 = vld [vmem:[%s7538 + $0x8] sm:$0xff]
    %v7541 = vld [vmem:[%s7538 + $0x10] sm:$0xff]
    %v7542 = vld [vmem:[%s7538 + $0x18] sm:$0xff]
    %v7543 = vld [vmem:[%s7538 + $0x20] sm:$0xff]
    %v7544 = vld [vmem:[%s7538 + $0x28] sm:$0xff]
    %v7545 = vld [vmem:[%s7538 + $0x30] sm:$0xff]
    %v7546 = vld [vmem:[%s7538 + $0x38] sm:$0xff]
    %v7547 = vld [vmem:[%s7538 + $0x40] sm:$0xff]
    %v7548 = vld [vmem:[%s7538 + $0x48] sm:$0xff]
    %v7549 = vld [vmem:[%s7538 + $0x50] sm:$0xff]
    %v7550 = vld [vmem:[%s7538 + $0x58] sm:$0xff]
    %v7551 = vld [vmem:[%s7538 + $0x60] sm:$0xff]
    %v7552 = vld [vmem:[%s7538 + $0x68] sm:$0xff]
    %v7553 = vld [vmem:[%s7538 + $0x70] sm:$0xff]
    %v7554 = vld [vmem:[%s7538 + $0x78] sm:$0xff]
    %7555 = vmatpush.msra.mxu0 %v7554
    %7556 = vmatpush.msra.mxu0 %v7553
    %7557 = vmatpush.msra.mxu0 %v7552
    %7558 = vmatpush.msra.mxu0 %v7551
    %7559 = vmatpush.msra.mxu0 %v7550
    %7560 = vmatpush.msra.mxu0 %v7549
    %7561 = vmatpush.msra.mxu0 %v7548
    %7562 = vmatpush.msra.mxu0 %v7547
    %7563 = vmatpush.msra.mxu0 %v7546
    %7564 = vmatpush.msra.mxu0 %v7545
    %7565 = vmatpush.msra.mxu0 %v7544
    %7566 = vmatpush.msra.mxu0 %v7543
    %7567 = vmatpush.msra.mxu0 %v7542
    %7568 = vmatpush.msra.mxu0 %v7541
    %7569 = vmatpush.msra.mxu0 %v7540
    %7570 = vmatpush.msra.mxu0 %v7539
    %7571 = vmatmul.f32.gmra.mxu0 %v7533
    %v7572 = vpop.f32.mrf.mxu0
    %v7573 = vadd.f32 0.0, %v7572
    %7574 = vmatmul.f32.gmra.mxu0 %v7534
    %v7575 = vpop.f32.mrf.mxu0
    %v7576 = vadd.f32 0.0, %v7575
    %7577 = vmatmul.f32.gmra.mxu0 %v7535
    %v7578 = vpop.f32.mrf.mxu0
    %v7579 = vadd.f32 0.0, %v7578
    %7580 = vmatmul.f32.gmra.mxu0 %v7536
    %v7581 = vpop.f32.mrf.mxu0
    %v7582 = vadd.f32 0.0, %v7581
    %7583 = vmatmul.f32.gmra.mxu0 %v7537
    %v7584 = vpop.f32.mrf.mxu0
    %v7585 = vadd.f32 0.0, %v7584
    %7586 = vdwg.mxu0
    %v7587 = vadd.f32 %v7528, %v7573
    %v7588 = vadd.f32 %v7529, %v7576
    %v7589 = vadd.f32 %v7530, %v7579
    %v7590 = vadd.f32 %v7531, %v7582
    %v7591 = vadd.f32 %v7532, %v7585
    %v7592 = vld [vmem:[#allocation4 + $0x6] sm:$0xff]
    %v7593 = vld [vmem:[#allocation4 + $0xe] sm:$0xff]
    %v7594 = vld [vmem:[#allocation4 + $0x16] sm:$0xff]
    %v7595 = vld [vmem:[#allocation4 + $0x1e] sm:$0xff]
    %v7596 = vld [vmem:[#allocation4 + $0x26] sm:$0x3f]
    %s7597 = scalar_lea.vmem [#allocation6], 512
    %v7598 = vld [vmem:[%s7597] sm:$0xff]
    %v7599 = vld [vmem:[%s7597 + $0x8] sm:$0xff]
    %v7600 = vld [vmem:[%s7597 + $0x10] sm:$0xff]
    %v7601 = vld [vmem:[%s7597 + $0x18] sm:$0xff]
    %v7602 = vld [vmem:[%s7597 + $0x20] sm:$0xff]
    %v7603 = vld [vmem:[%s7597 + $0x28] sm:$0xff]
    %v7604 = vld [vmem:[%s7597 + $0x30] sm:$0xff]
    %v7605 = vld [vmem:[%s7597 + $0x38] sm:$0xff]
    %v7606 = vld [vmem:[%s7597 + $0x40] sm:$0xff]
    %v7607 = vld [vmem:[%s7597 + $0x48] sm:$0xff]
    %v7608 = vld [vmem:[%s7597 + $0x50] sm:$0xff]
    %v7609 = vld [vmem:[%s7597 + $0x58] sm:$0xff]
    %v7610 = vld [vmem:[%s7597 + $0x60] sm:$0xff]
    %v7611 = vld [vmem:[%s7597 + $0x68] sm:$0xff]
    %v7612 = vld [vmem:[%s7597 + $0x70] sm:$0xff]
    %v7613 = vld [vmem:[%s7597 + $0x78] sm:$0xff]
    %7614 = vmatpush.msra.mxu0 %v7613
    %7615 = vmatpush.msra.mxu0 %v7612
    %7616 = vmatpush.msra.mxu0 %v7611
    %7617 = vmatpush.msra.mxu0 %v7610
    %7618 = vmatpush.msra.mxu0 %v7609
    %7619 = vmatpush.msra.mxu0 %v7608
    %7620 = vmatpush.msra.mxu0 %v7607
    %7621 = vmatpush.msra.mxu0 %v7606
    %7622 = vmatpush.msra.mxu0 %v7605
    %7623 = vmatpush.msra.mxu0 %v7604
    %7624 = vmatpush.msra.mxu0 %v7603
    %7625 = vmatpush.msra.mxu0 %v7602
    %7626 = vmatpush.msra.mxu0 %v7601
    %7627 = vmatpush.msra.mxu0 %v7600
    %7628 = vmatpush.msra.mxu0 %v7599
    %7629 = vmatpush.msra.mxu0 %v7598
    %7630 = vmatmul.f32.gmra.mxu0 %v7592
    %v7631 = vpop.f32.mrf.mxu0
    %v7632 = vadd.f32 0.0, %v7631
    %7633 = vmatmul.f32.gmra.mxu0 %v7593
    %v7634 = vpop.f32.mrf.mxu0
    %v7635 = vadd.f32 0.0, %v7634
    %7636 = vmatmul.f32.gmra.mxu0 %v7594
    %v7637 = vpop.f32.mrf.mxu0
    %v7638 = vadd.f32 0.0, %v7637
    %7639 = vmatmul.f32.gmra.mxu0 %v7595
    %v7640 = vpop.f32.mrf.mxu0
    %v7641 = vadd.f32 0.0, %v7640
    %7642 = vmatmul.f32.gmra.mxu0 %v7596
    %v7643 = vpop.f32.mrf.mxu0
    %v7644 = vadd.f32 0.0, %v7643
    %7645 = vdwg.mxu0
    %v7646 = vadd.f32 %v7587, %v7632
    %v7647 = vadd.f32 %v7588, %v7635
    %v7648 = vadd.f32 %v7589, %v7638
    %v7649 = vadd.f32 %v7590, %v7641
    %v7650 = vadd.f32 %v7591, %v7644
    %v7651 = vld [vmem:[#allocation4 + $0x7] sm:$0xff]
    %v7652 = vld [vmem:[#allocation4 + $0xf] sm:$0xff]
    %v7653 = vld [vmem:[#allocation4 + $0x17] sm:$0xff]
    %v7654 = vld [vmem:[#allocation4 + $0x1f] sm:$0xff]
    %v7655 = vld [vmem:[#allocation4 + $0x27] sm:$0x3f]
    %s7656 = scalar_lea.vmem [#allocation6], 640
    %v7657 = vld [vmem:[%s7656] sm:$0xff]
    %v7658 = vld [vmem:[%s7656 + $0x8] sm:$0xff]
    %v7659 = vld [vmem:[%s7656 + $0x10] sm:$0xff]
    %v7660 = vld [vmem:[%s7656 + $0x18] sm:$0xff]
    %v7661 = vld [vmem:[%s7656 + $0x20] sm:$0xff]
    %v7662 = vld [vmem:[%s7656 + $0x28] sm:$0xff]
    %v7663 = vld [vmem:[%s7656 + $0x30] sm:$0xff]
    %v7664 = vld [vmem:[%s7656 + $0x38] sm:$0xff]
    %v7665 = vld [vmem:[%s7656 + $0x40] sm:$0xff]
    %v7666 = vld [vmem:[%s7656 + $0x48] sm:$0xff]
    %v7667 = vld [vmem:[%s7656 + $0x50] sm:$0xff]
    %v7668 = vld [vmem:[%s7656 + $0x58] sm:$0xff]
    %v7669 = vld [vmem:[%s7656 + $0x60] sm:$0xff]
    %v7670 = vld [vmem:[%s7656 + $0x68] sm:$0xff]
    %v7671 = vld [vmem:[%s7656 + $0x70] sm:$0xff]
    %v7672 = vld [vmem:[%s7656 + $0x78] sm:$0xff]
    %7673 = vmatpush.msra.mxu0 %v7672
    %7674 = vmatpush.msra.mxu0 %v7671
    %7675 = vmatpush.msra.mxu0 %v7670
    %7676 = vmatpush.msra.mxu0 %v7669
    %7677 = vmatpush.msra.mxu0 %v7668
    %7678 = vmatpush.msra.mxu0 %v7667
    %7679 = vmatpush.msra.mxu0 %v7666
    %7680 = vmatpush.msra.mxu0 %v7665
    %7681 = vmatpush.msra.mxu0 %v7664
    %7682 = vmatpush.msra.mxu0 %v7663
    %7683 = vmatpush.msra.mxu0 %v7662
    %7684 = vmatpush.msra.mxu0 %v7661
    %7685 = vmatpush.msra.mxu0 %v7660
    %7686 = vmatpush.msra.mxu0 %v7659
    %7687 = vmatpush.msra.mxu0 %v7658
    %7688 = vmatpush.msra.mxu0 %v7657
    %7689 = vmatmul.f32.gmra.mxu0 %v7651
    %v7690 = vpop.f32.mrf.mxu0
    %v7691 = vadd.f32 0.0, %v7690
    %7692 = vmatmul.f32.gmra.mxu0 %v7652
    %v7693 = vpop.f32.mrf.mxu0
    %v7694 = vadd.f32 0.0, %v7693
    %7695 = vmatmul.f32.gmra.mxu0 %v7653
    %v7696 = vpop.f32.mrf.mxu0
    %v7697 = vadd.f32 0.0, %v7696
    %7698 = vmatmul.f32.gmra.mxu0 %v7654
    %v7699 = vpop.f32.mrf.mxu0
    %v7700 = vadd.f32 0.0, %v7699
    %7701 = vmatmul.f32.gmra.mxu0 %v7655
    %v7702 = vpop.f32.mrf.mxu0
    %v7703 = vadd.f32 0.0, %v7702
    %7704 = vdwg.mxu0
    %v7705 = vadd.f32 %v7646, %v7691
    %v7706 = vadd.f32 %v7647, %v7694
    %v7707 = vadd.f32 %v7648, %v7697
    %v7708 = vadd.f32 %v7649, %v7700
    %v7709 = vadd.f32 %v7650, %v7703
    %v7710 = vld [vmem:[#allocation4 + $0xa] sm:$0xff]
    %v7711 = vld [vmem:[#allocation4 + $0x12] sm:$0xff]
    %v7712 = vld [vmem:[#allocation4 + $0x1a] sm:$0xff]
    %v7713 = vld [vmem:[#allocation4 + $0x22] sm:$0xff]
    %v7714 = vld [vmem:[#allocation4 + $0x2a] sm:$0x3f]
    %s7715 = scalar_lea.vmem [#allocation6], 768
    %v7716 = vld [vmem:[%s7715] sm:$0xff]
    %v7717 = vld [vmem:[%s7715 + $0x8] sm:$0xff]
    %v7718 = vld [vmem:[%s7715 + $0x10] sm:$0xff]
    %v7719 = vld [vmem:[%s7715 + $0x18] sm:$0xff]
    %v7720 = vld [vmem:[%s7715 + $0x20] sm:$0xff]
    %v7721 = vld [vmem:[%s7715 + $0x28] sm:$0xff]
    %v7722 = vld [vmem:[%s7715 + $0x30] sm:$0xff]
    %v7723 = vld [vmem:[%s7715 + $0x38] sm:$0xff]
    %v7724 = vld [vmem:[%s7715 + $0x40] sm:$0xff]
    %v7725 = vld [vmem:[%s7715 + $0x48] sm:$0xff]
    %v7726 = vld [vmem:[%s7715 + $0x50] sm:$0xff]
    %v7727 = vld [vmem:[%s7715 + $0x58] sm:$0xff]
    %v7728 = vld [vmem:[%s7715 + $0x60] sm:$0xff]
    %v7729 = vld [vmem:[%s7715 + $0x68] sm:$0xff]
    %v7730 = vld [vmem:[%s7715 + $0x70] sm:$0xff]
    %v7731 = vld [vmem:[%s7715 + $0x78] sm:$0xff]
    %7732 = vmatpush.msra.mxu0 %v7731
    %7733 = vmatpush.msra.mxu0 %v7730
    %7734 = vmatpush.msra.mxu0 %v7729
    %7735 = vmatpush.msra.mxu0 %v7728
    %7736 = vmatpush.msra.mxu0 %v7727
    %7737 = vmatpush.msra.mxu0 %v7726
    %7738 = vmatpush.msra.mxu0 %v7725
    %7739 = vmatpush.msra.mxu0 %v7724
    %7740 = vmatpush.msra.mxu0 %v7723
    %7741 = vmatpush.msra.mxu0 %v7722
    %7742 = vmatpush.msra.mxu0 %v7721
    %7743 = vmatpush.msra.mxu0 %v7720
    %7744 = vmatpush.msra.mxu0 %v7719
    %7745 = vmatpush.msra.mxu0 %v7718
    %7746 = vmatpush.msra.mxu0 %v7717
    %7747 = vmatpush.msra.mxu0 %v7716
    %7748 = vmatmul.f32.gmra.mxu0 %v7710
    %v7749 = vpop.f32.mrf.mxu0
    %v7750 = vadd.f32 0.0, %v7749
    %7751 = vmatmul.f32.gmra.mxu0 %v7711
    %v7752 = vpop.f32.mrf.mxu0
    %v7753 = vadd.f32 0.0, %v7752
    %7754 = vmatmul.f32.gmra.mxu0 %v7712
    %v7755 = vpop.f32.mrf.mxu0
    %v7756 = vadd.f32 0.0, %v7755
    %7757 = vmatmul.f32.gmra.mxu0 %v7713
    %v7758 = vpop.f32.mrf.mxu0
    %v7759 = vadd.f32 0.0, %v7758
    %7760 = vmatmul.f32.gmra.mxu0 %v7714
    %v7761 = vpop.f32.mrf.mxu0
    %v7762 = vadd.f32 0.0, %v7761
    %7763 = vdwg.mxu0
    %v7764 = vadd.f32 %v7705, %v7750
    %v7765 = vadd.f32 %v7706, %v7753
    %v7766 = vadd.f32 %v7707, %v7756
    %v7767 = vadd.f32 %v7708, %v7759
    %v7768 = vadd.f32 %v7709, %v7762
    %v7769 = vld [vmem:[#allocation4 + $0xb] sm:$0xff]
    %v7770 = vld [vmem:[#allocation4 + $0x13] sm:$0xff]
    %v7771 = vld [vmem:[#allocation4 + $0x1b] sm:$0xff]
    %v7772 = vld [vmem:[#allocation4 + $0x23] sm:$0xff]
    %v7773 = vld [vmem:[#allocation4 + $0x2b] sm:$0x3f]
    %s7774 = scalar_lea.vmem [#allocation6], 896
    %v7775 = vld [vmem:[%s7774] sm:$0xff]
    %v7776 = vld [vmem:[%s7774 + $0x8] sm:$0xff]
    %v7777 = vld [vmem:[%s7774 + $0x10] sm:$0xff]
    %v7778 = vld [vmem:[%s7774 + $0x18] sm:$0xff]
    %v7779 = vld [vmem:[%s7774 + $0x20] sm:$0xff]
    %v7780 = vld [vmem:[%s7774 + $0x28] sm:$0xff]
    %v7781 = vld [vmem:[%s7774 + $0x30] sm:$0xff]
    %v7782 = vld [vmem:[%s7774 + $0x38] sm:$0xff]
    %v7783 = vld [vmem:[%s7774 + $0x40] sm:$0xff]
    %v7784 = vld [vmem:[%s7774 + $0x48] sm:$0xff]
    %v7785 = vld [vmem:[%s7774 + $0x50] sm:$0xff]
    %v7786 = vld [vmem:[%s7774 + $0x58] sm:$0xff]
    %v7787 = vld [vmem:[%s7774 + $0x60] sm:$0xff]
    %v7788 = vld [vmem:[%s7774 + $0x68] sm:$0xff]
    %v7789 = vld [vmem:[%s7774 + $0x70] sm:$0xff]
    %v7790 = vld [vmem:[%s7774 + $0x78] sm:$0xff]
    %7791 = vmatpush.msra.mxu0 %v7790
    %7792 = vmatpush.msra.mxu0 %v7789
    %7793 = vmatpush.msra.mxu0 %v7788
    %7794 = vmatpush.msra.mxu0 %v7787
    %7795 = vmatpush.msra.mxu0 %v7786
    %7796 = vmatpush.msra.mxu0 %v7785
    %7797 = vmatpush.msra.mxu0 %v7784
    %7798 = vmatpush.msra.mxu0 %v7783
    %7799 = vmatpush.msra.mxu0 %v7782
    %7800 = vmatpush.msra.mxu0 %v7781
    %7801 = vmatpush.msra.mxu0 %v7780
    %7802 = vmatpush.msra.mxu0 %v7779
    %7803 = vmatpush.msra.mxu0 %v7778
    %7804 = vmatpush.msra.mxu0 %v7777
    %7805 = vmatpush.msra.mxu0 %v7776
    %7806 = vmatpush.msra.mxu0 %v7775
    %7807 = vmatmul.f32.gmra.mxu0 %v7769
    %v7808 = vpop.f32.mrf.mxu0
    %v7809 = vadd.f32 0.0, %v7808
    %7810 = vmatmul.f32.gmra.mxu0 %v7770
    %v7811 = vpop.f32.mrf.mxu0
    %v7812 = vadd.f32 0.0, %v7811
    %7813 = vmatmul.f32.gmra.mxu0 %v7771
    %v7814 = vpop.f32.mrf.mxu0
    %v7815 = vadd.f32 0.0, %v7814
    %7816 = vmatmul.f32.gmra.mxu0 %v7772
    %v7817 = vpop.f32.mrf.mxu0
    %v7818 = vadd.f32 0.0, %v7817
    %7819 = vmatmul.f32.gmra.mxu0 %v7773
    %v7820 = vpop.f32.mrf.mxu0
    %v7821 = vadd.f32 0.0, %v7820
    %7822 = vdwg.mxu0
    %v7823 = vadd.f32 %v7764, %v7809
    %v7824 = vadd.f32 %v7765, %v7812
    %v7825 = vadd.f32 %v7766, %v7815
    %v7826 = vadd.f32 %v7767, %v7818
    %v7827 = vadd.f32 %v7768, %v7821
    %v7828 = vld [vmem:[#allocation4 + $0xc] sm:$0xff]
    %v7829 = vld [vmem:[#allocation4 + $0x14] sm:$0xff]
    %v7830 = vld [vmem:[#allocation4 + $0x1c] sm:$0xff]
    %v7831 = vld [vmem:[#allocation4 + $0x24] sm:$0xff]
    %v7832 = vld [vmem:[#allocation4 + $0x2c] sm:$0x3f]
    %s7833 = scalar_lea.vmem [#allocation6], 1024
    %v7834 = vld [vmem:[%s7833] sm:$0xff]
    %v7835 = vld [vmem:[%s7833 + $0x8] sm:$0xff]
    %v7836 = vld [vmem:[%s7833 + $0x10] sm:$0xff]
    %v7837 = vld [vmem:[%s7833 + $0x18] sm:$0xff]
    %v7838 = vld [vmem:[%s7833 + $0x20] sm:$0xff]
    %v7839 = vld [vmem:[%s7833 + $0x28] sm:$0xff]
    %v7840 = vld [vmem:[%s7833 + $0x30] sm:$0xff]
    %v7841 = vld [vmem:[%s7833 + $0x38] sm:$0xff]
    %v7842 = vld [vmem:[%s7833 + $0x40] sm:$0xff]
    %v7843 = vld [vmem:[%s7833 + $0x48] sm:$0xff]
    %v7844 = vld [vmem:[%s7833 + $0x50] sm:$0xff]
    %v7845 = vld [vmem:[%s7833 + $0x58] sm:$0xff]
    %v7846 = vld [vmem:[%s7833 + $0x60] sm:$0xff]
    %v7847 = vld [vmem:[%s7833 + $0x68] sm:$0xff]
    %v7848 = vld [vmem:[%s7833 + $0x70] sm:$0xff]
    %v7849 = vld [vmem:[%s7833 + $0x78] sm:$0xff]
    %7850 = vmatpush.msra.mxu0 %v7849
    %7851 = vmatpush.msra.mxu0 %v7848
    %7852 = vmatpush.msra.mxu0 %v7847
    %7853 = vmatpush.msra.mxu0 %v7846
    %7854 = vmatpush.msra.mxu0 %v7845
    %7855 = vmatpush.msra.mxu0 %v7844
    %7856 = vmatpush.msra.mxu0 %v7843
    %7857 = vmatpush.msra.mxu0 %v7842
    %7858 = vmatpush.msra.mxu0 %v7841
    %7859 = vmatpush.msra.mxu0 %v7840
    %7860 = vmatpush.msra.mxu0 %v7839
    %7861 = vmatpush.msra.mxu0 %v7838
    %7862 = vmatpush.msra.mxu0 %v7837
    %7863 = vmatpush.msra.mxu0 %v7836
    %7864 = vmatpush.msra.mxu0 %v7835
    %7865 = vmatpush.msra.mxu0 %v7834
    %7866 = vmatmul.f32.gmra.mxu0 %v7828
    %v7867 = vpop.f32.mrf.mxu0
    %v7868 = vadd.f32 0.0, %v7867
    %7869 = vmatmul.f32.gmra.mxu0 %v7829
    %v7870 = vpop.f32.mrf.mxu0
    %v7871 = vadd.f32 0.0, %v7870
    %7872 = vmatmul.f32.gmra.mxu0 %v7830
    %v7873 = vpop.f32.mrf.mxu0
    %v7874 = vadd.f32 0.0, %v7873
    %7875 = vmatmul.f32.gmra.mxu0 %v7831
    %v7876 = vpop.f32.mrf.mxu0
    %v7877 = vadd.f32 0.0, %v7876
    %7878 = vmatmul.f32.gmra.mxu0 %v7832
    %v7879 = vpop.f32.mrf.mxu0
    %v7880 = vadd.f32 0.0, %v7879
    %7881 = vdwg.mxu0
    %v7882 = vadd.f32 %v7823, %v7868
    %v7883 = vadd.f32 %v7824, %v7871
    %v7884 = vadd.f32 %v7825, %v7874
    %v7885 = vadd.f32 %v7826, %v7877
    %v7886 = vadd.f32 %v7827, %v7880
    %v7887 = vld [vmem:[%s7] sm:$0x1]
    %v7888 = vperm.slane %v7887, 0
    %v7889 = vmul.f32 %v7882, %v7888
    %v7890 = vmul.f32 %v7883, %v7888
    %v7891 = vmul.f32 %v7884, %v7888
    %v7892 = vmul.f32 %v7885, %v7888
    %v7893 = vmul.f32 %v7886, %v7888
    %v7894 = vld [vmem:[%s7 + $0x1] sm:$0x1]
    %v7895 = vperm.slane %v7894, 0
    %v7896 = vadd.f32 %v7889, %v7895
    %v7897 = vadd.f32 %v7890, %v7895
    %v7898 = vadd.f32 %v7891, %v7895
    %v7899 = vadd.f32 %v7892, %v7895
    %v7900 = vadd.f32 %v7893, %v7895
    %v7901 = vmax.f32 %v7896, 0.0
    %v7902 = vmax.f32 %v7897, 0.0
    %v7903 = vmax.f32 %v7898, 0.0
    %v7904 = vmax.f32 %v7899, 0.0
    %v7905 = vmax.f32 %v7900, 0.0
    %7906 = vst [vmem:[#allocation5] sm:$0xff] %v7901
    %7907 = vst [vmem:[#allocation5 + $0x8] sm:$0xff] %v7902
    %7908 = vst [vmem:[#allocation5 + $0x10] sm:$0xff] %v7903
    %7909 = vst [vmem:[#allocation5 + $0x18] sm:$0xff] %v7904
    %7910 = vst [vmem:[#allocation5 + $0x20] sm:$0x3f] %v7905
    %v7911 = vld [vmem:[#allocation5] sm:$0xff]
    %v7912 = vld [vmem:[#allocation5 + $0x8] sm:$0xff]
    %v7913 = vld [vmem:[#allocation5 + $0x10] sm:$0xff]
    %v7914 = vld [vmem:[#allocation5 + $0x18] sm:$0xff]
    %v7915 = vld [vmem:[#allocation5 + $0x20] sm:$0x3f]
    %v7916 = vld [vmem:[%s8] sm:$0xff]
    %v7917 = vld [vmem:[%s8 + $0x8] sm:$0xff]
    %v7918 = vld [vmem:[%s8 + $0x10] sm:$0xff]
    %v7919 = vld [vmem:[%s8 + $0x18] sm:$0xff]
    %v7920 = vld [vmem:[%s8 + $0x20] sm:$0xff]
    %v7921 = vld [vmem:[%s8 + $0x28] sm:$0xff]
    %v7922 = vld [vmem:[%s8 + $0x30] sm:$0xff]
    %v7923 = vld [vmem:[%s8 + $0x38] sm:$0xff]
    %v7924 = vld [vmem:[%s8 + $0x40] sm:$0xff]
    %v7925 = vld [vmem:[%s8 + $0x48] sm:$0xff]
    %v7926 = vld [vmem:[%s8 + $0x50] sm:$0xff]
    %v7927 = vld [vmem:[%s8 + $0x58] sm:$0xff]
    %v7928 = vld [vmem:[%s8 + $0x60] sm:$0xff]
    %v7929 = vld [vmem:[%s8 + $0x68] sm:$0xff]
    %v7930 = vld [vmem:[%s8 + $0x70] sm:$0xff]
    %v7931 = vld [vmem:[%s8 + $0x78] sm:$0xff]
    %7932 = vmatpush.msra.mxu0 %v7931
    %7933 = vmatpush.msra.mxu0 %v7930
    %7934 = vmatpush.msra.mxu0 %v7929
    %7935 = vmatpush.msra.mxu0 %v7928
    %7936 = vmatpush.msra.mxu0 %v7927
    %7937 = vmatpush.msra.mxu0 %v7926
    %7938 = vmatpush.msra.mxu0 %v7925
    %7939 = vmatpush.msra.mxu0 %v7924
    %7940 = vmatpush.msra.mxu0 %v7923
    %7941 = vmatpush.msra.mxu0 %v7922
    %7942 = vmatpush.msra.mxu0 %v7921
    %7943 = vmatpush.msra.mxu0 %v7920
    %7944 = vmatpush.msra.mxu0 %v7919
    %7945 = vmatpush.msra.mxu0 %v7918
    %7946 = vmatpush.msra.mxu0 %v7917
    %7947 = vmatpush.msra.mxu0 %v7916
    %7948 = vmatmul.f32.gmra.mxu0 %v7911
    %v7949 = vpop.f32.mrf.mxu0
    %v7950 = vadd.f32 0.0, %v7949
    %7951 = vmatmul.f32.gmra.mxu0 %v7912
    %v7952 = vpop.f32.mrf.mxu0
    %v7953 = vadd.f32 0.0, %v7952
    %7954 = vmatmul.f32.gmra.mxu0 %v7913
    %v7955 = vpop.f32.mrf.mxu0
    %v7956 = vadd.f32 0.0, %v7955
    %7957 = vmatmul.f32.gmra.mxu0 %v7914
    %v7958 = vpop.f32.mrf.mxu0
    %v7959 = vadd.f32 0.0, %v7958
    %7960 = vmatmul.f32.gmra.mxu0 %v7915
    %v7961 = vpop.f32.mrf.mxu0
    %v7962 = vadd.f32 0.0, %v7961
    %7963 = vdwg.mxu0
    %v7964 = vld [vmem:[%s9] sm:$0x1]
    %v7965 = vperm.slane %v7964, 0
    %v7966 = vmul.f32 %v7950, %v7965
    %v7967 = vmul.f32 %v7953, %v7965
    %v7968 = vmul.f32 %v7956, %v7965
    %v7969 = vmul.f32 %v7959, %v7965
    %v7970 = vmul.f32 %v7962, %v7965
    %v7971 = vld [vmem:[%s9 + $0x1] sm:$0x1]
    %v7972 = vperm.slane %v7971, 0
    %v7973 = vadd.f32 %v7966, %v7972
    %v7974 = vadd.f32 %v7967, %v7972
    %v7975 = vadd.f32 %v7968, %v7972
    %v7976 = vadd.f32 %v7969, %v7972
    %v7977 = vadd.f32 %v7970, %v7972
    %v7978 = vmax.f32 %v7973, 0.0
    %v7979 = vmax.f32 %v7974, 0.0
    %v7980 = vmax.f32 %v7975, 0.0
    %v7981 = vmax.f32 %v7976, 0.0
    %v7982 = vmax.f32 %v7977, 0.0
    %7983 = vst [vmem:[#allocation5] sm:$0xff] %v7978
    %7984 = vst [vmem:[#allocation5 + $0x8] sm:$0xff] %v7979
    %7985 = vst [vmem:[#allocation5 + $0x10] sm:$0xff] %v7980
    %7986 = vst [vmem:[#allocation5 + $0x18] sm:$0xff] %v7981
    %7987 = vst [vmem:[#allocation5 + $0x20] sm:$0x3f] %v7982
    %v7988 = vld [vmem:[#allocation5] sm:$0xff]
    %v7989 = vld [vmem:[#allocation5 + $0x8] sm:$0xff]
    %v7990 = vld [vmem:[#allocation5 + $0x10] sm:$0xff]
    %v7991 = vld [vmem:[#allocation5 + $0x18] sm:$0x3]
    %v7992 = vld [vmem:[#allocation9] sm:$0xff]
    %v7993 = vld [vmem:[#allocation9 + $0x8] sm:$0xff]
    %v7994 = vld [vmem:[#allocation9 + $0x10] sm:$0xff]
    %v7995 = vld [vmem:[#allocation9 + $0x18] sm:$0xff]
    %v7996 = vld [vmem:[#allocation9 + $0x20] sm:$0xff]
    %v7997 = vld [vmem:[#allocation9 + $0x28] sm:$0xff]
    %v7998 = vld [vmem:[#allocation9 + $0x30] sm:$0xff]
    %v7999 = vld [vmem:[#allocation9 + $0x38] sm:$0xff]
    %v8000 = vld [vmem:[#allocation9 + $0x40] sm:$0xff]
    %v8001 = vld [vmem:[#allocation9 + $0x48] sm:$0xff]
    %v8002 = vld [vmem:[#allocation9 + $0x50] sm:$0xff]
    %v8003 = vld [vmem:[#allocation9 + $0x58] sm:$0xff]
    %v8004 = vld [vmem:[#allocation9 + $0x60] sm:$0xff]
    %v8005 = vld [vmem:[#allocation9 + $0x68] sm:$0xff]
    %v8006 = vld [vmem:[#allocation9 + $0x70] sm:$0xff]
    %v8007 = vld [vmem:[#allocation9 + $0x78] sm:$0xff]
    %v8008 = vld [vmem:[#allocation5 + $0x1] sm:$0xff]
    %v8009 = vld [vmem:[#allocation5 + $0x9] sm:$0xff]
    %v8010 = vld [vmem:[#allocation5 + $0x11] sm:$0xff]
    %v8011 = vld [vmem:[#allocation5 + $0x19] sm:$0x3]
    %s8012 = scalar_lea.vmem [#allocation9], 128
    %v8013 = vld [vmem:[%s8012] sm:$0xff]
    %v8014 = vld [vmem:[%s8012 + $0x8] sm:$0xff]
    %v8015 = vld [vmem:[%s8012 + $0x10] sm:$0xff]
    %v8016 = vld [vmem:[%s8012 + $0x18] sm:$0xff]
    %v8017 = vld [vmem:[%s8012 + $0x20] sm:$0xff]
    %v8018 = vld [vmem:[%s8012 + $0x28] sm:$0xff]
    %v8019 = vld [vmem:[%s8012 + $0x30] sm:$0xff]
    %v8020 = vld [vmem:[%s8012 + $0x38] sm:$0xff]
    %v8021 = vld [vmem:[%s8012 + $0x40] sm:$0xff]
    %v8022 = vld [vmem:[%s8012 + $0x48] sm:$0xff]
    %v8023 = vld [vmem:[%s8012 + $0x50] sm:$0xff]
    %v8024 = vld [vmem:[%s8012 + $0x58] sm:$0xff]
    %v8025 = vld [vmem:[%s8012 + $0x60] sm:$0xff]
    %v8026 = vld [vmem:[%s8012 + $0x68] sm:$0xff]
    %v8027 = vld [vmem:[%s8012 + $0x70] sm:$0xff]
    %v8028 = vld [vmem:[%s8012 + $0x78] sm:$0xff]
    %8029 = vmatpush.msra.mxu0 %v8028
    %8030 = vmatpush.msra.mxu0 %v8027
    %8031 = vmatpush.msra.mxu0 %v8026
    %8032 = vmatpush.msra.mxu0 %v8025
    %8033 = vmatpush.msra.mxu0 %v8024
    %8034 = vmatpush.msra.mxu0 %v8023
    %8035 = vmatpush.msra.mxu0 %v8022
    %8036 = vmatpush.msra.mxu0 %v8021
    %8037 = vmatpush.msra.mxu0 %v8020
    %8038 = vmatpush.msra.mxu0 %v8019
    %8039 = vmatpush.msra.mxu0 %v8018
    %8040 = vmatpush.msra.mxu0 %v8017
    %8041 = vmatpush.msra.mxu0 %v8016
    %8042 = vmatpush.msra.mxu0 %v8015
    %8043 = vmatpush.msra.mxu0 %v8014
    %8044 = vmatpush.msra.mxu0 %v8013
    %8045 = vmatmul.f32.gmra.mxu0 %v8008
    %v8046 = vpop.f32.mrf.mxu0
    %v8047 = vadd.f32 0.0, %v8046
    %8048 = vmatmul.f32.gmra.mxu0 %v8009
    %v8049 = vpop.f32.mrf.mxu0
    %v8050 = vadd.f32 0.0, %v8049
    %8051 = vmatmul.f32.gmra.mxu0 %v8010
    %v8052 = vpop.f32.mrf.mxu0
    %v8053 = vadd.f32 0.0, %v8052
    %8054 = vmatmul.f32.gmra.mxu0 %v8011
    %v8055 = vpop.f32.mrf.mxu0
    %v8056 = vadd.f32 0.0, %v8055
    %8057 = vdwg.mxu0
    %8058 = vmatpush.msra.mxu0 %v8007
    %8059 = vmatpush.msra.mxu0 %v8006
    %8060 = vmatpush.msra.mxu0 %v8005
    %8061 = vmatpush.msra.mxu0 %v8004
    %8062 = vmatpush.msra.mxu0 %v8003
    %8063 = vmatpush.msra.mxu0 %v8002
    %8064 = vmatpush.msra.mxu0 %v8001
    %8065 = vmatpush.msra.mxu0 %v8000
    %8066 = vmatpush.msra.mxu0 %v7999
    %8067 = vmatpush.msra.mxu0 %v7998
    %8068 = vmatpush.msra.mxu0 %v7997
    %8069 = vmatpush.msra.mxu0 %v7996
    %8070 = vmatpush.msra.mxu0 %v7995
    %8071 = vmatpush.msra.mxu0 %v7994
    %8072 = vmatpush.msra.mxu0 %v7993
    %8073 = vmatpush.msra.mxu0 %v7992
    %8074 = vmatmul.f32.gmra.mxu0 %v7988
    %v8075 = vpop.f32.mrf.mxu0
    %v8076 = vadd.f32 %v8047, %v8075
    %8077 = vmatmul.f32.gmra.mxu0 %v7989
    %v8078 = vpop.f32.mrf.mxu0
    %v8079 = vadd.f32 %v8050, %v8078
    %8080 = vmatmul.f32.gmra.mxu0 %v7990
    %v8081 = vpop.f32.mrf.mxu0
    %v8082 = vadd.f32 %v8053, %v8081
    %8083 = vmatmul.f32.gmra.mxu0 %v7991
    %v8084 = vpop.f32.mrf.mxu0
    %v8085 = vadd.f32 %v8056, %v8084
    %8086 = vdwg.mxu0
    %v8087 = vld [vmem:[#allocation5 + $0x2] sm:$0xff]
    %v8088 = vld [vmem:[#allocation5 + $0xa] sm:$0xff]
    %v8089 = vld [vmem:[#allocation5 + $0x12] sm:$0xff]
    %v8090 = vld [vmem:[#allocation5 + $0x1a] sm:$0x3]
    %s8091 = scalar_lea.vmem [#allocation9], 256
    %v8092 = vld [vmem:[%s8091] sm:$0xff]
    %v8093 = vld [vmem:[%s8091 + $0x8] sm:$0xff]
    %v8094 = vld [vmem:[%s8091 + $0x10] sm:$0xff]
    %v8095 = vld [vmem:[%s8091 + $0x18] sm:$0xff]
    %v8096 = vld [vmem:[%s8091 + $0x20] sm:$0xff]
    %v8097 = vld [vmem:[%s8091 + $0x28] sm:$0xff]
    %v8098 = vld [vmem:[%s8091 + $0x30] sm:$0xff]
    %v8099 = vld [vmem:[%s8091 + $0x38] sm:$0xff]
    %v8100 = vld [vmem:[%s8091 + $0x40] sm:$0xff]
    %v8101 = vld [vmem:[%s8091 + $0x48] sm:$0xff]
    %v8102 = vld [vmem:[%s8091 + $0x50] sm:$0xff]
    %v8103 = vld [vmem:[%s8091 + $0x58] sm:$0xff]
    %v8104 = vld [vmem:[%s8091 + $0x60] sm:$0xff]
    %v8105 = vld [vmem:[%s8091 + $0x68] sm:$0xff]
    %v8106 = vld [vmem:[%s8091 + $0x70] sm:$0xff]
    %v8107 = vld [vmem:[%s8091 + $0x78] sm:$0xff]
    %8108 = vmatpush.msra.mxu0 %v8107
    %8109 = vmatpush.msra.mxu0 %v8106
    %8110 = vmatpush.msra.mxu0 %v8105
    %8111 = vmatpush.msra.mxu0 %v8104
    %8112 = vmatpush.msra.mxu0 %v8103
    %8113 = vmatpush.msra.mxu0 %v8102
    %8114 = vmatpush.msra.mxu0 %v8101
    %8115 = vmatpush.msra.mxu0 %v8100
    %8116 = vmatpush.msra.mxu0 %v8099
    %8117 = vmatpush.msra.mxu0 %v8098
    %8118 = vmatpush.msra.mxu0 %v8097
    %8119 = vmatpush.msra.mxu0 %v8096
    %8120 = vmatpush.msra.mxu0 %v8095
    %8121 = vmatpush.msra.mxu0 %v8094
    %8122 = vmatpush.msra.mxu0 %v8093
    %8123 = vmatpush.msra.mxu0 %v8092
    %8124 = vmatmul.f32.gmra.mxu0 %v8087
    %v8125 = vpop.f32.mrf.mxu0
    %v8126 = vadd.f32 0.0, %v8125
    %8127 = vmatmul.f32.gmra.mxu0 %v8088
    %v8128 = vpop.f32.mrf.mxu0
    %v8129 = vadd.f32 0.0, %v8128
    %8130 = vmatmul.f32.gmra.mxu0 %v8089
    %v8131 = vpop.f32.mrf.mxu0
    %v8132 = vadd.f32 0.0, %v8131
    %8133 = vmatmul.f32.gmra.mxu0 %v8090
    %v8134 = vpop.f32.mrf.mxu0
    %v8135 = vadd.f32 0.0, %v8134
    %8136 = vdwg.mxu0
    %v8137 = vadd.f32 %v8076, %v8126
    %v8138 = vadd.f32 %v8079, %v8129
    %v8139 = vadd.f32 %v8082, %v8132
    %v8140 = vadd.f32 %v8085, %v8135
    %v8141 = vld [vmem:[#allocation5 + $0x5] sm:$0xff]
    %v8142 = vld [vmem:[#allocation5 + $0xd] sm:$0xff]
    %v8143 = vld [vmem:[#allocation5 + $0x15] sm:$0xff]
    %v8144 = vld [vmem:[#allocation5 + $0x1d] sm:$0x3]
    %s8145 = scalar_lea.vmem [#allocation9], 384
    %v8146 = vld [vmem:[%s8145] sm:$0xff]
    %v8147 = vld [vmem:[%s8145 + $0x8] sm:$0xff]
    %v8148 = vld [vmem:[%s8145 + $0x10] sm:$0xff]
    %v8149 = vld [vmem:[%s8145 + $0x18] sm:$0xff]
    %v8150 = vld [vmem:[%s8145 + $0x20] sm:$0xff]
    %v8151 = vld [vmem:[%s8145 + $0x28] sm:$0xff]
    %v8152 = vld [vmem:[%s8145 + $0x30] sm:$0xff]
    %v8153 = vld [vmem:[%s8145 + $0x38] sm:$0xff]
    %v8154 = vld [vmem:[%s8145 + $0x40] sm:$0xff]
    %v8155 = vld [vmem:[%s8145 + $0x48] sm:$0xff]
    %v8156 = vld [vmem:[%s8145 + $0x50] sm:$0xff]
    %v8157 = vld [vmem:[%s8145 + $0x58] sm:$0xff]
    %v8158 = vld [vmem:[%s8145 + $0x60] sm:$0xff]
    %v8159 = vld [vmem:[%s8145 + $0x68] sm:$0xff]
    %v8160 = vld [vmem:[%s8145 + $0x70] sm:$0xff]
    %v8161 = vld [vmem:[%s8145 + $0x78] sm:$0xff]
    %8162 = vmatpush.msra.mxu0 %v8161
    %8163 = vmatpush.msra.mxu0 %v8160
    %8164 = vmatpush.msra.mxu0 %v8159
    %8165 = vmatpush.msra.mxu0 %v8158
    %8166 = vmatpush.msra.mxu0 %v8157
    %8167 = vmatpush.msra.mxu0 %v8156
    %8168 = vmatpush.msra.mxu0 %v8155
    %8169 = vmatpush.msra.mxu0 %v8154
    %8170 = vmatpush.msra.mxu0 %v8153
    %8171 = vmatpush.msra.mxu0 %v8152
    %8172 = vmatpush.msra.mxu0 %v8151
    %8173 = vmatpush.msra.mxu0 %v8150
    %8174 = vmatpush.msra.mxu0 %v8149
    %8175 = vmatpush.msra.mxu0 %v8148
    %8176 = vmatpush.msra.mxu0 %v8147
    %8177 = vmatpush.msra.mxu0 %v8146
    %8178 = vmatmul.f32.gmra.mxu0 %v8141
    %v8179 = vpop.f32.mrf.mxu0
    %v8180 = vadd.f32 0.0, %v8179
    %8181 = vmatmul.f32.gmra.mxu0 %v8142
    %v8182 = vpop.f32.mrf.mxu0
    %v8183 = vadd.f32 0.0, %v8182
    %8184 = vmatmul.f32.gmra.mxu0 %v8143
    %v8185 = vpop.f32.mrf.mxu0
    %v8186 = vadd.f32 0.0, %v8185
    %8187 = vmatmul.f32.gmra.mxu0 %v8144
    %v8188 = vpop.f32.mrf.mxu0
    %v8189 = vadd.f32 0.0, %v8188
    %8190 = vdwg.mxu0
    %v8191 = vadd.f32 %v8137, %v8180
    %v8192 = vadd.f32 %v8138, %v8183
    %v8193 = vadd.f32 %v8139, %v8186
    %v8194 = vadd.f32 %v8140, %v8189
    %v8195 = vld [vmem:[#allocation5 + $0x6] sm:$0xff]
    %v8196 = vld [vmem:[#allocation5 + $0xe] sm:$0xff]
    %v8197 = vld [vmem:[#allocation5 + $0x16] sm:$0xff]
    %v8198 = vld [vmem:[#allocation5 + $0x1e] sm:$0x3]
    %s8199 = scalar_lea.vmem [#allocation9], 512
    %v8200 = vld [vmem:[%s8199] sm:$0xff]
    %v8201 = vld [vmem:[%s8199 + $0x8] sm:$0xff]
    %v8202 = vld [vmem:[%s8199 + $0x10] sm:$0xff]
    %v8203 = vld [vmem:[%s8199 + $0x18] sm:$0xff]
    %v8204 = vld [vmem:[%s8199 + $0x20] sm:$0xff]
    %v8205 = vld [vmem:[%s8199 + $0x28] sm:$0xff]
    %v8206 = vld [vmem:[%s8199 + $0x30] sm:$0xff]
    %v8207 = vld [vmem:[%s8199 + $0x38] sm:$0xff]
    %v8208 = vld [vmem:[%s8199 + $0x40] sm:$0xff]
    %v8209 = vld [vmem:[%s8199 + $0x48] sm:$0xff]
    %v8210 = vld [vmem:[%s8199 + $0x50] sm:$0xff]
    %v8211 = vld [vmem:[%s8199 + $0x58] sm:$0xff]
    %v8212 = vld [vmem:[%s8199 + $0x60] sm:$0xff]
    %v8213 = vld [vmem:[%s8199 + $0x68] sm:$0xff]
    %v8214 = vld [vmem:[%s8199 + $0x70] sm:$0xff]
    %v8215 = vld [vmem:[%s8199 + $0x78] sm:$0xff]
    %8216 = vmatpush.msra.mxu0 %v8215
    %8217 = vmatpush.msra.mxu0 %v8214
    %8218 = vmatpush.msra.mxu0 %v8213
    %8219 = vmatpush.msra.mxu0 %v8212
    %8220 = vmatpush.msra.mxu0 %v8211
    %8221 = vmatpush.msra.mxu0 %v8210
    %8222 = vmatpush.msra.mxu0 %v8209
    %8223 = vmatpush.msra.mxu0 %v8208
    %8224 = vmatpush.msra.mxu0 %v8207
    %8225 = vmatpush.msra.mxu0 %v8206
    %8226 = vmatpush.msra.mxu0 %v8205
    %8227 = vmatpush.msra.mxu0 %v8204
    %8228 = vmatpush.msra.mxu0 %v8203
    %8229 = vmatpush.msra.mxu0 %v8202
    %8230 = vmatpush.msra.mxu0 %v8201
    %8231 = vmatpush.msra.mxu0 %v8200
    %8232 = vmatmul.f32.gmra.mxu0 %v8195
    %v8233 = vpop.f32.mrf.mxu0
    %v8234 = vadd.f32 0.0, %v8233
    %8235 = vmatmul.f32.gmra.mxu0 %v8196
    %v8236 = vpop.f32.mrf.mxu0
    %v8237 = vadd.f32 0.0, %v8236
    %8238 = vmatmul.f32.gmra.mxu0 %v8197
    %v8239 = vpop.f32.mrf.mxu0
    %v8240 = vadd.f32 0.0, %v8239
    %8241 = vmatmul.f32.gmra.mxu0 %v8198
    %v8242 = vpop.f32.mrf.mxu0
    %v8243 = vadd.f32 0.0, %v8242
    %8244 = vdwg.mxu0
    %v8245 = vadd.f32 %v8191, %v8234
    %v8246 = vadd.f32 %v8192, %v8237
    %v8247 = vadd.f32 %v8193, %v8240
    %v8248 = vadd.f32 %v8194, %v8243
    %v8249 = vld [vmem:[#allocation5 + $0x7] sm:$0xff]
    %v8250 = vld [vmem:[#allocation5 + $0xf] sm:$0xff]
    %v8251 = vld [vmem:[#allocation5 + $0x17] sm:$0xff]
    %v8252 = vld [vmem:[#allocation5 + $0x1f] sm:$0x3]
    %s8253 = scalar_lea.vmem [#allocation9], 640
    %v8254 = vld [vmem:[%s8253] sm:$0xff]
    %v8255 = vld [vmem:[%s8253 + $0x8] sm:$0xff]
    %v8256 = vld [vmem:[%s8253 + $0x10] sm:$0xff]
    %v8257 = vld [vmem:[%s8253 + $0x18] sm:$0xff]
    %v8258 = vld [vmem:[%s8253 + $0x20] sm:$0xff]
    %v8259 = vld [vmem:[%s8253 + $0x28] sm:$0xff]
    %v8260 = vld [vmem:[%s8253 + $0x30] sm:$0xff]
    %v8261 = vld [vmem:[%s8253 + $0x38] sm:$0xff]
    %v8262 = vld [vmem:[%s8253 + $0x40] sm:$0xff]
    %v8263 = vld [vmem:[%s8253 + $0x48] sm:$0xff]
    %v8264 = vld [vmem:[%s8253 + $0x50] sm:$0xff]
    %v8265 = vld [vmem:[%s8253 + $0x58] sm:$0xff]
    %v8266 = vld [vmem:[%s8253 + $0x60] sm:$0xff]
    %v8267 = vld [vmem:[%s8253 + $0x68] sm:$0xff]
    %v8268 = vld [vmem:[%s8253 + $0x70] sm:$0xff]
    %v8269 = vld [vmem:[%s8253 + $0x78] sm:$0xff]
    %8270 = vmatpush.msra.mxu0 %v8269
    %8271 = vmatpush.msra.mxu0 %v8268
    %8272 = vmatpush.msra.mxu0 %v8267
    %8273 = vmatpush.msra.mxu0 %v8266
    %8274 = vmatpush.msra.mxu0 %v8265
    %8275 = vmatpush.msra.mxu0 %v8264
    %8276 = vmatpush.msra.mxu0 %v8263
    %8277 = vmatpush.msra.mxu0 %v8262
    %8278 = vmatpush.msra.mxu0 %v8261
    %8279 = vmatpush.msra.mxu0 %v8260
    %8280 = vmatpush.msra.mxu0 %v8259
    %8281 = vmatpush.msra.mxu0 %v8258
    %8282 = vmatpush.msra.mxu0 %v8257
    %8283 = vmatpush.msra.mxu0 %v8256
    %8284 = vmatpush.msra.mxu0 %v8255
    %8285 = vmatpush.msra.mxu0 %v8254
    %8286 = vmatmul.f32.gmra.mxu0 %v8249
    %v8287 = vpop.f32.mrf.mxu0
    %v8288 = vadd.f32 0.0, %v8287
    %8289 = vmatmul.f32.gmra.mxu0 %v8250
    %v8290 = vpop.f32.mrf.mxu0
    %v8291 = vadd.f32 0.0, %v8290
    %8292 = vmatmul.f32.gmra.mxu0 %v8251
    %v8293 = vpop.f32.mrf.mxu0
    %v8294 = vadd.f32 0.0, %v8293
    %8295 = vmatmul.f32.gmra.mxu0 %v8252
    %v8296 = vpop.f32.mrf.mxu0
    %v8297 = vadd.f32 0.0, %v8296
    %8298 = vdwg.mxu0
    %v8299 = vadd.f32 %v8245, %v8288
    %v8300 = vadd.f32 %v8246, %v8291
    %v8301 = vadd.f32 %v8247, %v8294
    %v8302 = vadd.f32 %v8248, %v8297
    %v8303 = vld [vmem:[#allocation5 + $0xa] sm:$0xff]
    %v8304 = vld [vmem:[#allocation5 + $0x12] sm:$0xff]
    %v8305 = vld [vmem:[#allocation5 + $0x1a] sm:$0xff]
    %v8306 = vld [vmem:[#allocation5 + $0x22] sm:$0x3]
    %s8307 = scalar_lea.vmem [#allocation9], 768
    %v8308 = vld [vmem:[%s8307] sm:$0xff]
    %v8309 = vld [vmem:[%s8307 + $0x8] sm:$0xff]
    %v8310 = vld [vmem:[%s8307 + $0x10] sm:$0xff]
    %v8311 = vld [vmem:[%s8307 + $0x18] sm:$0xff]
    %v8312 = vld [vmem:[%s8307 + $0x20] sm:$0xff]
    %v8313 = vld [vmem:[%s8307 + $0x28] sm:$0xff]
    %v8314 = vld [vmem:[%s8307 + $0x30] sm:$0xff]
    %v8315 = vld [vmem:[%s8307 + $0x38] sm:$0xff]
    %v8316 = vld [vmem:[%s8307 + $0x40] sm:$0xff]
    %v8317 = vld [vmem:[%s8307 + $0x48] sm:$0xff]
    %v8318 = vld [vmem:[%s8307 + $0x50] sm:$0xff]
    %v8319 = vld [vmem:[%s8307 + $0x58] sm:$0xff]
    %v8320 = vld [vmem:[%s8307 + $0x60] sm:$0xff]
    %v8321 = vld [vmem:[%s8307 + $0x68] sm:$0xff]
    %v8322 = vld [vmem:[%s8307 + $0x70] sm:$0xff]
    %v8323 = vld [vmem:[%s8307 + $0x78] sm:$0xff]
    %8324 = vmatpush.msra.mxu0 %v8323
    %8325 = vmatpush.msra.mxu0 %v8322
    %8326 = vmatpush.msra.mxu0 %v8321
    %8327 = vmatpush.msra.mxu0 %v8320
    %8328 = vmatpush.msra.mxu0 %v8319
    %8329 = vmatpush.msra.mxu0 %v8318
    %8330 = vmatpush.msra.mxu0 %v8317
    %8331 = vmatpush.msra.mxu0 %v8316
    %8332 = vmatpush.msra.mxu0 %v8315
    %8333 = vmatpush.msra.mxu0 %v8314
    %8334 = vmatpush.msra.mxu0 %v8313
    %8335 = vmatpush.msra.mxu0 %v8312
    %8336 = vmatpush.msra.mxu0 %v8311
    %8337 = vmatpush.msra.mxu0 %v8310
    %8338 = vmatpush.msra.mxu0 %v8309
    %8339 = vmatpush.msra.mxu0 %v8308
    %8340 = vmatmul.f32.gmra.mxu0 %v8303
    %v8341 = vpop.f32.mrf.mxu0
    %v8342 = vadd.f32 0.0, %v8341
    %8343 = vmatmul.f32.gmra.mxu0 %v8304
    %v8344 = vpop.f32.mrf.mxu0
    %v8345 = vadd.f32 0.0, %v8344
    %8346 = vmatmul.f32.gmra.mxu0 %v8305
    %v8347 = vpop.f32.mrf.mxu0
    %v8348 = vadd.f32 0.0, %v8347
    %8349 = vmatmul.f32.gmra.mxu0 %v8306
    %v8350 = vpop.f32.mrf.mxu0
    %v8351 = vadd.f32 0.0, %v8350
    %8352 = vdwg.mxu0
    %v8353 = vadd.f32 %v8299, %v8342
    %v8354 = vadd.f32 %v8300, %v8345
    %v8355 = vadd.f32 %v8301, %v8348
    %v8356 = vadd.f32 %v8302, %v8351
    %v8357 = vld [vmem:[#allocation5 + $0xb] sm:$0xff]
    %v8358 = vld [vmem:[#allocation5 + $0x13] sm:$0xff]
    %v8359 = vld [vmem:[#allocation5 + $0x1b] sm:$0xff]
    %v8360 = vld [vmem:[#allocation5 + $0x23] sm:$0x3]
    %s8361 = scalar_lea.vmem [#allocation9], 896
    %v8362 = vld [vmem:[%s8361] sm:$0xff]
    %v8363 = vld [vmem:[%s8361 + $0x8] sm:$0xff]
    %v8364 = vld [vmem:[%s8361 + $0x10] sm:$0xff]
    %v8365 = vld [vmem:[%s8361 + $0x18] sm:$0xff]
    %v8366 = vld [vmem:[%s8361 + $0x20] sm:$0xff]
    %v8367 = vld [vmem:[%s8361 + $0x28] sm:$0xff]
    %v8368 = vld [vmem:[%s8361 + $0x30] sm:$0xff]
    %v8369 = vld [vmem:[%s8361 + $0x38] sm:$0xff]
    %v8370 = vld [vmem:[%s8361 + $0x40] sm:$0xff]
    %v8371 = vld [vmem:[%s8361 + $0x48] sm:$0xff]
    %v8372 = vld [vmem:[%s8361 + $0x50] sm:$0xff]
    %v8373 = vld [vmem:[%s8361 + $0x58] sm:$0xff]
    %v8374 = vld [vmem:[%s8361 + $0x60] sm:$0xff]
    %v8375 = vld [vmem:[%s8361 + $0x68] sm:$0xff]
    %v8376 = vld [vmem:[%s8361 + $0x70] sm:$0xff]
    %v8377 = vld [vmem:[%s8361 + $0x78] sm:$0xff]
    %8378 = vmatpush.msra.mxu0 %v8377
    %8379 = vmatpush.msra.mxu0 %v8376
    %8380 = vmatpush.msra.mxu0 %v8375
    %8381 = vmatpush.msra.mxu0 %v8374
    %8382 = vmatpush.msra.mxu0 %v8373
    %8383 = vmatpush.msra.mxu0 %v8372
    %8384 = vmatpush.msra.mxu0 %v8371
    %8385 = vmatpush.msra.mxu0 %v8370
    %8386 = vmatpush.msra.mxu0 %v8369
    %8387 = vmatpush.msra.mxu0 %v8368
    %8388 = vmatpush.msra.mxu0 %v8367
    %8389 = vmatpush.msra.mxu0 %v8366
    %8390 = vmatpush.msra.mxu0 %v8365
    %8391 = vmatpush.msra.mxu0 %v8364
    %8392 = vmatpush.msra.mxu0 %v8363
    %8393 = vmatpush.msra.mxu0 %v8362
    %8394 = vmatmul.f32.gmra.mxu0 %v8357
    %v8395 = vpop.f32.mrf.mxu0
    %v8396 = vadd.f32 0.0, %v8395
    %8397 = vmatmul.f32.gmra.mxu0 %v8358
    %v8398 = vpop.f32.mrf.mxu0
    %v8399 = vadd.f32 0.0, %v8398
    %8400 = vmatmul.f32.gmra.mxu0 %v8359
    %v8401 = vpop.f32.mrf.mxu0
    %v8402 = vadd.f32 0.0, %v8401
    %8403 = vmatmul.f32.gmra.mxu0 %v8360
    %v8404 = vpop.f32.mrf.mxu0
    %v8405 = vadd.f32 0.0, %v8404
    %8406 = vdwg.mxu0
    %v8407 = vadd.f32 %v8353, %v8396
    %v8408 = vadd.f32 %v8354, %v8399
    %v8409 = vadd.f32 %v8355, %v8402
    %v8410 = vadd.f32 %v8356, %v8405
    %v8411 = vld [vmem:[#allocation5 + $0xc] sm:$0xff]
    %v8412 = vld [vmem:[#allocation5 + $0x14] sm:$0xff]
    %v8413 = vld [vmem:[#allocation5 + $0x1c] sm:$0xff]
    %v8414 = vld [vmem:[#allocation5 + $0x24] sm:$0x3]
    %s8415 = scalar_lea.vmem [#allocation9], 1024
    %v8416 = vld [vmem:[%s8415] sm:$0xff]
    %v8417 = vld [vmem:[%s8415 + $0x8] sm:$0xff]
    %v8418 = vld [vmem:[%s8415 + $0x10] sm:$0xff]
    %v8419 = vld [vmem:[%s8415 + $0x18] sm:$0xff]
    %v8420 = vld [vmem:[%s8415 + $0x20] sm:$0xff]
    %v8421 = vld [vmem:[%s8415 + $0x28] sm:$0xff]
    %v8422 = vld [vmem:[%s8415 + $0x30] sm:$0xff]
    %v8423 = vld [vmem:[%s8415 + $0x38] sm:$0xff]
    %v8424 = vld [vmem:[%s8415 + $0x40] sm:$0xff]
    %v8425 = vld [vmem:[%s8415 + $0x48] sm:$0xff]
    %v8426 = vld [vmem:[%s8415 + $0x50] sm:$0xff]
    %v8427 = vld [vmem:[%s8415 + $0x58] sm:$0xff]
    %v8428 = vld [vmem:[%s8415 + $0x60] sm:$0xff]
    %v8429 = vld [vmem:[%s8415 + $0x68] sm:$0xff]
    %v8430 = vld [vmem:[%s8415 + $0x70] sm:$0xff]
    %v8431 = vld [vmem:[%s8415 + $0x78] sm:$0xff]
    %8432 = vmatpush.msra.mxu0 %v8431
    %8433 = vmatpush.msra.mxu0 %v8430
    %8434 = vmatpush.msra.mxu0 %v8429
    %8435 = vmatpush.msra.mxu0 %v8428
    %8436 = vmatpush.msra.mxu0 %v8427
    %8437 = vmatpush.msra.mxu0 %v8426
    %8438 = vmatpush.msra.mxu0 %v8425
    %8439 = vmatpush.msra.mxu0 %v8424
    %8440 = vmatpush.msra.mxu0 %v8423
    %8441 = vmatpush.msra.mxu0 %v8422
    %8442 = vmatpush.msra.mxu0 %v8421
    %8443 = vmatpush.msra.mxu0 %v8420
    %8444 = vmatpush.msra.mxu0 %v8419
    %8445 = vmatpush.msra.mxu0 %v8418
    %8446 = vmatpush.msra.mxu0 %v8417
    %8447 = vmatpush.msra.mxu0 %v8416
    %8448 = vmatmul.f32.gmra.mxu0 %v8411
    %v8449 = vpop.f32.mrf.mxu0
    %v8450 = vadd.f32 0.0, %v8449
    %8451 = vmatmul.f32.gmra.mxu0 %v8412
    %v8452 = vpop.f32.mrf.mxu0
    %v8453 = vadd.f32 0.0, %v8452
    %8454 = vmatmul.f32.gmra.mxu0 %v8413
    %v8455 = vpop.f32.mrf.mxu0
    %v8456 = vadd.f32 0.0, %v8455
    %8457 = vmatmul.f32.gmra.mxu0 %v8414
    %v8458 = vpop.f32.mrf.mxu0
    %v8459 = vadd.f32 0.0, %v8458
    %8460 = vdwg.mxu0
    %v8461 = vadd.f32 %v8407, %v8450
    %v8462 = vadd.f32 %v8408, %v8453
    %v8463 = vadd.f32 %v8409, %v8456
    %v8464 = vadd.f32 %v8410, %v8459
    %v8465 = vld [vmem:[%s12] sm:$0x3]
    %v8466 = vld [vmem:[%s11] sm:$0x1]
    %v8468 = vperm.slane %v8466, 0
    %v8470 = vadd.f32 %v8461, %v8468
    %v8471 = vadd.f32 %v8462, %v8468
    %v8472 = vadd.f32 %v8463, %v8468
    %v8473 = vadd.f32 %v8464, %v8468
    %vm8474 = vcmask 211968
    %v8476 = vsel %vm8474, %v8465, 0
    %vm8478 = vcmask 1041408
    %v8480 = vsel %vm8478, %v8473, 0
    %8482 = vmatpush.msra.mxu0 0.0
    %8483 = vmatpush.msra.mxu0 0.0
    %8484 = vmatpush.msra.mxu0 0.0
    %8485 = vmatpush.msra.mxu0 0.0
    %8486 = vmatpush.msra.mxu0 0.0
    %8487 = vmatpush.msra.mxu0 0.0
    %8488 = vmatpush.msra.mxu0 0.0
    %8489 = vmatpush.msra.mxu0 0.0
    %8490 = vmatpush.msra.mxu0 0.0
    %8491 = vmatpush.msra.mxu0 0.0
    %8492 = vmatpush.msra.mxu0 0.0
    %8493 = vmatpush.msra.mxu0 0.0
    %8494 = vmatpush.msra.mxu0 %v8480
    %8495 = vmatpush.msra.mxu0 %v8472
    %8496 = vmatpush.msra.mxu0 %v8471
    %8497 = vmatpush.msra.mxu0 %v8470
    %8498 = vmatmul.f32.gmra.mxu0 %v8476
    %v8499 = vpop.f32.mrf.mxu0
    %v8500 = vadd.f32 0.0, %v8499
    %8501 = vdwg.mxu0
    %v8502 = vld [vmem:[%s13] sm:$0xff]
    %v8503 = vld [vmem:[%s13 + $0x8] sm:$0xff]
    %v8504 = vld [vmem:[%s13 + $0x10] sm:$0xff]
    %v8505 = vld [vmem:[%s13 + $0x18] sm:$0xff]
    %v8506 = vld [vmem:[%s13 + $0x20] sm:$0xff]
    %v8507 = vld [vmem:[%s13 + $0x28] sm:$0xff]
    %v8508 = vld [vmem:[%s13 + $0x30] sm:$0xff]
    %v8509 = vld [vmem:[%s13 + $0x38] sm:$0xff]
    %v8510 = vld [vmem:[%s13 + $0x40] sm:$0xff]
    %v8511 = vld [vmem:[%s13 + $0x48] sm:$0xff]
    %v8512 = vld [vmem:[%s13 + $0x50] sm:$0xff]
    %v8513 = vld [vmem:[%s13 + $0x58] sm:$0xff]
    %v8514 = vld [vmem:[%s13 + $0x60] sm:$0xff]
    %v8515 = vld [vmem:[%s13 + $0x68] sm:$0xff]
    %v8516 = vld [vmem:[%s13 + $0x70] sm:$0xff]
    %v8517 = vld [vmem:[%s13 + $0x78] sm:$0xff]
    %v8518 = vld [vmem:[%s14] sm:$0x1]
    %v8520 = vperm.slane %v8518, 0
    %8522 = vmatpush.msra.mxu0 %v8517
    %8523 = vmatpush.msra.mxu0 %v8516
    %8524 = vmatpush.msra.mxu0 %v8515
    %8525 = vmatpush.msra.mxu0 %v8514
    %8526 = vmatpush.msra.mxu0 %v8513
    %8527 = vmatpush.msra.mxu0 %v8512
    %8528 = vmatpush.msra.mxu0 %v8511
    %8529 = vmatpush.msra.mxu0 %v8510
    %8530 = vmatpush.msra.mxu0 %v8509
    %8531 = vmatpush.msra.mxu0 %v8508
    %8532 = vmatpush.msra.mxu0 %v8507
    %8533 = vmatpush.msra.mxu0 %v8506
    %8534 = vmatpush.msra.mxu0 %v8505
    %8535 = vmatpush.msra.mxu0 %v8504
    %8536 = vmatpush.msra.mxu0 %v8503
    %8537 = vmatpush.msra.mxu0 %v8502
    %8538 = vmatmul.f32.gmra.mxu0 %v8500
    %v8539 = vpop.f32.mrf.mxu0
    %v8540 = vadd.f32 %v8520, %v8539
    %8541 = vdwg.mxu0
    %v8542 = vmax.f32 %v8540, 0.0
    %v8543 = vld [vmem:[%s15] sm:$0xff]
    %v8544 = vld [vmem:[%s15 + $0x8] sm:$0xff]
    %v8545 = vld [vmem:[%s15 + $0x10] sm:$0xff]
    %v8546 = vld [vmem:[%s15 + $0x18] sm:$0xff]
    %v8547 = vld [vmem:[%s15 + $0x20] sm:$0xff]
    %v8548 = vld [vmem:[%s15 + $0x28] sm:$0xff]
    %v8549 = vld [vmem:[%s15 + $0x30] sm:$0xff]
    %v8550 = vld [vmem:[%s15 + $0x38] sm:$0xff]
    %v8551 = vld [vmem:[%s16] sm:$0x1]
    %v8553 = vperm.slane %v8551, 0
    %v8556 = vsel %vm3561, %v8542, 0
    %8558 = vmatpush.msra.mxu0 0.0
    %8559 = vmatpush.msra.mxu0 0.0
    %8560 = vmatpush.msra.mxu0 0.0
    %8561 = vmatpush.msra.mxu0 0.0
    %8562 = vmatpush.msra.mxu0 0.0
    %8563 = vmatpush.msra.mxu0 0.0
    %8564 = vmatpush.msra.mxu0 0.0
    %8565 = vmatpush.msra.mxu0 0.0
    %8566 = vmatpush.msra.mxu0 %v8550
    %8567 = vmatpush.msra.mxu0 %v8549
    %8568 = vmatpush.msra.mxu0 %v8548
    %8569 = vmatpush.msra.mxu0 %v8547
    %8570 = vmatpush.msra.mxu0 %v8546
    %8571 = vmatpush.msra.mxu0 %v8545
    %8572 = vmatpush.msra.mxu0 %v8544
    %8573 = vmatpush.msra.mxu0 %v8543
    %8574 = vmatmul.f32.gmra.mxu0 %v8556
    %v8575 = vpop.f32.mrf.mxu0
    %v8576 = vadd.f32 %v8553, %v8575
    %8577 = vdwg.mxu0
    %vm8578 = vcmask 74752
    %8579 = vst.msk [vmem:[#allocation11] sm:$0x3] %vm8578, %v8576
    // Predicated region
    $region78: #{simple_net_forward.1} parent=1 // pred_check
      _
    $region79: #{simple_net_forward.1} parent=1 // pred_check_branch
      %8581 = sbr.rel (0) target = $region81
    $region80: #{simple_net_forward.1} parent=1 // pred_region
      %8583 = vsyncadd [#allocation8], 0
      %s8585 = sshll.u32 [#allocation11], 4
      %s8586 = int_to_ptr.vmem [resolvable:$true] %s8585
      %s8587 = sshll.u32 %s17, 4
      %s8588 = int_to_ptr.hbm [resolvable:$true] %s8587
      %8590 = dma.vmem_to_hbm [thread:$0]  %s8586, 32, %s8588, [#allocation8]
    $region81: #{simple_net_forward.1} parent=1 // pred_fallthru
      _
    // Predicated region
    $region82: #{simple_net_forward.1} parent=1 // pred_check
      _
    $region83: #{simple_net_forward.1} parent=1 // pred_check_branch
      %8592 = sbr.rel (0) target = $region85
    $region84: #{simple_net_forward.1} parent=1 // pred_region
      %8594 = dma.done [#allocation8], 32
    $region85: #{simple_net_forward.1} parent=1 // pred_fallthru
      _
    %8595 = vsyncpa [#allocation7], 1
    %8596 = vsyncpa [#allocation10], 1
    %8597 = vsyncpa [#allocation8], 1

</llo_original>
